<compile_context>
chip_gen: v5e
topology: v5e:2x2
jax: 0.10.0
libtpu: 0.0.40
codegen_flags: <defaults>
</compile_context>

<pallas_src>
import functools
import math

import jax
import jax.numpy as jnp
from jax.experimental import pallas as pl
from jax.experimental.pallas import tpu as pltpu


# ------------------------------ helpers ------------------------------------ #

def _row_tile(m, max_tm=256):
    """Largest multiple-of-8 row tile <= max_tm dividing m, preferring an even
    2-way split so every call has >=2 parallel grid steps (v7x has two
    TensorCores; harmless on single-core v5e/v6e)."""
    if m <= 8 or m % 8:
        return m
    half = m // 2
    if half % 8 == 0 and half <= max_tm:
        return half
    t = (min(max_tm, m) // 8) * 8
    while m % t:
        t -= 8
    return t


def _batch_spec(shape):
    """(1, ...) block indexed by the batch grid axis."""
    nd = len(shape)
    return pl.BlockSpec((1,) + tuple(shape[1:]), lambda i: (i,) + (0,) * (nd - 1))


def _const_spec(shape):
    """Full-array block, identical for every grid step (stays VMEM-resident;
    Pallas skips the re-DMA when the block index does not change)."""
    nd = len(shape)
    return pl.BlockSpec(tuple(shape), lambda i: (0,) * nd)


_PAR1 = pltpu.CompilerParams(dimension_semantics=("parallel",))


# --------------------------- in-kernel blocks ------------------------------- #

def _ln(h, g, b, eps):
    mu = jnp.mean(h, axis=-1, keepdims=True)
    var = jnp.mean(jnp.square(h - mu), axis=-1, keepdims=True)
    return (h - mu) * jax.lax.rsqrt(var + eps) * g + b


def _mha_block(xq_f32, xkv_bf16, masked, wq, wk, wv, wo, g, bta, eps):
    """Multi-head attention + output projection + residual + LayerNorm, fully
    head-batched (weights are (H,d,dk)/(H,d,dv)/(H,dv,d) bf16).  Returns the
    f32 (Lq, d) block output and the f32 (H, Lq, Lk) attention probabilities.
    1/sqrt(d_k) is folded into wq at init."""
    n_head = wq.shape[0]
    lq, d = xq_f32.shape
    lk = xkv_bf16.shape[0]

    qin = jnp.broadcast_to(xq_f32.astype(jnp.bfloat16)[None], (n_head, lq, d))
    kin = jnp.broadcast_to(xkv_bf16[None], (n_head, lk, d))

    def bmm(a, b_, cdims):  # batched (over heads) MXU matmul, f32 accumulation
        return jax.lax.dot_general(a, b_, (cdims, ((0,), (0,))),
                                   preferred_element_type=jnp.float32)

    q = bmm(qin, wq, ((2,), (1,))).astype(jnp.bfloat16)          # (H, Lq, dk)
    k = bmm(kin, wk, ((2,), (1,))).astype(jnp.bfloat16)          # (H, Lk, dk)
    v = bmm(kin, wv, ((2,), (1,))).astype(jnp.bfloat16)          # (H, Lk, dv)

    s = bmm(q, k, ((2,), (2,)))                                  # (H, Lq, Lk)
    s = jnp.where(masked[None], -1e9, s)
    s = s - jnp.max(s, axis=-1, keepdims=True)
    e = jnp.exp(s)
    p = e / jnp.sum(e, axis=-1, keepdims=True)   # exact divide: maps are outputs

    ctx = bmm(p.astype(jnp.bfloat16), v, ((2,), (1,)))           # (H, Lq, dv)
    oh = bmm(ctx.astype(jnp.bfloat16), wo, ((2,), (1,)))         # (H, Lq, d)
    out = oh[0]
    for h in range(1, n_head):                   # static head-sum: 3 VPU adds
        out = out + oh[h]
    out = _ln(out + xq_f32, g, bta, eps)         # residual + LayerNorm (f32)
    return out, p


def _ffn_block(h, w1, b1, w2, b2, g, bta, eps):
    f = jnp.dot(h.astype(jnp.bfloat16), w1, preferred_element_type=jnp.float32) + b1
    f = jnp.maximum(f, 0.0)
    f2 = jnp.dot(f.astype(jnp.bfloat16), w2, preferred_element_type=jnp.float32) + b2
    return _ln(f2 + h, g, bta, eps)


# ----------------------------- Pallas kernels ------------------------------- #

def _layernorm_kernel(x_ref, g_ref, b_ref, o_ref, *, eps):
    o_ref[...] = _ln(x_ref[...].astype(jnp.float32), g_ref[...], b_ref[...],
                     eps).astype(o_ref.dtype)


def _encoder_layer_kernel(x_ref, kpad_ref,
                          wq_ref, wk_ref, wv_ref, wo_ref, ag_ref, ab_ref,
                          w1_ref, b1_ref, w2_ref, b2_ref, fg_ref, fb_ref,
                          *out_refs, eps, return_attn):
    x = x_ref[0].astype(jnp.float32)                        # (L, d)
    l = x.shape[0]
    masked = jnp.broadcast_to(kpad_ref[0] != 0, (l, l))     # key padding mask
    attn_out, p = _mha_block(x, x.astype(jnp.bfloat16), masked,
                             wq_ref[...], wk_ref[...], wv_ref[...], wo_ref[...],
                             ag_ref[...], ab_ref[...], eps)
    y = _ffn_block(attn_out, w1_ref[...], b1_ref[...], w2_ref[...], b2_ref[...],
                   fg_ref[...], fb_ref[...], eps)
    out_refs[0][0] = y.astype(out_refs[0].dtype)            # single store
    if return_attn:
        out_refs[1][0] = p.astype(out_refs[1].dtype)        # single (H,Lq,Lk) store


def _decoder_layer_kernel(y_ref, enc_ref, dkpad_ref, ekpad_ref,
                          swq_ref, swk_ref, swv_ref, swo_ref, sg_ref, sb_ref,
                          cwq_ref, cwk_ref, cwv_ref, cwo_ref, cg_ref, cb_ref,
                          w1_ref, b1_ref, w2_ref, b2_ref, fg_ref, fb_ref,
                          o_ref, sa_ref, ca_ref, *, eps):
    y = y_ref[0].astype(jnp.float32)                        # (Ld, d)
    enc = enc_ref[0]                                        # (Le, d) bf16
    ld, le = y.shape[0], enc.shape[0]

    # self-attn mask: key padding OR causal (strict upper triangle), in-kernel
    row = jax.lax.broadcasted_iota(jnp.int32, (ld, ld), 0)
    col = jax.lax.broadcasted_iota(jnp.int32, (ld, ld), 1)
    self_masked = jnp.logical_or(dkpad_ref[0] != 0, col > row)
    cross_masked = jnp.broadcast_to(ekpad_ref[0] != 0, (ld, le))

    o1, sp = _mha_block(y, y.astype(jnp.bfloat16), self_masked,
                        swq_ref[...], swk_ref[...], swv_ref[...], swo_ref[...],
                        sg_ref[...], sb_ref[...], eps)
    o2, cp = _mha_block(o1, enc, cross_masked,
                        cwq_ref[...], cwk_ref[...], cwv_ref[...], cwo_ref[...],
                        cg_ref[...], cb_ref[...], eps)
    out = _ffn_block(o2, w1_ref[...], b1_ref[...], w2_ref[...], b2_ref[...],
                     fg_ref[...], fb_ref[...], eps)
    o_ref[0] = out.astype(o_ref.dtype)
    sa_ref[0] = sp.astype(sa_ref.dtype)
    ca_ref[0] = cp.astype(ca_ref.dtype)


def _proj_softmax_kernel(x_ref, w_ref, o_ref):
    # final linear (bias=False) fused with softmax(dim=-1); full vocab row per
    # block.  TODO(synk): at realistic vocab widths on v7x (64 MiB VMEM) this
    # needs an N-tiled two-pass/online softmax plus an explicit vmem_limit.
    acc = jnp.dot(x_ref[...].astype(jnp.bfloat16), w_ref[...],
                  preferred_element_type=jnp.float32)
    acc = acc - jnp.max(acc, axis=-1, keepdims=True)
    e = jnp.exp(acc)
    o_ref[...] = (e / jnp.sum(e, axis=-1, keepdims=True)).astype(o_ref.dtype)


# ------------------------------- wrappers ----------------------------------- #

def layernorm(x, gamma, beta, eps=1e-6):
    m, d = x.shape
    tm = _row_tile(m)
    return pl.pallas_call(
        functools.partial(_layernorm_kernel, eps=eps),
        out_shape=jax.ShapeDtypeStruct((m, d), x.dtype),
        grid=(m // tm,),
        in_specs=[pl.BlockSpec((tm, d), lambda i: (i, 0)),
                  _const_spec(gamma.shape), _const_spec(beta.shape)],
        out_specs=pl.BlockSpec((tm, d), lambda i: (i, 0)),
        compiler_params=_PAR1,
    )(x, gamma, beta)


def proj_softmax(x, w):
    m, k = x.shape
    n = w.shape[1]
    tm = _row_tile(m)
    return pl.pallas_call(
        _proj_softmax_kernel,
        out_shape=jax.ShapeDtypeStruct((m, n), jnp.float32),
        grid=(m // tm,),
        in_specs=[pl.BlockSpec((tm, k), lambda i: (i, 0)), _const_spec(w.shape)],
        out_specs=pl.BlockSpec((tm, n), lambda i: (i, 0)),
        compiler_params=_PAR1,
    )(x, w)


def encoder_layer(lp, x, enc_kpad, n_head, return_attn, eps=1e-6):
    b, l, d = x.shape
    slf, ffn = lp['slf'], lp['ffn']
    inputs = [x, enc_kpad,
              slf['wq'], slf['wk'], slf['wv'], slf['wo'], slf['ln_g'], slf['ln_b'],
              ffn['w1'], ffn['b1'], ffn['w2'], ffn['b2'], ffn['ln_g'], ffn['ln_b']]
    in_specs = ([_batch_spec(x.shape), _batch_spec(enc_kpad.shape)]
                + [_const_spec(a.shape) for a in inputs[2:]])
    kern = functools.partial(_encoder_layer_kernel, eps=eps,
                             return_attn=return_attn)
    # encoder layer output only feeds the decoder cross-attn matmuls -> bf16
    out_sds = jax.ShapeDtypeStruct((b, l, d), jnp.bfloat16)
    out_spec = _batch_spec((b, l, d))
    if return_attn:
        a_sds = jax.ShapeDtypeStruct((b, n_head, l, l), jnp.float32)
        out, attn = pl.pallas_call(
            kern, out_shape=(out_sds, a_sds), grid=(b,),
            in_specs=in_specs,
            out_specs=(out_spec, _batch_spec((b, n_head, l, l))),
            compiler_params=_PAR1)(*inputs)
        return out, attn
    out = pl.pallas_call(
        kern, out_shape=out_sds, grid=(b,),
        in_specs=in_specs, out_specs=out_spec,
        compiler_params=_PAR1)(*inputs)
    return out, None


def decoder_layer(lp, y, enc_output, dec_kpad, enc_kpad, n_head, eps=1e-6):
    b, ld, d = y.shape
    le = enc_output.shape[1]
    slf, crs, ffn = lp['slf'], lp['crs'], lp['ffn']
    inputs = [y, enc_output, dec_kpad, enc_kpad,
              slf['wq'], slf['wk'], slf['wv'], slf['wo'], slf['ln_g'], slf['ln_b'],
              crs['wq'], crs['wk'], crs['wv'], crs['wo'], crs['ln_g'], crs['ln_b'],
              ffn['w1'], ffn['b1'], ffn['w2'], ffn['b2'], ffn['ln_g'], ffn['ln_b']]
    in_specs = ([_batch_spec(a.shape) for a in inputs[:4]]
                + [_const_spec(a.shape) for a in inputs[4:]])
    out_shapes = (jax.ShapeDtypeStruct((b, ld, d), jnp.float32),
                  jax.ShapeDtypeStruct((b, n_head, ld, ld), jnp.float32),
                  jax.ShapeDtypeStruct((b, n_head, ld, le), jnp.float32))
    out_specs = (_batch_spec((b, ld, d)),
                 _batch_spec((b, n_head, ld, ld)),
                 _batch_spec((b, n_head, ld, le)))
    return pl.pallas_call(
        functools.partial(_decoder_layer_kernel, eps=eps),
        out_shape=out_shapes, grid=(b,),
        in_specs=in_specs, out_specs=out_specs,
        compiler_params=_PAR1)(*inputs)


# ------------------------------ model forward ------------------------------- #

def sinusoid_table(n_position, d):
    pos = jnp.arange(n_position, dtype=jnp.float32)[:, None]
    i = jnp.arange(d)[None, :]
    angle = pos / jnp.power(10000.0, (2 * (i // 2)).astype(jnp.float32) / d)
    return jnp.where(i % 2 == 0, jnp.sin(angle), jnp.cos(angle)).astype(jnp.float32)


def transformer_forward(params, enc_seq, dec_seq, cfg):
    b, le = enc_seq.shape
    _, ld = dec_seq.shape
    d, nh = cfg['model_d'], cfg['n_head']

    # key-padding indicators; the (Lq, Lk) masks themselves are built in-kernel
    enc_kpad = (enc_seq == 0).astype(jnp.int32).reshape(b, 1, le)
    dec_kpad = (dec_seq == 0).astype(jnp.int32).reshape(b, 1, ld)

    # ---------------- Encoder ----------------
    ep = params['enc']
    # TODO(synk): embedding lookup stays an XLA gather (jnp.take); a Pallas DMA
    # gather kernel is not worth it at these sizes.
    x = jnp.take(ep['emb'], enc_seq, axis=0) + ep['pe'][:le][None]
    x = layernorm(x.reshape(b * le, d), ep['ln_g'], ep['ln_b']).reshape(b, le, d)
    enc_slf_attn = None
    enc_output = None
    n_enc = len(ep['layers'])
    for li, lp in enumerate(ep['layers']):
        # faithful to the reference: x is NOT threaded through the layer stack,
        # and only the last layer's attention map is returned.
        need_attn = li == n_enc - 1
        enc_output, sa = encoder_layer(lp, x, enc_kpad, nh, return_attn=need_attn)
        if need_attn:
            enc_slf_attn = sa

    # ---------------- Decoder ----------------
    dp = params['dec']
    y = jnp.take(dp['emb'], dec_seq, axis=0) + dp['pe'][:ld][None]
    y = layernorm(y.reshape(b * ld, d), dp['ln_g'], dp['ln_b']).reshape(b, ld, d)
    dec_slf_list, dec_enc_list = [], []
    dec_output = y
    for lp in dp['layers']:
        # faithful to the reference: y is NOT threaded through the layer stack
        dec_output, sa, ca = decoder_layer(lp, y, enc_output, dec_kpad, enc_kpad, nh)
        dec_slf_list.append(sa)
        dec_enc_list.append(ca)

    # final projection (bias=False) fused with softmax(dim=2)
    out = proj_softmax(dec_output.reshape(b * ld, d), params['proj_w'])
    return (out.reshape(b, ld, cfg['dec_vocab_size']),
            enc_slf_attn, dec_slf_list, dec_enc_list)


# ------------------------------ parameters ---------------------------------- #

def init_params(key, cfg):
    d, nh, dk, dv, f = (cfg['model_d'], cfg['n_head'], cfg['d_k'], cfg['d_v'],
                        cfg['ffn_d'])
    keys = iter(jax.random.split(key, 256))

    def w(shape, scale=0.02, dtype=jnp.bfloat16):
        # matmul weights stored bf16 (MXU operands, half the weight DMA);
        # LN params / biases / embeddings stay f32.
        return (scale * jax.random.normal(next(keys), shape)).astype(dtype)

    def ln(n):
        return jnp.ones((1, n), jnp.float32), jnp.zeros((1, n), jnp.float32)

    def attn_params():
        g, bb = ln(d)
        return dict(
            # head-major weight blocks; 1/sqrt(d_k) folded into wq
            wq=w((nh, d, dk), scale=0.02 / math.sqrt(dk)),
            wk=w((nh, d, dk)), wv=w((nh, d, dv)), wo=w((nh, dv, d)),
            ln_g=g, ln_b=bb)

    def ffn_params():
        g, bb = ln(d)
        return dict(w1=w((d, f)), b1=jnp.zeros((1, f), jnp.float32),
                    w2=w((f, d)), b2=jnp.zeros((1, d), jnp.float32),
                    ln_g=g, ln_b=bb)

    enc_emb = w((cfg['n_enc_vocab'], d), 1.0, jnp.float32).at[0].set(0.0)  # padding_idx=0
    dec_emb = w((cfg['n_dec_vocab'], d), 1.0, jnp.float32).at[0].set(0.0)  # padding_idx=0
    pe = sinusoid_table(cfg['n_position'], d)

    g_e, b_e = ln(d)
    g_d, b_d = ln(d)
    return dict(
        enc=dict(emb=enc_emb, pe=pe, ln_g=g_e, ln_b=b_e,
                 layers=[dict(slf=attn_params(), ffn=ffn_params())
                         for _ in range(cfg['n_layer'])]),
        dec=dict(emb=dec_emb, pe=pe, ln_g=g_d, ln_b=b_d,
                 layers=[dict(slf=attn_params(), crs=attn_params(),
                              ffn=ffn_params())
                         for _ in range(cfg['n_layer'])]),
        proj_w=w((d, cfg['dec_vocab_size'])),
    )


# --------------------------------- main -------------------------------------- #

if __name__ == "__main__":
    cfg = dict(
        n_enc_vocab=40, n_dec_vocab=40,
        enc_vocab_size=64, dec_vocab_size=64,   # == model_d (embedding feeds LayerNorm(model_d))
        n_position=16, model_d=64, n_head=4, d_k=16, d_v=16,
        ffn_d=128, n_layer=2,
    )
    B, Le, Ld = 2, 8, 8

    root = jax.random.PRNGKey(0)
    k_p, k_e, k_d = jax.random.split(root, 3)
    params = init_params(k_p, cfg)

    enc_seq = jax.random.randint(k_e, (B, Le), 1, cfg['n_enc_vocab'], dtype=jnp.int32)
    dec_seq = jax.random.randint(k_d, (B, Ld), 1, cfg['n_dec_vocab'], dtype=jnp.int32)
    enc_seq = enc_seq.at[:, -2:].set(0)   # some padding to exercise masks
    dec_seq = dec_seq.at[:, -1:].set(0)

    fwd = jax.jit(lambda p, e, dd: transformer_forward(p, e, dd, cfg))
    out, enc_attn, dec_slf, dec_enc = fwd(params, enc_seq, dec_seq)
    jax.block_until_ready(out)

    assert out.shape == (B, Ld, cfg['dec_vocab_size'])
    assert enc_attn.shape == (B, cfg['n_head'], Le, Le)
    assert dec_slf[0].shape == (B, cfg['n_head'], Ld, Ld)
    assert dec_enc[0].shape == (B, cfg['n_head'], Ld, Le)
    # softmax rows sum to 1 (exact division in both attention and output softmax)
    assert bool(jnp.allclose(jnp.sum(out, axis=2), 1.0, atol=1e-4))
    assert bool(jnp.allclose(jnp.sum(enc_attn, axis=-1), 1.0, atol=1e-4))
    assert bool(jnp.all(jnp.isfinite(out)))

    print("KERNEL_OK")
</pallas_src>

<mosaic_0001>
module attributes {stable_mosaic.version = 11 : i64} {
  func.func @_layernorm_kernel(%arg0: i32, %arg1: memref<8x64xf32, #tpu.memory_space<vmem>>, %arg2: memref<1x64xf32, #tpu.memory_space<vmem>>, %arg3: memref<1x64xf32, #tpu.memory_space<vmem>>, %arg4: memref<8x64xf32, #tpu.memory_space<vmem>>) attributes {dimension_semantics = [#tpu.dimension_semantics<parallel>], iteration_bounds = array<i64: 2>, scalar_prefetch = 0 : i64, scratch_operands = 0 : i64, tpu.core_type = #tpu.core_type<tc>, window_params = [{transform_indices = @transform_0, window_bounds = array<i64: 8, 64>}, {pipeline_mode = #tpu.pipeline_mode<synchronous>, transform_indices = @transform_1, window_bounds = array<i64: 1, 64>}, {pipeline_mode = #tpu.pipeline_mode<synchronous>, transform_indices = @transform_2, window_bounds = array<i64: 1, 64>}, {transform_indices = @transform_3, window_bounds = array<i64: 8, 64>}]} {
    %c0 = arith.constant 0 : index
    %c0_0 = arith.constant 0 : index
    %0 = vector.load %arg1[%c0, %c0_0] : memref<8x64xf32, #tpu.memory_space<vmem>>, vector<8x64xf32>
    %c0_1 = arith.constant 0 : index
    %c0_2 = arith.constant 0 : index
    %1 = vector.load %arg2[%c0_1, %c0_2] : memref<1x64xf32, #tpu.memory_space<vmem>>, vector<1x64xf32>
    %c0_3 = arith.constant 0 : index
    %c0_4 = arith.constant 0 : index
    %2 = vector.load %arg3[%c0_3, %c0_4] : memref<1x64xf32, #tpu.memory_space<vmem>>, vector<1x64xf32>
    %cst = arith.constant dense<0.000000e+00> : vector<8xf32>
    %3 = vector.multi_reduction <add>, %0, %cst [1] : vector<8x64xf32> to vector<8xf32>
    %4 = vector.shape_cast %3 : vector<8xf32> to vector<8x1xf32>
    %cst_5 = arith.constant 6.400000e+01 : f32
    %5 = vector.broadcast %cst_5 : f32 to vector<8x1xf32>
    %6 = arith.divf %4, %5 : vector<8x1xf32>
    %7 = vector.broadcast %6 : vector<8x1xf32> to vector<8x64xf32>
    %8 = arith.subf %0, %7 : vector<8x64xf32>
    %9 = arith.mulf %8, %8 : vector<8x64xf32>
    %cst_6 = arith.constant dense<0.000000e+00> : vector<8xf32>
    %10 = vector.multi_reduction <add>, %9, %cst_6 [1] : vector<8x64xf32> to vector<8xf32>
    %11 = vector.shape_cast %10 : vector<8xf32> to vector<8x1xf32>
    %cst_7 = arith.constant 6.400000e+01 : f32
    %12 = vector.broadcast %cst_7 : f32 to vector<8x1xf32>
    %13 = arith.divf %11, %12 : vector<8x1xf32>
    %14 = vector.broadcast %6 : vector<8x1xf32> to vector<8x64xf32>
    %15 = arith.subf %0, %14 : vector<8x64xf32>
    %cst_8 = arith.constant 9.99999997E-7 : f32
    %16 = vector.broadcast %cst_8 : f32 to vector<8x1xf32>
    %17 = arith.addf %13, %16 : vector<8x1xf32>
    %18 = math.rsqrt %17 : vector<8x1xf32>
    %19 = vector.broadcast %18 : vector<8x1xf32> to vector<8x64xf32>
    %20 = arith.mulf %15, %19 : vector<8x64xf32>
    %21 = vector.broadcast %1 : vector<1x64xf32> to vector<8x64xf32>
    %22 = arith.mulf %20, %21 : vector<8x64xf32>
    %23 = vector.broadcast %2 : vector<1x64xf32> to vector<8x64xf32>
    %24 = arith.addf %22, %23 : vector<8x64xf32>
    %c0_9 = arith.constant 0 : index
    %c0_10 = arith.constant 0 : index
    %25 = vector.load %arg4[%c0_9, %c0_10] : memref<8x64xf32, #tpu.memory_space<vmem>>, vector<8x64xf32>
    tpu.vector_store %arg4[%c0_9, %c0_10], %24 {strides = array<i32>} : memref<8x64xf32, #tpu.memory_space<vmem>>, vector<8x64xf32>,
    return
  }
  func.func @transform_0(%arg0: i32) -> (i32, i32) {
    %c0_i32 = arith.constant 0 : i32
    %c0_i32_0 = arith.constant 0 : i32
    return %arg0, %c0_i32 : i32, i32
  }
  func.func @transform_1(%arg0: i32) -> (i32, i32) {
    %c0_i32 = arith.constant 0 : i32
    %c0_i32_0 = arith.constant 0 : i32
    %c0_i32_1 = arith.constant 0 : i32
    return %c0_i32, %c0_i32_0 : i32, i32
  }
  func.func @transform_2(%arg0: i32) -> (i32, i32) {
    %c0_i32 = arith.constant 0 : i32
    %c0_i32_0 = arith.constant 0 : i32
    %c0_i32_1 = arith.constant 0 : i32
    return %c0_i32, %c0_i32_0 : i32, i32
  }
  func.func @transform_3(%arg0: i32) -> (i32, i32) {
    %c0_i32 = arith.constant 0 : i32
    %c0_i32_0 = arith.constant 0 : i32
    return %arg0, %c0_i32 : i32, i32
  }
}

module attributes {stable_mosaic.version = 11 : i64} {
  func.func @_encoder_layer_kernel(%arg0: i32, %arg1: memref<1x8x64xf32, #tpu.memory_space<vmem>>, %arg2: memref<1x1x8xi32, #tpu.memory_space<vmem>>, %arg3: memref<4x64x16xbf16, #tpu.memory_space<vmem>>, %arg4: memref<4x64x16xbf16, #tpu.memory_space<vmem>>, %arg5: memref<4x64x16xbf16, #tpu.memory_space<vmem>>, %arg6: memref<4x16x64xbf16, #tpu.memory_space<vmem>>, %arg7: memref<1x64xf32, #tpu.memory_space<vmem>>, %arg8: memref<1x64xf32, #tpu.memory_space<vmem>>, %arg9: memref<64x128xbf16, #tpu.memory_space<vmem>>, %arg10: memref<1x128xf32, #tpu.memory_space<vmem>>, %arg11: memref<128x64xbf16, #tpu.memory_space<vmem>>, %arg12: memref<1x64xf32, #tpu.memory_space<vmem>>, %arg13: memref<1x64xf32, #tpu.memory_space<vmem>>, %arg14: memref<1x64xf32, #tpu.memory_space<vmem>>, %arg15: memref<1x8x64xbf16, #tpu.memory_space<vmem>>, %arg16: memref<1x4x8x8xf32, #tpu.memory_space<vmem>>) attributes {dimension_semantics = [#tpu.dimension_semantics<parallel>], iteration_bounds = array<i64: 2>, scalar_prefetch = 0 : i64, scratch_operands = 0 : i64, tpu.core_type = #tpu.core_type<tc>, window_params = [{transform_indices = @transform_0, window_bounds = array<i64: 1, 8, 64>}, {transform_indices = @transform_1, window_bounds = array<i64: 1, 1, 8>}, {pipeline_mode = #tpu.pipeline_mode<synchronous>, transform_indices = @transform_2, window_bounds = array<i64: 4, 64, 16>}, {pipeline_mode = #tpu.pipeline_mode<synchronous>, transform_indices = @transform_3, window_bounds = array<i64: 4, 64, 16>}, {pipeline_mode = #tpu.pipeline_mode<synchronous>, transform_indices = @transform_4, window_bounds = array<i64: 4, 64, 16>}, {pipeline_mode = #tpu.pipeline_mode<synchronous>, transform_indices = @transform_5, window_bounds = array<i64: 4, 16, 64>}, {pipeline_mode = #tpu.pipeline_mode<synchronous>, transform_indices = @transform_6, window_bounds = array<i64: 1, 64>}, {pipeline_mode = #tpu.pipeline_mode<synchronous>, transform_indices = @transform_7, window_bounds = array<i64: 1, 64>}, {pipeline_mode = #tpu.pipeline_mode<synchronous>, transform_indices = @transform_8, window_bounds = array<i64: 64, 128>}, {pipeline_mode = #tpu.pipeline_mode<synchronous>, transform_indices = @transform_9, window_bounds = array<i64: 1, 128>}, {pipeline_mode = #tpu.pipeline_mode<synchronous>, transform_indices = @transform_10, window_bounds = array<i64: 128, 64>}, {pipeline_mode = #tpu.pipeline_mode<synchronous>, transform_indices = @transform_11, window_bounds = array<i64: 1, 64>}, {pipeline_mode = #tpu.pipeline_mode<synchronous>, transform_indices = @transform_12, window_bounds = array<i64: 1, 64>}, {pipeline_mode = #tpu.pipeline_mode<synchronous>, transform_indices = @transform_13, window_bounds = array<i64: 1, 64>}, {transform_indices = @transform_14, window_bounds = array<i64: 1, 8, 64>}, {transform_indices = @transform_15, window_bounds = array<i64: 1, 4, 8, 8>}]} {
    %c0 = arith.constant 0 : index
    %c0_0 = arith.constant 0 : index
    %c0_1 = arith.constant 0 : index
    %0 = vector.load %arg1[%c0, %c0_0, %c0_1] : memref<1x8x64xf32, #tpu.memory_space<vmem>>, vector<1x8x64xf32>
    %1 = vector.shape_cast %0 : vector<1x8x64xf32> to vector<8x64xf32>
    %c0_2 = arith.constant 0 : index
    %c0_3 = arith.constant 0 : index
    %c0_4 = arith.constant 0 : index
    %2 = vector.load %arg2[%c0_2, %c0_3, %c0_4] : memref<1x1x8xi32, #tpu.memory_space<vmem>>, vector<1x1x8xi32>
    %3 = vector.shape_cast %2 : vector<1x1x8xi32> to vector<1x8xi32>
    %c0_i32 = arith.constant 0 : i32
    %4 = vector.broadcast %c0_i32 : i32 to vector<1x8xi32>
    %5 = arith.cmpi ne, %3, %4 : vector<1x8xi32>
    %6 = vector.shape_cast %5 : vector<1x8xi1> to vector<1x8xi1>
    %7 = vector.broadcast %6 : vector<1x8xi1> to vector<8x8xi1>
    %8 = arith.truncf %1 : vector<8x64xf32> to vector<8x64xbf16>
    %c0_5 = arith.constant 0 : index
    %c0_6 = arith.constant 0 : index
    %c0_7 = arith.constant 0 : index
    %9 = vector.load %arg3[%c0_5, %c0_6, %c0_7] : memref<4x64x16xbf16, #tpu.memory_space<vmem>>, vector<4x64x16xbf16>
    %c0_8 = arith.constant 0 : index
    %c0_9 = arith.constant 0 : index
    %c0_10 = arith.constant 0 : index
    %10 = vector.load %arg4[%c0_8, %c0_9, %c0_10] : memref<4x64x16xbf16, #tpu.memory_space<vmem>>, vector<4x64x16xbf16>
    %c0_11 = arith.constant 0 : index
    %c0_12 = arith.constant 0 : index
    %c0_13 = arith.constant 0 : index
    %11 = vector.load %arg5[%c0_11, %c0_12, %c0_13] : memref<4x64x16xbf16, #tpu.memory_space<vmem>>, vector<4x64x16xbf16>
    %c0_14 = arith.constant 0 : index
    %c0_15 = arith.constant 0 : index
    %c0_16 = arith.constant 0 : index
    %12 = vector.load %arg6[%c0_14, %c0_15, %c0_16] : memref<4x16x64xbf16, #tpu.memory_space<vmem>>, vector<4x16x64xbf16>
    %c0_17 = arith.constant 0 : index
    %c0_18 = arith.constant 0 : index
    %13 = vector.load %arg7[%c0_17, %c0_18] : memref<1x64xf32, #tpu.memory_space<vmem>>, vector<1x64xf32>
    %c0_19 = arith.constant 0 : index
    %c0_20 = arith.constant 0 : index
    %14 = vector.load %arg8[%c0_19, %c0_20] : memref<1x64xf32, #tpu.memory_space<vmem>>, vector<1x64xf32>
    %15 = arith.truncf %1 : vector<8x64xf32> to vector<8x64xbf16>
    %16 = vector.shape_cast %15 : vector<8x64xbf16> to vector<1x8x64xbf16>
    %17 = vector.shape_cast %16 : vector<1x8x64xbf16> to vector<1x8x64xbf16>
    %18 = vector.broadcast %17 : vector<1x8x64xbf16> to vector<4x8x64xbf16>
    %19 = vector.shape_cast %8 : vector<8x64xbf16> to vector<1x8x64xbf16>
    %20 = vector.shape_cast %19 : vector<1x8x64xbf16> to vector<1x8x64xbf16>
    %21 = vector.broadcast %20 : vector<1x8x64xbf16> to vector<4x8x64xbf16>
    %cst = arith.constant dense<0.000000e+00> : vector<4x8x16xf32>
    %22 = tpu.matmul %18, %9, %cst {dimension_numbers = #tpu.dot_dimension_numbers<[2], [1], [1], [2], [0, 0, 0, 1, 1, 2], [0], [0]>} : vector<4x8x64xbf16>, vector<4x64x16xbf16>, vector<4x8x16xf32> -> vector<4x8x16xf32>
    %23 = arith.truncf %22 : vector<4x8x16xf32> to vector<4x8x16xbf16>
    %cst_21 = arith.constant dense<0.000000e+00> : vector<4x8x16xf32>
    %24 = tpu.matmul %21, %10, %cst_21 {dimension_numbers = #tpu.dot_dimension_numbers<[2], [1], [1], [2], [0, 0, 0, 1, 1, 2], [0], [0]>} : vector<4x8x64xbf16>, vector<4x64x16xbf16>, vector<4x8x16xf32> -> vector<4x8x16xf32>
    %25 = arith.truncf %24 : vector<4x8x16xf32> to vector<4x8x16xbf16>
    %cst_22 = arith.constant dense<0.000000e+00> : vector<4x8x16xf32>
    %26 = tpu.matmul %21, %11, %cst_22 {dimension_numbers = #tpu.dot_dimension_numbers<[2], [1], [1], [2], [0, 0, 0, 1, 1, 2], [0], [0]>} : vector<4x8x64xbf16>, vector<4x64x16xbf16>, vector<4x8x16xf32> -> vector<4x8x16xf32>
    %27 = arith.truncf %26 : vector<4x8x16xf32> to vector<4x8x16xbf16>
    %cst_23 = arith.constant dense<0.000000e+00> : vector<4x8x8xf32>
    %28 = tpu.matmul %23, %25, %cst_23 {dimension_numbers = #tpu.dot_dimension_numbers<[2], [2], [1], [1], [0, 0, 0, 1, 1, 1], [0], [0]>} : vector<4x8x16xbf16>, vector<4x8x16xbf16>, vector<4x8x8xf32> -> vector<4x8x8xf32>
    %29 = vector.shape_cast %7 : vector<8x8xi1> to vector<1x8x8xi1>
    %cst_24 = arith.constant -1.000000e+09 : f32
    %30 = vector.shape_cast %29 : vector<1x8x8xi1> to vector<1x8x8xi1>
    %31 = vector.broadcast %30 : vector<1x8x8xi1> to vector<4x8x8xi1>
    %32 = vector.broadcast %cst_24 : f32 to vector<4x8x8xf32>
    %33 = arith.select %31, %32, %28 : vector<4x8x8xi1>, vector<4x8x8xf32>
    %cst_25 = arith.constant dense<0xFF800000> : vector<4x8xf32>
    %34 = vector.multi_reduction <maximumf>, %33, %cst_25 [2] : vector<4x8x8xf32> to vector<4x8xf32>
    %35 = vector.shape_cast %34 : vector<4x8xf32> to vector<4x8x1xf32>
    %36 = vector.broadcast %35 : vector<4x8x1xf32> to vector<4x8x8xf32>
    %37 = arith.subf %33, %36 : vector<4x8x8xf32>
    %38 = math.exp %37 : vector<4x8x8xf32>
    %cst_26 = arith.constant dense<0.000000e+00> : vector<4x8xf32>
    %39 = vector.multi_reduction <add>, %38, %cst_26 [2] : vector<4x8x8xf32> to vector<4x8xf32>
    %40 = vector.shape_cast %39 : vector<4x8xf32> to vector<4x8x1xf32>
    %41 = vector.broadcast %40 : vector<4x8x1xf32> to vector<4x8x8xf32>
    %42 = arith.divf %38, %41 : vector<4x8x8xf32>
    %43 = arith.truncf %42 : vector<4x8x8xf32> to vector<4x8x8xbf16>
    %cst_27 = arith.constant dense<0.000000e+00> : vector<4x8x16xf32>
    %44 = tpu.matmul %43, %27, %cst_27 {dimension_numbers = #tpu.dot_dimension_numbers<[2], [1], [1], [2], [0, 0, 0, 1, 1, 2], [0], [0]>} : vector<4x8x8xbf16>, vector<4x8x16xbf16>, vector<4x8x16xf32> -> vector<4x8x16xf32>
    %45 = arith.truncf %44 : vector<4x8x16xf32> to vector<4x8x16xbf16>
    %cst_28 = arith.constant dense<0.000000e+00> : vector<4x8x64xf32>
    %46 = tpu.matmul %45, %12, %cst_28 {dimension_numbers = #tpu.dot_dimension_numbers<[2], [1], [1], [2], [0, 0, 0, 1, 1, 2], [0], [0]>} : vector<4x8x16xbf16>, vector<4x16x64xbf16>, vector<4x8x64xf32> -> vector<4x8x64xf32>
    %47 = vector.extract_strided_slice %46 {offsets = [0, 0, 0], sizes = [1, 8, 64], strides = [1, 1, 1]} : vector<4x8x64xf32> to vector<1x8x64xf32>
    %48 = vector.shape_cast %47 : vector<1x8x64xf32> to vector<8x64xf32>
    %49 = vector.extract_strided_slice %46 {offsets = [1, 0, 0], sizes = [1, 8, 64], strides = [1, 1, 1]} : vector<4x8x64xf32> to vector<1x8x64xf32>
    %50 = vector.shape_cast %49 : vector<1x8x64xf32> to vector<8x64xf32>
    %51 = arith.addf %48, %50 : vector<8x64xf32>
    %52 = vector.extract_strided_slice %46 {offsets = [2, 0, 0], sizes = [1, 8, 64], strides = [1, 1, 1]} : vector<4x8x64xf32> to vector<1x8x64xf32>
    %53 = vector.shape_cast %52 : vector<1x8x64xf32> to vector<8x64xf32>
    %54 = arith.addf %51, %53 : vector<8x64xf32>
    %55 = vector.extract_strided_slice %46 {offsets = [3, 0, 0], sizes = [1, 8, 64], strides = [1, 1, 1]} : vector<4x8x64xf32> to vector<1x8x64xf32>
    %56 = vector.shape_cast %55 : vector<1x8x64xf32> to vector<8x64xf32>
    %57 = arith.addf %54, %56 : vector<8x64xf32>
    %58 = arith.addf %57, %1 : vector<8x64xf32>
    %cst_29 = arith.constant dense<0.000000e+00> : vector<8xf32>
    %59 = vector.multi_reduction <add>, %58, %cst_29 [1] : vector<8x64xf32> to vector<8xf32>
    %60 = vector.shape_cast %59 : vector<8xf32> to vector<8x1xf32>
    %cst_30 = arith.constant 6.400000e+01 : f32
    %61 = vector.broadcast %cst_30 : f32 to vector<8x1xf32>
    %62 = arith.divf %60, %61 : vector<8x1xf32>
    %63 = vector.broadcast %62 : vector<8x1xf32> to vector<8x64xf32>
    %64 = arith.subf %58, %63 : vector<8x64xf32>
    %65 = arith.mulf %64, %64 : vector<8x64xf32>
    %cst_31 = arith.constant dense<0.000000e+00> : vector<8xf32>
    %66 = vector.multi_reduction <add>, %65, %cst_31 [1] : vector<8x64xf32> to vector<8xf32>
    %67 = vector.shape_cast %66 : vector<8xf32> to vector<8x1xf32>
    %cst_32 = arith.constant 6.400000e+01 : f32
    %68 = vector.broadcast %cst_32 : f32 to vector<8x1xf32>
    %69 = arith.divf %67, %68 : vector<8x1xf32>
    %70 = vector.broadcast %62 : vector<8x1xf32> to vector<8x64xf32>
    %71 = arith.subf %58, %70 : vector<8x64xf32>
    %cst_33 = arith.constant 9.99999997E-7 : f32
    %72 = vector.broadcast %cst_33 : f32 to vector<8x1xf32>
    %73 = arith.addf %69, %72 : vector<8x1xf32>
    %74 = math.rsqrt %73 : vector<8x1xf32>
    %75 = vector.broadcast %74 : vector<8x1xf32> to vector<8x64xf32>
    %76 = arith.mulf %71, %75 : vector<8x64xf32>
    %77 = vector.broadcast %13 : vector<1x64xf32> to vector<8x64xf32>
    %78 = arith.mulf %76, %77 : vector<8x64xf32>
    %79 = vector.broadcast %14 : vector<1x64xf32> to vector<8x64xf32>
    %80 = arith.addf %78, %79 : vector<8x64xf32>
    %c0_34 = arith.constant 0 : index
    %c0_35 = arith.constant 0 : index
    %81 = vector.load %arg9[%c0_34, %c0_35] : memref<64x128xbf16, #tpu.memory_space<vmem>>, vector<64x128xbf16>
    %c0_36 = arith.constant 0 : index
    %c0_37 = arith.constant 0 : index
    %82 = vector.load %arg10[%c0_36, %c0_37] : memref<1x128xf32, #tpu.memory_space<vmem>>, vector<1x128xf32>
    %c0_38 = arith.constant 0 : index
    %c0_39 = arith.constant 0 : index
    %83 = vector.load %arg11[%c0_38, %c0_39] : memref<128x64xbf16, #tpu.memory_space<vmem>>, vector<128x64xbf16>
    %c0_40 = arith.constant 0 : index
    %c0_41 = arith.constant 0 : index
    %84 = vector.load %arg12[%c0_40, %c0_41] : memref<1x64xf32, #tpu.memory_space<vmem>>, vector<1x64xf32>
    %c0_42 = arith.constant 0 : index
    %c0_43 = arith.constant 0 : index
    %85 = vector.load %arg13[%c0_42, %c0_43] : memref<1x64xf32, #tpu.memory_space<vmem>>, vector<1x64xf32>
    %c0_44 = arith.constant 0 : index
    %c0_45 = arith.constant 0 : index
    %86 = vector.load %arg14[%c0_44, %c0_45] : memref<1x64xf32, #tpu.memory_space<vmem>>, vector<1x64xf32>
    %87 = arith.truncf %80 : vector<8x64xf32> to vector<8x64xbf16>
    %cst_46 = arith.constant dense<0.000000e+00> : vector<8x128xf32>
    %88 = tpu.matmul %87, %81, %cst_46 {dimension_numbers = #tpu.dot_dimension_numbers<[1], [0], [0], [1], [0, 0, 1, 1], [], []>} : vector<8x64xbf16>, vector<64x128xbf16>, vector<8x128xf32> -> vector<8x128xf32>
    %89 = vector.broadcast %82 : vector<1x128xf32> to vector<8x128xf32>
    %90 = arith.addf %88, %89 : vector<8x128xf32>
    %cst_47 = arith.constant 0.000000e+00 : f32
    %91 = vector.broadcast %cst_47 : f32 to vector<8x128xf32>
    %92 = arith.maximumf %90, %91 : vector<8x128xf32>
    %93 = arith.truncf %92 : vector<8x128xf32> to vector<8x128xbf16>
    %cst_48 = arith.constant dense<0.000000e+00> : vector<8x64xf32>
    %94 = tpu.matmul %93, %83, %cst_48 {dimension_numbers = #tpu.dot_dimension_numbers<[1], [0], [0], [1], [0, 0, 1, 1], [], []>} : vector<8x128xbf16>, vector<128x64xbf16>, vector<8x64xf32> -> vector<8x64xf32>
    %95 = vector.broadcast %84 : vector<1x64xf32> to vector<8x64xf32>
    %96 = arith.addf %94, %95 : vector<8x64xf32>
    %97 = arith.addf %96, %80 : vector<8x64xf32>
    %cst_49 = arith.constant dense<0.000000e+00> : vector<8xf32>
    %98 = vector.multi_reduction <add>, %97, %cst_49 [1] : vector<8x64xf32> to vector<8xf32>
    %99 = vector.shape_cast %98 : vector<8xf32> to vector<8x1xf32>
    %cst_50 = arith.constant 6.400000e+01 : f32
    %100 = vector.broadcast %cst_50 : f32 to vector<8x1xf32>
    %101 = arith.divf %99, %100 : vector<8x1xf32>
    %102 = vector.broadcast %101 : vector<8x1xf32> to vector<8x64xf32>
    %103 = arith.subf %97, %102 : vector<8x64xf32>
    %104 = arith.mulf %103, %103 : vector<8x64xf32>
    %cst_51 = arith.constant dense<0.000000e+00> : vector<8xf32>
    %105 = vector.multi_reduction <add>, %104, %cst_51 [1] : vector<8x64xf32> to vector<8xf32>
    %106 = vector.shape_cast %105 : vector<8xf32> to vector<8x1xf32>
    %cst_52 = arith.constant 6.400000e+01 : f32
    %107 = vector.broadcast %cst_52 : f32 to vector<8x1xf32>
    %108 = arith.divf %106, %107 : vector<8x1xf32>
    %109 = vector.broadcast %101 : vector<8x1xf32> to vector<8x64xf32>
    %110 = arith.subf %97, %109 : vector<8x64xf32>
    %cst_53 = arith.constant 9.99999997E-7 : f32
    %111 = vector.broadcast %cst_53 : f32 to vector<8x1xf32>
    %112 = arith.addf %108, %111 : vector<8x1xf32>
    %113 = math.rsqrt %112 : vector<8x1xf32>
    %114 = vector.broadcast %113 : vector<8x1xf32> to vector<8x64xf32>
    %115 = arith.mulf %110, %114 : vector<8x64xf32>
    %116 = vector.broadcast %85 : vector<1x64xf32> to vector<8x64xf32>
    %117 = arith.mulf %115, %116 : vector<8x64xf32>
    %118 = vector.broadcast %86 : vector<1x64xf32> to vector<8x64xf32>
    %119 = arith.addf %117, %118 : vector<8x64xf32>
    %120 = arith.truncf %119 : vector<8x64xf32> to vector<8x64xbf16>
    %c0_54 = arith.constant 0 : index
    %c0_55 = arith.constant 0 : index
    %c0_56 = arith.constant 0 : index
    %121 = vector.load %arg15[%c0_54, %c0_55, %c0_56] : memref<1x8x64xbf16, #tpu.memory_space<vmem>>, vector<1x8x64xbf16>
    %122 = vector.shape_cast %121 : vector<1x8x64xbf16> to vector<8x64xbf16>
    %123 = vector.shape_cast %120 : vector<8x64xbf16> to vector<1x8x64xbf16>
    tpu.vector_store %arg15[%c0_54, %c0_55, %c0_56], %123 {strides = array<i32>} : memref<1x8x64xbf16, #tpu.memory_space<vmem>>, vector<1x8x64xbf16>,
    %c0_57 = arith.constant 0 : index
    %c0_58 = arith.constant 0 : index
    %c0_59 = arith.constant 0 : index
    %c0_60 = arith.constant 0 : index
    %124 = vector.load %arg16[%c0_57, %c0_58, %c0_59, %c0_60] : memref<1x4x8x8xf32, #tpu.memory_space<vmem>>, vector<1x4x8x8xf32>
    %125 = vector.shape_cast %124 : vector<1x4x8x8xf32> to vector<4x8x8xf32>
    %126 = vector.shape_cast %42 : vector<4x8x8xf32> to vector<1x4x8x8xf32>
    tpu.vector_store %arg16[%c0_57, %c0_58, %c0_59, %c0_60], %126 {strides = array<i32>} : memref<1x4x8x8xf32, #tpu.memory_space<vmem>>, vector<1x4x8x8xf32>,
    return
  }
  func.func @transform_0(%arg0: i32) -> (i32, i32, i32) {
    %c0_i32 = arith.constant 0 : i32
    %c0_i32_0 = arith.constant 0 : i32
    %c0_i32_1 = arith.constant 0 : i32
    return %arg0, %c0_i32, %c0_i32_0 : i32, i32, i32
  }
  func.func @transform_1(%arg0: i32) -> (i32, i32, i32) {
    %c0_i32 = arith.constant 0 : i32
    %c0_i32_0 = arith.constant 0 : i32
    %c0_i32_1 = arith.constant 0 : i32
    return %arg0, %c0_i32, %c0_i32_0 : i32, i32, i32
  }
  func.func @transform_2(%arg0: i32) -> (i32, i32, i32) {
    %c0_i32 = arith.constant 0 : i32
    %c0_i32_0 = arith.constant 0 : i32
    %c0_i32_1 = arith.constant 0 : i32
    %c0_i32_2 = arith.constant 0 : i32
    return %c0_i32, %c0_i32_0, %c0_i32_1 : i32, i32, i32
  }
  func.func @transform_3(%arg0: i32) -> (i32, i32, i32) {
    %c0_i32 = arith.constant 0 : i32
    %c0_i32_0 = arith.constant 0 : i32
    %c0_i32_1 = arith.constant 0 : i32
    %c0_i32_2 = arith.constant 0 : i32
    return %c0_i32, %c0_i32_0, %c0_i32_1 : i32, i32, i32
  }
  func.func @transform_4(%arg0: i32) -> (i32, i32, i32) {
    %c0_i32 = arith.constant 0 : i32
    %c0_i32_0 = arith.constant 0 : i32
    %c0_i32_1 = arith.constant 0 : i32
    %c0_i32_2 = arith.constant 0 : i32
    return %c0_i32, %c0_i32_0, %c0_i32_1 : i32, i32, i32
  }
  func.func @transform_5(%arg0: i32) -> (i32, i32, i32) {
    %c0_i32 = arith.constant 0 : i32
    %c0_i32_0 = arith.constant 0 : i32
    %c0_i32_1 = arith.constant 0 : i32
    %c0_i32_2 = arith.constant 0 : i32
    return %c0_i32, %c0_i32_0, %c0_i32_1 : i32, i32, i32
  }
  func.func @transform_6(%arg0: i32) -> (i32, i32) {
    %c0_i32 = arith.constant 0 : i32
    %c0_i32_0 = arith.constant 0 : i32
    %c0_i32_1 = arith.constant 0 : i32
    return %c0_i32, %c0_i32_0 : i32, i32
  }
  func.func @transform_7(%arg0: i32) -> (i32, i32) {
    %c0_i32 = arith.constant 0 : i32
    %c0_i32_0 = arith.constant 0 : i32
    %c0_i32_1 = arith.constant 0 : i32
    return %c0_i32, %c0_i32_0 : i32, i32
  }
  func.func @transform_8(%arg0: i32) -> (i32, i32) {
    %c0_i32 = arith.constant 0 : i32
    %c0_i32_0 = arith.constant 0 : i32
    %c0_i32_1 = arith.constant 0 : i32
    return %c0_i32, %c0_i32_0 : i32, i32
  }
  func.func @transform_9(%arg0: i32) -> (i32, i32) {
    %c0_i32 = arith.constant 0 : i32
    %c0_i32_0 = arith.constant 0 : i32
    %c0_i32_1 = arith.constant 0 : i32
    return %c0_i32, %c0_i32_0 : i32, i32
  }
  func.func @transform_10(%arg0: i32) -> (i32, i32) {
    %c0_i32 = arith.constant 0 : i32
    %c0_i32_0 = arith.constant 0 : i32
    %c0_i32_1 = arith.constant 0 : i32
    return %c0_i32, %c0_i32_0 : i32, i32
  }
  func.func @transform_11(%arg0: i32) -> (i32, i32) {
    %c0_i32 = arith.constant 0 : i32
    %c0_i32_0 = arith.constant 0 : i32
    %c0_i32_1 = arith.constant 0 : i32
    return %c0_i32, %c0_i32_0 : i32, i32
  }
  func.func @transform_12(%arg0: i32) -> (i32, i32) {
    %c0_i32 = arith.constant 0 : i32
    %c0_i32_0 = arith.constant 0 : i32
    %c0_i32_1 = arith.constant 0 : i32
    return %c0_i32, %c0_i32_0 : i32, i32
  }
  func.func @transform_13(%arg0: i32) -> (i32, i32) {
    %c0_i32 = arith.constant 0 : i32
    %c0_i32_0 = arith.constant 0 : i32
    %c0_i32_1 = arith.constant 0 : i32
    return %c0_i32, %c0_i32_0 : i32, i32
  }
  func.func @transform_14(%arg0: i32) -> (i32, i32, i32) {
    %c0_i32 = arith.constant 0 : i32
    %c0_i32_0 = arith.constant 0 : i32
    %c0_i32_1 = arith.constant 0 : i32
    return %arg0, %c0_i32, %c0_i32_0 : i32, i32, i32
  }
  func.func @transform_15(%arg0: i32) -> (i32, i32, i32, i32) {
    %c0_i32 = arith.constant 0 : i32
    %c0_i32_0 = arith.constant 0 : i32
    %c0_i32_1 = arith.constant 0 : i32
    %c0_i32_2 = arith.constant 0 : i32
    return %arg0, %c0_i32, %c0_i32_0, %c0_i32_1 : i32, i32, i32, i32
  }
}

module attributes {stable_mosaic.version = 11 : i64} {
  func.func @_proj_softmax_kernel(%arg0: i32, %arg1: memref<8x64xf32, #tpu.memory_space<vmem>>, %arg2: memref<64x64xbf16, #tpu.memory_space<vmem>>, %arg3: memref<8x64xf32, #tpu.memory_space<vmem>>) attributes {dimension_semantics = [#tpu.dimension_semantics<parallel>], iteration_bounds = array<i64: 2>, scalar_prefetch = 0 : i64, scratch_operands = 0 : i64, tpu.core_type = #tpu.core_type<tc>, window_params = [{transform_indices = @transform_0, window_bounds = array<i64: 8, 64>}, {pipeline_mode = #tpu.pipeline_mode<synchronous>, transform_indices = @transform_1, window_bounds = array<i64: 64, 64>}, {transform_indices = @transform_2, window_bounds = array<i64: 8, 64>}]} {
    %c0 = arith.constant 0 : index
    %c0_0 = arith.constant 0 : index
    %0 = vector.load %arg1[%c0, %c0_0] : memref<8x64xf32, #tpu.memory_space<vmem>>, vector<8x64xf32>
    %1 = arith.truncf %0 : vector<8x64xf32> to vector<8x64xbf16>
    %c0_1 = arith.constant 0 : index
    %c0_2 = arith.constant 0 : index
    %2 = vector.load %arg2[%c0_1, %c0_2] : memref<64x64xbf16, #tpu.memory_space<vmem>>, vector<64x64xbf16>
    %cst = arith.constant dense<0.000000e+00> : vector<8x64xf32>
    %3 = tpu.matmul %1, %2, %cst {dimension_numbers = #tpu.dot_dimension_numbers<[1], [0], [0], [1], [0, 0, 1, 1], [], []>} : vector<8x64xbf16>, vector<64x64xbf16>, vector<8x64xf32> -> vector<8x64xf32>
    %cst_3 = arith.constant dense<0xFF800000> : vector<8xf32>
    %4 = vector.multi_reduction <maximumf>, %3, %cst_3 [1] : vector<8x64xf32> to vector<8xf32>
    %5 = vector.shape_cast %4 : vector<8xf32> to vector<8x1xf32>
    %6 = vector.broadcast %5 : vector<8x1xf32> to vector<8x64xf32>
    %7 = arith.subf %3, %6 : vector<8x64xf32>
    %8 = math.exp %7 : vector<8x64xf32>
    %cst_4 = arith.constant dense<0.000000e+00> : vector<8xf32>
    %9 = vector.multi_reduction <add>, %8, %cst_4 [1] : vector<8x64xf32> to vector<8xf32>
    %10 = vector.shape_cast %9 : vector<8xf32> to vector<8x1xf32>
    %11 = vector.broadcast %10 : vector<8x1xf32> to vector<8x64xf32>
    %12 = arith.divf %8, %11 : vector<8x64xf32>
    %c0_5 = arith.constant 0 : index
    %c0_6 = arith.constant 0 : index
    %13 = vector.load %arg3[%c0_5, %c0_6] : memref<8x64xf32, #tpu.memory_space<vmem>>, vector<8x64xf32>
    tpu.vector_store %arg3[%c0_5, %c0_6], %12 {strides = array<i32>} : memref<8x64xf32, #tpu.memory_space<vmem>>, vector<8x64xf32>,
    return
  }
  func.func @transform_0(%arg0: i32) -> (i32, i32) {
    %c0_i32 = arith.constant 0 : i32
    %c0_i32_0 = arith.constant 0 : i32
    return %arg0, %c0_i32 : i32, i32
  }
  func.func @transform_1(%arg0: i32) -> (i32, i32) {
    %c0_i32 = arith.constant 0 : i32
    %c0_i32_0 = arith.constant 0 : i32
    %c0_i32_1 = arith.constant 0 : i32
    return %c0_i32, %c0_i32_0 : i32, i32
  }
  func.func @transform_2(%arg0: i32) -> (i32, i32) {
    %c0_i32 = arith.constant 0 : i32
    %c0_i32_0 = arith.constant 0 : i32
    return %arg0, %c0_i32 : i32, i32
  }
}

module attributes {stable_mosaic.version = 11 : i64} {
  func.func @_decoder_layer_kernel(%arg0: i32, %arg1: memref<1x8x64xf32, #tpu.memory_space<vmem>>, %arg2: memref<1x8x64xbf16, #tpu.memory_space<vmem>>, %arg3: memref<1x1x8xi32, #tpu.memory_space<vmem>>, %arg4: memref<1x1x8xi32, #tpu.memory_space<vmem>>, %arg5: memref<4x64x16xbf16, #tpu.memory_space<vmem>>, %arg6: memref<4x64x16xbf16, #tpu.memory_space<vmem>>, %arg7: memref<4x64x16xbf16, #tpu.memory_space<vmem>>, %arg8: memref<4x16x64xbf16, #tpu.memory_space<vmem>>, %arg9: memref<1x64xf32, #tpu.memory_space<vmem>>, %arg10: memref<1x64xf32, #tpu.memory_space<vmem>>, %arg11: memref<4x64x16xbf16, #tpu.memory_space<vmem>>, %arg12: memref<4x64x16xbf16, #tpu.memory_space<vmem>>, %arg13: memref<4x64x16xbf16, #tpu.memory_space<vmem>>, %arg14: memref<4x16x64xbf16, #tpu.memory_space<vmem>>, %arg15: memref<1x64xf32, #tpu.memory_space<vmem>>, %arg16: memref<1x64xf32, #tpu.memory_space<vmem>>, %arg17: memref<64x128xbf16, #tpu.memory_space<vmem>>, %arg18: memref<1x128xf32, #tpu.memory_space<vmem>>, %arg19: memref<128x64xbf16, #tpu.memory_space<vmem>>, %arg20: memref<1x64xf32, #tpu.memory_space<vmem>>, %arg21: memref<1x64xf32, #tpu.memory_space<vmem>>, %arg22: memref<1x64xf32, #tpu.memory_space<vmem>>, %arg23: memref<1x8x64xf32, #tpu.memory_space<vmem>>, %arg24: memref<1x4x8x8xf32, #tpu.memory_space<vmem>>, %arg25: memref<1x4x8x8xf32, #tpu.memory_space<vmem>>) attributes {dimension_semantics = [#tpu.dimension_semantics<parallel>], iteration_bounds = array<i64: 2>, scalar_prefetch = 0 : i64, scratch_operands = 0 : i64, tpu.core_type = #tpu.core_type<tc>, window_params = [{transform_indices = @transform_0, window_bounds = array<i64: 1, 8, 64>}, {transform_indices = @transform_1, window_bounds = array<i64: 1, 8, 64>}, {transform_indices = @transform_2, window_bounds = array<i64: 1, 1, 8>}, {transform_indices = @transform_3, window_bounds = array<i64: 1, 1, 8>}, {pipeline_mode = #tpu.pipeline_mode<synchronous>, transform_indices = @transform_4, window_bounds = array<i64: 4, 64, 16>}, {pipeline_mode = #tpu.pipeline_mode<synchronous>, transform_indices = @transform_5, window_bounds = array<i64: 4, 64, 16>}, {pipeline_mode = #tpu.pipeline_mode<synchronous>, transform_indices = @transform_6, window_bounds = array<i64: 4, 64, 16>}, {pipeline_mode = #tpu.pipeline_mode<synchronous>, transform_indices = @transform_7, window_bounds = array<i64: 4, 16, 64>}, {pipeline_mode = #tpu.pipeline_mode<synchronous>, transform_indices = @transform_8, window_bounds = array<i64: 1, 64>}, {pipeline_mode = #tpu.pipeline_mode<synchronous>, transform_indices = @transform_9, window_bounds = array<i64: 1, 64>}, {pipeline_mode = #tpu.pipeline_mode<synchronous>, transform_indices = @transform_10, window_bounds = array<i64: 4, 64, 16>}, {pipeline_mode = #tpu.pipeline_mode<synchronous>, transform_indices = @transform_11, window_bounds = array<i64: 4, 64, 16>}, {pipeline_mode = #tpu.pipeline_mode<synchronous>, transform_indices = @transform_12, window_bounds = array<i64: 4, 64, 16>}, {pipeline_mode = #tpu.pipeline_mode<synchronous>, transform_indices = @transform_13, window_bounds = array<i64: 4, 16, 64>}, {pipeline_mode = #tpu.pipeline_mode<synchronous>, transform_indices = @transform_14, window_bounds = array<i64: 1, 64>}, {pipeline_mode = #tpu.pipeline_mode<synchronous>, transform_indices = @transform_15, window_bounds = array<i64: 1, 64>}, {pipeline_mode = #tpu.pipeline_mode<synchronous>, transform_indices = @transform_16, window_bounds = array<i64: 64, 128>}, {pipeline_mode = #tpu.pipeline_mode<synchronous>, transform_indices = @transform_17, window_bounds = array<i64: 1, 128>}, {pipeline_mode = #tpu.pipeline_mode<synchronous>, transform_indices = @transform_18, window_bounds = array<i64: 128, 64>}, {pipeline_mode = #tpu.pipeline_mode<synchronous>, transform_indices = @transform_19, window_bounds = array<i64: 1, 64>}, {pipeline_mode = #tpu.pipeline_mode<synchronous>, transform_indices = @transform_20, window_bounds = array<i64: 1, 64>}, {pipeline_mode = #tpu.pipeline_mode<synchronous>, transform_indices = @transform_21, window_bounds = array<i64: 1, 64>}, {transform_indices = @transform_22, window_bounds = array<i64: 1, 8, 64>}, {transform_indices = @transform_23, window_bounds = array<i64: 1, 4, 8, 8>}, {transform_indices = @transform_24, window_bounds = array<i64: 1, 4, 8, 8>}]} {
    %c0 = arith.constant 0 : index
    %c0_0 = arith.constant 0 : index
    %c0_1 = arith.constant 0 : index
    %0 = vector.load %arg1[%c0, %c0_0, %c0_1] : memref<1x8x64xf32, #tpu.memory_space<vmem>>, vector<1x8x64xf32>
    %1 = vector.shape_cast %0 : vector<1x8x64xf32> to vector<8x64xf32>
    %c0_2 = arith.constant 0 : index
    %c0_3 = arith.constant 0 : index
    %c0_4 = arith.constant 0 : index
    %2 = vector.load %arg2[%c0_2, %c0_3, %c0_4] : memref<1x8x64xbf16, #tpu.memory_space<vmem>>, vector<1x8x64xbf16>
    %3 = vector.shape_cast %2 : vector<1x8x64xbf16> to vector<8x64xbf16>
    %4 = tpu.iota {dimensions = array<i32: 0>} : vector<8x8xi32>
    %5 = tpu.iota {dimensions = array<i32: 1>} : vector<8x8xi32>
    %c0_5 = arith.constant 0 : index
    %c0_6 = arith.constant 0 : index
    %c0_7 = arith.constant 0 : index
    %6 = vector.load %arg3[%c0_5, %c0_6, %c0_7] : memref<1x1x8xi32, #tpu.memory_space<vmem>>, vector<1x1x8xi32>
    %7 = vector.shape_cast %6 : vector<1x1x8xi32> to vector<1x8xi32>
    %c0_i32 = arith.constant 0 : i32
    %8 = vector.broadcast %c0_i32 : i32 to vector<1x8xi32>
    %9 = arith.cmpi ne, %7, %8 : vector<1x8xi32>
    %10 = arith.cmpi sgt, %5, %4 : vector<8x8xi32>
    %11 = vector.broadcast %9 : vector<1x8xi1> to vector<8x8xi1>
    %12 = arith.ori %11, %10 : vector<8x8xi1>
    %c0_8 = arith.constant 0 : index
    %c0_9 = arith.constant 0 : index
    %c0_10 = arith.constant 0 : index
    %13 = vector.load %arg4[%c0_8, %c0_9, %c0_10] : memref<1x1x8xi32, #tpu.memory_space<vmem>>, vector<1x1x8xi32>
    %14 = vector.shape_cast %13 : vector<1x1x8xi32> to vector<1x8xi32>
    %c0_i32_11 = arith.constant 0 : i32
    %15 = vector.broadcast %c0_i32_11 : i32 to vector<1x8xi32>
    %16 = arith.cmpi ne, %14, %15 : vector<1x8xi32>
    %17 = vector.shape_cast %16 : vector<1x8xi1> to vector<1x8xi1>
    %18 = vector.broadcast %17 : vector<1x8xi1> to vector<8x8xi1>
    %19 = arith.truncf %1 : vector<8x64xf32> to vector<8x64xbf16>
    %c0_12 = arith.constant 0 : index
    %c0_13 = arith.constant 0 : index
    %c0_14 = arith.constant 0 : index
    %20 = vector.load %arg5[%c0_12, %c0_13, %c0_14] : memref<4x64x16xbf16, #tpu.memory_space<vmem>>, vector<4x64x16xbf16>
    %c0_15 = arith.constant 0 : index
    %c0_16 = arith.constant 0 : index
    %c0_17 = arith.constant 0 : index
    %21 = vector.load %arg6[%c0_15, %c0_16, %c0_17] : memref<4x64x16xbf16, #tpu.memory_space<vmem>>, vector<4x64x16xbf16>
    %c0_18 = arith.constant 0 : index
    %c0_19 = arith.constant 0 : index
    %c0_20 = arith.constant 0 : index
    %22 = vector.load %arg7[%c0_18, %c0_19, %c0_20] : memref<4x64x16xbf16, #tpu.memory_space<vmem>>, vector<4x64x16xbf16>
    %c0_21 = arith.constant 0 : index
    %c0_22 = arith.constant 0 : index
    %c0_23 = arith.constant 0 : index
    %23 = vector.load %arg8[%c0_21, %c0_22, %c0_23] : memref<4x16x64xbf16, #tpu.memory_space<vmem>>, vector<4x16x64xbf16>
    %c0_24 = arith.constant 0 : index
    %c0_25 = arith.constant 0 : index
    %24 = vector.load %arg9[%c0_24, %c0_25] : memref<1x64xf32, #tpu.memory_space<vmem>>, vector<1x64xf32>
    %c0_26 = arith.constant 0 : index
    %c0_27 = arith.constant 0 : index
    %25 = vector.load %arg10[%c0_26, %c0_27] : memref<1x64xf32, #tpu.memory_space<vmem>>, vector<1x64xf32>
    %26 = arith.truncf %1 : vector<8x64xf32> to vector<8x64xbf16>
    %27 = vector.shape_cast %26 : vector<8x64xbf16> to vector<1x8x64xbf16>
    %28 = vector.shape_cast %27 : vector<1x8x64xbf16> to vector<1x8x64xbf16>
    %29 = vector.broadcast %28 : vector<1x8x64xbf16> to vector<4x8x64xbf16>
    %30 = vector.shape_cast %19 : vector<8x64xbf16> to vector<1x8x64xbf16>
    %31 = vector.shape_cast %30 : vector<1x8x64xbf16> to vector<1x8x64xbf16>
    %32 = vector.broadcast %31 : vector<1x8x64xbf16> to vector<4x8x64xbf16>
    %cst = arith.constant dense<0.000000e+00> : vector<4x8x16xf32>
    %33 = tpu.matmul %29, %20, %cst {dimension_numbers = #tpu.dot_dimension_numbers<[2], [1], [1], [2], [0, 0, 0, 1, 1, 2], [0], [0]>} : vector<4x8x64xbf16>, vector<4x64x16xbf16>, vector<4x8x16xf32> -> vector<4x8x16xf32>
    %34 = arith.truncf %33 : vector<4x8x16xf32> to vector<4x8x16xbf16>
    %cst_28 = arith.constant dense<0.000000e+00> : vector<4x8x16xf32>
    %35 = tpu.matmul %32, %21, %cst_28 {dimension_numbers = #tpu.dot_dimension_numbers<[2], [1], [1], [2], [0, 0, 0, 1, 1, 2], [0], [0]>} : vector<4x8x64xbf16>, vector<4x64x16xbf16>, vector<4x8x16xf32> -> vector<4x8x16xf32>
    %36 = arith.truncf %35 : vector<4x8x16xf32> to vector<4x8x16xbf16>
    %cst_29 = arith.constant dense<0.000000e+00> : vector<4x8x16xf32>
    %37 = tpu.matmul %32, %22, %cst_29 {dimension_numbers = #tpu.dot_dimension_numbers<[2], [1], [1], [2], [0, 0, 0, 1, 1, 2], [0], [0]>} : vector<4x8x64xbf16>, vector<4x64x16xbf16>, vector<4x8x16xf32> -> vector<4x8x16xf32>
    %38 = arith.truncf %37 : vector<4x8x16xf32> to vector<4x8x16xbf16>
    %cst_30 = arith.constant dense<0.000000e+00> : vector<4x8x8xf32>
    %39 = tpu.matmul %34, %36, %cst_30 {dimension_numbers = #tpu.dot_dimension_numbers<[2], [2], [1], [1], [0, 0, 0, 1, 1, 1], [0], [0]>} : vector<4x8x16xbf16>, vector<4x8x16xbf16>, vector<4x8x8xf32> -> vector<4x8x8xf32>
    %40 = vector.shape_cast %12 : vector<8x8xi1> to vector<1x8x8xi1>
    %cst_31 = arith.constant -1.000000e+09 : f32
    %41 = vector.shape_cast %40 : vector<1x8x8xi1> to vector<1x8x8xi1>
    %42 = vector.broadcast %41 : vector<1x8x8xi1> to vector<4x8x8xi1>
    %43 = vector.broadcast %cst_31 : f32 to vector<4x8x8xf32>
    %44 = arith.select %42, %43, %39 : vector<4x8x8xi1>, vector<4x8x8xf32>
    %cst_32 = arith.constant dense<0xFF800000> : vector<4x8xf32>
    %45 = vector.multi_reduction <maximumf>, %44, %cst_32 [2] : vector<4x8x8xf32> to vector<4x8xf32>
    %46 = vector.shape_cast %45 : vector<4x8xf32> to vector<4x8x1xf32>
    %47 = vector.broadcast %46 : vector<4x8x1xf32> to vector<4x8x8xf32>
    %48 = arith.subf %44, %47 : vector<4x8x8xf32>
    %49 = math.exp %48 : vector<4x8x8xf32>
    %cst_33 = arith.constant dense<0.000000e+00> : vector<4x8xf32>
    %50 = vector.multi_reduction <add>, %49, %cst_33 [2] : vector<4x8x8xf32> to vector<4x8xf32>
    %51 = vector.shape_cast %50 : vector<4x8xf32> to vector<4x8x1xf32>
    %52 = vector.broadcast %51 : vector<4x8x1xf32> to vector<4x8x8xf32>
    %53 = arith.divf %49, %52 : vector<4x8x8xf32>
    %54 = arith.truncf %53 : vector<4x8x8xf32> to vector<4x8x8xbf16>
    %cst_34 = arith.constant dense<0.000000e+00> : vector<4x8x16xf32>
    %55 = tpu.matmul %54, %38, %cst_34 {dimension_numbers = #tpu.dot_dimension_numbers<[2], [1], [1], [2], [0, 0, 0, 1, 1, 2], [0], [0]>} : vector<4x8x8xbf16>, vector<4x8x16xbf16>, vector<4x8x16xf32> -> vector<4x8x16xf32>
    %56 = arith.truncf %55 : vector<4x8x16xf32> to vector<4x8x16xbf16>
    %cst_35 = arith.constant dense<0.000000e+00> : vector<4x8x64xf32>
    %57 = tpu.matmul %56, %23, %cst_35 {dimension_numbers = #tpu.dot_dimension_numbers<[2], [1], [1], [2], [0, 0, 0, 1, 1, 2], [0], [0]>} : vector<4x8x16xbf16>, vector<4x16x64xbf16>, vector<4x8x64xf32> -> vector<4x8x64xf32>
    %58 = vector.extract_strided_slice %57 {offsets = [0, 0, 0], sizes = [1, 8, 64], strides = [1, 1, 1]} : vector<4x8x64xf32> to vector<1x8x64xf32>
    %59 = vector.shape_cast %58 : vector<1x8x64xf32> to vector<8x64xf32>
    %60 = vector.extract_strided_slice %57 {offsets = [1, 0, 0], sizes = [1, 8, 64], strides = [1, 1, 1]} : vector<4x8x64xf32> to vector<1x8x64xf32>
    %61 = vector.shape_cast %60 : vector<1x8x64xf32> to vector<8x64xf32>
    %62 = arith.addf %59, %61 : vector<8x64xf32>
    %63 = vector.extract_strided_slice %57 {offsets = [2, 0, 0], sizes = [1, 8, 64], strides = [1, 1, 1]} : vector<4x8x64xf32> to vector<1x8x64xf32>
    %64 = vector.shape_cast %63 : vector<1x8x64xf32> to vector<8x64xf32>
    %65 = arith.addf %62, %64 : vector<8x64xf32>
    %66 = vector.extract_strided_slice %57 {offsets = [3, 0, 0], sizes = [1, 8, 64], strides = [1, 1, 1]} : vector<4x8x64xf32> to vector<1x8x64xf32>
    %67 = vector.shape_cast %66 : vector<1x8x64xf32> to vector<8x64xf32>
    %68 = arith.addf %65, %67 : vector<8x64xf32>
    %69 = arith.addf %68, %1 : vector<8x64xf32>
    %cst_36 = arith.constant dense<0.000000e+00> : vector<8xf32>
    %70 = vector.multi_reduction <add>, %69, %cst_36 [1] : vector<8x64xf32> to vector<8xf32>
    %71 = vector.shape_cast %70 : vector<8xf32> to vector<8x1xf32>
    %cst_37 = arith.constant 6.400000e+01 : f32
    %72 = vector.broadcast %cst_37 : f32 to vector<8x1xf32>
    %73 = arith.divf %71, %72 : vector<8x1xf32>
    %74 = vector.broadcast %73 : vector<8x1xf32> to vector<8x64xf32>
    %75 = arith.subf %69, %74 : vector<8x64xf32>
    %76 = arith.mulf %75, %75 : vector<8x64xf32>
    %cst_38 = arith.constant dense<0.000000e+00> : vector<8xf32>
    %77 = vector.multi_reduction <add>, %76, %cst_38 [1] : vector<8x64xf32> to vector<8xf32>
    %78 = vector.shape_cast %77 : vector<8xf32> to vector<8x1xf32>
    %cst_39 = arith.constant 6.400000e+01 : f32
    %79 = vector.broadcast %cst_39 : f32 to vector<8x1xf32>
    %80 = arith.divf %78, %79 : vector<8x1xf32>
    %81 = vector.broadcast %73 : vector<8x1xf32> to vector<8x64xf32>
    %82 = arith.subf %69, %81 : vector<8x64xf32>
    %cst_40 = arith.constant 9.99999997E-7 : f32
    %83 = vector.broadcast %cst_40 : f32 to vector<8x1xf32>
    %84 = arith.addf %80, %83 : vector<8x1xf32>
    %85 = math.rsqrt %84 : vector<8x1xf32>
    %86 = vector.broadcast %85 : vector<8x1xf32> to vector<8x64xf32>
    %87 = arith.mulf %82, %86 : vector<8x64xf32>
    %88 = vector.broadcast %24 : vector<1x64xf32> to vector<8x64xf32>
    %89 = arith.mulf %87, %88 : vector<8x64xf32>
    %90 = vector.broadcast %25 : vector<1x64xf32> to vector<8x64xf32>
    %91 = arith.addf %89, %90 : vector<8x64xf32>
    %c0_41 = arith.constant 0 : index
    %c0_42 = arith.constant 0 : index
    %c0_43 = arith.constant 0 : index
    %92 = vector.load %arg11[%c0_41, %c0_42, %c0_43] : memref<4x64x16xbf16, #tpu.memory_space<vmem>>, vector<4x64x16xbf16>
    %c0_44 = arith.constant 0 : index
    %c0_45 = arith.constant 0 : index
    %c0_46 = arith.constant 0 : index
    %93 = vector.load %arg12[%c0_44, %c0_45, %c0_46] : memref<4x64x16xbf16, #tpu.memory_space<vmem>>, vector<4x64x16xbf16>
    %c0_47 = arith.constant 0 : index
    %c0_48 = arith.constant 0 : index
    %c0_49 = arith.constant 0 : index
    %94 = vector.load %arg13[%c0_47, %c0_48, %c0_49] : memref<4x64x16xbf16, #tpu.memory_space<vmem>>, vector<4x64x16xbf16>
    %c0_50 = arith.constant 0 : index
    %c0_51 = arith.constant 0 : index
    %c0_52 = arith.constant 0 : index
    %95 = vector.load %arg14[%c0_50, %c0_51, %c0_52] : memref<4x16x64xbf16, #tpu.memory_space<vmem>>, vector<4x16x64xbf16>
    %c0_53 = arith.constant 0 : index
    %c0_54 = arith.constant 0 : index
    %96 = vector.load %arg15[%c0_53, %c0_54] : memref<1x64xf32, #tpu.memory_space<vmem>>, vector<1x64xf32>
    %c0_55 = arith.constant 0 : index
    %c0_56 = arith.constant 0 : index
    %97 = vector.load %arg16[%c0_55, %c0_56] : memref<1x64xf32, #tpu.memory_space<vmem>>, vector<1x64xf32>
    %98 = arith.truncf %91 : vector<8x64xf32> to vector<8x64xbf16>
    %99 = vector.shape_cast %98 : vector<8x64xbf16> to vector<1x8x64xbf16>
    %100 = vector.shape_cast %99 : vector<1x8x64xbf16> to vector<1x8x64xbf16>
    %101 = vector.broadcast %100 : vector<1x8x64xbf16> to vector<4x8x64xbf16>
    %102 = vector.shape_cast %3 : vector<8x64xbf16> to vector<1x8x64xbf16>
    %103 = vector.shape_cast %102 : vector<1x8x64xbf16> to vector<1x8x64xbf16>
    %104 = vector.broadcast %103 : vector<1x8x64xbf16> to vector<4x8x64xbf16>
    %cst_57 = arith.constant dense<0.000000e+00> : vector<4x8x16xf32>
    %105 = tpu.matmul %101, %92, %cst_57 {dimension_numbers = #tpu.dot_dimension_numbers<[2], [1], [1], [2], [0, 0, 0, 1, 1, 2], [0], [0]>} : vector<4x8x64xbf16>, vector<4x64x16xbf16>, vector<4x8x16xf32> -> vector<4x8x16xf32>
    %106 = arith.truncf %105 : vector<4x8x16xf32> to vector<4x8x16xbf16>
    %cst_58 = arith.constant dense<0.000000e+00> : vector<4x8x16xf32>
    %107 = tpu.matmul %104, %93, %cst_58 {dimension_numbers = #tpu.dot_dimension_numbers<[2], [1], [1], [2], [0, 0, 0, 1, 1, 2], [0], [0]>} : vector<4x8x64xbf16>, vector<4x64x16xbf16>, vector<4x8x16xf32> -> vector<4x8x16xf32>
    %108 = arith.truncf %107 : vector<4x8x16xf32> to vector<4x8x16xbf16>
    %cst_59 = arith.constant dense<0.000000e+00> : vector<4x8x16xf32>
    %109 = tpu.matmul %104, %94, %cst_59 {dimension_numbers = #tpu.dot_dimension_numbers<[2], [1], [1], [2], [0, 0, 0, 1, 1, 2], [0], [0]>} : vector<4x8x64xbf16>, vector<4x64x16xbf16>, vector<4x8x16xf32> -> vector<4x8x16xf32>
    %110 = arith.truncf %109 : vector<4x8x16xf32> to vector<4x8x16xbf16>
    %cst_60 = arith.constant dense<0.000000e+00> : vector<4x8x8xf32>
    %111 = tpu.matmul %106, %108, %cst_60 {dimension_numbers = #tpu.dot_dimension_numbers<[2], [2], [1], [1], [0, 0, 0, 1, 1, 1], [0], [0]>} : vector<4x8x16xbf16>, vector<4x8x16xbf16>, vector<4x8x8xf32> -> vector<4x8x8xf32>
    %112 = vector.shape_cast %18 : vector<8x8xi1> to vector<1x8x8xi1>
    %cst_61 = arith.constant -1.000000e+09 : f32
    %113 = vector.shape_cast %112 : vector<1x8x8xi1> to vector<1x8x8xi1>
    %114 = vector.broadcast %113 : vector<1x8x8xi1> to vector<4x8x8xi1>
    %115 = vector.broadcast %cst_61 : f32 to vector<4x8x8xf32>
    %116 = arith.select %114, %115, %111 : vector<4x8x8xi1>, vector<4x8x8xf32>
    %cst_62 = arith.constant dense<0xFF800000> : vector<4x8xf32>
    %117 = vector.multi_reduction <maximumf>, %116, %cst_62 [2] : vector<4x8x8xf32> to vector<4x8xf32>
    %118 = vector.shape_cast %117 : vector<4x8xf32> to vector<4x8x1xf32>
    %119 = vector.broadcast %118 : vector<4x8x1xf32> to vector<4x8x8xf32>
    %120 = arith.subf %116, %119 : vector<4x8x8xf32>
    %121 = math.exp %120 : vector<4x8x8xf32>
    %cst_63 = arith.constant dense<0.000000e+00> : vector<4x8xf32>
    %122 = vector.multi_reduction <add>, %121, %cst_63 [2] : vector<4x8x8xf32> to vector<4x8xf32>
    %123 = vector.shape_cast %122 : vector<4x8xf32> to vector<4x8x1xf32>
    %124 = vector.broadcast %123 : vector<4x8x1xf32> to vector<4x8x8xf32>
    %125 = arith.divf %121, %124 : vector<4x8x8xf32>
    %126 = arith.truncf %125 : vector<4x8x8xf32> to vector<4x8x8xbf16>
    %cst_64 = arith.constant dense<0.000000e+00> : vector<4x8x16xf32>
    %127 = tpu.matmul %126, %110, %cst_64 {dimension_numbers = #tpu.dot_dimension_numbers<[2], [1], [1], [2], [0, 0, 0, 1, 1, 2], [0], [0]>} : vector<4x8x8xbf16>, vector<4x8x16xbf16>, vector<4x8x16xf32> -> vector<4x8x16xf32>
    %128 = arith.truncf %127 : vector<4x8x16xf32> to vector<4x8x16xbf16>
    %cst_65 = arith.constant dense<0.000000e+00> : vector<4x8x64xf32>
    %129 = tpu.matmul %128, %95, %cst_65 {dimension_numbers = #tpu.dot_dimension_numbers<[2], [1], [1], [2], [0, 0, 0, 1, 1, 2], [0], [0]>} : vector<4x8x16xbf16>, vector<4x16x64xbf16>, vector<4x8x64xf32> -> vector<4x8x64xf32>
    %130 = vector.extract_strided_slice %129 {offsets = [0, 0, 0], sizes = [1, 8, 64], strides = [1, 1, 1]} : vector<4x8x64xf32> to vector<1x8x64xf32>
    %131 = vector.shape_cast %130 : vector<1x8x64xf32> to vector<8x64xf32>
    %132 = vector.extract_strided_slice %129 {offsets = [1, 0, 0], sizes = [1, 8, 64], strides = [1, 1, 1]} : vector<4x8x64xf32> to vector<1x8x64xf32>
    %133 = vector.shape_cast %132 : vector<1x8x64xf32> to vector<8x64xf32>
    %134 = arith.addf %131, %133 : vector<8x64xf32>
    %135 = vector.extract_strided_slice %129 {offsets = [2, 0, 0], sizes = [1, 8, 64], strides = [1, 1, 1]} : vector<4x8x64xf32> to vector<1x8x64xf32>
    %136 = vector.shape_cast %135 : vector<1x8x64xf32> to vector<8x64xf32>
    %137 = arith.addf %134, %136 : vector<8x64xf32>
    %138 = vector.extract_strided_slice %129 {offsets = [3, 0, 0], sizes = [1, 8, 64], strides = [1, 1, 1]} : vector<4x8x64xf32> to vector<1x8x64xf32>
    %139 = vector.shape_cast %138 : vector<1x8x64xf32> to vector<8x64xf32>
    %140 = arith.addf %137, %139 : vector<8x64xf32>
    %141 = arith.addf %140, %91 : vector<8x64xf32>
    %cst_66 = arith.constant dense<0.000000e+00> : vector<8xf32>
    %142 = vector.multi_reduction <add>, %141, %cst_66 [1] : vector<8x64xf32> to vector<8xf32>
    %143 = vector.shape_cast %142 : vector<8xf32> to vector<8x1xf32>
    %cst_67 = arith.constant 6.400000e+01 : f32
    %144 = vector.broadcast %cst_67 : f32 to vector<8x1xf32>
    %145 = arith.divf %143, %144 : vector<8x1xf32>
    %146 = vector.broadcast %145 : vector<8x1xf32> to vector<8x64xf32>
    %147 = arith.subf %141, %146 : vector<8x64xf32>
    %148 = arith.mulf %147, %147 : vector<8x64xf32>
    %cst_68 = arith.constant dense<0.000000e+00> : vector<8xf32>
    %149 = vector.multi_reduction <add>, %148, %cst_68 [1] : vector<8x64xf32> to vector<8xf32>
    %150 = vector.shape_cast %149 : vector<8xf32> to vector<8x1xf32>
    %cst_69 = arith.constant 6.400000e+01 : f32
    %151 = vector.broadcast %cst_69 : f32 to vector<8x1xf32>
    %152 = arith.divf %150, %151 : vector<8x1xf32>
    %153 = vector.broadcast %145 : vector<8x1xf32> to vector<8x64xf32>
    %154 = arith.subf %141, %153 : vector<8x64xf32>
    %cst_70 = arith.constant 9.99999997E-7 : f32
    %155 = vector.broadcast %cst_70 : f32 to vector<8x1xf32>
    %156 = arith.addf %152, %155 : vector<8x1xf32>
    %157 = math.rsqrt %156 : vector<8x1xf32>
    %158 = vector.broadcast %157 : vector<8x1xf32> to vector<8x64xf32>
    %159 = arith.mulf %154, %158 : vector<8x64xf32>
    %160 = vector.broadcast %96 : vector<1x64xf32> to vector<8x64xf32>
    %161 = arith.mulf %159, %160 : vector<8x64xf32>
    %162 = vector.broadcast %97 : vector<1x64xf32> to vector<8x64xf32>
    %163 = arith.addf %161, %162 : vector<8x64xf32>
    %c0_71 = arith.constant 0 : index
    %c0_72 = arith.constant 0 : index
    %164 = vector.load %arg17[%c0_71, %c0_72] : memref<64x128xbf16, #tpu.memory_space<vmem>>, vector<64x128xbf16>
    %c0_73 = arith.constant 0 : index
    %c0_74 = arith.constant 0 : index
    %165 = vector.load %arg18[%c0_73, %c0_74] : memref<1x128xf32, #tpu.memory_space<vmem>>, vector<1x128xf32>
    %c0_75 = arith.constant 0 : index
    %c0_76 = arith.constant 0 : index
    %166 = vector.load %arg19[%c0_75, %c0_76] : memref<128x64xbf16, #tpu.memory_space<vmem>>, vector<128x64xbf16>
    %c0_77 = arith.constant 0 : index
    %c0_78 = arith.constant 0 : index
    %167 = vector.load %arg20[%c0_77, %c0_78] : memref<1x64xf32, #tpu.memory_space<vmem>>, vector<1x64xf32>
    %c0_79 = arith.constant 0 : index
    %c0_80 = arith.constant 0 : index
    %168 = vector.load %arg21[%c0_79, %c0_80] : memref<1x64xf32, #tpu.memory_space<vmem>>, vector<1x64xf32>
    %c0_81 = arith.constant 0 : index
    %c0_82 = arith.constant 0 : index
    %169 = vector.load %arg22[%c0_81, %c0_82] : memref<1x64xf32, #tpu.memory_space<vmem>>, vector<1x64xf32>
    %170 = arith.truncf %163 : vector<8x64xf32> to vector<8x64xbf16>
    %cst_83 = arith.constant dense<0.000000e+00> : vector<8x128xf32>
    %171 = tpu.matmul %170, %164, %cst_83 {dimension_numbers = #tpu.dot_dimension_numbers<[1], [0], [0], [1], [0, 0, 1, 1], [], []>} : vector<8x64xbf16>, vector<64x128xbf16>, vector<8x128xf32> -> vector<8x128xf32>
    %172 = vector.broadcast %165 : vector<1x128xf32> to vector<8x128xf32>
    %173 = arith.addf %171, %172 : vector<8x128xf32>
    %cst_84 = arith.constant 0.000000e+00 : f32
    %174 = vector.broadcast %cst_84 : f32 to vector<8x128xf32>
    %175 = arith.maximumf %173, %174 : vector<8x128xf32>
    %176 = arith.truncf %175 : vector<8x128xf32> to vector<8x128xbf16>
    %cst_85 = arith.constant dense<0.000000e+00> : vector<8x64xf32>
    %177 = tpu.matmul %176, %166, %cst_85 {dimension_numbers = #tpu.dot_dimension_numbers<[1], [0], [0], [1], [0, 0, 1, 1], [], []>} : vector<8x128xbf16>, vector<128x64xbf16>, vector<8x64xf32> -> vector<8x64xf32>
    %178 = vector.broadcast %167 : vector<1x64xf32> to vector<8x64xf32>
    %179 = arith.addf %177, %178 : vector<8x64xf32>
    %180 = arith.addf %179, %163 : vector<8x64xf32>
    %cst_86 = arith.constant dense<0.000000e+00> : vector<8xf32>
    %181 = vector.multi_reduction <add>, %180, %cst_86 [1] : vector<8x64xf32> to vector<8xf32>
    %182 = vector.shape_cast %181 : vector<8xf32> to vector<8x1xf32>
    %cst_87 = arith.constant 6.400000e+01 : f32
    %183 = vector.broadcast %cst_87 : f32 to vector<8x1xf32>
    %184 = arith.divf %182, %183 : vector<8x1xf32>
    %185 = vector.broadcast %184 : vector<8x1xf32> to vector<8x64xf32>
    %186 = arith.subf %180, %185 : vector<8x64xf32>
    %187 = arith.mulf %186, %186 : vector<8x64xf32>
    %cst_88 = arith.constant dense<0.000000e+00> : vector<8xf32>
    %188 = vector.multi_reduction <add>, %187, %cst_88 [1] : vector<8x64xf32> to vector<8xf32>
    %189 = vector.shape_cast %188 : vector<8xf32> to vector<8x1xf32>
    %cst_89 = arith.constant 6.400000e+01 : f32
    %190 = vector.broadcast %cst_89 : f32 to vector<8x1xf32>
    %191 = arith.divf %189, %190 : vector<8x1xf32>
    %192 = vector.broadcast %184 : vector<8x1xf32> to vector<8x64xf32>
    %193 = arith.subf %180, %192 : vector<8x64xf32>
    %cst_90 = arith.constant 9.99999997E-7 : f32
    %194 = vector.broadcast %cst_90 : f32 to vector<8x1xf32>
    %195 = arith.addf %191, %194 : vector<8x1xf32>
    %196 = math.rsqrt %195 : vector<8x1xf32>
    %197 = vector.broadcast %196 : vector<8x1xf32> to vector<8x64xf32>
    %198 = arith.mulf %193, %197 : vector<8x64xf32>
    %199 = vector.broadcast %168 : vector<1x64xf32> to vector<8x64xf32>
    %200 = arith.mulf %198, %199 : vector<8x64xf32>
    %201 = vector.broadcast %169 : vector<1x64xf32> to vector<8x64xf32>
    %202 = arith.addf %200, %201 : vector<8x64xf32>
    %c0_91 = arith.constant 0 : index
    %c0_92 = arith.constant 0 : index
    %c0_93 = arith.constant 0 : index
    %203 = vector.load %arg23[%c0_91, %c0_92, %c0_93] : memref<1x8x64xf32, #tpu.memory_space<vmem>>, vector<1x8x64xf32>
    %204 = vector.shape_cast %203 : vector<1x8x64xf32> to vector<8x64xf32>
    %205 = vector.shape_cast %202 : vector<8x64xf32> to vector<1x8x64xf32>
    tpu.vector_store %arg23[%c0_91, %c0_92, %c0_93], %205 {strides = array<i32>} : memref<1x8x64xf32, #tpu.memory_space<vmem>>, vector<1x8x64xf32>,
    %c0_94 = arith.constant 0 : index
    %c0_95 = arith.constant 0 : index
    %c0_96 = arith.constant 0 : index
    %c0_97 = arith.constant 0 : index
    %206 = vector.load %arg24[%c0_94, %c0_95, %c0_96, %c0_97] : memref<1x4x8x8xf32, #tpu.memory_space<vmem>>, vector<1x4x8x8xf32>
    %207 = vector.shape_cast %206 : vector<1x4x8x8xf32> to vector<4x8x8xf32>
    %208 = vector.shape_cast %53 : vector<4x8x8xf32> to vector<1x4x8x8xf32>
    tpu.vector_store %arg24[%c0_94, %c0_95, %c0_96, %c0_97], %208 {strides = array<i32>} : memref<1x4x8x8xf32, #tpu.memory_space<vmem>>, vector<1x4x8x8xf32>,
    %c0_98 = arith.constant 0 : index
    %c0_99 = arith.constant 0 : index
    %c0_100 = arith.constant 0 : index
    %c0_101 = arith.constant 0 : index
    %209 = vector.load %arg25[%c0_98, %c0_99, %c0_100, %c0_101] : memref<1x4x8x8xf32, #tpu.memory_space<vmem>>, vector<1x4x8x8xf32>
    %210 = vector.shape_cast %209 : vector<1x4x8x8xf32> to vector<4x8x8xf32>
    %211 = vector.shape_cast %125 : vector<4x8x8xf32> to vector<1x4x8x8xf32>
    tpu.vector_store %arg25[%c0_98, %c0_99, %c0_100, %c0_101], %211 {strides = array<i32>} : memref<1x4x8x8xf32, #tpu.memory_space<vmem>>, vector<1x4x8x8xf32>,
    return
  }
  func.func @transform_0(%arg0: i32) -> (i32, i32, i32) {
    %c0_i32 = arith.constant 0 : i32
    %c0_i32_0 = arith.constant 0 : i32
    %c0_i32_1 = arith.constant 0 : i32
    return %arg0, %c0_i32, %c0_i32_0 : i32, i32, i32
  }
  func.func @transform_1(%arg0: i32) -> (i32, i32, i32) {
    %c0_i32 = arith.constant 0 : i32
    %c0_i32_0 = arith.constant 0 : i32
    %c0_i32_1 = arith.constant 0 : i32
    return %arg0, %c0_i32, %c0_i32_0 : i32, i32, i32
  }
  func.func @transform_2(%arg0: i32) -> (i32, i32, i32) {
    %c0_i32 = arith.constant 0 : i32
    %c0_i32_0 = arith.constant 0 : i32
    %c0_i32_1 = arith.constant 0 : i32
    return %arg0, %c0_i32, %c0_i32_0 : i32, i32, i32
  }
  func.func @transform_3(%arg0: i32) -> (i32, i32, i32) {
    %c0_i32 = arith.constant 0 : i32
    %c0_i32_0 = arith.constant 0 : i32
    %c0_i32_1 = arith.constant 0 : i32
    return %arg0, %c0_i32, %c0_i32_0 : i32, i32, i32
  }
  func.func @transform_4(%arg0: i32) -> (i32, i32, i32) {
    %c0_i32 = arith.constant 0 : i32
    %c0_i32_0 = arith.constant 0 : i32
    %c0_i32_1 = arith.constant 0 : i32
    %c0_i32_2 = arith.constant 0 : i32
    return %c0_i32, %c0_i32_0, %c0_i32_1 : i32, i32, i32
  }
  func.func @transform_5(%arg0: i32) -> (i32, i32, i32) {
    %c0_i32 = arith.constant 0 : i32
    %c0_i32_0 = arith.constant 0 : i32
    %c0_i32_1 = arith.constant 0 : i32
    %c0_i32_2 = arith.constant 0 : i32
    return %c0_i32, %c0_i32_0, %c0_i32_1 : i32, i32, i32
  }
  func.func @transform_6(%arg0: i32) -> (i32, i32, i32) {
    %c0_i32 = arith.constant 0 : i32
    %c0_i32_0 = arith.constant 0 : i32
    %c0_i32_1 = arith.constant 0 : i32
    %c0_i32_2 = arith.constant 0 : i32
    return %c0_i32, %c0_i32_0, %c0_i32_1 : i32, i32, i32
  }
  func.func @transform_7(%arg0: i32) -> (i32, i32, i32) {
    %c0_i32 = arith.constant 0 : i32
    %c0_i32_0 = arith.constant 0 : i32
    %c0_i32_1 = arith.constant 0 : i32
    %c0_i32_2 = arith.constant 0 : i32
    return %c0_i32, %c0_i32_0, %c0_i32_1 : i32, i32, i32
  }
  func.func @transform_8(%arg0: i32) -> (i32, i32) {
    %c0_i32 = arith.constant 0 : i32
    %c0_i32_0 = arith.constant 0 : i32
    %c0_i32_1 = arith.constant 0 : i32
    return %c0_i32, %c0_i32_0 : i32, i32
  }
  func.func @transform_9(%arg0: i32) -> (i32, i32) {
    %c0_i32 = arith.constant 0 : i32
    %c0_i32_0 = arith.constant 0 : i32
    %c0_i32_1 = arith.constant 0 : i32
    return %c0_i32, %c0_i32_0 : i32, i32
  }
  func.func @transform_10(%arg0: i32) -> (i32, i32, i32) {
    %c0_i32 = arith.constant 0 : i32
    %c0_i32_0 = arith.constant 0 : i32
    %c0_i32_1 = arith.constant 0 : i32
    %c0_i32_2 = arith.constant 0 : i32
    return %c0_i32, %c0_i32_0, %c0_i32_1 : i32, i32, i32
  }
  func.func @transform_11(%arg0: i32) -> (i32, i32, i32) {
    %c0_i32 = arith.constant 0 : i32
    %c0_i32_0 = arith.constant 0 : i32
    %c0_i32_1 = arith.constant 0 : i32
    %c0_i32_2 = arith.constant 0 : i32
    return %c0_i32, %c0_i32_0, %c0_i32_1 : i32, i32, i32
  }
  func.func @transform_12(%arg0: i32) -> (i32, i32, i32) {
    %c0_i32 = arith.constant 0 : i32
    %c0_i32_0 = arith.constant 0 : i32
    %c0_i32_1 = arith.constant 0 : i32
    %c0_i32_2 = arith.constant 0 : i32
    return %c0_i32, %c0_i32_0, %c0_i32_1 : i32, i32, i32
  }
  func.func @transform_13(%arg0: i32) -> (i32, i32, i32) {
    %c0_i32 = arith.constant 0 : i32
    %c0_i32_0 = arith.constant 0 : i32
    %c0_i32_1 = arith.constant 0 : i32
    %c0_i32_2 = arith.constant 0 : i32
    return %c0_i32, %c0_i32_0, %c0_i32_1 : i32, i32, i32
  }
  func.func @transform_14(%arg0: i32) -> (i32, i32) {
    %c0_i32 = arith.constant 0 : i32
    %c0_i32_0 = arith.constant 0 : i32
    %c0_i32_1 = arith.constant 0 : i32
    return %c0_i32, %c0_i32_0 : i32, i32
  }
  func.func @transform_15(%arg0: i32) -> (i32, i32) {
    %c0_i32 = arith.constant 0 : i32
    %c0_i32_0 = arith.constant 0 : i32
    %c0_i32_1 = arith.constant 0 : i32
    return %c0_i32, %c0_i32_0 : i32, i32
  }
  func.func @transform_16(%arg0: i32) -> (i32, i32) {
    %c0_i32 = arith.constant 0 : i32
    %c0_i32_0 = arith.constant 0 : i32
    %c0_i32_1 = arith.constant 0 : i32
    return %c0_i32, %c0_i32_0 : i32, i32
  }
  func.func @transform_17(%arg0: i32) -> (i32, i32) {
    %c0_i32 = arith.constant 0 : i32
    %c0_i32_0 = arith.constant 0 : i32
    %c0_i32_1 = arith.constant 0 : i32
    return %c0_i32, %c0_i32_0 : i32, i32
  }
  func.func @transform_18(%arg0: i32) -> (i32, i32) {
    %c0_i32 = arith.constant 0 : i32
    %c0_i32_0 = arith.constant 0 : i32
    %c0_i32_1 = arith.constant 0 : i32
    return %c0_i32, %c0_i32_0 : i32, i32
  }
  func.func @transform_19(%arg0: i32) -> (i32, i32) {
    %c0_i32 = arith.constant 0 : i32
    %c0_i32_0 = arith.constant 0 : i32
    %c0_i32_1 = arith.constant 0 : i32
    return %c0_i32, %c0_i32_0 : i32, i32
  }
  func.func @transform_20(%arg0: i32) -> (i32, i32) {
    %c0_i32 = arith.constant 0 : i32
    %c0_i32_0 = arith.constant 0 : i32
    %c0_i32_1 = arith.constant 0 : i32
    return %c0_i32, %c0_i32_0 : i32, i32
  }
  func.func @transform_21(%arg0: i32) -> (i32, i32) {
    %c0_i32 = arith.constant 0 : i32
    %c0_i32_0 = arith.constant 0 : i32
    %c0_i32_1 = arith.constant 0 : i32
    return %c0_i32, %c0_i32_0 : i32, i32
  }
  func.func @transform_22(%arg0: i32) -> (i32, i32, i32) {
    %c0_i32 = arith.constant 0 : i32
    %c0_i32_0 = arith.constant 0 : i32
    %c0_i32_1 = arith.constant 0 : i32
    return %arg0, %c0_i32, %c0_i32_0 : i32, i32, i32
  }
  func.func @transform_23(%arg0: i32) -> (i32, i32, i32, i32) {
    %c0_i32 = arith.constant 0 : i32
    %c0_i32_0 = arith.constant 0 : i32
    %c0_i32_1 = arith.constant 0 : i32
    %c0_i32_2 = arith.constant 0 : i32
    return %arg0, %c0_i32, %c0_i32_0, %c0_i32_1 : i32, i32, i32, i32
  }
  func.func @transform_24(%arg0: i32) -> (i32, i32, i32, i32) {
    %c0_i32 = arith.constant 0 : i32
    %c0_i32_0 = arith.constant 0 : i32
    %c0_i32_1 = arith.constant 0 : i32
    %c0_i32_2 = arith.constant 0 : i32
    return %arg0, %c0_i32, %c0_i32_0, %c0_i32_1 : i32, i32, i32, i32
  }
}

module attributes {stable_mosaic.version = 11 : i64} {
  func.func @_decoder_layer_kernel(%arg0: i32, %arg1: memref<1x8x64xf32, #tpu.memory_space<vmem>>, %arg2: memref<1x8x64xbf16, #tpu.memory_space<vmem>>, %arg3: memref<1x1x8xi32, #tpu.memory_space<vmem>>, %arg4: memref<1x1x8xi32, #tpu.memory_space<vmem>>, %arg5: memref<4x64x16xbf16, #tpu.memory_space<vmem>>, %arg6: memref<4x64x16xbf16, #tpu.memory_space<vmem>>, %arg7: memref<4x64x16xbf16, #tpu.memory_space<vmem>>, %arg8: memref<4x16x64xbf16, #tpu.memory_space<vmem>>, %arg9: memref<1x64xf32, #tpu.memory_space<vmem>>, %arg10: memref<1x64xf32, #tpu.memory_space<vmem>>, %arg11: memref<4x64x16xbf16, #tpu.memory_space<vmem>>, %arg12: memref<4x64x16xbf16, #tpu.memory_space<vmem>>, %arg13: memref<4x64x16xbf16, #tpu.memory_space<vmem>>, %arg14: memref<4x16x64xbf16, #tpu.memory_space<vmem>>, %arg15: memref<1x64xf32, #tpu.memory_space<vmem>>, %arg16: memref<1x64xf32, #tpu.memory_space<vmem>>, %arg17: memref<64x128xbf16, #tpu.memory_space<vmem>>, %arg18: memref<1x128xf32, #tpu.memory_space<vmem>>, %arg19: memref<128x64xbf16, #tpu.memory_space<vmem>>, %arg20: memref<1x64xf32, #tpu.memory_space<vmem>>, %arg21: memref<1x64xf32, #tpu.memory_space<vmem>>, %arg22: memref<1x64xf32, #tpu.memory_space<vmem>>, %arg23: memref<1x8x64xf32, #tpu.memory_space<vmem>>, %arg24: memref<1x4x8x8xf32, #tpu.memory_space<vmem>>, %arg25: memref<1x4x8x8xf32, #tpu.memory_space<vmem>>) attributes {dimension_semantics = [#tpu.dimension_semantics<parallel>], iteration_bounds = array<i64: 2>, scalar_prefetch = 0 : i64, scratch_operands = 0 : i64, tpu.core_type = #tpu.core_type<tc>, window_params = [{transform_indices = @transform_0, window_bounds = array<i64: 1, 8, 64>}, {transform_indices = @transform_1, window_bounds = array<i64: 1, 8, 64>}, {transform_indices = @transform_2, window_bounds = array<i64: 1, 1, 8>}, {transform_indices = @transform_3, window_bounds = array<i64: 1, 1, 8>}, {pipeline_mode = #tpu.pipeline_mode<synchronous>, transform_indices = @transform_4, window_bounds = array<i64: 4, 64, 16>}, {pipeline_mode = #tpu.pipeline_mode<synchronous>, transform_indices = @transform_5, window_bounds = array<i64: 4, 64, 16>}, {pipeline_mode = #tpu.pipeline_mode<synchronous>, transform_indices = @transform_6, window_bounds = array<i64: 4, 64, 16>}, {pipeline_mode = #tpu.pipeline_mode<synchronous>, transform_indices = @transform_7, window_bounds = array<i64: 4, 16, 64>}, {pipeline_mode = #tpu.pipeline_mode<synchronous>, transform_indices = @transform_8, window_bounds = array<i64: 1, 64>}, {pipeline_mode = #tpu.pipeline_mode<synchronous>, transform_indices = @transform_9, window_bounds = array<i64: 1, 64>}, {pipeline_mode = #tpu.pipeline_mode<synchronous>, transform_indices = @transform_10, window_bounds = array<i64: 4, 64, 16>}, {pipeline_mode = #tpu.pipeline_mode<synchronous>, transform_indices = @transform_11, window_bounds = array<i64: 4, 64, 16>}, {pipeline_mode = #tpu.pipeline_mode<synchronous>, transform_indices = @transform_12, window_bounds = array<i64: 4, 64, 16>}, {pipeline_mode = #tpu.pipeline_mode<synchronous>, transform_indices = @transform_13, window_bounds = array<i64: 4, 16, 64>}, {pipeline_mode = #tpu.pipeline_mode<synchronous>, transform_indices = @transform_14, window_bounds = array<i64: 1, 64>}, {pipeline_mode = #tpu.pipeline_mode<synchronous>, transform_indices = @transform_15, window_bounds = array<i64: 1, 64>}, {pipeline_mode = #tpu.pipeline_mode<synchronous>, transform_indices = @transform_16, window_bounds = array<i64: 64, 128>}, {pipeline_mode = #tpu.pipeline_mode<synchronous>, transform_indices = @transform_17, window_bounds = array<i64: 1, 128>}, {pipeline_mode = #tpu.pipeline_mode<synchronous>, transform_indices = @transform_18, window_bounds = array<i64: 128, 64>}, {pipeline_mode = #tpu.pipeline_mode<synchronous>, transform_indices = @transform_19, window_bounds = array<i64: 1, 64>}, {pipeline_mode = #tpu.pipeline_mode<synchronous>, transform_indices = @transform_20, window_bounds = array<i64: 1, 64>}, {pipeline_mode = #tpu.pipeline_mode<synchronous>, transform_indices = @transform_21, window_bounds = array<i64: 1, 64>}, {transform_indices = @transform_22, window_bounds = array<i64: 1, 8, 64>}, {transform_indices = @transform_23, window_bounds = array<i64: 1, 4, 8, 8>}, {transform_indices = @transform_24, window_bounds = array<i64: 1, 4, 8, 8>}]} {
    %c0 = arith.constant 0 : index
    %c0_0 = arith.constant 0 : index
    %c0_1 = arith.constant 0 : index
    %0 = vector.load %arg1[%c0, %c0_0, %c0_1] : memref<1x8x64xf32, #tpu.memory_space<vmem>>, vector<1x8x64xf32>
    %1 = vector.shape_cast %0 : vector<1x8x64xf32> to vector<8x64xf32>
    %c0_2 = arith.constant 0 : index
    %c0_3 = arith.constant 0 : index
    %c0_4 = arith.constant 0 : index
    %2 = vector.load %arg2[%c0_2, %c0_3, %c0_4] : memref<1x8x64xbf16, #tpu.memory_space<vmem>>, vector<1x8x64xbf16>
    %3 = vector.shape_cast %2 : vector<1x8x64xbf16> to vector<8x64xbf16>
    %4 = tpu.iota {dimensions = array<i32: 0>} : vector<8x8xi32>
    %5 = tpu.iota {dimensions = array<i32: 1>} : vector<8x8xi32>
    %c0_5 = arith.constant 0 : index
    %c0_6 = arith.constant 0 : index
    %c0_7 = arith.constant 0 : index
    %6 = vector.load %arg3[%c0_5, %c0_6, %c0_7] : memref<1x1x8xi32, #tpu.memory_space<vmem>>, vector<1x1x8xi32>
    %7 = vector.shape_cast %6 : vector<1x1x8xi32> to vector<1x8xi32>
    %c0_i32 = arith.constant 0 : i32
    %8 = vector.broadcast %c0_i32 : i32 to vector<1x8xi32>
    %9 = arith.cmpi ne, %7, %8 : vector<1x8xi32>
    %10 = arith.cmpi sgt, %5, %4 : vector<8x8xi32>
    %11 = vector.broadcast %9 : vector<1x8xi1> to vector<8x8xi1>
    %12 = arith.ori %11, %10 : vector<8x8xi1>
    %c0_8 = arith.constant 0 : index
    %c0_9 = arith.constant 0 : index
    %c0_10 = arith.constant 0 : index
    %13 = vector.load %arg4[%c0_8, %c0_9, %c0_10] : memref<1x1x8xi32, #tpu.memory_space<vmem>>, vector<1x1x8xi32>
    %14 = vector.shape_cast %13 : vector<1x1x8xi32> to vector<1x8xi32>
    %c0_i32_11 = arith.constant 0 : i32
    %15 = vector.broadcast %c0_i32_11 : i32 to vector<1x8xi32>
    %16 = arith.cmpi ne, %14, %15 : vector<1x8xi32>
    %17 = vector.shape_cast %16 : vector<1x8xi1> to vector<1x8xi1>
    %18 = vector.broadcast %17 : vector<1x8xi1> to vector<8x8xi1>
    %19 = arith.truncf %1 : vector<8x64xf32> to vector<8x64xbf16>
    %c0_12 = arith.constant 0 : index
    %c0_13 = arith.constant 0 : index
    %c0_14 = arith.constant 0 : index
    %20 = vector.load %arg5[%c0_12, %c0_13, %c0_14] : memref<4x64x16xbf16, #tpu.memory_space<vmem>>, vector<4x64x16xbf16>
    %c0_15 = arith.constant 0 : index
    %c0_16 = arith.constant 0 : index
    %c0_17 = arith.constant 0 : index
    %21 = vector.load %arg6[%c0_15, %c0_16, %c0_17] : memref<4x64x16xbf16, #tpu.memory_space<vmem>>, vector<4x64x16xbf16>
    %c0_18 = arith.constant 0 : index
    %c0_19 = arith.constant 0 : index
    %c0_20 = arith.constant 0 : index
    %22 = vector.load %arg7[%c0_18, %c0_19, %c0_20] : memref<4x64x16xbf16, #tpu.memory_space<vmem>>, vector<4x64x16xbf16>
    %c0_21 = arith.constant 0 : index
    %c0_22 = arith.constant 0 : index
    %c0_23 = arith.constant 0 : index
    %23 = vector.load %arg8[%c0_21, %c0_22, %c0_23] : memref<4x16x64xbf16, #tpu.memory_space<vmem>>, vector<4x16x64xbf16>
    %c0_24 = arith.constant 0 : index
    %c0_25 = arith.constant 0 : index
    %24 = vector.load %arg9[%c0_24, %c0_25] : memref<1x64xf32, #tpu.memory_space<vmem>>, vector<1x64xf32>
    %c0_26 = arith.constant 0 : index
    %c0_27 = arith.constant 0 : index
    %25 = vector.load %arg10[%c0_26, %c0_27] : memref<1x64xf32, #tpu.memory_space<vmem>>, vector<1x64xf32>
    %26 = arith.truncf %1 : vector<8x64xf32> to vector<8x64xbf16>
    %27 = vector.shape_cast %26 : vector<8x64xbf16> to vector<1x8x64xbf16>
    %28 = vector.shape_cast %27 : vector<1x8x64xbf16> to vector<1x8x64xbf16>
    %29 = vector.broadcast %28 : vector<1x8x64xbf16> to vector<4x8x64xbf16>
    %30 = vector.shape_cast %19 : vector<8x64xbf16> to vector<1x8x64xbf16>
    %31 = vector.shape_cast %30 : vector<1x8x64xbf16> to vector<1x8x64xbf16>
    %32 = vector.broadcast %31 : vector<1x8x64xbf16> to vector<4x8x64xbf16>
    %cst = arith.constant dense<0.000000e+00> : vector<4x8x16xf32>
    %33 = tpu.matmul %29, %20, %cst {dimension_numbers = #tpu.dot_dimension_numbers<[2], [1], [1], [2], [0, 0, 0, 1, 1, 2], [0], [0]>} : vector<4x8x64xbf16>, vector<4x64x16xbf16>, vector<4x8x16xf32> -> vector<4x8x16xf32>
    %34 = arith.truncf %33 : vector<4x8x16xf32> to vector<4x8x16xbf16>
    %cst_28 = arith.constant dense<0.000000e+00> : vector<4x8x16xf32>
    %35 = tpu.matmul %32, %21, %cst_28 {dimension_numbers = #tpu.dot_dimension_numbers<[2], [1], [1], [2], [0, 0, 0, 1, 1, 2], [0], [0]>} : vector<4x8x64xbf16>, vector<4x64x16xbf16>, vector<4x8x16xf32> -> vector<4x8x16xf32>
    %36 = arith.truncf %35 : vector<4x8x16xf32> to vector<4x8x16xbf16>
    %cst_29 = arith.constant dense<0.000000e+00> : vector<4x8x16xf32>
    %37 = tpu.matmul %32, %22, %cst_29 {dimension_numbers = #tpu.dot_dimension_numbers<[2], [1], [1], [2], [0, 0, 0, 1, 1, 2], [0], [0]>} : vector<4x8x64xbf16>, vector<4x64x16xbf16>, vector<4x8x16xf32> -> vector<4x8x16xf32>
    %38 = arith.truncf %37 : vector<4x8x16xf32> to vector<4x8x16xbf16>
    %cst_30 = arith.constant dense<0.000000e+00> : vector<4x8x8xf32>
    %39 = tpu.matmul %34, %36, %cst_30 {dimension_numbers = #tpu.dot_dimension_numbers<[2], [2], [1], [1], [0, 0, 0, 1, 1, 1], [0], [0]>} : vector<4x8x16xbf16>, vector<4x8x16xbf16>, vector<4x8x8xf32> -> vector<4x8x8xf32>
    %40 = vector.shape_cast %12 : vector<8x8xi1> to vector<1x8x8xi1>
    %cst_31 = arith.constant -1.000000e+09 : f32
    %41 = vector.shape_cast %40 : vector<1x8x8xi1> to vector<1x8x8xi1>
    %42 = vector.broadcast %41 : vector<1x8x8xi1> to vector<4x8x8xi1>
    %43 = vector.broadcast %cst_31 : f32 to vector<4x8x8xf32>
    %44 = arith.select %42, %43, %39 : vector<4x8x8xi1>, vector<4x8x8xf32>
    %cst_32 = arith.constant dense<0xFF800000> : vector<4x8xf32>
    %45 = vector.multi_reduction <maximumf>, %44, %cst_32 [2] : vector<4x8x8xf32> to vector<4x8xf32>
    %46 = vector.shape_cast %45 : vector<4x8xf32> to vector<4x8x1xf32>
    %47 = vector.broadcast %46 : vector<4x8x1xf32> to vector<4x8x8xf32>
    %48 = arith.subf %44, %47 : vector<4x8x8xf32>
    %49 = math.exp %48 : vector<4x8x8xf32>
    %cst_33 = arith.constant dense<0.000000e+00> : vector<4x8xf32>
    %50 = vector.multi_reduction <add>, %49, %cst_33 [2] : vector<4x8x8xf32> to vector<4x8xf32>
    %51 = vector.shape_cast %50 : vector<4x8xf32> to vector<4x8x1xf32>
    %52 = vector.broadcast %51 : vector<4x8x1xf32> to vector<4x8x8xf32>
    %53 = arith.divf %49, %52 : vector<4x8x8xf32>
    %54 = arith.truncf %53 : vector<4x8x8xf32> to vector<4x8x8xbf16>
    %cst_34 = arith.constant dense<0.000000e+00> : vector<4x8x16xf32>
    %55 = tpu.matmul %54, %38, %cst_34 {dimension_numbers = #tpu.dot_dimension_numbers<[2], [1], [1], [2], [0, 0, 0, 1, 1, 2], [0], [0]>} : vector<4x8x8xbf16>, vector<4x8x16xbf16>, vector<4x8x16xf32> -> vector<4x8x16xf32>
    %56 = arith.truncf %55 : vector<4x8x16xf32> to vector<4x8x16xbf16>
    %cst_35 = arith.constant dense<0.000000e+00> : vector<4x8x64xf32>
    %57 = tpu.matmul %56, %23, %cst_35 {dimension_numbers = #tpu.dot_dimension_numbers<[2], [1], [1], [2], [0, 0, 0, 1, 1, 2], [0], [0]>} : vector<4x8x16xbf16>, vector<4x16x64xbf16>, vector<4x8x64xf32> -> vector<4x8x64xf32>
    %58 = vector.extract_strided_slice %57 {offsets = [0, 0, 0], sizes = [1, 8, 64], strides = [1, 1, 1]} : vector<4x8x64xf32> to vector<1x8x64xf32>
    %59 = vector.shape_cast %58 : vector<1x8x64xf32> to vector<8x64xf32>
    %60 = vector.extract_strided_slice %57 {offsets = [1, 0, 0], sizes = [1, 8, 64], strides = [1, 1, 1]} : vector<4x8x64xf32> to vector<1x8x64xf32>
    %61 = vector.shape_cast %60 : vector<1x8x64xf32> to vector<8x64xf32>
    %62 = arith.addf %59, %61 : vector<8x64xf32>
    %63 = vector.extract_strided_slice %57 {offsets = [2, 0, 0], sizes = [1, 8, 64], strides = [1, 1, 1]} : vector<4x8x64xf32> to vector<1x8x64xf32>
    %64 = vector.shape_cast %63 : vector<1x8x64xf32> to vector<8x64xf32>
    %65 = arith.addf %62, %64 : vector<8x64xf32>
    %66 = vector.extract_strided_slice %57 {offsets = [3, 0, 0], sizes = [1, 8, 64], strides = [1, 1, 1]} : vector<4x8x64xf32> to vector<1x8x64xf32>
    %67 = vector.shape_cast %66 : vector<1x8x64xf32> to vector<8x64xf32>
    %68 = arith.addf %65, %67 : vector<8x64xf32>
    %69 = arith.addf %68, %1 : vector<8x64xf32>
    %cst_36 = arith.constant dense<0.000000e+00> : vector<8xf32>
    %70 = vector.multi_reduction <add>, %69, %cst_36 [1] : vector<8x64xf32> to vector<8xf32>
    %71 = vector.shape_cast %70 : vector<8xf32> to vector<8x1xf32>
    %cst_37 = arith.constant 6.400000e+01 : f32
    %72 = vector.broadcast %cst_37 : f32 to vector<8x1xf32>
    %73 = arith.divf %71, %72 : vector<8x1xf32>
    %74 = vector.broadcast %73 : vector<8x1xf32> to vector<8x64xf32>
    %75 = arith.subf %69, %74 : vector<8x64xf32>
    %76 = arith.mulf %75, %75 : vector<8x64xf32>
    %cst_38 = arith.constant dense<0.000000e+00> : vector<8xf32>
    %77 = vector.multi_reduction <add>, %76, %cst_38 [1] : vector<8x64xf32> to vector<8xf32>
    %78 = vector.shape_cast %77 : vector<8xf32> to vector<8x1xf32>
    %cst_39 = arith.constant 6.400000e+01 : f32
    %79 = vector.broadcast %cst_39 : f32 to vector<8x1xf32>
    %80 = arith.divf %78, %79 : vector<8x1xf32>
    %81 = vector.broadcast %73 : vector<8x1xf32> to vector<8x64xf32>
    %82 = arith.subf %69, %81 : vector<8x64xf32>
    %cst_40 = arith.constant 9.99999997E-7 : f32
    %83 = vector.broadcast %cst_40 : f32 to vector<8x1xf32>
    %84 = arith.addf %80, %83 : vector<8x1xf32>
    %85 = math.rsqrt %84 : vector<8x1xf32>
    %86 = vector.broadcast %85 : vector<8x1xf32> to vector<8x64xf32>
    %87 = arith.mulf %82, %86 : vector<8x64xf32>
    %88 = vector.broadcast %24 : vector<1x64xf32> to vector<8x64xf32>
    %89 = arith.mulf %87, %88 : vector<8x64xf32>
    %90 = vector.broadcast %25 : vector<1x64xf32> to vector<8x64xf32>
    %91 = arith.addf %89, %90 : vector<8x64xf32>
    %c0_41 = arith.constant 0 : index
    %c0_42 = arith.constant 0 : index
    %c0_43 = arith.constant 0 : index
    %92 = vector.load %arg11[%c0_41, %c0_42, %c0_43] : memref<4x64x16xbf16, #tpu.memory_space<vmem>>, vector<4x64x16xbf16>
    %c0_44 = arith.constant 0 : index
    %c0_45 = arith.constant 0 : index
    %c0_46 = arith.constant 0 : index
    %93 = vector.load %arg12[%c0_44, %c0_45, %c0_46] : memref<4x64x16xbf16, #tpu.memory_space<vmem>>, vector<4x64x16xbf16>
    %c0_47 = arith.constant 0 : index
    %c0_48 = arith.constant 0 : index
    %c0_49 = arith.constant 0 : index
    %94 = vector.load %arg13[%c0_47, %c0_48, %c0_49] : memref<4x64x16xbf16, #tpu.memory_space<vmem>>, vector<4x64x16xbf16>
    %c0_50 = arith.constant 0 : index
    %c0_51 = arith.constant 0 : index
    %c0_52 = arith.constant 0 : index
    %95 = vector.load %arg14[%c0_50, %c0_51, %c0_52] : memref<4x16x64xbf16, #tpu.memory_space<vmem>>, vector<4x16x64xbf16>
    %c0_53 = arith.constant 0 : index
    %c0_54 = arith.constant 0 : index
    %96 = vector.load %arg15[%c0_53, %c0_54] : memref<1x64xf32, #tpu.memory_space<vmem>>, vector<1x64xf32>
    %c0_55 = arith.constant 0 : index
    %c0_56 = arith.constant 0 : index
    %97 = vector.load %arg16[%c0_55, %c0_56] : memref<1x64xf32, #tpu.memory_space<vmem>>, vector<1x64xf32>
    %98 = arith.truncf %91 : vector<8x64xf32> to vector<8x64xbf16>
    %99 = vector.shape_cast %98 : vector<8x64xbf16> to vector<1x8x64xbf16>
    %100 = vector.shape_cast %99 : vector<1x8x64xbf16> to vector<1x8x64xbf16>
    %101 = vector.broadcast %100 : vector<1x8x64xbf16> to vector<4x8x64xbf16>
    %102 = vector.shape_cast %3 : vector<8x64xbf16> to vector<1x8x64xbf16>
    %103 = vector.shape_cast %102 : vector<1x8x64xbf16> to vector<1x8x64xbf16>
    %104 = vector.broadcast %103 : vector<1x8x64xbf16> to vector<4x8x64xbf16>
    %cst_57 = arith.constant dense<0.000000e+00> : vector<4x8x16xf32>
    %105 = tpu.matmul %101, %92, %cst_57 {dimension_numbers = #tpu.dot_dimension_numbers<[2], [1], [1], [2], [0, 0, 0, 1, 1, 2], [0], [0]>} : vector<4x8x64xbf16>, vector<4x64x16xbf16>, vector<4x8x16xf32> -> vector<4x8x16xf32>
    %106 = arith.truncf %105 : vector<4x8x16xf32> to vector<4x8x16xbf16>
    %cst_58 = arith.constant dense<0.000000e+00> : vector<4x8x16xf32>
    %107 = tpu.matmul %104, %93, %cst_58 {dimension_numbers = #tpu.dot_dimension_numbers<[2], [1], [1], [2], [0, 0, 0, 1, 1, 2], [0], [0]>} : vector<4x8x64xbf16>, vector<4x64x16xbf16>, vector<4x8x16xf32> -> vector<4x8x16xf32>
    %108 = arith.truncf %107 : vector<4x8x16xf32> to vector<4x8x16xbf16>
    %cst_59 = arith.constant dense<0.000000e+00> : vector<4x8x16xf32>
    %109 = tpu.matmul %104, %94, %cst_59 {dimension_numbers = #tpu.dot_dimension_numbers<[2], [1], [1], [2], [0, 0, 0, 1, 1, 2], [0], [0]>} : vector<4x8x64xbf16>, vector<4x64x16xbf16>, vector<4x8x16xf32> -> vector<4x8x16xf32>
    %110 = arith.truncf %109 : vector<4x8x16xf32> to vector<4x8x16xbf16>
    %cst_60 = arith.constant dense<0.000000e+00> : vector<4x8x8xf32>
    %111 = tpu.matmul %106, %108, %cst_60 {dimension_numbers = #tpu.dot_dimension_numbers<[2], [2], [1], [1], [0, 0, 0, 1, 1, 1], [0], [0]>} : vector<4x8x16xbf16>, vector<4x8x16xbf16>, vector<4x8x8xf32> -> vector<4x8x8xf32>
    %112 = vector.shape_cast %18 : vector<8x8xi1> to vector<1x8x8xi1>
    %cst_61 = arith.constant -1.000000e+09 : f32
    %113 = vector.shape_cast %112 : vector<1x8x8xi1> to vector<1x8x8xi1>
    %114 = vector.broadcast %113 : vector<1x8x8xi1> to vector<4x8x8xi1>
    %115 = vector.broadcast %cst_61 : f32 to vector<4x8x8xf32>
    %116 = arith.select %114, %115, %111 : vector<4x8x8xi1>, vector<4x8x8xf32>
    %cst_62 = arith.constant dense<0xFF800000> : vector<4x8xf32>
    %117 = vector.multi_reduction <maximumf>, %116, %cst_62 [2] : vector<4x8x8xf32> to vector<4x8xf32>
    %118 = vector.shape_cast %117 : vector<4x8xf32> to vector<4x8x1xf32>
    %119 = vector.broadcast %118 : vector<4x8x1xf32> to vector<4x8x8xf32>
    %120 = arith.subf %116, %119 : vector<4x8x8xf32>
    %121 = math.exp %120 : vector<4x8x8xf32>
    %cst_63 = arith.constant dense<0.000000e+00> : vector<4x8xf32>
    %122 = vector.multi_reduction <add>, %121, %cst_63 [2] : vector<4x8x8xf32> to vector<4x8xf32>
    %123 = vector.shape_cast %122 : vector<4x8xf32> to vector<4x8x1xf32>
    %124 = vector.broadcast %123 : vector<4x8x1xf32> to vector<4x8x8xf32>
    %125 = arith.divf %121, %124 : vector<4x8x8xf32>
    %126 = arith.truncf %125 : vector<4x8x8xf32> to vector<4x8x8xbf16>
    %cst_64 = arith.constant dense<0.000000e+00> : vector<4x8x16xf32>
    %127 = tpu.matmul %126, %110, %cst_64 {dimension_numbers = #tpu.dot_dimension_numbers<[2], [1], [1], [2], [0, 0, 0, 1, 1, 2], [0], [0]>} : vector<4x8x8xbf16>, vector<4x8x16xbf16>, vector<4x8x16xf32> -> vector<4x8x16xf32>
    %128 = arith.truncf %127 : vector<4x8x16xf32> to vector<4x8x16xbf16>
    %cst_65 = arith.constant dense<0.000000e+00> : vector<4x8x64xf32>
    %129 = tpu.matmul %128, %95, %cst_65 {dimension_numbers = #tpu.dot_dimension_numbers<[2], [1], [1], [2], [0, 0, 0, 1, 1, 2], [0], [0]>} : vector<4x8x16xbf16>, vector<4x16x64xbf16>, vector<4x8x64xf32> -> vector<4x8x64xf32>
    %130 = vector.extract_strided_slice %129 {offsets = [0, 0, 0], sizes = [1, 8, 64], strides = [1, 1, 1]} : vector<4x8x64xf32> to vector<1x8x64xf32>
    %131 = vector.shape_cast %130 : vector<1x8x64xf32> to vector<8x64xf32>
    %132 = vector.extract_strided_slice %129 {offsets = [1, 0, 0], sizes = [1, 8, 64], strides = [1, 1, 1]} : vector<4x8x64xf32> to vector<1x8x64xf32>
    %133 = vector.shape_cast %132 : vector<1x8x64xf32> to vector<8x64xf32>
    %134 = arith.addf %131, %133 : vector<8x64xf32>
    %135 = vector.extract_strided_slice %129 {offsets = [2, 0, 0], sizes = [1, 8, 64], strides = [1, 1, 1]} : vector<4x8x64xf32> to vector<1x8x64xf32>
    %136 = vector.shape_cast %135 : vector<1x8x64xf32> to vector<8x64xf32>
    %137 = arith.addf %134, %136 : vector<8x64xf32>
    %138 = vector.extract_strided_slice %129 {offsets = [3, 0, 0], sizes = [1, 8, 64], strides = [1, 1, 1]} : vector<4x8x64xf32> to vector<1x8x64xf32>
    %139 = vector.shape_cast %138 : vector<1x8x64xf32> to vector<8x64xf32>
    %140 = arith.addf %137, %139 : vector<8x64xf32>
    %141 = arith.addf %140, %91 : vector<8x64xf32>
    %cst_66 = arith.constant dense<0.000000e+00> : vector<8xf32>
    %142 = vector.multi_reduction <add>, %141, %cst_66 [1] : vector<8x64xf32> to vector<8xf32>
    %143 = vector.shape_cast %142 : vector<8xf32> to vector<8x1xf32>
    %cst_67 = arith.constant 6.400000e+01 : f32
    %144 = vector.broadcast %cst_67 : f32 to vector<8x1xf32>
    %145 = arith.divf %143, %144 : vector<8x1xf32>
    %146 = vector.broadcast %145 : vector<8x1xf32> to vector<8x64xf32>
    %147 = arith.subf %141, %146 : vector<8x64xf32>
    %148 = arith.mulf %147, %147 : vector<8x64xf32>
    %cst_68 = arith.constant dense<0.000000e+00> : vector<8xf32>
    %149 = vector.multi_reduction <add>, %148, %cst_68 [1] : vector<8x64xf32> to vector<8xf32>
    %150 = vector.shape_cast %149 : vector<8xf32> to vector<8x1xf32>
    %cst_69 = arith.constant 6.400000e+01 : f32
    %151 = vector.broadcast %cst_69 : f32 to vector<8x1xf32>
    %152 = arith.divf %150, %151 : vector<8x1xf32>
    %153 = vector.broadcast %145 : vector<8x1xf32> to vector<8x64xf32>
    %154 = arith.subf %141, %153 : vector<8x64xf32>
    %cst_70 = arith.constant 9.99999997E-7 : f32
    %155 = vector.broadcast %cst_70 : f32 to vector<8x1xf32>
    %156 = arith.addf %152, %155 : vector<8x1xf32>
    %157 = math.rsqrt %156 : vector<8x1xf32>
    %158 = vector.broadcast %157 : vector<8x1xf32> to vector<8x64xf32>
    %159 = arith.mulf %154, %158 : vector<8x64xf32>
    %160 = vector.broadcast %96 : vector<1x64xf32> to vector<8x64xf32>
    %161 = arith.mulf %159, %160 : vector<8x64xf32>
    %162 = vector.broadcast %97 : vector<1x64xf32> to vector<8x64xf32>
    %163 = arith.addf %161, %162 : vector<8x64xf32>
    %c0_71 = arith.constant 0 : index
    %c0_72 = arith.constant 0 : index
    %164 = vector.load %arg17[%c0_71, %c0_72] : memref<64x128xbf16, #tpu.memory_space<vmem>>, vector<64x128xbf16>
    %c0_73 = arith.constant 0 : index
    %c0_74 = arith.constant 0 : index
    %165 = vector.load %arg18[%c0_73, %c0_74] : memref<1x128xf32, #tpu.memory_space<vmem>>, vector<1x128xf32>
    %c0_75 = arith.constant 0 : index
    %c0_76 = arith.constant 0 : index
    %166 = vector.load %arg19[%c0_75, %c0_76] : memref<128x64xbf16, #tpu.memory_space<vmem>>, vector<128x64xbf16>
    %c0_77 = arith.constant 0 : index
    %c0_78 = arith.constant 0 : index
    %167 = vector.load %arg20[%c0_77, %c0_78] : memref<1x64xf32, #tpu.memory_space<vmem>>, vector<1x64xf32>
    %c0_79 = arith.constant 0 : index
    %c0_80 = arith.constant 0 : index
    %168 = vector.load %arg21[%c0_79, %c0_80] : memref<1x64xf32, #tpu.memory_space<vmem>>, vector<1x64xf32>
    %c0_81 = arith.constant 0 : index
    %c0_82 = arith.constant 0 : index
    %169 = vector.load %arg22[%c0_81, %c0_82] : memref<1x64xf32, #tpu.memory_space<vmem>>, vector<1x64xf32>
    %170 = arith.truncf %163 : vector<8x64xf32> to vector<8x64xbf16>
    %cst_83 = arith.constant dense<0.000000e+00> : vector<8x128xf32>
    %171 = tpu.matmul %170, %164, %cst_83 {dimension_numbers = #tpu.dot_dimension_numbers<[1], [0], [0], [1], [0, 0, 1, 1], [], []>} : vector<8x64xbf16>, vector<64x128xbf16>, vector<8x128xf32> -> vector<8x128xf32>
    %172 = vector.broadcast %165 : vector<1x128xf32> to vector<8x128xf32>
    %173 = arith.addf %171, %172 : vector<8x128xf32>
    %cst_84 = arith.constant 0.000000e+00 : f32
    %174 = vector.broadcast %cst_84 : f32 to vector<8x128xf32>
    %175 = arith.maximumf %173, %174 : vector<8x128xf32>
    %176 = arith.truncf %175 : vector<8x128xf32> to vector<8x128xbf16>
    %cst_85 = arith.constant dense<0.000000e+00> : vector<8x64xf32>
    %177 = tpu.matmul %176, %166, %cst_85 {dimension_numbers = #tpu.dot_dimension_numbers<[1], [0], [0], [1], [0, 0, 1, 1], [], []>} : vector<8x128xbf16>, vector<128x64xbf16>, vector<8x64xf32> -> vector<8x64xf32>
    %178 = vector.broadcast %167 : vector<1x64xf32> to vector<8x64xf32>
    %179 = arith.addf %177, %178 : vector<8x64xf32>
    %180 = arith.addf %179, %163 : vector<8x64xf32>
    %cst_86 = arith.constant dense<0.000000e+00> : vector<8xf32>
    %181 = vector.multi_reduction <add>, %180, %cst_86 [1] : vector<8x64xf32> to vector<8xf32>
    %182 = vector.shape_cast %181 : vector<8xf32> to vector<8x1xf32>
    %cst_87 = arith.constant 6.400000e+01 : f32
    %183 = vector.broadcast %cst_87 : f32 to vector<8x1xf32>
    %184 = arith.divf %182, %183 : vector<8x1xf32>
    %185 = vector.broadcast %184 : vector<8x1xf32> to vector<8x64xf32>
    %186 = arith.subf %180, %185 : vector<8x64xf32>
    %187 = arith.mulf %186, %186 : vector<8x64xf32>
    %cst_88 = arith.constant dense<0.000000e+00> : vector<8xf32>
    %188 = vector.multi_reduction <add>, %187, %cst_88 [1] : vector<8x64xf32> to vector<8xf32>
    %189 = vector.shape_cast %188 : vector<8xf32> to vector<8x1xf32>
    %cst_89 = arith.constant 6.400000e+01 : f32
    %190 = vector.broadcast %cst_89 : f32 to vector<8x1xf32>
    %191 = arith.divf %189, %190 : vector<8x1xf32>
    %192 = vector.broadcast %184 : vector<8x1xf32> to vector<8x64xf32>
    %193 = arith.subf %180, %192 : vector<8x64xf32>
    %cst_90 = arith.constant 9.99999997E-7 : f32
    %194 = vector.broadcast %cst_90 : f32 to vector<8x1xf32>
    %195 = arith.addf %191, %194 : vector<8x1xf32>
    %196 = math.rsqrt %195 : vector<8x1xf32>
    %197 = vector.broadcast %196 : vector<8x1xf32> to vector<8x64xf32>
    %198 = arith.mulf %193, %197 : vector<8x64xf32>
    %199 = vector.broadcast %168 : vector<1x64xf32> to vector<8x64xf32>
    %200 = arith.mulf %198, %199 : vector<8x64xf32>
    %201 = vector.broadcast %169 : vector<1x64xf32> to vector<8x64xf32>
    %202 = arith.addf %200, %201 : vector<8x64xf32>
    %c0_91 = arith.constant 0 : index
    %c0_92 = arith.constant 0 : index
    %c0_93 = arith.constant 0 : index
    %203 = vector.load %arg23[%c0_91, %c0_92, %c0_93] : memref<1x8x64xf32, #tpu.memory_space<vmem>>, vector<1x8x64xf32>
    %204 = vector.shape_cast %203 : vector<1x8x64xf32> to vector<8x64xf32>
    %205 = vector.shape_cast %202 : vector<8x64xf32> to vector<1x8x64xf32>
    tpu.vector_store %arg23[%c0_91, %c0_92, %c0_93], %205 {strides = array<i32>} : memref<1x8x64xf32, #tpu.memory_space<vmem>>, vector<1x8x64xf32>,
    %c0_94 = arith.constant 0 : index
    %c0_95 = arith.constant 0 : index
    %c0_96 = arith.constant 0 : index
    %c0_97 = arith.constant 0 : index
    %206 = vector.load %arg24[%c0_94, %c0_95, %c0_96, %c0_97] : memref<1x4x8x8xf32, #tpu.memory_space<vmem>>, vector<1x4x8x8xf32>
    %207 = vector.shape_cast %206 : vector<1x4x8x8xf32> to vector<4x8x8xf32>
    %208 = vector.shape_cast %53 : vector<4x8x8xf32> to vector<1x4x8x8xf32>
    tpu.vector_store %arg24[%c0_94, %c0_95, %c0_96, %c0_97], %208 {strides = array<i32>} : memref<1x4x8x8xf32, #tpu.memory_space<vmem>>, vector<1x4x8x8xf32>,
    %c0_98 = arith.constant 0 : index
    %c0_99 = arith.constant 0 : index
    %c0_100 = arith.constant 0 : index
    %c0_101 = arith.constant 0 : index
    %209 = vector.load %arg25[%c0_98, %c0_99, %c0_100, %c0_101] : memref<1x4x8x8xf32, #tpu.memory_space<vmem>>, vector<1x4x8x8xf32>
    %210 = vector.shape_cast %209 : vector<1x4x8x8xf32> to vector<4x8x8xf32>
    %211 = vector.shape_cast %125 : vector<4x8x8xf32> to vector<1x4x8x8xf32>
    tpu.vector_store %arg25[%c0_98, %c0_99, %c0_100, %c0_101], %211 {strides = array<i32>} : memref<1x4x8x8xf32, #tpu.memory_space<vmem>>, vector<1x4x8x8xf32>,
    return
  }
  func.func @transform_0(%arg0: i32) -> (i32, i32, i32) {
    %c0_i32 = arith.constant 0 : i32
    %c0_i32_0 = arith.constant 0 : i32
    %c0_i32_1 = arith.constant 0 : i32
    return %arg0, %c0_i32, %c0_i32_0 : i32, i32, i32
  }
  func.func @transform_1(%arg0: i32) -> (i32, i32, i32) {
    %c0_i32 = arith.constant 0 : i32
    %c0_i32_0 = arith.constant 0 : i32
    %c0_i32_1 = arith.constant 0 : i32
    return %arg0, %c0_i32, %c0_i32_0 : i32, i32, i32
  }
  func.func @transform_2(%arg0: i32) -> (i32, i32, i32) {
    %c0_i32 = arith.constant 0 : i32
    %c0_i32_0 = arith.constant 0 : i32
    %c0_i32_1 = arith.constant 0 : i32
    return %arg0, %c0_i32, %c0_i32_0 : i32, i32, i32
  }
  func.func @transform_3(%arg0: i32) -> (i32, i32, i32) {
    %c0_i32 = arith.constant 0 : i32
    %c0_i32_0 = arith.constant 0 : i32
    %c0_i32_1 = arith.constant 0 : i32
    return %arg0, %c0_i32, %c0_i32_0 : i32, i32, i32
  }
  func.func @transform_4(%arg0: i32) -> (i32, i32, i32) {
    %c0_i32 = arith.constant 0 : i32
    %c0_i32_0 = arith.constant 0 : i32
    %c0_i32_1 = arith.constant 0 : i32
    %c0_i32_2 = arith.constant 0 : i32
    return %c0_i32, %c0_i32_0, %c0_i32_1 : i32, i32, i32
  }
  func.func @transform_5(%arg0: i32) -> (i32, i32, i32) {
    %c0_i32 = arith.constant 0 : i32
    %c0_i32_0 = arith.constant 0 : i32
    %c0_i32_1 = arith.constant 0 : i32
    %c0_i32_2 = arith.constant 0 : i32
    return %c0_i32, %c0_i32_0, %c0_i32_1 : i32, i32, i32
  }
  func.func @transform_6(%arg0: i32) -> (i32, i32, i32) {
    %c0_i32 = arith.constant 0 : i32
    %c0_i32_0 = arith.constant 0 : i32
    %c0_i32_1 = arith.constant 0 : i32
    %c0_i32_2 = arith.constant 0 : i32
    return %c0_i32, %c0_i32_0, %c0_i32_1 : i32, i32, i32
  }
  func.func @transform_7(%arg0: i32) -> (i32, i32, i32) {
    %c0_i32 = arith.constant 0 : i32
    %c0_i32_0 = arith.constant 0 : i32
    %c0_i32_1 = arith.constant 0 : i32
    %c0_i32_2 = arith.constant 0 : i32
    return %c0_i32, %c0_i32_0, %c0_i32_1 : i32, i32, i32
  }
  func.func @transform_8(%arg0: i32) -> (i32, i32) {
    %c0_i32 = arith.constant 0 : i32
    %c0_i32_0 = arith.constant 0 : i32
    %c0_i32_1 = arith.constant 0 : i32
    return %c0_i32, %c0_i32_0 : i32, i32
  }
  func.func @transform_9(%arg0: i32) -> (i32, i32) {
    %c0_i32 = arith.constant 0 : i32
    %c0_i32_0 = arith.constant 0 : i32
    %c0_i32_1 = arith.constant 0 : i32
    return %c0_i32, %c0_i32_0 : i32, i32
  }
  func.func @transform_10(%arg0: i32) -> (i32, i32, i32) {
    %c0_i32 = arith.constant 0 : i32
    %c0_i32_0 = arith.constant 0 : i32
    %c0_i32_1 = arith.constant 0 : i32
    %c0_i32_2 = arith.constant 0 : i32
    return %c0_i32, %c0_i32_0, %c0_i32_1 : i32, i32, i32
  }
  func.func @transform_11(%arg0: i32) -> (i32, i32, i32) {
    %c0_i32 = arith.constant 0 : i32
    %c0_i32_0 = arith.constant 0 : i32
    %c0_i32_1 = arith.constant 0 : i32
    %c0_i32_2 = arith.constant 0 : i32
    return %c0_i32, %c0_i32_0, %c0_i32_1 : i32, i32, i32
  }
  func.func @transform_12(%arg0: i32) -> (i32, i32, i32) {
    %c0_i32 = arith.constant 0 : i32
    %c0_i32_0 = arith.constant 0 : i32
    %c0_i32_1 = arith.constant 0 : i32
    %c0_i32_2 = arith.constant 0 : i32
    return %c0_i32, %c0_i32_0, %c0_i32_1 : i32, i32, i32
  }
  func.func @transform_13(%arg0: i32) -> (i32, i32, i32) {
    %c0_i32 = arith.constant 0 : i32
    %c0_i32_0 = arith.constant 0 : i32
    %c0_i32_1 = arith.constant 0 : i32
    %c0_i32_2 = arith.constant 0 : i32
    return %c0_i32, %c0_i32_0, %c0_i32_1 : i32, i32, i32
  }
  func.func @transform_14(%arg0: i32) -> (i32, i32) {
    %c0_i32 = arith.constant 0 : i32
    %c0_i32_0 = arith.constant 0 : i32
    %c0_i32_1 = arith.constant 0 : i32
    return %c0_i32, %c0_i32_0 : i32, i32
  }
  func.func @transform_15(%arg0: i32) -> (i32, i32) {
    %c0_i32 = arith.constant 0 : i32
    %c0_i32_0 = arith.constant 0 : i32
    %c0_i32_1 = arith.constant 0 : i32
    return %c0_i32, %c0_i32_0 : i32, i32
  }
  func.func @transform_16(%arg0: i32) -> (i32, i32) {
    %c0_i32 = arith.constant 0 : i32
    %c0_i32_0 = arith.constant 0 : i32
    %c0_i32_1 = arith.constant 0 : i32
    return %c0_i32, %c0_i32_0 : i32, i32
  }
  func.func @transform_17(%arg0: i32) -> (i32, i32) {
    %c0_i32 = arith.constant 0 : i32
    %c0_i32_0 = arith.constant 0 : i32
    %c0_i32_1 = arith.constant 0 : i32
    return %c0_i32, %c0_i32_0 : i32, i32
  }
  func.func @transform_18(%arg0: i32) -> (i32, i32) {
    %c0_i32 = arith.constant 0 : i32
    %c0_i32_0 = arith.constant 0 : i32
    %c0_i32_1 = arith.constant 0 : i32
    return %c0_i32, %c0_i32_0 : i32, i32
  }
  func.func @transform_19(%arg0: i32) -> (i32, i32) {
    %c0_i32 = arith.constant 0 : i32
    %c0_i32_0 = arith.constant 0 : i32
    %c0_i32_1 = arith.constant 0 : i32
    return %c0_i32, %c0_i32_0 : i32, i32
  }
  func.func @transform_20(%arg0: i32) -> (i32, i32) {
    %c0_i32 = arith.constant 0 : i32
    %c0_i32_0 = arith.constant 0 : i32
    %c0_i32_1 = arith.constant 0 : i32
    return %c0_i32, %c0_i32_0 : i32, i32
  }
  func.func @transform_21(%arg0: i32) -> (i32, i32) {
    %c0_i32 = arith.constant 0 : i32
    %c0_i32_0 = arith.constant 0 : i32
    %c0_i32_1 = arith.constant 0 : i32
    return %c0_i32, %c0_i32_0 : i32, i32
  }
  func.func @transform_22(%arg0: i32) -> (i32, i32, i32) {
    %c0_i32 = arith.constant 0 : i32
    %c0_i32_0 = arith.constant 0 : i32
    %c0_i32_1 = arith.constant 0 : i32
    return %arg0, %c0_i32, %c0_i32_0 : i32, i32, i32
  }
  func.func @transform_23(%arg0: i32) -> (i32, i32, i32, i32) {
    %c0_i32 = arith.constant 0 : i32
    %c0_i32_0 = arith.constant 0 : i32
    %c0_i32_1 = arith.constant 0 : i32
    %c0_i32_2 = arith.constant 0 : i32
    return %arg0, %c0_i32, %c0_i32_0, %c0_i32_1 : i32, i32, i32, i32
  }
  func.func @transform_24(%arg0: i32) -> (i32, i32, i32, i32) {
    %c0_i32 = arith.constant 0 : i32
    %c0_i32_0 = arith.constant 0 : i32
    %c0_i32_1 = arith.constant 0 : i32
    %c0_i32_2 = arith.constant 0 : i32
    return %arg0, %c0_i32, %c0_i32_0, %c0_i32_1 : i32, i32, i32, i32
  }
}

</mosaic_0001>

<llo_original>
// kernel: _lambda_.11
$region0: #{_lambda_.11}
  #allocation0 [shape = 'u32[]', space=smem, size = 0x4, offset = 0x4, fixed_abs, tag = 'smem constant byte address 0x4 - core index']
  #allocation1 [shape = 'u32[72,128]{1,0:T(1,128)}', space=vmem, size = 0x9000, scoped, tag = 'internal scratch']
  %s0 = inlined_call_operand.vmem [shape: f32[16,64], index: 0, kind: input, shape index: {}]
  %s1 = inlined_call_operand.vmem [shape: bf16[64,64], index: 1, kind: input, shape index: {}]
  %s2 = inlined_call_operand.hbm [shape: f32[16,64], index: 2, kind: output, shape index: {}]
  %s3 = sld [smem:[#allocation0]]
  $region41: #{_lambda_.11} parent=0
    _
  %s5 = ssub.s32 1, %s3
  %s6 = scalar_select 0, %s5, %s3
  $region1: #{_lambda_.11} parent=0
    #allocation2 [shape = 'u8[8192]{0}', space=vmem, size = 0x2000, scoped, tag = 'output window, operand 0']
    #allocation3 [shape = 's32[2]{0}', space=sflag, size = 0x8, scoped, tag = 'scoped memory for _lambda_.11']
    %7 = vsyncpa [#allocation3], 0
    %s8 = scalar_lea.sflag [#allocation3], 1
    %9 = vsyncpa %s8, 0
    loop: start=0, step=1, limit=4
    $region2: #{_lambda_.11} parent=1 // loop_pre_header
      _
    $region3: #{_lambda_.11} parent=1 // loop_header
      %s11 = sphi 0, %s15
      %p12 = scmp.ge.s32.totalorder %s11, 4
      %s21 = sphi 0, %s23
      %s24 = sphi 0, %s21
      %s25 = sphi 0, %s24
      %s41 = sphi 0, %s25
      %s45 = sphi 0, %s45
      %s47 = sphi 0, %s45
      %s48 = sphi 0, %s47
      %s62 = sphi 0, %s48
      %s68 = sphi 0, %s70
      %s71 = sphi 0, %s68
      %s72 = sphi 0, %s71
      %s88 = sphi 0, %s72
    $region4: #{_lambda_.11} parent=1 // loop_header_branch
      %14 = sbr.rel (%p12) target = $region8
    $region5: #{_lambda_.11} parent=1 // loop_body
      %s16 = ssub.s32 %s11, 1
      %s17 = ssub.s32 %s11, 2
      %s18 = sadd.s32 %s11, 1
      %s19 = ssub.s32 %s11, %s18
      %p20 = scmp.eq.s32.totalorder %s19, 0
      %s22 = sadd.s32 %s21, 1
      %s23 = scalar_select %p20, %s21, %s22
      %p26 = pneg %p20
      %p27 = scmp.eq.s32.totalorder %s11, 1
      %p28 = por %p26, %p27
      %p29 = scmp.ne.s32.totalorder %s21, %s24
      %p30 = scmp.eq.s32.totalorder %s11, 0
      %p31 = por %p29, %p30
      %p32 = scmp.ne.s32.totalorder %s21, %s24
      %p33 = scmp.eq.s32.totalorder %s16, 1
      %p34 = por %p32, %p33
      %p35 = scmp.ne.s32.totalorder %s24, %s25
      %p36 = scmp.eq.s32.totalorder %s16, 0
      %p37 = por %p35, %p36
      %p38 = scmp.ne.s32.totalorder %s24, %s25
      %p39 = scmp.eq.s32.totalorder %s17, 1
      %p40 = por %p38, %p39
      %p42 = scmp.ne.s32.totalorder %s25, %s41
      %p43 = scmp.eq.s32.totalorder %s17, 0
      %p44 = por %p42, %p43
      %s46 = sadd.s32 %s45, 1
      %p49 = scmp.eq.s32.totalorder %s11, 1
      %p50 = scmp.ne.s32.totalorder %s45, %s47
      %p51 = scmp.eq.s32.totalorder %s11, 0
      %p52 = por %p50, %p51
      %p53 = scmp.ne.s32.totalorder %s45, %s47
      %p54 = scmp.eq.s32.totalorder %s16, 1
      %p55 = por %p53, %p54
      %p56 = scmp.ne.s32.totalorder %s47, %s48
      %p57 = scmp.eq.s32.totalorder %s16, 0
      %p58 = por %p56, %p57
      %p59 = scmp.ne.s32.totalorder %s47, %s48
      %p60 = scmp.eq.s32.totalorder %s17, 1
      %p61 = por %p59, %p60
      %p63 = scmp.ne.s32.totalorder %s48, %s62
      %p64 = scmp.eq.s32.totalorder %s17, 0
      %p65 = por %p63, %p64
      %s66 = ssub.s32 %s11, %s18
      %p67 = scmp.eq.s32.totalorder %s66, 0
      %s69 = sadd.s32 %s68, 1
      %s70 = scalar_select %p67, %s68, %s69
      %p73 = pneg %p67
      %p74 = scmp.eq.s32.totalorder %s11, 1
      %p75 = por %p73, %p74
      %p76 = scmp.ne.s32.totalorder %s68, %s71
      %p77 = scmp.eq.s32.totalorder %s11, 0
      %p78 = por %p76, %p77
      %p79 = scmp.ne.s32.totalorder %s68, %s71
      %p80 = scmp.eq.s32.totalorder %s16, 1
      %p81 = por %p79, %p80
      %p82 = scmp.ne.s32.totalorder %s71, %s72
      %p83 = scmp.eq.s32.totalorder %s16, 0
      %p84 = por %p82, %p83
      %p85 = scmp.ne.s32.totalorder %s71, %s72
      %p86 = scmp.eq.s32.totalorder %s17, 1
      %p87 = por %p85, %p86
      %p89 = scmp.ne.s32.totalorder %s72, %s88
      %p90 = scmp.eq.s32.totalorder %s17, 0
      %p91 = por %p89, %p90
      %p92 = scmp.le.s32.totalorder 1, %s11
      %p93 = scmp.lt.s32.totalorder %s11, 3
      %p94 = pnand %p92, %p93
      %p95 = pneg %p94
      // Predicated region
      $region9: #{_lambda_.11} parent=5 // pred_check
        _
      $region10: #{_lambda_.11} parent=5 // pred_check_branch
        %97 = sbr.rel (%p94) target = $region12
      $region11: #{_lambda_.11} parent=5 // pred_region
        %s98 = ssub.s32 %s11, 1
        // Predicated region
        $region13: #{_lambda_.11} parent=11 // pred_check
          %p99 = pneg %p58
        $region14: #{_lambda_.11} parent=11 // pred_check_branch
          %101 = sbr.rel (%p99) target = $region16
        $region15: #{_lambda_.11} parent=11 // pred_region
          _
        $region16: #{_lambda_.11} parent=11 // pred_fallthru
          _
      $region12: #{_lambda_.11} parent=5 // pred_fallthru
        _
      %p102 = scmp.lt.s32.totalorder %s11, 2
      // Predicated region
      $region17: #{_lambda_.11} parent=5 // pred_check
        %p103 = pneg %p102
      $region18: #{_lambda_.11} parent=5 // pred_check_branch
        %105 = sbr.rel (%p103) target = $region20
      $region19: #{_lambda_.11} parent=5 // pred_region
        // Predicated region
        $region21: #{_lambda_.11} parent=19 // pred_check
          %p106 = pneg %p31
        $region22: #{_lambda_.11} parent=19 // pred_check_branch
          %108 = sbr.rel (%p106) target = $region24
        $region23: #{_lambda_.11} parent=19 // pred_region
          %p109 = scmp.lt.s32.totalorder %s11, 1
          %s110 = scalar_select %p109, %s11, 1
          %s111 = smul.addr %s110, 8
          %s112 = scalar_lea.vmem %s0, %s111
        $region24: #{_lambda_.11} parent=19 // pred_fallthru
          _
      $region20: #{_lambda_.11} parent=5 // pred_fallthru
        _
      %p113 = scmp.le.s32.totalorder 1, %s11
      %p114 = scmp.lt.s32.totalorder %s11, 3
      %p115 = pnand %p113, %p114
      %p116 = pneg %p115
      // Predicated region
      $region25: #{_lambda_.11} parent=5 // pred_check
        _
      $region26: #{_lambda_.11} parent=5 // pred_check_branch
        %118 = sbr.rel (%p115) target = $region28
      $region27: #{_lambda_.11} parent=5 // pred_region
        %s119 = ssub.s32 %s11, 1
        %p120 = scmp.lt.s32.totalorder %s16, 1
        %s121 = scalar_select %p120, %s16, 1
        %s122 = smul.addr %s121, 8
        %s123 = scalar_lea.vmem %s0, %s122
        %p124 = pneg %p37
        %p125 = pneg %p34
        %p126 = pneg %p58
        %p127 = pneg %p55
        %p128 = pneg %p84
        %p129 = pneg %p81
        %s130 = sand.u32 %s71, 1
        %s131 = scalar_lea.sflag [#allocation3], %s130
        %s132 = sand.u32 %s71, 1
        %s133 = smul.addr %s132, 8
        %s134 = scalar_lea.vmem [#allocation2], %s133
        %p135 = scmp.lt.s32.totalorder %s16, 1
        %s136 = scalar_select %p135, %s16, 1
        %s137 = smul.addr %s136, 8
        %s138 = scalar_lea.vmem %s0, %s137
        %v140 = vld [vmem:[%s138] sm:$0xff]
        %v141 = vpack.c.bf16 %v140, %v140
        %v142 = vld [vmem:[%s1] sm:$0xf]
        %v143 = vld [vmem:[%s1 + $0x4] sm:$0xf]
        %v144 = vld [vmem:[%s1 + $0x8] sm:$0xf]
        %v145 = vld [vmem:[%s1 + $0xc] sm:$0xf]
        %v146 = vld [vmem:[%s1 + $0x10] sm:$0xf]
        %v147 = vld [vmem:[%s1 + $0x14] sm:$0xf]
        %v148 = vld [vmem:[%s1 + $0x18] sm:$0xf]
        %v149 = vld [vmem:[%s1 + $0x1c] sm:$0xf]
        %v158 = vunpack.c.l.b16 %v142
        %v159 = vunpack.c.l.b16 %v143
        %v160 = vunpack.c.l.b16 %v144
        %v161 = vunpack.c.l.b16 %v145
        %v162 = vunpack.c.l.b16 %v146
        %v163 = vunpack.c.l.b16 %v147
        %v164 = vunpack.c.l.b16 %v148
        %v165 = vunpack.c.l.b16 %v149
        %v166 = vpack.c.b16 %v159, %v158
        %v167 = vpack.c.b16 %v161, %v160
        %v168 = vpack.c.b16 %v163, %v162
        %v169 = vpack.c.b16 %v165, %v164
        %vm174 = vcmask 523264
        %v176 = vsel %vm174, %v141, 0
        %178 = vmatpush.bf16.msra.mxu0 0
        %179 = vmatpush.bf16.msra.mxu0 0
        %180 = vmatpush.bf16.msra.mxu0 0
        %181 = vmatpush.bf16.msra.mxu0 0
        %182 = vmatpush.bf16.msra.mxu0 %v169
        %183 = vmatpush.bf16.msra.mxu0 %v168
        %184 = vmatpush.bf16.msra.mxu0 %v167
        %185 = vmatpush.bf16.msra.mxu0 %v166
        %186 = vmatmul.bf16.gmra.mxu0 %v176
        %v187 = vpop.f32.mrf.mxu0
        %v188 = vadd.f32 0.0, %v187
        %v189 = vpop.f32.mrf.mxu0
        %190 = vdwg.mxu0
        %v191 = vsel %vm174, %v188, -inf
        %192 = vmax.xlane.f32.xlu0 %v191
        %v193 = vpop.xlane.xlu0 %192
        %v194 = vsub.f32 %v188, %v193
        %v195 = vmul.f32 %v194, 1.442695
        %v196 = vpow.pop %v195
        %v197 = vsel %vm174, %v196, 0.0
        %198 = vadd.xlane.f32.xlu0 %v197
        %v199 = vpop.xlane.xlu0 %198
        %v200 = vrcp.pop %v199
        %v201 = vmul.f32 %v199, %v200
        %v202 = vsub.f32 1.0, %v201
        %v203 = vmul.f32 %v200, %v202
        %v204 = vadd.f32 %v200, %v203
        %vm205 = vweird.f32 %v199
        %vm206 = vweird.f32 %v200
        %vm207 = vmor %vm205, %vm206
        %v208 = vsel %vm207, %v200, %v204
        %v209 = vand.u32 2147483647, %v199
        %vm210 = vcmp.eq.f32.partialorder %v209, 8.507059e+37
        %v211 = vand.u32 %v199, 2147483648
        %v212 = vor.u32 1.1754944e-38, %v211
        %v213 = vsel %vm210, %v212, %v208
        %v214 = vmul.f32 %v196, %v213
        %215 = vst.msk [vmem:[%s134] sm:$0xff] %vm174, %v214
        %s216 = sand.u32 %s71, 1
        %s217 = scalar_lea.sflag [#allocation3], %s216
        %s218 = sand.u32 %s71, 1
        %s219 = smul.addr %s218, 8
        %s220 = scalar_lea.vmem [#allocation2], %s219
        // Predicated region
        $region29: #{_lambda_.11} parent=27 // pred_check
          %p221 = pneg %p81
        $region30: #{_lambda_.11} parent=27 // pred_check_branch
          %223 = sbr.rel (%p221) target = $region32
        $region31: #{_lambda_.11} parent=27 // pred_region
          %225 = vsyncadd %s217, 0
          %s226 = smul.addr %s16, 8
          %s227 = scalar_lea.hbm %s2, %s226
          %s229 = sshll.u32 %s220, 4
          %s230 = int_to_ptr.vmem [resolvable:$true] %s229
          %s231 = sshll.u32 %s227, 4
          %s232 = int_to_ptr.hbm [resolvable:$true] %s231
          %234 = dma.vmem_to_hbm [thread:$0]  %s230, 128, %s232, %s217
        $region32: #{_lambda_.11} parent=27 // pred_fallthru
          _
      $region28: #{_lambda_.11} parent=5 // pred_fallthru
        _
      %p235 = scmp.le.s32.totalorder 2, %s11
      // Predicated region
      $region33: #{_lambda_.11} parent=5 // pred_check
        %p236 = pneg %p235
      $region34: #{_lambda_.11} parent=5 // pred_check_branch
        %238 = sbr.rel (%p236) target = $region36
      $region35: #{_lambda_.11} parent=5 // pred_region
        %s239 = ssub.s32 %s11, 2
        // Predicated region
        $region37: #{_lambda_.11} parent=35 // pred_check
          %p240 = pneg %p87
        $region38: #{_lambda_.11} parent=35 // pred_check_branch
          %242 = sbr.rel (%p240) target = $region40
        $region39: #{_lambda_.11} parent=35 // pred_region
          %s243 = sand.u32 %s72, 1
          %s244 = scalar_lea.sflag [#allocation3], %s243
          %s245 = sand.u32 %s72, 1
          %s246 = smul.addr %s245, 8
          %s247 = scalar_lea.vmem [#allocation2], %s246
          %249 = dma.done %s244, 128
        $region40: #{_lambda_.11} parent=35 // pred_fallthru
          _
      $region36: #{_lambda_.11} parent=5 // pred_fallthru
        _
    $region6: #{_lambda_.11} parent=1 // loop_footer
      %s15 = sadd.s32 1, %s11
    $region7: #{_lambda_.11} parent=1 // loop_footer_branch
      %10 = sbr.rel target = $region3
    $region8: #{_lambda_.11} parent=1 // loop_exit
      _
    %250 = vsyncpa [#allocation3], 1
    %s251 = scalar_lea.sflag [#allocation3], 1
    %252 = vsyncpa %s251, 1

// kernel: _lambda_.6
$region0: #{_lambda_.6}
  #allocation0 [shape = 'u32[]', space=smem, size = 0x4, offset = 0x4, fixed_abs, tag = 'smem constant byte address 0x4 - core index']
  #allocation1 [shape = 'u32[72,128]{1,0:T(1,128)}', space=vmem, size = 0x9000, scoped, tag = 'internal scratch']
  %s0 = inlined_call_operand.vmem [shape: f32[16,64], index: 0, kind: input, shape index: {}]
  %s1 = inlined_call_operand.vmem [shape: f32[1,64], index: 1, kind: input, shape index: {}]
  %s2 = inlined_call_operand.vmem [shape: f32[1,64], index: 2, kind: input, shape index: {}]
  %s3 = inlined_call_operand.vmem [shape: f32[16,64], index: 3, kind: output, shape index: {}]
  %s4 = sld [smem:[#allocation0]]
  $region45: #{_lambda_.6} parent=0
    _
  %s6 = ssub.s32 1, %s4
  %s7 = scalar_select 0, %s6, %s4
  loop: start=0, step=1, limit=4
  $region2: #{_lambda_.6} parent=0 // loop_pre_header
    _
  $region3: #{_lambda_.6} parent=0 // loop_header
    %s9 = sphi 0, %s13
    %p10 = scmp.ge.s32.totalorder %s9, 4
    %s19 = sphi 0, %s21
    %s22 = sphi 0, %s19
    %s23 = sphi 0, %s22
    %s39 = sphi 0, %s23
    %s43 = sphi 0, %s43
    %s45 = sphi 0, %s43
    %s46 = sphi 0, %s45
    %s60 = sphi 0, %s46
    %s64 = sphi 0, %s64
    %s66 = sphi 0, %s64
    %s67 = sphi 0, %s66
    %s81 = sphi 0, %s67
    %s87 = sphi 0, %s89
    %s90 = sphi 0, %s87
    %s91 = sphi 0, %s90
    %s107 = sphi 0, %s91
  $region4: #{_lambda_.6} parent=0 // loop_header_branch
    %12 = sbr.rel (%p10) target = $region8
  $region5: #{_lambda_.6} parent=0 // loop_body
    %s14 = ssub.s32 %s9, 1
    %s15 = ssub.s32 %s9, 2
    %s16 = sadd.s32 %s9, 1
    %s17 = ssub.s32 %s9, %s16
    %p18 = scmp.eq.s32.totalorder %s17, 0
    %s20 = sadd.s32 %s19, 1
    %s21 = scalar_select %p18, %s19, %s20
    %p24 = pneg %p18
    %p25 = scmp.eq.s32.totalorder %s9, 1
    %p26 = por %p24, %p25
    %p27 = scmp.ne.s32.totalorder %s19, %s22
    %p28 = scmp.eq.s32.totalorder %s9, 0
    %p29 = por %p27, %p28
    %p30 = scmp.ne.s32.totalorder %s19, %s22
    %p31 = scmp.eq.s32.totalorder %s14, 1
    %p32 = por %p30, %p31
    %p33 = scmp.ne.s32.totalorder %s22, %s23
    %p34 = scmp.eq.s32.totalorder %s14, 0
    %p35 = por %p33, %p34
    %p36 = scmp.ne.s32.totalorder %s22, %s23
    %p37 = scmp.eq.s32.totalorder %s15, 1
    %p38 = por %p36, %p37
    %p40 = scmp.ne.s32.totalorder %s23, %s39
    %p41 = scmp.eq.s32.totalorder %s15, 0
    %p42 = por %p40, %p41
    %s44 = sadd.s32 %s43, 1
    %p47 = scmp.eq.s32.totalorder %s9, 1
    %p48 = scmp.ne.s32.totalorder %s43, %s45
    %p49 = scmp.eq.s32.totalorder %s9, 0
    %p50 = por %p48, %p49
    %p51 = scmp.ne.s32.totalorder %s43, %s45
    %p52 = scmp.eq.s32.totalorder %s14, 1
    %p53 = por %p51, %p52
    %p54 = scmp.ne.s32.totalorder %s45, %s46
    %p55 = scmp.eq.s32.totalorder %s14, 0
    %p56 = por %p54, %p55
    %p57 = scmp.ne.s32.totalorder %s45, %s46
    %p58 = scmp.eq.s32.totalorder %s15, 1
    %p59 = por %p57, %p58
    %p61 = scmp.ne.s32.totalorder %s46, %s60
    %p62 = scmp.eq.s32.totalorder %s15, 0
    %p63 = por %p61, %p62
    %s65 = sadd.s32 %s64, 1
    %p68 = scmp.eq.s32.totalorder %s9, 1
    %p69 = scmp.ne.s32.totalorder %s64, %s66
    %p70 = scmp.eq.s32.totalorder %s9, 0
    %p71 = por %p69, %p70
    %p72 = scmp.ne.s32.totalorder %s64, %s66
    %p73 = scmp.eq.s32.totalorder %s14, 1
    %p74 = por %p72, %p73
    %p75 = scmp.ne.s32.totalorder %s66, %s67
    %p76 = scmp.eq.s32.totalorder %s14, 0
    %p77 = por %p75, %p76
    %p78 = scmp.ne.s32.totalorder %s66, %s67
    %p79 = scmp.eq.s32.totalorder %s15, 1
    %p80 = por %p78, %p79
    %p82 = scmp.ne.s32.totalorder %s67, %s81
    %p83 = scmp.eq.s32.totalorder %s15, 0
    %p84 = por %p82, %p83
    %s85 = ssub.s32 %s9, %s16
    %p86 = scmp.eq.s32.totalorder %s85, 0
    %s88 = sadd.s32 %s87, 1
    %s89 = scalar_select %p86, %s87, %s88
    %p92 = pneg %p86
    %p93 = scmp.eq.s32.totalorder %s9, 1
    %p94 = por %p92, %p93
    %p95 = scmp.ne.s32.totalorder %s87, %s90
    %p96 = scmp.eq.s32.totalorder %s9, 0
    %p97 = por %p95, %p96
    %p98 = scmp.ne.s32.totalorder %s87, %s90
    %p99 = scmp.eq.s32.totalorder %s14, 1
    %p100 = por %p98, %p99
    %p101 = scmp.ne.s32.totalorder %s90, %s91
    %p102 = scmp.eq.s32.totalorder %s14, 0
    %p103 = por %p101, %p102
    %p104 = scmp.ne.s32.totalorder %s90, %s91
    %p105 = scmp.eq.s32.totalorder %s15, 1
    %p106 = por %p104, %p105
    %p108 = scmp.ne.s32.totalorder %s91, %s107
    %p109 = scmp.eq.s32.totalorder %s15, 0
    %p110 = por %p108, %p109
    %p111 = scmp.le.s32.totalorder 1, %s9
    %p112 = scmp.lt.s32.totalorder %s9, 3
    %p113 = pnand %p111, %p112
    %p114 = pneg %p113
    // Predicated region
    $region9: #{_lambda_.6} parent=5 // pred_check
      _
    $region10: #{_lambda_.6} parent=5 // pred_check_branch
      %116 = sbr.rel (%p113) target = $region12
    $region11: #{_lambda_.6} parent=5 // pred_region
      %s117 = ssub.s32 %s9, 1
      // Predicated region
      $region13: #{_lambda_.6} parent=11 // pred_check
        %p118 = pneg %p56
      $region14: #{_lambda_.6} parent=11 // pred_check_branch
        %120 = sbr.rel (%p118) target = $region16
      $region15: #{_lambda_.6} parent=11 // pred_region
        _
      $region16: #{_lambda_.6} parent=11 // pred_fallthru
        _
      // Predicated region
      $region17: #{_lambda_.6} parent=11 // pred_check
        %p121 = pneg %p77
      $region18: #{_lambda_.6} parent=11 // pred_check_branch
        %123 = sbr.rel (%p121) target = $region20
      $region19: #{_lambda_.6} parent=11 // pred_region
        _
      $region20: #{_lambda_.6} parent=11 // pred_fallthru
        _
    $region12: #{_lambda_.6} parent=5 // pred_fallthru
      _
    %p124 = scmp.lt.s32.totalorder %s9, 2
    // Predicated region
    $region21: #{_lambda_.6} parent=5 // pred_check
      %p125 = pneg %p124
    $region22: #{_lambda_.6} parent=5 // pred_check_branch
      %127 = sbr.rel (%p125) target = $region24
    $region23: #{_lambda_.6} parent=5 // pred_region
      // Predicated region
      $region25: #{_lambda_.6} parent=23 // pred_check
        %p128 = pneg %p29
      $region26: #{_lambda_.6} parent=23 // pred_check_branch
        %130 = sbr.rel (%p128) target = $region28
      $region27: #{_lambda_.6} parent=23 // pred_region
        %p131 = scmp.lt.s32.totalorder %s9, 1
        %s132 = scalar_select %p131, %s9, 1
        %s133 = smul.addr %s132, 8
        %s134 = scalar_lea.vmem %s0, %s133
      $region28: #{_lambda_.6} parent=23 // pred_fallthru
        _
    $region24: #{_lambda_.6} parent=5 // pred_fallthru
      _
    %p135 = scmp.le.s32.totalorder 1, %s9
    %p136 = scmp.lt.s32.totalorder %s9, 3
    %p137 = pnand %p135, %p136
    %p138 = pneg %p137
    // Predicated region
    $region29: #{_lambda_.6} parent=5 // pred_check
      _
    $region30: #{_lambda_.6} parent=5 // pred_check_branch
      %140 = sbr.rel (%p137) target = $region32
    $region31: #{_lambda_.6} parent=5 // pred_region
      %s141 = ssub.s32 %s9, 1
      %p142 = scmp.lt.s32.totalorder %s14, 1
      %s143 = scalar_select %p142, %s14, 1
      %s144 = smul.addr %s143, 8
      %s145 = scalar_lea.vmem %s0, %s144
      %p146 = pneg %p35
      %p147 = pneg %p32
      %p148 = pneg %p56
      %p149 = pneg %p53
      %p150 = pneg %p77
      %p151 = pneg %p74
      %p152 = pneg %p103
      %p153 = pneg %p100
      %p154 = scmp.lt.s32.totalorder %s14, 1
      %s155 = scalar_select %p154, %s14, 1
      %s156 = smul.addr %s155, 8
      %s157 = scalar_lea.vmem %s3, %s156
      %p158 = scmp.lt.s32.totalorder %s14, 1
      %s159 = scalar_select %p158, %s14, 1
      %s160 = smul.addr %s159, 8
      %s161 = scalar_lea.vmem %s0, %s160
      %p162 = scmp.lt.s32.totalorder %s14, 1
      %s163 = scalar_select %p162, %s14, 1
      %s164 = smul.addr %s163, 8
      %s165 = scalar_lea.vmem %s3, %s164
      %v166 = vld [vmem:[%s161] sm:$0xff]
      %v167 = vld [vmem:[%s1] sm:$0x1]
      %v168 = vld [vmem:[%s2] sm:$0x1]
      %vm169 = vcmask 523264
      %v170 = vsel %vm169, %v166, 0.0
      %171 = vadd.xlane.f32.xlu0 %v170
      %v172 = vpop.xlane.xlu0 %171
      %v173 = vrcp.pop 64.0
      %v174 = vmul.f32 64.0, %v173
      %v175 = vsub.f32 1.0, %v174
      %v176 = vmul.f32 %v173, %v175
      %v177 = vadd.f32 %v173, %v176
      %vm178 = vweird.f32 %v173
      %v179 = vsel %vm178, %v173, %v177
      %v180 = vmul.f32 %v172, %v179
      %v181 = vsub.f32 %v166, %v180
      %v182 = vmul.f32 %v181, %v181
      %v183 = vsel %vm169, %v182, 0.0
      %184 = vadd.xlane.f32.xlu0 %v183
      %v185 = vpop.xlane.xlu0 %184
      %v186 = vmul.f32 %v185, %v179
      %v187 = vadd.f32 %v186, 1e-06
      %v188 = vrsqrt.pop %v187
      %v189 = vmul.f32 %v188, %v187
      %v190 = vmul.f32 %v189, %v188
      %v191 = vmul.f32 0.5, %v190
      %v192 = vsub.f32 1.5, %v191
      %v193 = vmul.f32 %v188, %v192
      %vm194 = vweird.f32 %v187
      %vm195 = vweird.f32 %v188
      %vm196 = vmor %vm194, %vm195
      %v197 = vsel %vm196, %v188, %v193
      %v198 = vmul.f32 %v181, %v197
      %v200 = vperm.slane %v167, 0
      %v202 = vmul.f32 %v198, %v200
      %v204 = vperm.slane %v168, 0
      %v206 = vadd.f32 %v202, %v204
      %207 = vst.msk [vmem:[%s165] sm:$0xff] %vm169, %v206
      %p208 = scmp.lt.s32.totalorder %s14, 1
      %s209 = scalar_select %p208, %s14, 1
      %s210 = smul.addr %s209, 8
      %s211 = scalar_lea.vmem %s3, %s210
      // Predicated region
      $region33: #{_lambda_.6} parent=31 // pred_check
        %p212 = pneg %p100
      $region34: #{_lambda_.6} parent=31 // pred_check_branch
        %214 = sbr.rel (%p212) target = $region36
      $region35: #{_lambda_.6} parent=31 // pred_region
        _
      $region36: #{_lambda_.6} parent=31 // pred_fallthru
        _
    $region32: #{_lambda_.6} parent=5 // pred_fallthru
      _
    %p215 = scmp.le.s32.totalorder 2, %s9
    // Predicated region
    $region37: #{_lambda_.6} parent=5 // pred_check
      %p216 = pneg %p215
    $region38: #{_lambda_.6} parent=5 // pred_check_branch
      %218 = sbr.rel (%p216) target = $region40
    $region39: #{_lambda_.6} parent=5 // pred_region
      %s219 = ssub.s32 %s9, 2
      // Predicated region
      $region41: #{_lambda_.6} parent=39 // pred_check
        %p220 = pneg %p106
      $region42: #{_lambda_.6} parent=39 // pred_check_branch
        %222 = sbr.rel (%p220) target = $region44
      $region43: #{_lambda_.6} parent=39 // pred_region
        %p223 = scmp.lt.s32.totalorder %s15, 1
        %s224 = scalar_select %p223, %s15, 1
        %s225 = smul.addr %s224, 8
        %s226 = scalar_lea.vmem %s3, %s225
      $region44: #{_lambda_.6} parent=39 // pred_fallthru
        _
    $region40: #{_lambda_.6} parent=5 // pred_fallthru
      _
  $region6: #{_lambda_.6} parent=0 // loop_footer
    %s13 = sadd.s32 1, %s9
  $region7: #{_lambda_.6} parent=0 // loop_footer_branch
    %8 = sbr.rel target = $region3
  $region8: #{_lambda_.6} parent=0 // loop_exit
    _

// kernel: _lambda_.7
$region0: #{_lambda_.7}
  #allocation0 [shape = 'u32[]', space=smem, size = 0x4, offset = 0x4, fixed_abs, tag = 'smem constant byte address 0x4 - core index']
  #allocation1 [shape = 'u32[72,128]{1,0:T(1,128)}', space=vmem, size = 0x9000, scoped, tag = 'internal scratch']
  %s0 = inlined_call_operand.vmem [shape: f32[2,8,64], index: 0, kind: input, shape index: {}]
  %s1 = inlined_call_operand.vmem [shape: s32[2,1,8], index: 1, kind: input, shape index: {}]
  %s2 = inlined_call_operand.vmem [shape: bf16[4,64,16], index: 2, kind: input, shape index: {}]
  %s3 = inlined_call_operand.vmem [shape: bf16[4,64,16], index: 3, kind: input, shape index: {}]
  %s4 = inlined_call_operand.vmem [shape: bf16[4,64,16], index: 4, kind: input, shape index: {}]
  %s5 = inlined_call_operand.vmem [shape: bf16[4,16,64], index: 5, kind: input, shape index: {}]
  %s6 = inlined_call_operand.vmem [shape: f32[1,64], index: 6, kind: input, shape index: {}]
  %s7 = inlined_call_operand.vmem [shape: f32[1,64], index: 7, kind: input, shape index: {}]
  %s8 = inlined_call_operand.vmem [shape: bf16[64,128], index: 8, kind: input, shape index: {}]
  %s9 = inlined_call_operand.vmem [shape: f32[1,128], index: 9, kind: input, shape index: {}]
  %s10 = inlined_call_operand.vmem [shape: bf16[128,64], index: 10, kind: input, shape index: {}]
  %s11 = inlined_call_operand.vmem [shape: f32[1,64], index: 11, kind: input, shape index: {}]
  %s12 = inlined_call_operand.vmem [shape: f32[1,64], index: 12, kind: input, shape index: {}]
  %s13 = inlined_call_operand.vmem [shape: f32[1,64], index: 13, kind: input, shape index: {}]
  %s14 = inlined_call_operand.vmem [shape: bf16[2,8,64], index: 14, kind: output, shape index: {0}]
  %s15 = inlined_call_operand.hbm [shape: f32[2,4,8,8], index: 15, kind: output, shape index: {1}]
  %16 = xla_tuple %s14, %s15
  %s17 = sld [smem:[#allocation0]]
  $region97: #{_lambda_.7} parent=0
    _
  %s19 = ssub.s32 1, %s17
  %s20 = scalar_select 0, %s19, %s17
  $region1: #{_lambda_.7} parent=0
    #allocation2 [shape = 'u8[32768]{0}', space=vmem, size = 0x8000, scoped, tag = 'output window, operand 1']
    #allocation3 [shape = 's32[2]{0}', space=sflag, size = 0x8, scoped, tag = 'scoped memory for _lambda_.7']
    %21 = vsyncpa [#allocation3], 0
    %s22 = scalar_lea.sflag [#allocation3], 1
    %23 = vsyncpa %s22, 0
    loop: start=0, step=1, limit=4
    $region2: #{_lambda_.7} parent=1 // loop_pre_header
      _
    $region3: #{_lambda_.7} parent=1 // loop_header
      %s25 = sphi 0, %s29
      %p26 = scmp.ge.s32.totalorder %s25, 4
      %s35 = sphi 0, %s37
      %s38 = sphi 0, %s35
      %s39 = sphi 0, %s38
      %s55 = sphi 0, %s39
      %s61 = sphi 0, %s63
      %s64 = sphi 0, %s61
      %s65 = sphi 0, %s64
      %s81 = sphi 0, %s65
      %s85 = sphi 0, %s85
      %s87 = sphi 0, %s85
      %s88 = sphi 0, %s87
      %s102 = sphi 0, %s88
      %s106 = sphi 0, %s106
      %s108 = sphi 0, %s106
      %s109 = sphi 0, %s108
      %s123 = sphi 0, %s109
      %s127 = sphi 0, %s127
      %s129 = sphi 0, %s127
      %s130 = sphi 0, %s129
      %s144 = sphi 0, %s130
      %s148 = sphi 0, %s148
      %s150 = sphi 0, %s148
      %s151 = sphi 0, %s150
      %s165 = sphi 0, %s151
      %s169 = sphi 0, %s169
      %s171 = sphi 0, %s169
      %s172 = sphi 0, %s171
      %s186 = sphi 0, %s172
      %s190 = sphi 0, %s190
      %s192 = sphi 0, %s190
      %s193 = sphi 0, %s192
      %s207 = sphi 0, %s193
      %s211 = sphi 0, %s211
      %s213 = sphi 0, %s211
      %s214 = sphi 0, %s213
      %s228 = sphi 0, %s214
      %s232 = sphi 0, %s232
      %s234 = sphi 0, %s232
      %s235 = sphi 0, %s234
      %s249 = sphi 0, %s235
      %s253 = sphi 0, %s253
      %s255 = sphi 0, %s253
      %s256 = sphi 0, %s255
      %s270 = sphi 0, %s256
      %s274 = sphi 0, %s274
      %s276 = sphi 0, %s274
      %s277 = sphi 0, %s276
      %s291 = sphi 0, %s277
      %s295 = sphi 0, %s295
      %s297 = sphi 0, %s295
      %s298 = sphi 0, %s297
      %s312 = sphi 0, %s298
      %s316 = sphi 0, %s316
      %s318 = sphi 0, %s316
      %s319 = sphi 0, %s318
      %s333 = sphi 0, %s319
      %s339 = sphi 0, %s341
      %s342 = sphi 0, %s339
      %s343 = sphi 0, %s342
      %s359 = sphi 0, %s343
      %s365 = sphi 0, %s367
      %s368 = sphi 0, %s365
      %s369 = sphi 0, %s368
      %s385 = sphi 0, %s369
    $region4: #{_lambda_.7} parent=1 // loop_header_branch
      %28 = sbr.rel (%p26) target = $region8
    $region5: #{_lambda_.7} parent=1 // loop_body
      %s30 = ssub.s32 %s25, 1
      %s31 = ssub.s32 %s25, 2
      %s32 = sadd.s32 %s25, 1
      %s33 = ssub.s32 %s25, %s32
      %p34 = scmp.eq.s32.totalorder %s33, 0
      %s36 = sadd.s32 %s35, 1
      %s37 = scalar_select %p34, %s35, %s36
      %p40 = pneg %p34
      %p41 = scmp.eq.s32.totalorder %s25, 1
      %p42 = por %p40, %p41
      %p43 = scmp.ne.s32.totalorder %s35, %s38
      %p44 = scmp.eq.s32.totalorder %s25, 0
      %p45 = por %p43, %p44
      %p46 = scmp.ne.s32.totalorder %s35, %s38
      %p47 = scmp.eq.s32.totalorder %s30, 1
      %p48 = por %p46, %p47
      %p49 = scmp.ne.s32.totalorder %s38, %s39
      %p50 = scmp.eq.s32.totalorder %s30, 0
      %p51 = por %p49, %p50
      %p52 = scmp.ne.s32.totalorder %s38, %s39
      %p53 = scmp.eq.s32.totalorder %s31, 1
      %p54 = por %p52, %p53
      %p56 = scmp.ne.s32.totalorder %s39, %s55
      %p57 = scmp.eq.s32.totalorder %s31, 0
      %p58 = por %p56, %p57
      %s59 = ssub.s32 %s25, %s32
      %p60 = scmp.eq.s32.totalorder %s59, 0
      %s62 = sadd.s32 %s61, 1
      %s63 = scalar_select %p60, %s61, %s62
      %p66 = pneg %p60
      %p67 = scmp.eq.s32.totalorder %s25, 1
      %p68 = por %p66, %p67
      %p69 = scmp.ne.s32.totalorder %s61, %s64
      %p70 = scmp.eq.s32.totalorder %s25, 0
      %p71 = por %p69, %p70
      %p72 = scmp.ne.s32.totalorder %s61, %s64
      %p73 = scmp.eq.s32.totalorder %s30, 1
      %p74 = por %p72, %p73
      %p75 = scmp.ne.s32.totalorder %s64, %s65
      %p76 = scmp.eq.s32.totalorder %s30, 0
      %p77 = por %p75, %p76
      %p78 = scmp.ne.s32.totalorder %s64, %s65
      %p79 = scmp.eq.s32.totalorder %s31, 1
      %p80 = por %p78, %p79
      %p82 = scmp.ne.s32.totalorder %s65, %s81
      %p83 = scmp.eq.s32.totalorder %s31, 0
      %p84 = por %p82, %p83
      %s86 = sadd.s32 %s85, 1
      %p89 = scmp.eq.s32.totalorder %s25, 1
      %p90 = scmp.ne.s32.totalorder %s85, %s87
      %p91 = scmp.eq.s32.totalorder %s25, 0
      %p92 = por %p90, %p91
      %p93 = scmp.ne.s32.totalorder %s85, %s87
      %p94 = scmp.eq.s32.totalorder %s30, 1
      %p95 = por %p93, %p94
      %p96 = scmp.ne.s32.totalorder %s87, %s88
      %p97 = scmp.eq.s32.totalorder %s30, 0
      %p98 = por %p96, %p97
      %p99 = scmp.ne.s32.totalorder %s87, %s88
      %p100 = scmp.eq.s32.totalorder %s31, 1
      %p101 = por %p99, %p100
      %p103 = scmp.ne.s32.totalorder %s88, %s102
      %p104 = scmp.eq.s32.totalorder %s31, 0
      %p105 = por %p103, %p104
      %s107 = sadd.s32 %s106, 1
      %p110 = scmp.eq.s32.totalorder %s25, 1
      %p111 = scmp.ne.s32.totalorder %s106, %s108
      %p112 = scmp.eq.s32.totalorder %s25, 0
      %p113 = por %p111, %p112
      %p114 = scmp.ne.s32.totalorder %s106, %s108
      %p115 = scmp.eq.s32.totalorder %s30, 1
      %p116 = por %p114, %p115
      %p117 = scmp.ne.s32.totalorder %s108, %s109
      %p118 = scmp.eq.s32.totalorder %s30, 0
      %p119 = por %p117, %p118
      %p120 = scmp.ne.s32.totalorder %s108, %s109
      %p121 = scmp.eq.s32.totalorder %s31, 1
      %p122 = por %p120, %p121
      %p124 = scmp.ne.s32.totalorder %s109, %s123
      %p125 = scmp.eq.s32.totalorder %s31, 0
      %p126 = por %p124, %p125
      %s128 = sadd.s32 %s127, 1
      %p131 = scmp.eq.s32.totalorder %s25, 1
      %p132 = scmp.ne.s32.totalorder %s127, %s129
      %p133 = scmp.eq.s32.totalorder %s25, 0
      %p134 = por %p132, %p133
      %p135 = scmp.ne.s32.totalorder %s127, %s129
      %p136 = scmp.eq.s32.totalorder %s30, 1
      %p137 = por %p135, %p136
      %p138 = scmp.ne.s32.totalorder %s129, %s130
      %p139 = scmp.eq.s32.totalorder %s30, 0
      %p140 = por %p138, %p139
      %p141 = scmp.ne.s32.totalorder %s129, %s130
      %p142 = scmp.eq.s32.totalorder %s31, 1
      %p143 = por %p141, %p142
      %p145 = scmp.ne.s32.totalorder %s130, %s144
      %p146 = scmp.eq.s32.totalorder %s31, 0
      %p147 = por %p145, %p146
      %s149 = sadd.s32 %s148, 1
      %p152 = scmp.eq.s32.totalorder %s25, 1
      %p153 = scmp.ne.s32.totalorder %s148, %s150
      %p154 = scmp.eq.s32.totalorder %s25, 0
      %p155 = por %p153, %p154
      %p156 = scmp.ne.s32.totalorder %s148, %s150
      %p157 = scmp.eq.s32.totalorder %s30, 1
      %p158 = por %p156, %p157
      %p159 = scmp.ne.s32.totalorder %s150, %s151
      %p160 = scmp.eq.s32.totalorder %s30, 0
      %p161 = por %p159, %p160
      %p162 = scmp.ne.s32.totalorder %s150, %s151
      %p163 = scmp.eq.s32.totalorder %s31, 1
      %p164 = por %p162, %p163
      %p166 = scmp.ne.s32.totalorder %s151, %s165
      %p167 = scmp.eq.s32.totalorder %s31, 0
      %p168 = por %p166, %p167
      %s170 = sadd.s32 %s169, 1
      %p173 = scmp.eq.s32.totalorder %s25, 1
      %p174 = scmp.ne.s32.totalorder %s169, %s171
      %p175 = scmp.eq.s32.totalorder %s25, 0
      %p176 = por %p174, %p175
      %p177 = scmp.ne.s32.totalorder %s169, %s171
      %p178 = scmp.eq.s32.totalorder %s30, 1
      %p179 = por %p177, %p178
      %p180 = scmp.ne.s32.totalorder %s171, %s172
      %p181 = scmp.eq.s32.totalorder %s30, 0
      %p182 = por %p180, %p181
      %p183 = scmp.ne.s32.totalorder %s171, %s172
      %p184 = scmp.eq.s32.totalorder %s31, 1
      %p185 = por %p183, %p184
      %p187 = scmp.ne.s32.totalorder %s172, %s186
      %p188 = scmp.eq.s32.totalorder %s31, 0
      %p189 = por %p187, %p188
      %s191 = sadd.s32 %s190, 1
      %p194 = scmp.eq.s32.totalorder %s25, 1
      %p195 = scmp.ne.s32.totalorder %s190, %s192
      %p196 = scmp.eq.s32.totalorder %s25, 0
      %p197 = por %p195, %p196
      %p198 = scmp.ne.s32.totalorder %s190, %s192
      %p199 = scmp.eq.s32.totalorder %s30, 1
      %p200 = por %p198, %p199
      %p201 = scmp.ne.s32.totalorder %s192, %s193
      %p202 = scmp.eq.s32.totalorder %s30, 0
      %p203 = por %p201, %p202
      %p204 = scmp.ne.s32.totalorder %s192, %s193
      %p205 = scmp.eq.s32.totalorder %s31, 1
      %p206 = por %p204, %p205
      %p208 = scmp.ne.s32.totalorder %s193, %s207
      %p209 = scmp.eq.s32.totalorder %s31, 0
      %p210 = por %p208, %p209
      %s212 = sadd.s32 %s211, 1
      %p215 = scmp.eq.s32.totalorder %s25, 1
      %p216 = scmp.ne.s32.totalorder %s211, %s213
      %p217 = scmp.eq.s32.totalorder %s25, 0
      %p218 = por %p216, %p217
      %p219 = scmp.ne.s32.totalorder %s211, %s213
      %p220 = scmp.eq.s32.totalorder %s30, 1
      %p221 = por %p219, %p220
      %p222 = scmp.ne.s32.totalorder %s213, %s214
      %p223 = scmp.eq.s32.totalorder %s30, 0
      %p224 = por %p222, %p223
      %p225 = scmp.ne.s32.totalorder %s213, %s214
      %p226 = scmp.eq.s32.totalorder %s31, 1
      %p227 = por %p225, %p226
      %p229 = scmp.ne.s32.totalorder %s214, %s228
      %p230 = scmp.eq.s32.totalorder %s31, 0
      %p231 = por %p229, %p230
      %s233 = sadd.s32 %s232, 1
      %p236 = scmp.eq.s32.totalorder %s25, 1
      %p237 = scmp.ne.s32.totalorder %s232, %s234
      %p238 = scmp.eq.s32.totalorder %s25, 0
      %p239 = por %p237, %p238
      %p240 = scmp.ne.s32.totalorder %s232, %s234
      %p241 = scmp.eq.s32.totalorder %s30, 1
      %p242 = por %p240, %p241
      %p243 = scmp.ne.s32.totalorder %s234, %s235
      %p244 = scmp.eq.s32.totalorder %s30, 0
      %p245 = por %p243, %p244
      %p246 = scmp.ne.s32.totalorder %s234, %s235
      %p247 = scmp.eq.s32.totalorder %s31, 1
      %p248 = por %p246, %p247
      %p250 = scmp.ne.s32.totalorder %s235, %s249
      %p251 = scmp.eq.s32.totalorder %s31, 0
      %p252 = por %p250, %p251
      %s254 = sadd.s32 %s253, 1
      %p257 = scmp.eq.s32.totalorder %s25, 1
      %p258 = scmp.ne.s32.totalorder %s253, %s255
      %p259 = scmp.eq.s32.totalorder %s25, 0
      %p260 = por %p258, %p259
      %p261 = scmp.ne.s32.totalorder %s253, %s255
      %p262 = scmp.eq.s32.totalorder %s30, 1
      %p263 = por %p261, %p262
      %p264 = scmp.ne.s32.totalorder %s255, %s256
      %p265 = scmp.eq.s32.totalorder %s30, 0
      %p266 = por %p264, %p265
      %p267 = scmp.ne.s32.totalorder %s255, %s256
      %p268 = scmp.eq.s32.totalorder %s31, 1
      %p269 = por %p267, %p268
      %p271 = scmp.ne.s32.totalorder %s256, %s270
      %p272 = scmp.eq.s32.totalorder %s31, 0
      %p273 = por %p271, %p272
      %s275 = sadd.s32 %s274, 1
      %p278 = scmp.eq.s32.totalorder %s25, 1
      %p279 = scmp.ne.s32.totalorder %s274, %s276
      %p280 = scmp.eq.s32.totalorder %s25, 0
      %p281 = por %p279, %p280
      %p282 = scmp.ne.s32.totalorder %s274, %s276
      %p283 = scmp.eq.s32.totalorder %s30, 1
      %p284 = por %p282, %p283
      %p285 = scmp.ne.s32.totalorder %s276, %s277
      %p286 = scmp.eq.s32.totalorder %s30, 0
      %p287 = por %p285, %p286
      %p288 = scmp.ne.s32.totalorder %s276, %s277
      %p289 = scmp.eq.s32.totalorder %s31, 1
      %p290 = por %p288, %p289
      %p292 = scmp.ne.s32.totalorder %s277, %s291
      %p293 = scmp.eq.s32.totalorder %s31, 0
      %p294 = por %p292, %p293
      %s296 = sadd.s32 %s295, 1
      %p299 = scmp.eq.s32.totalorder %s25, 1
      %p300 = scmp.ne.s32.totalorder %s295, %s297
      %p301 = scmp.eq.s32.totalorder %s25, 0
      %p302 = por %p300, %p301
      %p303 = scmp.ne.s32.totalorder %s295, %s297
      %p304 = scmp.eq.s32.totalorder %s30, 1
      %p305 = por %p303, %p304
      %p306 = scmp.ne.s32.totalorder %s297, %s298
      %p307 = scmp.eq.s32.totalorder %s30, 0
      %p308 = por %p306, %p307
      %p309 = scmp.ne.s32.totalorder %s297, %s298
      %p310 = scmp.eq.s32.totalorder %s31, 1
      %p311 = por %p309, %p310
      %p313 = scmp.ne.s32.totalorder %s298, %s312
      %p314 = scmp.eq.s32.totalorder %s31, 0
      %p315 = por %p313, %p314
      %s317 = sadd.s32 %s316, 1
      %p320 = scmp.eq.s32.totalorder %s25, 1
      %p321 = scmp.ne.s32.totalorder %s316, %s318
      %p322 = scmp.eq.s32.totalorder %s25, 0
      %p323 = por %p321, %p322
      %p324 = scmp.ne.s32.totalorder %s316, %s318
      %p325 = scmp.eq.s32.totalorder %s30, 1
      %p326 = por %p324, %p325
      %p327 = scmp.ne.s32.totalorder %s318, %s319
      %p328 = scmp.eq.s32.totalorder %s30, 0
      %p329 = por %p327, %p328
      %p330 = scmp.ne.s32.totalorder %s318, %s319
      %p331 = scmp.eq.s32.totalorder %s31, 1
      %p332 = por %p330, %p331
      %p334 = scmp.ne.s32.totalorder %s319, %s333
      %p335 = scmp.eq.s32.totalorder %s31, 0
      %p336 = por %p334, %p335
      %s337 = ssub.s32 %s25, %s32
      %p338 = scmp.eq.s32.totalorder %s337, 0
      %s340 = sadd.s32 %s339, 1
      %s341 = scalar_select %p338, %s339, %s340
      %p344 = pneg %p338
      %p345 = scmp.eq.s32.totalorder %s25, 1
      %p346 = por %p344, %p345
      %p347 = scmp.ne.s32.totalorder %s339, %s342
      %p348 = scmp.eq.s32.totalorder %s25, 0
      %p349 = por %p347, %p348
      %p350 = scmp.ne.s32.totalorder %s339, %s342
      %p351 = scmp.eq.s32.totalorder %s30, 1
      %p352 = por %p350, %p351
      %p353 = scmp.ne.s32.totalorder %s342, %s343
      %p354 = scmp.eq.s32.totalorder %s30, 0
      %p355 = por %p353, %p354
      %p356 = scmp.ne.s32.totalorder %s342, %s343
      %p357 = scmp.eq.s32.totalorder %s31, 1
      %p358 = por %p356, %p357
      %p360 = scmp.ne.s32.totalorder %s343, %s359
      %p361 = scmp.eq.s32.totalorder %s31, 0
      %p362 = por %p360, %p361
      %s363 = ssub.s32 %s25, %s32
      %p364 = scmp.eq.s32.totalorder %s363, 0
      %s366 = sadd.s32 %s365, 1
      %s367 = scalar_select %p364, %s365, %s366
      %p370 = pneg %p364
      %p371 = scmp.eq.s32.totalorder %s25, 1
      %p372 = por %p370, %p371
      %p373 = scmp.ne.s32.totalorder %s365, %s368
      %p374 = scmp.eq.s32.totalorder %s25, 0
      %p375 = por %p373, %p374
      %p376 = scmp.ne.s32.totalorder %s365, %s368
      %p377 = scmp.eq.s32.totalorder %s30, 1
      %p378 = por %p376, %p377
      %p379 = scmp.ne.s32.totalorder %s368, %s369
      %p380 = scmp.eq.s32.totalorder %s30, 0
      %p381 = por %p379, %p380
      %p382 = scmp.ne.s32.totalorder %s368, %s369
      %p383 = scmp.eq.s32.totalorder %s31, 1
      %p384 = por %p382, %p383
      %p386 = scmp.ne.s32.totalorder %s369, %s385
      %p387 = scmp.eq.s32.totalorder %s31, 0
      %p388 = por %p386, %p387
      %p389 = scmp.le.s32.totalorder 1, %s25
      %p390 = scmp.lt.s32.totalorder %s25, 3
      %p391 = pnand %p389, %p390
      %p392 = pneg %p391
      // Predicated region
      $region9: #{_lambda_.7} parent=5 // pred_check
        _
      $region10: #{_lambda_.7} parent=5 // pred_check_branch
        %394 = sbr.rel (%p391) target = $region12
      $region11: #{_lambda_.7} parent=5 // pred_region
        %s395 = ssub.s32 %s25, 1
        // Predicated region
        $region13: #{_lambda_.7} parent=11 // pred_check
          %p396 = pneg %p98
        $region14: #{_lambda_.7} parent=11 // pred_check_branch
          %398 = sbr.rel (%p396) target = $region16
        $region15: #{_lambda_.7} parent=11 // pred_region
          _
        $region16: #{_lambda_.7} parent=11 // pred_fallthru
          _
        // Predicated region
        $region17: #{_lambda_.7} parent=11 // pred_check
          %p399 = pneg %p119
        $region18: #{_lambda_.7} parent=11 // pred_check_branch
          %401 = sbr.rel (%p399) target = $region20
        $region19: #{_lambda_.7} parent=11 // pred_region
          _
        $region20: #{_lambda_.7} parent=11 // pred_fallthru
          _
        // Predicated region
        $region21: #{_lambda_.7} parent=11 // pred_check
          %p402 = pneg %p140
        $region22: #{_lambda_.7} parent=11 // pred_check_branch
          %404 = sbr.rel (%p402) target = $region24
        $region23: #{_lambda_.7} parent=11 // pred_region
          _
        $region24: #{_lambda_.7} parent=11 // pred_fallthru
          _
        // Predicated region
        $region25: #{_lambda_.7} parent=11 // pred_check
          %p405 = pneg %p161
        $region26: #{_lambda_.7} parent=11 // pred_check_branch
          %407 = sbr.rel (%p405) target = $region28
        $region27: #{_lambda_.7} parent=11 // pred_region
          _
        $region28: #{_lambda_.7} parent=11 // pred_fallthru
          _
        // Predicated region
        $region29: #{_lambda_.7} parent=11 // pred_check
          %p408 = pneg %p182
        $region30: #{_lambda_.7} parent=11 // pred_check_branch
          %410 = sbr.rel (%p408) target = $region32
        $region31: #{_lambda_.7} parent=11 // pred_region
          _
        $region32: #{_lambda_.7} parent=11 // pred_fallthru
          _
        // Predicated region
        $region33: #{_lambda_.7} parent=11 // pred_check
          %p411 = pneg %p203
        $region34: #{_lambda_.7} parent=11 // pred_check_branch
          %413 = sbr.rel (%p411) target = $region36
        $region35: #{_lambda_.7} parent=11 // pred_region
          _
        $region36: #{_lambda_.7} parent=11 // pred_fallthru
          _
        // Predicated region
        $region37: #{_lambda_.7} parent=11 // pred_check
          %p414 = pneg %p224
        $region38: #{_lambda_.7} parent=11 // pred_check_branch
          %416 = sbr.rel (%p414) target = $region40
        $region39: #{_lambda_.7} parent=11 // pred_region
          _
        $region40: #{_lambda_.7} parent=11 // pred_fallthru
          _
        // Predicated region
        $region41: #{_lambda_.7} parent=11 // pred_check
          %p417 = pneg %p245
        $region42: #{_lambda_.7} parent=11 // pred_check_branch
          %419 = sbr.rel (%p417) target = $region44
        $region43: #{_lambda_.7} parent=11 // pred_region
          _
        $region44: #{_lambda_.7} parent=11 // pred_fallthru
          _
        // Predicated region
        $region45: #{_lambda_.7} parent=11 // pred_check
          %p420 = pneg %p266
        $region46: #{_lambda_.7} parent=11 // pred_check_branch
          %422 = sbr.rel (%p420) target = $region48
        $region47: #{_lambda_.7} parent=11 // pred_region
          _
        $region48: #{_lambda_.7} parent=11 // pred_fallthru
          _
        // Predicated region
        $region49: #{_lambda_.7} parent=11 // pred_check
          %p423 = pneg %p287
        $region50: #{_lambda_.7} parent=11 // pred_check_branch
          %425 = sbr.rel (%p423) target = $region52
        $region51: #{_lambda_.7} parent=11 // pred_region
          _
        $region52: #{_lambda_.7} parent=11 // pred_fallthru
          _
        // Predicated region
        $region53: #{_lambda_.7} parent=11 // pred_check
          %p426 = pneg %p308
        $region54: #{_lambda_.7} parent=11 // pred_check_branch
          %428 = sbr.rel (%p426) target = $region56
        $region55: #{_lambda_.7} parent=11 // pred_region
          _
        $region56: #{_lambda_.7} parent=11 // pred_fallthru
          _
        // Predicated region
        $region57: #{_lambda_.7} parent=11 // pred_check
          %p429 = pneg %p329
        $region58: #{_lambda_.7} parent=11 // pred_check_branch
          %431 = sbr.rel (%p429) target = $region60
        $region59: #{_lambda_.7} parent=11 // pred_region
          _
        $region60: #{_lambda_.7} parent=11 // pred_fallthru
          _
      $region12: #{_lambda_.7} parent=5 // pred_fallthru
        _
      %p432 = scmp.lt.s32.totalorder %s25, 2
      // Predicated region
      $region61: #{_lambda_.7} parent=5 // pred_check
        %p433 = pneg %p432
      $region62: #{_lambda_.7} parent=5 // pred_check_branch
        %435 = sbr.rel (%p433) target = $region64
      $region63: #{_lambda_.7} parent=5 // pred_region
        // Predicated region
        $region65: #{_lambda_.7} parent=63 // pred_check
          %p436 = pneg %p45
        $region66: #{_lambda_.7} parent=63 // pred_check_branch
          %438 = sbr.rel (%p436) target = $region68
        $region67: #{_lambda_.7} parent=63 // pred_region
          %p439 = scmp.lt.s32.totalorder %s25, 1
          %s440 = scalar_select %p439, %s25, 1
          %s441 = smul.addr %s440, 8
          %s442 = scalar_lea.vmem %s0, %s441
        $region68: #{_lambda_.7} parent=63 // pred_fallthru
          _
        // Predicated region
        $region69: #{_lambda_.7} parent=63 // pred_check
          %p443 = pneg %p71
        $region70: #{_lambda_.7} parent=63 // pred_check_branch
          %445 = sbr.rel (%p443) target = $region72
        $region71: #{_lambda_.7} parent=63 // pred_region
          %p446 = scmp.lt.s32.totalorder %s25, 1
          %s447 = scalar_select %p446, %s25, 1
          %s448 = scalar_lea.vmem %s1, %s447
        $region72: #{_lambda_.7} parent=63 // pred_fallthru
          _
      $region64: #{_lambda_.7} parent=5 // pred_fallthru
        _
      %p449 = scmp.le.s32.totalorder 1, %s25
      %p450 = scmp.lt.s32.totalorder %s25, 3
      %p451 = pnand %p449, %p450
      %p452 = pneg %p451
      // Predicated region
      $region73: #{_lambda_.7} parent=5 // pred_check
        _
      $region74: #{_lambda_.7} parent=5 // pred_check_branch
        %454 = sbr.rel (%p451) target = $region76
      $region75: #{_lambda_.7} parent=5 // pred_region
        %s455 = ssub.s32 %s25, 1
        %p456 = scmp.lt.s32.totalorder %s30, 1
        %s457 = scalar_select %p456, %s30, 1
        %s458 = smul.addr %s457, 8
        %s459 = scalar_lea.vmem %s0, %s458
        %p460 = pneg %p51
        %p461 = pneg %p48
        %p462 = scmp.lt.s32.totalorder %s30, 1
        %s463 = scalar_select %p462, %s30, 1
        %s464 = scalar_lea.vmem %s1, %s463
        %p465 = pneg %p77
        %p466 = pneg %p74
        %p467 = pneg %p98
        %p468 = pneg %p95
        %p469 = pneg %p119
        %p470 = pneg %p116
        %p471 = pneg %p140
        %p472 = pneg %p137
        %p473 = pneg %p161
        %p474 = pneg %p158
        %p475 = pneg %p182
        %p476 = pneg %p179
        %p477 = pneg %p203
        %p478 = pneg %p200
        %p479 = pneg %p224
        %p480 = pneg %p221
        %p481 = pneg %p245
        %p482 = pneg %p242
        %p483 = pneg %p266
        %p484 = pneg %p263
        %p485 = pneg %p287
        %p486 = pneg %p284
        %p487 = pneg %p308
        %p488 = pneg %p305
        %p489 = pneg %p329
        %p490 = pneg %p326
        %p491 = pneg %p355
        %p492 = pneg %p352
        %p493 = scmp.lt.s32.totalorder %s30, 1
        %s494 = scalar_select %p493, %s30, 1
        %s495 = smul.addr %s494, 4
        %s496 = scalar_lea.vmem %s14, %s495
        %p497 = pneg %p381
        %p498 = pneg %p378
        %s499 = sand.u32 %s368, 1
        %s500 = scalar_lea.sflag [#allocation3], %s499
        %s501 = sand.u32 %s368, 1
        %s502 = smul.addr %s501, 32
        %s503 = scalar_lea.vmem [#allocation2], %s502
        %p504 = scmp.lt.s32.totalorder %s30, 1
        %s505 = scalar_select %p504, %s30, 1
        %s506 = smul.addr %s505, 8
        %s507 = scalar_lea.vmem %s0, %s506
        %p508 = scmp.lt.s32.totalorder %s30, 1
        %s509 = scalar_select %p508, %s30, 1
        %s510 = scalar_lea.vmem %s1, %s509
        %p511 = scmp.lt.s32.totalorder %s30, 1
        %s512 = scalar_select %p511, %s30, 1
        %s513 = smul.addr %s512, 4
        %s514 = scalar_lea.vmem %s14, %s513
        %v516 = vld [vmem:[%s507] sm:$0xff]
        %v517 = vld [vmem:[%s510] sm:$0x1]
        %vm518 = vcmp.ne.s32.totalorder %v517, 0
        %v519 = vpack.c.bf16 %v516, %v516
        %v520 = vld [vmem:[%s2] sm:$0xf]
        %v521 = vld [vmem:[%s2 + $0x4] sm:$0xf]
        %v522 = vld [vmem:[%s2 + $0x8] sm:$0xf]
        %v523 = vld [vmem:[%s2 + $0xc] sm:$0xf]
        %v524 = vld [vmem:[%s2 + $0x10] sm:$0xf]
        %v525 = vld [vmem:[%s2 + $0x14] sm:$0xf]
        %v526 = vld [vmem:[%s2 + $0x18] sm:$0xf]
        %v527 = vld [vmem:[%s2 + $0x1c] sm:$0xf]
        %v528 = vld [vmem:[%s2 + $0x20] sm:$0xf]
        %v529 = vld [vmem:[%s2 + $0x24] sm:$0xf]
        %v530 = vld [vmem:[%s2 + $0x28] sm:$0xf]
        %v531 = vld [vmem:[%s2 + $0x2c] sm:$0xf]
        %v532 = vld [vmem:[%s2 + $0x30] sm:$0xf]
        %v533 = vld [vmem:[%s2 + $0x34] sm:$0xf]
        %v534 = vld [vmem:[%s2 + $0x38] sm:$0xf]
        %v535 = vld [vmem:[%s2 + $0x3c] sm:$0xf]
        %v536 = vld [vmem:[%s2 + $0x40] sm:$0xf]
        %v537 = vld [vmem:[%s2 + $0x44] sm:$0xf]
        %v538 = vld [vmem:[%s2 + $0x48] sm:$0xf]
        %v539 = vld [vmem:[%s2 + $0x4c] sm:$0xf]
        %v540 = vld [vmem:[%s2 + $0x50] sm:$0xf]
        %v541 = vld [vmem:[%s2 + $0x54] sm:$0xf]
        %v542 = vld [vmem:[%s2 + $0x58] sm:$0xf]
        %v543 = vld [vmem:[%s2 + $0x5c] sm:$0xf]
        %v544 = vld [vmem:[%s2 + $0x60] sm:$0xf]
        %v545 = vld [vmem:[%s2 + $0x64] sm:$0xf]
        %v546 = vld [vmem:[%s2 + $0x68] sm:$0xf]
        %v547 = vld [vmem:[%s2 + $0x6c] sm:$0xf]
        %v548 = vld [vmem:[%s2 + $0x70] sm:$0xf]
        %v549 = vld [vmem:[%s2 + $0x74] sm:$0xf]
        %v550 = vld [vmem:[%s2 + $0x78] sm:$0xf]
        %v551 = vld [vmem:[%s2 + $0x7c] sm:$0xf]
        %v552 = vld [vmem:[%s3] sm:$0xf]
        %v553 = vld [vmem:[%s3 + $0x4] sm:$0xf]
        %v554 = vld [vmem:[%s3 + $0x8] sm:$0xf]
        %v555 = vld [vmem:[%s3 + $0xc] sm:$0xf]
        %v556 = vld [vmem:[%s3 + $0x10] sm:$0xf]
        %v557 = vld [vmem:[%s3 + $0x14] sm:$0xf]
        %v558 = vld [vmem:[%s3 + $0x18] sm:$0xf]
        %v559 = vld [vmem:[%s3 + $0x1c] sm:$0xf]
        %v560 = vld [vmem:[%s3 + $0x20] sm:$0xf]
        %v561 = vld [vmem:[%s3 + $0x24] sm:$0xf]
        %v562 = vld [vmem:[%s3 + $0x28] sm:$0xf]
        %v563 = vld [vmem:[%s3 + $0x2c] sm:$0xf]
        %v564 = vld [vmem:[%s3 + $0x30] sm:$0xf]
        %v565 = vld [vmem:[%s3 + $0x34] sm:$0xf]
        %v566 = vld [vmem:[%s3 + $0x38] sm:$0xf]
        %v567 = vld [vmem:[%s3 + $0x3c] sm:$0xf]
        %v568 = vld [vmem:[%s3 + $0x40] sm:$0xf]
        %v569 = vld [vmem:[%s3 + $0x44] sm:$0xf]
        %v570 = vld [vmem:[%s3 + $0x48] sm:$0xf]
        %v571 = vld [vmem:[%s3 + $0x4c] sm:$0xf]
        %v572 = vld [vmem:[%s3 + $0x50] sm:$0xf]
        %v573 = vld [vmem:[%s3 + $0x54] sm:$0xf]
        %v574 = vld [vmem:[%s3 + $0x58] sm:$0xf]
        %v575 = vld [vmem:[%s3 + $0x5c] sm:$0xf]
        %v576 = vld [vmem:[%s3 + $0x60] sm:$0xf]
        %v577 = vld [vmem:[%s3 + $0x64] sm:$0xf]
        %v578 = vld [vmem:[%s3 + $0x68] sm:$0xf]
        %v579 = vld [vmem:[%s3 + $0x6c] sm:$0xf]
        %v580 = vld [vmem:[%s3 + $0x70] sm:$0xf]
        %v581 = vld [vmem:[%s3 + $0x74] sm:$0xf]
        %v582 = vld [vmem:[%s3 + $0x78] sm:$0xf]
        %v583 = vld [vmem:[%s3 + $0x7c] sm:$0xf]
        %v584 = vld [vmem:[%s4] sm:$0xf]
        %v585 = vld [vmem:[%s4 + $0x4] sm:$0xf]
        %v586 = vld [vmem:[%s4 + $0x8] sm:$0xf]
        %v587 = vld [vmem:[%s4 + $0xc] sm:$0xf]
        %v588 = vld [vmem:[%s4 + $0x10] sm:$0xf]
        %v589 = vld [vmem:[%s4 + $0x14] sm:$0xf]
        %v590 = vld [vmem:[%s4 + $0x18] sm:$0xf]
        %v591 = vld [vmem:[%s4 + $0x1c] sm:$0xf]
        %v592 = vld [vmem:[%s4 + $0x20] sm:$0xf]
        %v593 = vld [vmem:[%s4 + $0x24] sm:$0xf]
        %v594 = vld [vmem:[%s4 + $0x28] sm:$0xf]
        %v595 = vld [vmem:[%s4 + $0x2c] sm:$0xf]
        %v596 = vld [vmem:[%s4 + $0x30] sm:$0xf]
        %v597 = vld [vmem:[%s4 + $0x34] sm:$0xf]
        %v598 = vld [vmem:[%s4 + $0x38] sm:$0xf]
        %v599 = vld [vmem:[%s4 + $0x3c] sm:$0xf]
        %v600 = vld [vmem:[%s4 + $0x40] sm:$0xf]
        %v601 = vld [vmem:[%s4 + $0x44] sm:$0xf]
        %v602 = vld [vmem:[%s4 + $0x48] sm:$0xf]
        %v603 = vld [vmem:[%s4 + $0x4c] sm:$0xf]
        %v604 = vld [vmem:[%s4 + $0x50] sm:$0xf]
        %v605 = vld [vmem:[%s4 + $0x54] sm:$0xf]
        %v606 = vld [vmem:[%s4 + $0x58] sm:$0xf]
        %v607 = vld [vmem:[%s4 + $0x5c] sm:$0xf]
        %v608 = vld [vmem:[%s4 + $0x60] sm:$0xf]
        %v609 = vld [vmem:[%s4 + $0x64] sm:$0xf]
        %v610 = vld [vmem:[%s4 + $0x68] sm:$0xf]
        %v611 = vld [vmem:[%s4 + $0x6c] sm:$0xf]
        %v612 = vld [vmem:[%s4 + $0x70] sm:$0xf]
        %v613 = vld [vmem:[%s4 + $0x74] sm:$0xf]
        %v614 = vld [vmem:[%s4 + $0x78] sm:$0xf]
        %v615 = vld [vmem:[%s4 + $0x7c] sm:$0xf]
        %v616 = vld [vmem:[%s5] sm:$0xf]
        %v617 = vld [vmem:[%s5 + $0x4] sm:$0xf]
        %v618 = vld [vmem:[%s5 + $0x8] sm:$0xf]
        %v619 = vld [vmem:[%s5 + $0xc] sm:$0xf]
        %v620 = vld [vmem:[%s5 + $0x10] sm:$0xf]
        %v621 = vld [vmem:[%s5 + $0x14] sm:$0xf]
        %v622 = vld [vmem:[%s5 + $0x18] sm:$0xf]
        %v623 = vld [vmem:[%s5 + $0x1c] sm:$0xf]
        %v624 = vld [vmem:[%s6] sm:$0x1]
        %v625 = vld [vmem:[%s7] sm:$0x1]
        %v634 = vunpack.c.l.b16 %v520
        %v635 = vunpack.c.l.b16 %v521
        %v636 = vunpack.c.l.b16 %v522
        %v637 = vunpack.c.l.b16 %v523
        %v638 = vunpack.c.l.b16 %v524
        %v639 = vunpack.c.l.b16 %v525
        %v640 = vunpack.c.l.b16 %v526
        %v641 = vunpack.c.l.b16 %v527
        %v642 = vpack.c.b16 %v635, %v634
        %v643 = vpack.c.b16 %v637, %v636
        %v644 = vpack.c.b16 %v639, %v638
        %v645 = vpack.c.b16 %v641, %v640
        %vm650 = vcmask 523264
        %v652 = vsel %vm650, %v519, 0
        %654 = vmatpush.bf16.msra.mxu0 0
        %655 = vmatpush.bf16.msra.mxu0 0
        %656 = vmatpush.bf16.msra.mxu0 0
        %657 = vmatpush.bf16.msra.mxu0 0
        %658 = vmatpush.bf16.msra.mxu0 %v645
        %659 = vmatpush.bf16.msra.mxu0 %v644
        %660 = vmatpush.bf16.msra.mxu0 %v643
        %661 = vmatpush.bf16.msra.mxu0 %v642
        %662 = vmatmul.bf16.gmra.mxu0 %v652
        %v663 = vpop.f32.mrf.mxu0
        %v664 = vadd.f32 0.0, %v663
        %v665 = vpop.f32.mrf.mxu0
        %666 = vdwg.mxu0
        %v675 = vunpack.c.l.b16 %v528
        %v676 = vunpack.c.l.b16 %v529
        %v677 = vunpack.c.l.b16 %v530
        %v678 = vunpack.c.l.b16 %v531
        %v679 = vunpack.c.l.b16 %v532
        %v680 = vunpack.c.l.b16 %v533
        %v681 = vunpack.c.l.b16 %v534
        %v682 = vunpack.c.l.b16 %v535
        %v683 = vpack.c.b16 %v676, %v675
        %v684 = vpack.c.b16 %v678, %v677
        %v685 = vpack.c.b16 %v680, %v679
        %v686 = vpack.c.b16 %v682, %v681
        %691 = vmatpush.bf16.msra.mxu0 0
        %692 = vmatpush.bf16.msra.mxu0 0
        %693 = vmatpush.bf16.msra.mxu0 0
        %694 = vmatpush.bf16.msra.mxu0 0
        %695 = vmatpush.bf16.msra.mxu0 %v686
        %696 = vmatpush.bf16.msra.mxu0 %v685
        %697 = vmatpush.bf16.msra.mxu0 %v684
        %698 = vmatpush.bf16.msra.mxu0 %v683
        %699 = vmatmul.bf16.gmra.mxu0 %v652
        %v700 = vpop.f32.mrf.mxu0
        %v701 = vadd.f32 0.0, %v700
        %v702 = vpop.f32.mrf.mxu0
        %703 = vdwg.mxu0
        %v712 = vunpack.c.l.b16 %v536
        %v713 = vunpack.c.l.b16 %v537
        %v714 = vunpack.c.l.b16 %v538
        %v715 = vunpack.c.l.b16 %v539
        %v716 = vunpack.c.l.b16 %v540
        %v717 = vunpack.c.l.b16 %v541
        %v718 = vunpack.c.l.b16 %v542
        %v719 = vunpack.c.l.b16 %v543
        %v720 = vpack.c.b16 %v713, %v712
        %v721 = vpack.c.b16 %v715, %v714
        %v722 = vpack.c.b16 %v717, %v716
        %v723 = vpack.c.b16 %v719, %v718
        %728 = vmatpush.bf16.msra.mxu0 0
        %729 = vmatpush.bf16.msra.mxu0 0
        %730 = vmatpush.bf16.msra.mxu0 0
        %731 = vmatpush.bf16.msra.mxu0 0
        %732 = vmatpush.bf16.msra.mxu0 %v723
        %733 = vmatpush.bf16.msra.mxu0 %v722
        %734 = vmatpush.bf16.msra.mxu0 %v721
        %735 = vmatpush.bf16.msra.mxu0 %v720
        %736 = vmatmul.bf16.gmra.mxu0 %v652
        %v737 = vpop.f32.mrf.mxu0
        %v738 = vadd.f32 0.0, %v737
        %v739 = vpop.f32.mrf.mxu0
        %740 = vdwg.mxu0
        %v749 = vunpack.c.l.b16 %v544
        %v750 = vunpack.c.l.b16 %v545
        %v751 = vunpack.c.l.b16 %v546
        %v752 = vunpack.c.l.b16 %v547
        %v753 = vunpack.c.l.b16 %v548
        %v754 = vunpack.c.l.b16 %v549
        %v755 = vunpack.c.l.b16 %v550
        %v756 = vunpack.c.l.b16 %v551
        %v757 = vpack.c.b16 %v750, %v749
        %v758 = vpack.c.b16 %v752, %v751
        %v759 = vpack.c.b16 %v754, %v753
        %v760 = vpack.c.b16 %v756, %v755
        %765 = vmatpush.bf16.msra.mxu0 0
        %766 = vmatpush.bf16.msra.mxu0 0
        %767 = vmatpush.bf16.msra.mxu0 0
        %768 = vmatpush.bf16.msra.mxu0 0
        %769 = vmatpush.bf16.msra.mxu0 %v760
        %770 = vmatpush.bf16.msra.mxu0 %v759
        %771 = vmatpush.bf16.msra.mxu0 %v758
        %772 = vmatpush.bf16.msra.mxu0 %v757
        %773 = vmatmul.bf16.gmra.mxu0 %v652
        %v774 = vpop.f32.mrf.mxu0
        %v775 = vadd.f32 0.0, %v774
        %v776 = vpop.f32.mrf.mxu0
        %777 = vdwg.mxu0
        %v778 = vpack.c.bf16 %v664, %v664
        %v779 = vpack.c.bf16 %v701, %v701
        %v780 = vpack.c.bf16 %v738, %v738
        %v781 = vpack.c.bf16 %v775, %v775
        %v790 = vunpack.c.l.b16 %v552
        %v791 = vunpack.c.l.b16 %v553
        %v792 = vunpack.c.l.b16 %v554
        %v793 = vunpack.c.l.b16 %v555
        %v794 = vunpack.c.l.b16 %v556
        %v795 = vunpack.c.l.b16 %v557
        %v796 = vunpack.c.l.b16 %v558
        %v797 = vunpack.c.l.b16 %v559
        %v798 = vpack.c.b16 %v791, %v790
        %v799 = vpack.c.b16 %v793, %v792
        %v800 = vpack.c.b16 %v795, %v794
        %v801 = vpack.c.b16 %v797, %v796
        %806 = vmatpush.bf16.msra.mxu0 0
        %807 = vmatpush.bf16.msra.mxu0 0
        %808 = vmatpush.bf16.msra.mxu0 0
        %809 = vmatpush.bf16.msra.mxu0 0
        %810 = vmatpush.bf16.msra.mxu0 %v801
        %811 = vmatpush.bf16.msra.mxu0 %v800
        %812 = vmatpush.bf16.msra.mxu0 %v799
        %813 = vmatpush.bf16.msra.mxu0 %v798
        %814 = vmatmul.bf16.gmra.mxu0 %v652
        %v815 = vpop.f32.mrf.mxu0
        %v816 = vadd.f32 0.0, %v815
        %v817 = vpop.f32.mrf.mxu0
        %818 = vdwg.mxu0
        %v827 = vunpack.c.l.b16 %v560
        %v828 = vunpack.c.l.b16 %v561
        %v829 = vunpack.c.l.b16 %v562
        %v830 = vunpack.c.l.b16 %v563
        %v831 = vunpack.c.l.b16 %v564
        %v832 = vunpack.c.l.b16 %v565
        %v833 = vunpack.c.l.b16 %v566
        %v834 = vunpack.c.l.b16 %v567
        %v835 = vpack.c.b16 %v828, %v827
        %v836 = vpack.c.b16 %v830, %v829
        %v837 = vpack.c.b16 %v832, %v831
        %v838 = vpack.c.b16 %v834, %v833
        %843 = vmatpush.bf16.msra.mxu0 0
        %844 = vmatpush.bf16.msra.mxu0 0
        %845 = vmatpush.bf16.msra.mxu0 0
        %846 = vmatpush.bf16.msra.mxu0 0
        %847 = vmatpush.bf16.msra.mxu0 %v838
        %848 = vmatpush.bf16.msra.mxu0 %v837
        %849 = vmatpush.bf16.msra.mxu0 %v836
        %850 = vmatpush.bf16.msra.mxu0 %v835
        %851 = vmatmul.bf16.gmra.mxu0 %v652
        %v852 = vpop.f32.mrf.mxu0
        %v853 = vadd.f32 0.0, %v852
        %v854 = vpop.f32.mrf.mxu0
        %855 = vdwg.mxu0
        %v864 = vunpack.c.l.b16 %v568
        %v865 = vunpack.c.l.b16 %v569
        %v866 = vunpack.c.l.b16 %v570
        %v867 = vunpack.c.l.b16 %v571
        %v868 = vunpack.c.l.b16 %v572
        %v869 = vunpack.c.l.b16 %v573
        %v870 = vunpack.c.l.b16 %v574
        %v871 = vunpack.c.l.b16 %v575
        %v872 = vpack.c.b16 %v865, %v864
        %v873 = vpack.c.b16 %v867, %v866
        %v874 = vpack.c.b16 %v869, %v868
        %v875 = vpack.c.b16 %v871, %v870
        %880 = vmatpush.bf16.msra.mxu0 0
        %881 = vmatpush.bf16.msra.mxu0 0
        %882 = vmatpush.bf16.msra.mxu0 0
        %883 = vmatpush.bf16.msra.mxu0 0
        %884 = vmatpush.bf16.msra.mxu0 %v875
        %885 = vmatpush.bf16.msra.mxu0 %v874
        %886 = vmatpush.bf16.msra.mxu0 %v873
        %887 = vmatpush.bf16.msra.mxu0 %v872
        %888 = vmatmul.bf16.gmra.mxu0 %v652
        %v889 = vpop.f32.mrf.mxu0
        %v890 = vadd.f32 0.0, %v889
        %v891 = vpop.f32.mrf.mxu0
        %892 = vdwg.mxu0
        %v901 = vunpack.c.l.b16 %v576
        %v902 = vunpack.c.l.b16 %v577
        %v903 = vunpack.c.l.b16 %v578
        %v904 = vunpack.c.l.b16 %v579
        %v905 = vunpack.c.l.b16 %v580
        %v906 = vunpack.c.l.b16 %v581
        %v907 = vunpack.c.l.b16 %v582
        %v908 = vunpack.c.l.b16 %v583
        %v909 = vpack.c.b16 %v902, %v901
        %v910 = vpack.c.b16 %v904, %v903
        %v911 = vpack.c.b16 %v906, %v905
        %v912 = vpack.c.b16 %v908, %v907
        %917 = vmatpush.bf16.msra.mxu0 0
        %918 = vmatpush.bf16.msra.mxu0 0
        %919 = vmatpush.bf16.msra.mxu0 0
        %920 = vmatpush.bf16.msra.mxu0 0
        %921 = vmatpush.bf16.msra.mxu0 %v912
        %922 = vmatpush.bf16.msra.mxu0 %v911
        %923 = vmatpush.bf16.msra.mxu0 %v910
        %924 = vmatpush.bf16.msra.mxu0 %v909
        %925 = vmatmul.bf16.gmra.mxu0 %v652
        %v926 = vpop.f32.mrf.mxu0
        %v927 = vadd.f32 0.0, %v926
        %v928 = vpop.f32.mrf.mxu0
        %929 = vdwg.mxu0
        %v930 = vpack.c.bf16 %v816, %v816
        %v931 = vpack.c.bf16 %v853, %v853
        %v932 = vpack.c.bf16 %v890, %v890
        %v933 = vpack.c.bf16 %v927, %v927
        %v942 = vunpack.c.l.b16 %v584
        %v943 = vunpack.c.l.b16 %v585
        %v944 = vunpack.c.l.b16 %v586
        %v945 = vunpack.c.l.b16 %v587
        %v946 = vunpack.c.l.b16 %v588
        %v947 = vunpack.c.l.b16 %v589
        %v948 = vunpack.c.l.b16 %v590
        %v949 = vunpack.c.l.b16 %v591
        %v950 = vpack.c.b16 %v943, %v942
        %v951 = vpack.c.b16 %v945, %v944
        %v952 = vpack.c.b16 %v947, %v946
        %v953 = vpack.c.b16 %v949, %v948
        %958 = vmatpush.bf16.msra.mxu0 0
        %959 = vmatpush.bf16.msra.mxu0 0
        %960 = vmatpush.bf16.msra.mxu0 0
        %961 = vmatpush.bf16.msra.mxu0 0
        %962 = vmatpush.bf16.msra.mxu0 %v953
        %963 = vmatpush.bf16.msra.mxu0 %v952
        %964 = vmatpush.bf16.msra.mxu0 %v951
        %965 = vmatpush.bf16.msra.mxu0 %v950
        %966 = vmatmul.bf16.gmra.mxu0 %v652
        %v967 = vpop.f32.mrf.mxu0
        %v968 = vadd.f32 0.0, %v967
        %v969 = vpop.f32.mrf.mxu0
        %970 = vdwg.mxu0
        %v979 = vunpack.c.l.b16 %v592
        %v980 = vunpack.c.l.b16 %v593
        %v981 = vunpack.c.l.b16 %v594
        %v982 = vunpack.c.l.b16 %v595
        %v983 = vunpack.c.l.b16 %v596
        %v984 = vunpack.c.l.b16 %v597
        %v985 = vunpack.c.l.b16 %v598
        %v986 = vunpack.c.l.b16 %v599
        %v987 = vpack.c.b16 %v980, %v979
        %v988 = vpack.c.b16 %v982, %v981
        %v989 = vpack.c.b16 %v984, %v983
        %v990 = vpack.c.b16 %v986, %v985
        %995 = vmatpush.bf16.msra.mxu0 0
        %996 = vmatpush.bf16.msra.mxu0 0
        %997 = vmatpush.bf16.msra.mxu0 0
        %998 = vmatpush.bf16.msra.mxu0 0
        %999 = vmatpush.bf16.msra.mxu0 %v990
        %1000 = vmatpush.bf16.msra.mxu0 %v989
        %1001 = vmatpush.bf16.msra.mxu0 %v988
        %1002 = vmatpush.bf16.msra.mxu0 %v987
        %1003 = vmatmul.bf16.gmra.mxu0 %v652
        %v1004 = vpop.f32.mrf.mxu0
        %v1005 = vadd.f32 0.0, %v1004
        %v1006 = vpop.f32.mrf.mxu0
        %1007 = vdwg.mxu0
        %v1016 = vunpack.c.l.b16 %v600
        %v1017 = vunpack.c.l.b16 %v601
        %v1018 = vunpack.c.l.b16 %v602
        %v1019 = vunpack.c.l.b16 %v603
        %v1020 = vunpack.c.l.b16 %v604
        %v1021 = vunpack.c.l.b16 %v605
        %v1022 = vunpack.c.l.b16 %v606
        %v1023 = vunpack.c.l.b16 %v607
        %v1024 = vpack.c.b16 %v1017, %v1016
        %v1025 = vpack.c.b16 %v1019, %v1018
        %v1026 = vpack.c.b16 %v1021, %v1020
        %v1027 = vpack.c.b16 %v1023, %v1022
        %1032 = vmatpush.bf16.msra.mxu0 0
        %1033 = vmatpush.bf16.msra.mxu0 0
        %1034 = vmatpush.bf16.msra.mxu0 0
        %1035 = vmatpush.bf16.msra.mxu0 0
        %1036 = vmatpush.bf16.msra.mxu0 %v1027
        %1037 = vmatpush.bf16.msra.mxu0 %v1026
        %1038 = vmatpush.bf16.msra.mxu0 %v1025
        %1039 = vmatpush.bf16.msra.mxu0 %v1024
        %1040 = vmatmul.bf16.gmra.mxu0 %v652
        %v1041 = vpop.f32.mrf.mxu0
        %v1042 = vadd.f32 0.0, %v1041
        %v1043 = vpop.f32.mrf.mxu0
        %1044 = vdwg.mxu0
        %v1053 = vunpack.c.l.b16 %v608
        %v1054 = vunpack.c.l.b16 %v609
        %v1055 = vunpack.c.l.b16 %v610
        %v1056 = vunpack.c.l.b16 %v611
        %v1057 = vunpack.c.l.b16 %v612
        %v1058 = vunpack.c.l.b16 %v613
        %v1059 = vunpack.c.l.b16 %v614
        %v1060 = vunpack.c.l.b16 %v615
        %v1061 = vpack.c.b16 %v1054, %v1053
        %v1062 = vpack.c.b16 %v1056, %v1055
        %v1063 = vpack.c.b16 %v1058, %v1057
        %v1064 = vpack.c.b16 %v1060, %v1059
        %1069 = vmatpush.bf16.msra.mxu0 0
        %1070 = vmatpush.bf16.msra.mxu0 0
        %1071 = vmatpush.bf16.msra.mxu0 0
        %1072 = vmatpush.bf16.msra.mxu0 0
        %1073 = vmatpush.bf16.msra.mxu0 %v1064
        %1074 = vmatpush.bf16.msra.mxu0 %v1063
        %1075 = vmatpush.bf16.msra.mxu0 %v1062
        %1076 = vmatpush.bf16.msra.mxu0 %v1061
        %1077 = vmatmul.bf16.gmra.mxu0 %v652
        %v1078 = vpop.f32.mrf.mxu0
        %v1079 = vadd.f32 0.0, %v1078
        %v1080 = vpop.f32.mrf.mxu0
        %1081 = vdwg.mxu0
        %v1082 = vpack.c.bf16 %v968, %v968
        %v1083 = vpack.c.bf16 %v1005, %v1005
        %v1084 = vpack.c.bf16 %v1042, %v1042
        %v1085 = vpack.c.bf16 %v1079, %v1079
        %vm1086 = vcmask 130048
        %v1088 = vsel %vm1086, %v778, 0
        %v1091 = vsel %vm1086, %v930, 0
        %1093 = vmatpush.bf16.xpose.msra.mxu0 0
        %1094 = vmatpush.bf16.xpose.msra.mxu0 0
        %1095 = vmatpush.bf16.xpose.msra.mxu0 0
        %1096 = vmatpush.bf16.xpose.msra.mxu0 0
        %1097 = vmatpush.bf16.xpose.msra.mxu0 0
        %1098 = vmatpush.bf16.xpose.msra.mxu0 0
        %1099 = vmatpush.bf16.xpose.msra.mxu0 0
        %1100 = vmatpush.bf16.xpose.msra.mxu0 %v1091
        %1101 = vmatmul.bf16.gmra.mxu0 %v1088
        %v1102 = vpop.f32.mrf.mxu0
        %v1103 = vadd.f32 0.0, %v1102
        %v1104 = vpop.f32.mrf.mxu0
        %1105 = vdwg.mxu0
        %v1107 = vsel %vm1086, %v779, 0
        %v1110 = vsel %vm1086, %v931, 0
        %1112 = vmatpush.bf16.xpose.msra.mxu0 0
        %1113 = vmatpush.bf16.xpose.msra.mxu0 0
        %1114 = vmatpush.bf16.xpose.msra.mxu0 0
        %1115 = vmatpush.bf16.xpose.msra.mxu0 0
        %1116 = vmatpush.bf16.xpose.msra.mxu0 0
        %1117 = vmatpush.bf16.xpose.msra.mxu0 0
        %1118 = vmatpush.bf16.xpose.msra.mxu0 0
        %1119 = vmatpush.bf16.xpose.msra.mxu0 %v1110
        %1120 = vmatmul.bf16.gmra.mxu0 %v1107
        %v1121 = vpop.f32.mrf.mxu0
        %v1122 = vadd.f32 0.0, %v1121
        %v1123 = vpop.f32.mrf.mxu0
        %1124 = vdwg.mxu0
        %v1126 = vsel %vm1086, %v780, 0
        %v1129 = vsel %vm1086, %v932, 0
        %1131 = vmatpush.bf16.xpose.msra.mxu0 0
        %1132 = vmatpush.bf16.xpose.msra.mxu0 0
        %1133 = vmatpush.bf16.xpose.msra.mxu0 0
        %1134 = vmatpush.bf16.xpose.msra.mxu0 0
        %1135 = vmatpush.bf16.xpose.msra.mxu0 0
        %1136 = vmatpush.bf16.xpose.msra.mxu0 0
        %1137 = vmatpush.bf16.xpose.msra.mxu0 0
        %1138 = vmatpush.bf16.xpose.msra.mxu0 %v1129
        %1139 = vmatmul.bf16.gmra.mxu0 %v1126
        %v1140 = vpop.f32.mrf.mxu0
        %v1141 = vadd.f32 0.0, %v1140
        %v1142 = vpop.f32.mrf.mxu0
        %1143 = vdwg.mxu0
        %v1145 = vsel %vm1086, %v781, 0
        %v1148 = vsel %vm1086, %v933, 0
        %1150 = vmatpush.bf16.xpose.msra.mxu0 0
        %1151 = vmatpush.bf16.xpose.msra.mxu0 0
        %1152 = vmatpush.bf16.xpose.msra.mxu0 0
        %1153 = vmatpush.bf16.xpose.msra.mxu0 0
        %1154 = vmatpush.bf16.xpose.msra.mxu0 0
        %1155 = vmatpush.bf16.xpose.msra.mxu0 0
        %1156 = vmatpush.bf16.xpose.msra.mxu0 0
        %1157 = vmatpush.bf16.xpose.msra.mxu0 %v1148
        %1158 = vmatmul.bf16.gmra.mxu0 %v1145
        %v1159 = vpop.f32.mrf.mxu0
        %v1160 = vadd.f32 0.0, %v1159
        %v1161 = vpop.f32.mrf.mxu0
        %1162 = vdwg.mxu0
        %v1163 = vsel %vm518, 1, 0
        %v1164 = vperm.slane %v1163, 0
        %vm1165 = vcmp.eq.s32.totalorder %v1164, 1
        %v1166 = vsel %vm1165, -1e+09, %v1103
        %v1167 = vsel %vm1165, -1e+09, %v1122
        %v1168 = vsel %vm1165, -1e+09, %v1141
        %v1169 = vsel %vm1165, -1e+09, %v1160
        %vm1170 = vcmask 64512
        %v1171 = vsel %vm1170, %v1166, -inf
        %1172 = vmax.xlane.f32.xlu0 %v1171
        %v1173 = vpop.xlane.xlu0 %1172
        %v1174 = vsel %vm1170, %v1167, -inf
        %1175 = vmax.xlane.f32.xlu0 %v1174
        %v1176 = vpop.xlane.xlu0 %1175
        %v1177 = vsel %vm1170, %v1168, -inf
        %1178 = vmax.xlane.f32.xlu0 %v1177
        %v1179 = vpop.xlane.xlu0 %1178
        %v1180 = vsel %vm1170, %v1169, -inf
        %1181 = vmax.xlane.f32.xlu0 %v1180
        %v1182 = vpop.xlane.xlu0 %1181
        %v1183 = vsub.f32 %v1166, %v1173
        %v1184 = vsub.f32 %v1167, %v1176
        %v1185 = vsub.f32 %v1168, %v1179
        %v1186 = vsub.f32 %v1169, %v1182
        %v1187 = vmul.f32 %v1183, 1.442695
        %v1188 = vpow.pop %v1187
        %v1189 = vmul.f32 %v1184, 1.442695
        %v1190 = vpow.pop %v1189
        %v1191 = vmul.f32 %v1185, 1.442695
        %v1192 = vpow.pop %v1191
        %v1193 = vmul.f32 %v1186, 1.442695
        %v1194 = vpow.pop %v1193
        %v1195 = vsel %vm1170, %v1188, 0.0
        %1196 = vadd.xlane.f32.xlu0 %v1195
        %v1197 = vpop.xlane.xlu0 %1196
        %v1198 = vsel %vm1170, %v1190, 0.0
        %1199 = vadd.xlane.f32.xlu0 %v1198
        %v1200 = vpop.xlane.xlu0 %1199
        %v1201 = vsel %vm1170, %v1192, 0.0
        %1202 = vadd.xlane.f32.xlu0 %v1201
        %v1203 = vpop.xlane.xlu0 %1202
        %v1204 = vsel %vm1170, %v1194, 0.0
        %1205 = vadd.xlane.f32.xlu0 %v1204
        %v1206 = vpop.xlane.xlu0 %1205
        %v1207 = vrcp.pop %v1197
        %v1208 = vmul.f32 %v1197, %v1207
        %v1209 = vsub.f32 1.0, %v1208
        %v1210 = vmul.f32 %v1207, %v1209
        %v1211 = vadd.f32 %v1207, %v1210
        %vm1212 = vweird.f32 %v1197
        %vm1213 = vweird.f32 %v1207
        %vm1214 = vmor %vm1212, %vm1213
        %v1215 = vsel %vm1214, %v1207, %v1211
        %v1216 = vand.u32 2147483647, %v1197
        %vm1217 = vcmp.eq.f32.partialorder %v1216, 8.507059e+37
        %v1218 = vand.u32 %v1197, 2147483648
        %v1219 = vor.u32 1.1754944e-38, %v1218
        %v1220 = vsel %vm1217, %v1219, %v1215
        %v1221 = vmul.f32 %v1188, %v1220
        %v1222 = vrcp.pop %v1200
        %v1223 = vmul.f32 %v1200, %v1222
        %v1224 = vsub.f32 1.0, %v1223
        %v1225 = vmul.f32 %v1222, %v1224
        %v1226 = vadd.f32 %v1222, %v1225
        %vm1227 = vweird.f32 %v1200
        %vm1228 = vweird.f32 %v1222
        %vm1229 = vmor %vm1227, %vm1228
        %v1230 = vsel %vm1229, %v1222, %v1226
        %v1231 = vand.u32 2147483647, %v1200
        %vm1232 = vcmp.eq.f32.partialorder %v1231, 8.507059e+37
        %v1233 = vand.u32 %v1200, 2147483648
        %v1234 = vor.u32 1.1754944e-38, %v1233
        %v1235 = vsel %vm1232, %v1234, %v1230
        %v1236 = vmul.f32 %v1190, %v1235
        %v1237 = vrcp.pop %v1203
        %v1238 = vmul.f32 %v1203, %v1237
        %v1239 = vsub.f32 1.0, %v1238
        %v1240 = vmul.f32 %v1237, %v1239
        %v1241 = vadd.f32 %v1237, %v1240
        %vm1242 = vweird.f32 %v1203
        %vm1243 = vweird.f32 %v1237
        %vm1244 = vmor %vm1242, %vm1243
        %v1245 = vsel %vm1244, %v1237, %v1241
        %v1246 = vand.u32 2147483647, %v1203
        %vm1247 = vcmp.eq.f32.partialorder %v1246, 8.507059e+37
        %v1248 = vand.u32 %v1203, 2147483648
        %v1249 = vor.u32 1.1754944e-38, %v1248
        %v1250 = vsel %vm1247, %v1249, %v1245
        %v1251 = vmul.f32 %v1192, %v1250
        %v1252 = vrcp.pop %v1206
        %v1253 = vmul.f32 %v1206, %v1252
        %v1254 = vsub.f32 1.0, %v1253
        %v1255 = vmul.f32 %v1252, %v1254
        %v1256 = vadd.f32 %v1252, %v1255
        %vm1257 = vweird.f32 %v1206
        %vm1258 = vweird.f32 %v1252
        %vm1259 = vmor %vm1257, %vm1258
        %v1260 = vsel %vm1259, %v1252, %v1256
        %v1261 = vand.u32 2147483647, %v1206
        %vm1262 = vcmp.eq.f32.partialorder %v1261, 8.507059e+37
        %v1263 = vand.u32 %v1206, 2147483648
        %v1264 = vor.u32 1.1754944e-38, %v1263
        %v1265 = vsel %vm1262, %v1264, %v1260
        %v1266 = vmul.f32 %v1194, %v1265
        %v1267 = vpack.c.bf16 %v1221, %v1221
        %v1268 = vpack.c.bf16 %v1236, %v1236
        %v1269 = vpack.c.bf16 %v1251, %v1251
        %v1270 = vpack.c.bf16 %v1266, %v1266
        %v1272 = vsel %vm1170, %v1267, 0
        %vm1274 = vcmask 1043456
        %v1276 = vsel %vm1274, %v1082, 0
        %1278 = vmatpush.bf16.msra.mxu0 0
        %1279 = vmatpush.bf16.msra.mxu0 0
        %1280 = vmatpush.bf16.msra.mxu0 0
        %1281 = vmatpush.bf16.msra.mxu0 0
        %1282 = vmatpush.bf16.msra.mxu0 0
        %1283 = vmatpush.bf16.msra.mxu0 0
        %1284 = vmatpush.bf16.msra.mxu0 0
        %1285 = vmatpush.bf16.msra.mxu0 %v1276
        %1286 = vmatmul.bf16.gmra.mxu0 %v1272
        %v1287 = vpop.f32.mrf.mxu0
        %v1288 = vadd.f32 0.0, %v1287
        %v1289 = vpop.f32.mrf.mxu0
        %1290 = vdwg.mxu0
        %v1292 = vsel %vm1170, %v1268, 0
        %v1295 = vsel %vm1274, %v1083, 0
        %1297 = vmatpush.bf16.msra.mxu0 0
        %1298 = vmatpush.bf16.msra.mxu0 0
        %1299 = vmatpush.bf16.msra.mxu0 0
        %1300 = vmatpush.bf16.msra.mxu0 0
        %1301 = vmatpush.bf16.msra.mxu0 0
        %1302 = vmatpush.bf16.msra.mxu0 0
        %1303 = vmatpush.bf16.msra.mxu0 0
        %1304 = vmatpush.bf16.msra.mxu0 %v1295
        %1305 = vmatmul.bf16.gmra.mxu0 %v1292
        %v1306 = vpop.f32.mrf.mxu0
        %v1307 = vadd.f32 0.0, %v1306
        %v1308 = vpop.f32.mrf.mxu0
        %1309 = vdwg.mxu0
        %v1311 = vsel %vm1170, %v1269, 0
        %v1314 = vsel %vm1274, %v1084, 0
        %1316 = vmatpush.bf16.msra.mxu0 0
        %1317 = vmatpush.bf16.msra.mxu0 0
        %1318 = vmatpush.bf16.msra.mxu0 0
        %1319 = vmatpush.bf16.msra.mxu0 0
        %1320 = vmatpush.bf16.msra.mxu0 0
        %1321 = vmatpush.bf16.msra.mxu0 0
        %1322 = vmatpush.bf16.msra.mxu0 0
        %1323 = vmatpush.bf16.msra.mxu0 %v1314
        %1324 = vmatmul.bf16.gmra.mxu0 %v1311
        %v1325 = vpop.f32.mrf.mxu0
        %v1326 = vadd.f32 0.0, %v1325
        %v1327 = vpop.f32.mrf.mxu0
        %1328 = vdwg.mxu0
        %v1330 = vsel %vm1170, %v1270, 0
        %v1333 = vsel %vm1274, %v1085, 0
        %1335 = vmatpush.bf16.msra.mxu0 0
        %1336 = vmatpush.bf16.msra.mxu0 0
        %1337 = vmatpush.bf16.msra.mxu0 0
        %1338 = vmatpush.bf16.msra.mxu0 0
        %1339 = vmatpush.bf16.msra.mxu0 0
        %1340 = vmatpush.bf16.msra.mxu0 0
        %1341 = vmatpush.bf16.msra.mxu0 0
        %1342 = vmatpush.bf16.msra.mxu0 %v1333
        %1343 = vmatmul.bf16.gmra.mxu0 %v1330
        %v1344 = vpop.f32.mrf.mxu0
        %v1345 = vadd.f32 0.0, %v1344
        %v1346 = vpop.f32.mrf.mxu0
        %1347 = vdwg.mxu0
        %v1348 = vpack.c.bf16 %v1288, %v1288
        %v1349 = vpack.c.bf16 %v1307, %v1307
        %v1350 = vpack.c.bf16 %v1326, %v1326
        %v1351 = vpack.c.bf16 %v1345, %v1345
        %v1354 = vunpack.c.l.b16 %v616
        %v1355 = vunpack.c.l.b16 %v617
        %v1356 = vpack.c.b16 %v1355, %v1354
        %v1359 = vsel %vm1086, %v1348, 0
        %1361 = vmatpush.bf16.msra.mxu0 0
        %1362 = vmatpush.bf16.msra.mxu0 0
        %1363 = vmatpush.bf16.msra.mxu0 0
        %1364 = vmatpush.bf16.msra.mxu0 0
        %1365 = vmatpush.bf16.msra.mxu0 0
        %1366 = vmatpush.bf16.msra.mxu0 0
        %1367 = vmatpush.bf16.msra.mxu0 0
        %1368 = vmatpush.bf16.msra.mxu0 %v1356
        %1369 = vmatmul.bf16.gmra.mxu0 %v1359
        %v1370 = vpop.f32.mrf.mxu0
        %v1371 = vadd.f32 0.0, %v1370
        %v1372 = vpop.f32.mrf.mxu0
        %1373 = vdwg.mxu0
        %v1376 = vunpack.c.l.b16 %v618
        %v1377 = vunpack.c.l.b16 %v619
        %v1378 = vpack.c.b16 %v1377, %v1376
        %v1381 = vsel %vm1086, %v1349, 0
        %1383 = vmatpush.bf16.msra.mxu0 0
        %1384 = vmatpush.bf16.msra.mxu0 0
        %1385 = vmatpush.bf16.msra.mxu0 0
        %1386 = vmatpush.bf16.msra.mxu0 0
        %1387 = vmatpush.bf16.msra.mxu0 0
        %1388 = vmatpush.bf16.msra.mxu0 0
        %1389 = vmatpush.bf16.msra.mxu0 0
        %1390 = vmatpush.bf16.msra.mxu0 %v1378
        %1391 = vmatmul.bf16.gmra.mxu0 %v1381
        %v1392 = vpop.f32.mrf.mxu0
        %v1393 = vadd.f32 0.0, %v1392
        %v1394 = vpop.f32.mrf.mxu0
        %1395 = vdwg.mxu0
        %v1398 = vunpack.c.l.b16 %v620
        %v1399 = vunpack.c.l.b16 %v621
        %v1400 = vpack.c.b16 %v1399, %v1398
        %v1403 = vsel %vm1086, %v1350, 0
        %1405 = vmatpush.bf16.msra.mxu0 0
        %1406 = vmatpush.bf16.msra.mxu0 0
        %1407 = vmatpush.bf16.msra.mxu0 0
        %1408 = vmatpush.bf16.msra.mxu0 0
        %1409 = vmatpush.bf16.msra.mxu0 0
        %1410 = vmatpush.bf16.msra.mxu0 0
        %1411 = vmatpush.bf16.msra.mxu0 0
        %1412 = vmatpush.bf16.msra.mxu0 %v1400
        %1413 = vmatmul.bf16.gmra.mxu0 %v1403
        %v1414 = vpop.f32.mrf.mxu0
        %v1415 = vadd.f32 0.0, %v1414
        %v1416 = vpop.f32.mrf.mxu0
        %1417 = vdwg.mxu0
        %v1420 = vunpack.c.l.b16 %v622
        %v1421 = vunpack.c.l.b16 %v623
        %v1422 = vpack.c.b16 %v1421, %v1420
        %v1425 = vsel %vm1086, %v1351, 0
        %1427 = vmatpush.bf16.msra.mxu0 0
        %1428 = vmatpush.bf16.msra.mxu0 0
        %1429 = vmatpush.bf16.msra.mxu0 0
        %1430 = vmatpush.bf16.msra.mxu0 0
        %1431 = vmatpush.bf16.msra.mxu0 0
        %1432 = vmatpush.bf16.msra.mxu0 0
        %1433 = vmatpush.bf16.msra.mxu0 0
        %1434 = vmatpush.bf16.msra.mxu0 %v1422
        %1435 = vmatmul.bf16.gmra.mxu0 %v1425
        %v1436 = vpop.f32.mrf.mxu0
        %v1437 = vadd.f32 0.0, %v1436
        %v1438 = vpop.f32.mrf.mxu0
        %1439 = vdwg.mxu0
        %v1440 = vadd.f32 %v1371, %v1393
        %v1441 = vadd.f32 %v1440, %v1415
        %v1442 = vadd.f32 %v1441, %v1437
        %v1443 = vadd.f32 %v1442, %v516
        %v1444 = vsel %vm650, %v1443, 0.0
        %1445 = vadd.xlane.f32.xlu0 %v1444
        %v1446 = vpop.xlane.xlu0 %1445
        %v1447 = vrcp.pop 64.0
        %v1448 = vmul.f32 64.0, %v1447
        %v1449 = vsub.f32 1.0, %v1448
        %v1450 = vmul.f32 %v1447, %v1449
        %v1451 = vadd.f32 %v1447, %v1450
        %vm1452 = vweird.f32 %v1447
        %v1453 = vsel %vm1452, %v1447, %v1451
        %v1454 = vmul.f32 %v1446, %v1453
        %v1455 = vsub.f32 %v1443, %v1454
        %v1456 = vmul.f32 %v1455, %v1455
        %v1457 = vsel %vm650, %v1456, 0.0
        %1458 = vadd.xlane.f32.xlu0 %v1457
        %v1459 = vpop.xlane.xlu0 %1458
        %v1460 = vmul.f32 %v1459, %v1453
        %v1461 = vadd.f32 %v1460, 1e-06
        %v1462 = vrsqrt.pop %v1461
        %v1463 = vmul.f32 %v1462, %v1461
        %v1464 = vmul.f32 %v1463, %v1462
        %v1465 = vmul.f32 0.5, %v1464
        %v1466 = vsub.f32 1.5, %v1465
        %v1467 = vmul.f32 %v1462, %v1466
        %vm1468 = vweird.f32 %v1461
        %vm1469 = vweird.f32 %v1462
        %vm1470 = vmor %vm1468, %vm1469
        %v1471 = vsel %vm1470, %v1462, %v1467
        %v1472 = vmul.f32 %v1455, %v1471
        %v1474 = vperm.slane %v624, 0
        %v1476 = vmul.f32 %v1472, %v1474
        %v1478 = vperm.slane %v625, 0
        %v1480 = vadd.f32 %v1476, %v1478
        %v1481 = vld [vmem:[%s8] sm:$0xf]
        %v1482 = vld [vmem:[%s8 + $0x4] sm:$0xf]
        %v1483 = vld [vmem:[%s8 + $0x8] sm:$0xf]
        %v1484 = vld [vmem:[%s8 + $0xc] sm:$0xf]
        %v1485 = vld [vmem:[%s8 + $0x10] sm:$0xf]
        %v1486 = vld [vmem:[%s8 + $0x14] sm:$0xf]
        %v1487 = vld [vmem:[%s8 + $0x18] sm:$0xf]
        %v1488 = vld [vmem:[%s8 + $0x1c] sm:$0xf]
        %v1489 = vld [vmem:[%s9] sm:$0x1]
        %v1490 = vld [vmem:[%s10] sm:$0xf]
        %v1491 = vld [vmem:[%s10 + $0x4] sm:$0xf]
        %v1492 = vld [vmem:[%s10 + $0x8] sm:$0xf]
        %v1493 = vld [vmem:[%s10 + $0xc] sm:$0xf]
        %v1494 = vld [vmem:[%s10 + $0x10] sm:$0xf]
        %v1495 = vld [vmem:[%s10 + $0x14] sm:$0xf]
        %v1496 = vld [vmem:[%s10 + $0x18] sm:$0xf]
        %v1497 = vld [vmem:[%s10 + $0x1c] sm:$0xf]
        %v1498 = vld [vmem:[%s10 + $0x20] sm:$0xf]
        %v1499 = vld [vmem:[%s10 + $0x24] sm:$0xf]
        %v1500 = vld [vmem:[%s10 + $0x28] sm:$0xf]
        %v1501 = vld [vmem:[%s10 + $0x2c] sm:$0xf]
        %v1502 = vld [vmem:[%s10 + $0x30] sm:$0xf]
        %v1503 = vld [vmem:[%s10 + $0x34] sm:$0xf]
        %v1504 = vld [vmem:[%s10 + $0x38] sm:$0xf]
        %v1505 = vld [vmem:[%s10 + $0x3c] sm:$0xf]
        %v1506 = vld [vmem:[%s11] sm:$0x1]
        %v1507 = vld [vmem:[%s12] sm:$0x1]
        %v1508 = vld [vmem:[%s13] sm:$0x1]
        %v1509 = vpack.c.bf16 %v1480, %v1480
        %v1511 = vperm.slane %v1489, 0
        %v1521 = vunpack.c.l.b16 %v1481
        %v1522 = vunpack.c.l.b16 %v1482
        %v1523 = vunpack.c.l.b16 %v1483
        %v1524 = vunpack.c.l.b16 %v1484
        %v1525 = vunpack.c.l.b16 %v1485
        %v1526 = vunpack.c.l.b16 %v1486
        %v1527 = vunpack.c.l.b16 %v1487
        %v1528 = vunpack.c.l.b16 %v1488
        %v1529 = vpack.c.b16 %v1522, %v1521
        %v1530 = vpack.c.b16 %v1524, %v1523
        %v1531 = vpack.c.b16 %v1526, %v1525
        %v1532 = vpack.c.b16 %v1528, %v1527
        %v1538 = vsel %vm650, %v1509, 0
        %1540 = vmatpush.bf16.msra.mxu0 0
        %1541 = vmatpush.bf16.msra.mxu0 0
        %1542 = vmatpush.bf16.msra.mxu0 0
        %1543 = vmatpush.bf16.msra.mxu0 0
        %1544 = vmatpush.bf16.msra.mxu0 %v1532
        %1545 = vmatpush.bf16.msra.mxu0 %v1531
        %1546 = vmatpush.bf16.msra.mxu0 %v1530
        %1547 = vmatpush.bf16.msra.mxu0 %v1529
        %1548 = vmatmul.bf16.gmra.mxu0 %v1538
        %v1549 = vpop.f32.mrf.mxu0
        %v1550 = vadd.f32 %v1511, %v1549
        %v1551 = vpop.f32.mrf.mxu0
        %1552 = vdwg.mxu0
        %v1553 = vmax.f32 %v1550, 0.0
        %v1554 = vpack.c.bf16 %v1553, %v1553
        %v1556 = vperm.slane %v1506, 0
        %v1574 = vunpack.c.l.b16 %v1490
        %v1575 = vunpack.c.l.b16 %v1491
        %v1576 = vunpack.c.l.b16 %v1492
        %v1577 = vunpack.c.l.b16 %v1493
        %v1578 = vunpack.c.l.b16 %v1494
        %v1579 = vunpack.c.l.b16 %v1495
        %v1580 = vunpack.c.l.b16 %v1496
        %v1581 = vunpack.c.l.b16 %v1497
        %v1582 = vunpack.c.l.b16 %v1498
        %v1583 = vunpack.c.l.b16 %v1499
        %v1584 = vunpack.c.l.b16 %v1500
        %v1585 = vunpack.c.l.b16 %v1501
        %v1586 = vunpack.c.l.b16 %v1502
        %v1587 = vunpack.c.l.b16 %v1503
        %v1588 = vunpack.c.l.b16 %v1504
        %v1589 = vunpack.c.l.b16 %v1505
        %v1590 = vpack.c.b16 %v1575, %v1574
        %v1591 = vpack.c.b16 %v1577, %v1576
        %v1592 = vpack.c.b16 %v1579, %v1578
        %v1593 = vpack.c.b16 %v1581, %v1580
        %v1594 = vpack.c.b16 %v1583, %v1582
        %v1595 = vpack.c.b16 %v1585, %v1584
        %v1596 = vpack.c.b16 %v1587, %v1586
        %v1597 = vpack.c.b16 %v1589, %v1588
        %1606 = vmatpush.bf16.msra.mxu0 %v1597
        %1607 = vmatpush.bf16.msra.mxu0 %v1596
        %1608 = vmatpush.bf16.msra.mxu0 %v1595
        %1609 = vmatpush.bf16.msra.mxu0 %v1594
        %1610 = vmatpush.bf16.msra.mxu0 %v1593
        %1611 = vmatpush.bf16.msra.mxu0 %v1592
        %1612 = vmatpush.bf16.msra.mxu0 %v1591
        %1613 = vmatpush.bf16.msra.mxu0 %v1590
        %1614 = vmatmul.bf16.gmra.mxu0 %v1554
        %v1615 = vpop.f32.mrf.mxu0
        %v1616 = vadd.f32 %v1556, %v1615
        %v1617 = vpop.f32.mrf.mxu0
        %1618 = vdwg.mxu0
        %v1619 = vadd.f32 %v1616, %v1480
        %v1620 = vsel %vm650, %v1619, 0.0
        %1621 = vadd.xlane.f32.xlu0 %v1620
        %v1622 = vpop.xlane.xlu0 %1621
        %v1623 = vmul.f32 %v1622, %v1453
        %v1624 = vsub.f32 %v1619, %v1623
        %v1625 = vmul.f32 %v1624, %v1624
        %v1626 = vsel %vm650, %v1625, 0.0
        %1627 = vadd.xlane.f32.xlu0 %v1626
        %v1628 = vpop.xlane.xlu0 %1627
        %v1629 = vmul.f32 %v1628, %v1453
        %v1630 = vadd.f32 %v1629, 1e-06
        %v1631 = vrsqrt.pop %v1630
        %v1632 = vmul.f32 %v1631, %v1630
        %v1633 = vmul.f32 %v1632, %v1631
        %v1634 = vmul.f32 0.5, %v1633
        %v1635 = vsub.f32 1.5, %v1634
        %v1636 = vmul.f32 %v1631, %v1635
        %vm1637 = vweird.f32 %v1630
        %vm1638 = vweird.f32 %v1631
        %vm1639 = vmor %vm1637, %vm1638
        %v1640 = vsel %vm1639, %v1631, %v1636
        %v1641 = vmul.f32 %v1624, %v1640
        %v1643 = vperm.slane %v1507, 0
        %v1645 = vmul.f32 %v1641, %v1643
        %v1647 = vperm.slane %v1508, 0
        %v1649 = vadd.f32 %v1645, %v1647
        %v1650 = vpack.c.bf16 %v1649, %v1649
        %vm1651 = vcmask 519168
        %1652 = vst.msk [vmem:[%s514] sm:$0xf] %vm1651, %v1650
        %1653 = vst.msk [vmem:[%s503] sm:$0xff] %vm1170, %v1221
        %1654 = vst.msk [vmem:[%s503 + $0x8] sm:$0xff] %vm1170, %v1236
        %1655 = vst.msk [vmem:[%s503 + $0x10] sm:$0xff] %vm1170, %v1251
        %1656 = vst.msk [vmem:[%s503 + $0x18] sm:$0xff] %vm1170, %v1266
        %p1657 = scmp.lt.s32.totalorder %s30, 1
        %s1658 = scalar_select %p1657, %s30, 1
        %s1659 = smul.addr %s1658, 4
        %s1660 = scalar_lea.vmem %s14, %s1659
        %s1661 = sand.u32 %s368, 1
        %s1662 = scalar_lea.sflag [#allocation3], %s1661
        %s1663 = sand.u32 %s368, 1
        %s1664 = smul.addr %s1663, 32
        %s1665 = scalar_lea.vmem [#allocation2], %s1664
        // Predicated region
        $region77: #{_lambda_.7} parent=75 // pred_check
          %p1666 = pneg %p352
        $region78: #{_lambda_.7} parent=75 // pred_check_branch
          %1668 = sbr.rel (%p1666) target = $region80
        $region79: #{_lambda_.7} parent=75 // pred_region
          _
        $region80: #{_lambda_.7} parent=75 // pred_fallthru
          _
        // Predicated region
        $region81: #{_lambda_.7} parent=75 // pred_check
          %p1669 = pneg %p378
        $region82: #{_lambda_.7} parent=75 // pred_check_branch
          %1671 = sbr.rel (%p1669) target = $region84
        $region83: #{_lambda_.7} parent=75 // pred_region
          %1673 = vsyncadd %s1662, 0
          %s1674 = smul.addr %s30, 4
          %s1675 = smul.addr %s1674, 8
          %s1676 = scalar_lea.hbm %s15, %s1675
          %s1677 = sshll.u32 %s1665, 4
          %s1678 = int_to_ptr.vmem [resolvable:$true] %s1677
          %s1679 = sshll.u32 %s1676, 4
          %s1680 = int_to_ptr.hbm [resolvable:$true] %s1679
          %1685 = dma.vmem_to_hbm [thread:$0]  %s1678, 512, %s1680, %s1662, 128, 128, 8
        $region84: #{_lambda_.7} parent=75 // pred_fallthru
          _
      $region76: #{_lambda_.7} parent=5 // pred_fallthru
        _
      %p1686 = scmp.le.s32.totalorder 2, %s25
      // Predicated region
      $region85: #{_lambda_.7} parent=5 // pred_check
        %p1687 = pneg %p1686
      $region86: #{_lambda_.7} parent=5 // pred_check_branch
        %1689 = sbr.rel (%p1687) target = $region88
      $region87: #{_lambda_.7} parent=5 // pred_region
        %s1690 = ssub.s32 %s25, 2
        // Predicated region
        $region89: #{_lambda_.7} parent=87 // pred_check
          %p1691 = pneg %p358
        $region90: #{_lambda_.7} parent=87 // pred_check_branch
          %1693 = sbr.rel (%p1691) target = $region92
        $region91: #{_lambda_.7} parent=87 // pred_region
          %p1694 = scmp.lt.s32.totalorder %s31, 1
          %s1695 = scalar_select %p1694, %s31, 1
          %s1696 = smul.addr %s1695, 4
          %s1697 = scalar_lea.vmem %s14, %s1696
        $region92: #{_lambda_.7} parent=87 // pred_fallthru
          _
        // Predicated region
        $region93: #{_lambda_.7} parent=87 // pred_check
          %p1698 = pneg %p384
        $region94: #{_lambda_.7} parent=87 // pred_check_branch
          %1700 = sbr.rel (%p1698) target = $region96
        $region95: #{_lambda_.7} parent=87 // pred_region
          %s1701 = sand.u32 %s369, 1
          %s1702 = scalar_lea.sflag [#allocation3], %s1701
          %s1703 = sand.u32 %s369, 1
          %s1704 = smul.addr %s1703, 32
          %s1705 = scalar_lea.vmem [#allocation2], %s1704
          %1707 = dma.done %s1702, 512
        $region96: #{_lambda_.7} parent=87 // pred_fallthru
          _
      $region88: #{_lambda_.7} parent=5 // pred_fallthru
        _
    $region6: #{_lambda_.7} parent=1 // loop_footer
      %s29 = sadd.s32 1, %s25
    $region7: #{_lambda_.7} parent=1 // loop_footer_branch
      %24 = sbr.rel target = $region3
    $region8: #{_lambda_.7} parent=1 // loop_exit
      _
    %1708 = vsyncpa [#allocation3], 1
    %s1709 = scalar_lea.sflag [#allocation3], 1
    %1710 = vsyncpa %s1709, 1

// kernel: _lambda_.10
$region0: #{_lambda_.10}
  #allocation0 [shape = 'u32[]', space=smem, size = 0x4, offset = 0x4, fixed_abs, tag = 'smem constant byte address 0x4 - core index']
  #allocation1 [shape = 'u32[72,128]{1,0:T(1,128)}', space=vmem, size = 0x9000, scoped, tag = 'internal scratch']
  %s0 = inlined_call_operand.vmem [shape: f32[2,8,64], index: 0, kind: input, shape index: {}]
  %s1 = inlined_call_operand.vmem [shape: bf16[2,8,64], index: 1, kind: input, shape index: {}]
  %s2 = inlined_call_operand.vmem [shape: s32[2,1,8], index: 2, kind: input, shape index: {}]
  %s3 = inlined_call_operand.vmem [shape: s32[2,1,8], index: 3, kind: input, shape index: {}]
  %s4 = inlined_call_operand.vmem [shape: bf16[4,64,16], index: 4, kind: input, shape index: {}]
  %s5 = inlined_call_operand.vmem [shape: bf16[4,64,16], index: 5, kind: input, shape index: {}]
  %s6 = inlined_call_operand.vmem [shape: bf16[4,64,16], index: 6, kind: input, shape index: {}]
  %s7 = inlined_call_operand.vmem [shape: bf16[4,16,64], index: 7, kind: input, shape index: {}]
  %s8 = inlined_call_operand.vmem [shape: f32[1,64], index: 8, kind: input, shape index: {}]
  %s9 = inlined_call_operand.vmem [shape: f32[1,64], index: 9, kind: input, shape index: {}]
  %s10 = inlined_call_operand.vmem [shape: bf16[4,64,16], index: 10, kind: input, shape index: {}]
  %s11 = inlined_call_operand.vmem [shape: bf16[4,64,16], index: 11, kind: input, shape index: {}]
  %s12 = inlined_call_operand.vmem [shape: bf16[4,64,16], index: 12, kind: input, shape index: {}]
  %s13 = inlined_call_operand.vmem [shape: bf16[4,16,64], index: 13, kind: input, shape index: {}]
  %s14 = inlined_call_operand.vmem [shape: f32[1,64], index: 14, kind: input, shape index: {}]
  %s15 = inlined_call_operand.vmem [shape: f32[1,64], index: 15, kind: input, shape index: {}]
  %s16 = inlined_call_operand.vmem [shape: bf16[64,128], index: 16, kind: input, shape index: {}]
  %s17 = inlined_call_operand.vmem [shape: f32[1,128], index: 17, kind: input, shape index: {}]
  %s18 = inlined_call_operand.vmem [shape: bf16[128,64], index: 18, kind: input, shape index: {}]
  %s19 = inlined_call_operand.vmem [shape: f32[1,64], index: 19, kind: input, shape index: {}]
  %s20 = inlined_call_operand.vmem [shape: f32[1,64], index: 20, kind: input, shape index: {}]
  %s21 = inlined_call_operand.vmem [shape: f32[1,64], index: 21, kind: input, shape index: {}]
  %s22 = inlined_call_operand.vmem [shape: f32[2,8,64], index: 22, kind: output, shape index: {0}]
  %s23 = inlined_call_operand.hbm [shape: f32[2,4,8,8], index: 23, kind: output, shape index: {1}]
  %s24 = inlined_call_operand.hbm [shape: f32[2,4,8,8], index: 24, kind: output, shape index: {2}]
  %25 = xla_tuple %s22, %s23, %s24
  %s26 = sld [smem:[#allocation0]]
  $region137: #{_lambda_.10} parent=0
    _
  %s28 = ssub.s32 1, %s26
  %s29 = scalar_select 0, %s28, %s26
  $region1: #{_lambda_.10} parent=0
    #allocation2 [shape = 'u8[32768]{0}', space=vmem, size = 0x8000, scoped, tag = 'output window, operand 1']
    #allocation3 [shape = 's32[2]{0}', space=sflag, size = 0x8, scoped, tag = 'scoped memory for _lambda_.10']
    #allocation4 [shape = 'u8[32768]{0}', space=vmem, size = 0x8000, scoped, tag = 'output window, operand 2']
    #allocation5 [shape = 's32[2]{0}', space=sflag, size = 0x8, scoped, tag = 'scoped memory for _lambda_.10']
    %30 = vsyncpa [#allocation3], 0
    %s31 = scalar_lea.sflag [#allocation3], 1
    %32 = vsyncpa %s31, 0
    %33 = vsyncpa [#allocation5], 0
    %s34 = scalar_lea.sflag [#allocation5], 1
    %35 = vsyncpa %s34, 0
    loop: start=0, step=1, limit=4
    $region2: #{_lambda_.10} parent=1 // loop_pre_header
      _
    $region3: #{_lambda_.10} parent=1 // loop_header
      %s37 = sphi 0, %s41
      %p38 = scmp.ge.s32.totalorder %s37, 4
      %s47 = sphi 0, %s49
      %s50 = sphi 0, %s47
      %s51 = sphi 0, %s50
      %s67 = sphi 0, %s51
      %s73 = sphi 0, %s75
      %s76 = sphi 0, %s73
      %s77 = sphi 0, %s76
      %s93 = sphi 0, %s77
      %s99 = sphi 0, %s101
      %s102 = sphi 0, %s99
      %s103 = sphi 0, %s102
      %s119 = sphi 0, %s103
      %s125 = sphi 0, %s127
      %s128 = sphi 0, %s125
      %s129 = sphi 0, %s128
      %s145 = sphi 0, %s129
      %s149 = sphi 0, %s149
      %s151 = sphi 0, %s149
      %s152 = sphi 0, %s151
      %s166 = sphi 0, %s152
      %s170 = sphi 0, %s170
      %s172 = sphi 0, %s170
      %s173 = sphi 0, %s172
      %s187 = sphi 0, %s173
      %s191 = sphi 0, %s191
      %s193 = sphi 0, %s191
      %s194 = sphi 0, %s193
      %s208 = sphi 0, %s194
      %s212 = sphi 0, %s212
      %s214 = sphi 0, %s212
      %s215 = sphi 0, %s214
      %s229 = sphi 0, %s215
      %s233 = sphi 0, %s233
      %s235 = sphi 0, %s233
      %s236 = sphi 0, %s235
      %s250 = sphi 0, %s236
      %s254 = sphi 0, %s254
      %s256 = sphi 0, %s254
      %s257 = sphi 0, %s256
      %s271 = sphi 0, %s257
      %s275 = sphi 0, %s275
      %s277 = sphi 0, %s275
      %s278 = sphi 0, %s277
      %s292 = sphi 0, %s278
      %s296 = sphi 0, %s296
      %s298 = sphi 0, %s296
      %s299 = sphi 0, %s298
      %s313 = sphi 0, %s299
      %s317 = sphi 0, %s317
      %s319 = sphi 0, %s317
      %s320 = sphi 0, %s319
      %s334 = sphi 0, %s320
      %s338 = sphi 0, %s338
      %s340 = sphi 0, %s338
      %s341 = sphi 0, %s340
      %s355 = sphi 0, %s341
      %s359 = sphi 0, %s359
      %s361 = sphi 0, %s359
      %s362 = sphi 0, %s361
      %s376 = sphi 0, %s362
      %s380 = sphi 0, %s380
      %s382 = sphi 0, %s380
      %s383 = sphi 0, %s382
      %s397 = sphi 0, %s383
      %s401 = sphi 0, %s401
      %s403 = sphi 0, %s401
      %s404 = sphi 0, %s403
      %s418 = sphi 0, %s404
      %s422 = sphi 0, %s422
      %s424 = sphi 0, %s422
      %s425 = sphi 0, %s424
      %s439 = sphi 0, %s425
      %s443 = sphi 0, %s443
      %s445 = sphi 0, %s443
      %s446 = sphi 0, %s445
      %s460 = sphi 0, %s446
      %s464 = sphi 0, %s464
      %s466 = sphi 0, %s464
      %s467 = sphi 0, %s466
      %s481 = sphi 0, %s467
      %s485 = sphi 0, %s485
      %s487 = sphi 0, %s485
      %s488 = sphi 0, %s487
      %s502 = sphi 0, %s488
      %s506 = sphi 0, %s506
      %s508 = sphi 0, %s506
      %s509 = sphi 0, %s508
      %s523 = sphi 0, %s509
      %s529 = sphi 0, %s531
      %s532 = sphi 0, %s529
      %s533 = sphi 0, %s532
      %s549 = sphi 0, %s533
      %s555 = sphi 0, %s557
      %s558 = sphi 0, %s555
      %s559 = sphi 0, %s558
      %s575 = sphi 0, %s559
      %s581 = sphi 0, %s583
      %s584 = sphi 0, %s581
      %s585 = sphi 0, %s584
      %s601 = sphi 0, %s585
    $region4: #{_lambda_.10} parent=1 // loop_header_branch
      %40 = sbr.rel (%p38) target = $region8
    $region5: #{_lambda_.10} parent=1 // loop_body
      %s42 = ssub.s32 %s37, 1
      %s43 = ssub.s32 %s37, 2
      %s44 = sadd.s32 %s37, 1
      %s45 = ssub.s32 %s37, %s44
      %p46 = scmp.eq.s32.totalorder %s45, 0
      %s48 = sadd.s32 %s47, 1
      %s49 = scalar_select %p46, %s47, %s48
      %p52 = pneg %p46
      %p53 = scmp.eq.s32.totalorder %s37, 1
      %p54 = por %p52, %p53
      %p55 = scmp.ne.s32.totalorder %s47, %s50
      %p56 = scmp.eq.s32.totalorder %s37, 0
      %p57 = por %p55, %p56
      %p58 = scmp.ne.s32.totalorder %s47, %s50
      %p59 = scmp.eq.s32.totalorder %s42, 1
      %p60 = por %p58, %p59
      %p61 = scmp.ne.s32.totalorder %s50, %s51
      %p62 = scmp.eq.s32.totalorder %s42, 0
      %p63 = por %p61, %p62
      %p64 = scmp.ne.s32.totalorder %s50, %s51
      %p65 = scmp.eq.s32.totalorder %s43, 1
      %p66 = por %p64, %p65
      %p68 = scmp.ne.s32.totalorder %s51, %s67
      %p69 = scmp.eq.s32.totalorder %s43, 0
      %p70 = por %p68, %p69
      %s71 = ssub.s32 %s37, %s44
      %p72 = scmp.eq.s32.totalorder %s71, 0
      %s74 = sadd.s32 %s73, 1
      %s75 = scalar_select %p72, %s73, %s74
      %p78 = pneg %p72
      %p79 = scmp.eq.s32.totalorder %s37, 1
      %p80 = por %p78, %p79
      %p81 = scmp.ne.s32.totalorder %s73, %s76
      %p82 = scmp.eq.s32.totalorder %s37, 0
      %p83 = por %p81, %p82
      %p84 = scmp.ne.s32.totalorder %s73, %s76
      %p85 = scmp.eq.s32.totalorder %s42, 1
      %p86 = por %p84, %p85
      %p87 = scmp.ne.s32.totalorder %s76, %s77
      %p88 = scmp.eq.s32.totalorder %s42, 0
      %p89 = por %p87, %p88
      %p90 = scmp.ne.s32.totalorder %s76, %s77
      %p91 = scmp.eq.s32.totalorder %s43, 1
      %p92 = por %p90, %p91
      %p94 = scmp.ne.s32.totalorder %s77, %s93
      %p95 = scmp.eq.s32.totalorder %s43, 0
      %p96 = por %p94, %p95
      %s97 = ssub.s32 %s37, %s44
      %p98 = scmp.eq.s32.totalorder %s97, 0
      %s100 = sadd.s32 %s99, 1
      %s101 = scalar_select %p98, %s99, %s100
      %p104 = pneg %p98
      %p105 = scmp.eq.s32.totalorder %s37, 1
      %p106 = por %p104, %p105
      %p107 = scmp.ne.s32.totalorder %s99, %s102
      %p108 = scmp.eq.s32.totalorder %s37, 0
      %p109 = por %p107, %p108
      %p110 = scmp.ne.s32.totalorder %s99, %s102
      %p111 = scmp.eq.s32.totalorder %s42, 1
      %p112 = por %p110, %p111
      %p113 = scmp.ne.s32.totalorder %s102, %s103
      %p114 = scmp.eq.s32.totalorder %s42, 0
      %p115 = por %p113, %p114
      %p116 = scmp.ne.s32.totalorder %s102, %s103
      %p117 = scmp.eq.s32.totalorder %s43, 1
      %p118 = por %p116, %p117
      %p120 = scmp.ne.s32.totalorder %s103, %s119
      %p121 = scmp.eq.s32.totalorder %s43, 0
      %p122 = por %p120, %p121
      %s123 = ssub.s32 %s37, %s44
      %p124 = scmp.eq.s32.totalorder %s123, 0
      %s126 = sadd.s32 %s125, 1
      %s127 = scalar_select %p124, %s125, %s126
      %p130 = pneg %p124
      %p131 = scmp.eq.s32.totalorder %s37, 1
      %p132 = por %p130, %p131
      %p133 = scmp.ne.s32.totalorder %s125, %s128
      %p134 = scmp.eq.s32.totalorder %s37, 0
      %p135 = por %p133, %p134
      %p136 = scmp.ne.s32.totalorder %s125, %s128
      %p137 = scmp.eq.s32.totalorder %s42, 1
      %p138 = por %p136, %p137
      %p139 = scmp.ne.s32.totalorder %s128, %s129
      %p140 = scmp.eq.s32.totalorder %s42, 0
      %p141 = por %p139, %p140
      %p142 = scmp.ne.s32.totalorder %s128, %s129
      %p143 = scmp.eq.s32.totalorder %s43, 1
      %p144 = por %p142, %p143
      %p146 = scmp.ne.s32.totalorder %s129, %s145
      %p147 = scmp.eq.s32.totalorder %s43, 0
      %p148 = por %p146, %p147
      %s150 = sadd.s32 %s149, 1
      %p153 = scmp.eq.s32.totalorder %s37, 1
      %p154 = scmp.ne.s32.totalorder %s149, %s151
      %p155 = scmp.eq.s32.totalorder %s37, 0
      %p156 = por %p154, %p155
      %p157 = scmp.ne.s32.totalorder %s149, %s151
      %p158 = scmp.eq.s32.totalorder %s42, 1
      %p159 = por %p157, %p158
      %p160 = scmp.ne.s32.totalorder %s151, %s152
      %p161 = scmp.eq.s32.totalorder %s42, 0
      %p162 = por %p160, %p161
      %p163 = scmp.ne.s32.totalorder %s151, %s152
      %p164 = scmp.eq.s32.totalorder %s43, 1
      %p165 = por %p163, %p164
      %p167 = scmp.ne.s32.totalorder %s152, %s166
      %p168 = scmp.eq.s32.totalorder %s43, 0
      %p169 = por %p167, %p168
      %s171 = sadd.s32 %s170, 1
      %p174 = scmp.eq.s32.totalorder %s37, 1
      %p175 = scmp.ne.s32.totalorder %s170, %s172
      %p176 = scmp.eq.s32.totalorder %s37, 0
      %p177 = por %p175, %p176
      %p178 = scmp.ne.s32.totalorder %s170, %s172
      %p179 = scmp.eq.s32.totalorder %s42, 1
      %p180 = por %p178, %p179
      %p181 = scmp.ne.s32.totalorder %s172, %s173
      %p182 = scmp.eq.s32.totalorder %s42, 0
      %p183 = por %p181, %p182
      %p184 = scmp.ne.s32.totalorder %s172, %s173
      %p185 = scmp.eq.s32.totalorder %s43, 1
      %p186 = por %p184, %p185
      %p188 = scmp.ne.s32.totalorder %s173, %s187
      %p189 = scmp.eq.s32.totalorder %s43, 0
      %p190 = por %p188, %p189
      %s192 = sadd.s32 %s191, 1
      %p195 = scmp.eq.s32.totalorder %s37, 1
      %p196 = scmp.ne.s32.totalorder %s191, %s193
      %p197 = scmp.eq.s32.totalorder %s37, 0
      %p198 = por %p196, %p197
      %p199 = scmp.ne.s32.totalorder %s191, %s193
      %p200 = scmp.eq.s32.totalorder %s42, 1
      %p201 = por %p199, %p200
      %p202 = scmp.ne.s32.totalorder %s193, %s194
      %p203 = scmp.eq.s32.totalorder %s42, 0
      %p204 = por %p202, %p203
      %p205 = scmp.ne.s32.totalorder %s193, %s194
      %p206 = scmp.eq.s32.totalorder %s43, 1
      %p207 = por %p205, %p206
      %p209 = scmp.ne.s32.totalorder %s194, %s208
      %p210 = scmp.eq.s32.totalorder %s43, 0
      %p211 = por %p209, %p210
      %s213 = sadd.s32 %s212, 1
      %p216 = scmp.eq.s32.totalorder %s37, 1
      %p217 = scmp.ne.s32.totalorder %s212, %s214
      %p218 = scmp.eq.s32.totalorder %s37, 0
      %p219 = por %p217, %p218
      %p220 = scmp.ne.s32.totalorder %s212, %s214
      %p221 = scmp.eq.s32.totalorder %s42, 1
      %p222 = por %p220, %p221
      %p223 = scmp.ne.s32.totalorder %s214, %s215
      %p224 = scmp.eq.s32.totalorder %s42, 0
      %p225 = por %p223, %p224
      %p226 = scmp.ne.s32.totalorder %s214, %s215
      %p227 = scmp.eq.s32.totalorder %s43, 1
      %p228 = por %p226, %p227
      %p230 = scmp.ne.s32.totalorder %s215, %s229
      %p231 = scmp.eq.s32.totalorder %s43, 0
      %p232 = por %p230, %p231
      %s234 = sadd.s32 %s233, 1
      %p237 = scmp.eq.s32.totalorder %s37, 1
      %p238 = scmp.ne.s32.totalorder %s233, %s235
      %p239 = scmp.eq.s32.totalorder %s37, 0
      %p240 = por %p238, %p239
      %p241 = scmp.ne.s32.totalorder %s233, %s235
      %p242 = scmp.eq.s32.totalorder %s42, 1
      %p243 = por %p241, %p242
      %p244 = scmp.ne.s32.totalorder %s235, %s236
      %p245 = scmp.eq.s32.totalorder %s42, 0
      %p246 = por %p244, %p245
      %p247 = scmp.ne.s32.totalorder %s235, %s236
      %p248 = scmp.eq.s32.totalorder %s43, 1
      %p249 = por %p247, %p248
      %p251 = scmp.ne.s32.totalorder %s236, %s250
      %p252 = scmp.eq.s32.totalorder %s43, 0
      %p253 = por %p251, %p252
      %s255 = sadd.s32 %s254, 1
      %p258 = scmp.eq.s32.totalorder %s37, 1
      %p259 = scmp.ne.s32.totalorder %s254, %s256
      %p260 = scmp.eq.s32.totalorder %s37, 0
      %p261 = por %p259, %p260
      %p262 = scmp.ne.s32.totalorder %s254, %s256
      %p263 = scmp.eq.s32.totalorder %s42, 1
      %p264 = por %p262, %p263
      %p265 = scmp.ne.s32.totalorder %s256, %s257
      %p266 = scmp.eq.s32.totalorder %s42, 0
      %p267 = por %p265, %p266
      %p268 = scmp.ne.s32.totalorder %s256, %s257
      %p269 = scmp.eq.s32.totalorder %s43, 1
      %p270 = por %p268, %p269
      %p272 = scmp.ne.s32.totalorder %s257, %s271
      %p273 = scmp.eq.s32.totalorder %s43, 0
      %p274 = por %p272, %p273
      %s276 = sadd.s32 %s275, 1
      %p279 = scmp.eq.s32.totalorder %s37, 1
      %p280 = scmp.ne.s32.totalorder %s275, %s277
      %p281 = scmp.eq.s32.totalorder %s37, 0
      %p282 = por %p280, %p281
      %p283 = scmp.ne.s32.totalorder %s275, %s277
      %p284 = scmp.eq.s32.totalorder %s42, 1
      %p285 = por %p283, %p284
      %p286 = scmp.ne.s32.totalorder %s277, %s278
      %p287 = scmp.eq.s32.totalorder %s42, 0
      %p288 = por %p286, %p287
      %p289 = scmp.ne.s32.totalorder %s277, %s278
      %p290 = scmp.eq.s32.totalorder %s43, 1
      %p291 = por %p289, %p290
      %p293 = scmp.ne.s32.totalorder %s278, %s292
      %p294 = scmp.eq.s32.totalorder %s43, 0
      %p295 = por %p293, %p294
      %s297 = sadd.s32 %s296, 1
      %p300 = scmp.eq.s32.totalorder %s37, 1
      %p301 = scmp.ne.s32.totalorder %s296, %s298
      %p302 = scmp.eq.s32.totalorder %s37, 0
      %p303 = por %p301, %p302
      %p304 = scmp.ne.s32.totalorder %s296, %s298
      %p305 = scmp.eq.s32.totalorder %s42, 1
      %p306 = por %p304, %p305
      %p307 = scmp.ne.s32.totalorder %s298, %s299
      %p308 = scmp.eq.s32.totalorder %s42, 0
      %p309 = por %p307, %p308
      %p310 = scmp.ne.s32.totalorder %s298, %s299
      %p311 = scmp.eq.s32.totalorder %s43, 1
      %p312 = por %p310, %p311
      %p314 = scmp.ne.s32.totalorder %s299, %s313
      %p315 = scmp.eq.s32.totalorder %s43, 0
      %p316 = por %p314, %p315
      %s318 = sadd.s32 %s317, 1
      %p321 = scmp.eq.s32.totalorder %s37, 1
      %p322 = scmp.ne.s32.totalorder %s317, %s319
      %p323 = scmp.eq.s32.totalorder %s37, 0
      %p324 = por %p322, %p323
      %p325 = scmp.ne.s32.totalorder %s317, %s319
      %p326 = scmp.eq.s32.totalorder %s42, 1
      %p327 = por %p325, %p326
      %p328 = scmp.ne.s32.totalorder %s319, %s320
      %p329 = scmp.eq.s32.totalorder %s42, 0
      %p330 = por %p328, %p329
      %p331 = scmp.ne.s32.totalorder %s319, %s320
      %p332 = scmp.eq.s32.totalorder %s43, 1
      %p333 = por %p331, %p332
      %p335 = scmp.ne.s32.totalorder %s320, %s334
      %p336 = scmp.eq.s32.totalorder %s43, 0
      %p337 = por %p335, %p336
      %s339 = sadd.s32 %s338, 1
      %p342 = scmp.eq.s32.totalorder %s37, 1
      %p343 = scmp.ne.s32.totalorder %s338, %s340
      %p344 = scmp.eq.s32.totalorder %s37, 0
      %p345 = por %p343, %p344
      %p346 = scmp.ne.s32.totalorder %s338, %s340
      %p347 = scmp.eq.s32.totalorder %s42, 1
      %p348 = por %p346, %p347
      %p349 = scmp.ne.s32.totalorder %s340, %s341
      %p350 = scmp.eq.s32.totalorder %s42, 0
      %p351 = por %p349, %p350
      %p352 = scmp.ne.s32.totalorder %s340, %s341
      %p353 = scmp.eq.s32.totalorder %s43, 1
      %p354 = por %p352, %p353
      %p356 = scmp.ne.s32.totalorder %s341, %s355
      %p357 = scmp.eq.s32.totalorder %s43, 0
      %p358 = por %p356, %p357
      %s360 = sadd.s32 %s359, 1
      %p363 = scmp.eq.s32.totalorder %s37, 1
      %p364 = scmp.ne.s32.totalorder %s359, %s361
      %p365 = scmp.eq.s32.totalorder %s37, 0
      %p366 = por %p364, %p365
      %p367 = scmp.ne.s32.totalorder %s359, %s361
      %p368 = scmp.eq.s32.totalorder %s42, 1
      %p369 = por %p367, %p368
      %p370 = scmp.ne.s32.totalorder %s361, %s362
      %p371 = scmp.eq.s32.totalorder %s42, 0
      %p372 = por %p370, %p371
      %p373 = scmp.ne.s32.totalorder %s361, %s362
      %p374 = scmp.eq.s32.totalorder %s43, 1
      %p375 = por %p373, %p374
      %p377 = scmp.ne.s32.totalorder %s362, %s376
      %p378 = scmp.eq.s32.totalorder %s43, 0
      %p379 = por %p377, %p378
      %s381 = sadd.s32 %s380, 1
      %p384 = scmp.eq.s32.totalorder %s37, 1
      %p385 = scmp.ne.s32.totalorder %s380, %s382
      %p386 = scmp.eq.s32.totalorder %s37, 0
      %p387 = por %p385, %p386
      %p388 = scmp.ne.s32.totalorder %s380, %s382
      %p389 = scmp.eq.s32.totalorder %s42, 1
      %p390 = por %p388, %p389
      %p391 = scmp.ne.s32.totalorder %s382, %s383
      %p392 = scmp.eq.s32.totalorder %s42, 0
      %p393 = por %p391, %p392
      %p394 = scmp.ne.s32.totalorder %s382, %s383
      %p395 = scmp.eq.s32.totalorder %s43, 1
      %p396 = por %p394, %p395
      %p398 = scmp.ne.s32.totalorder %s383, %s397
      %p399 = scmp.eq.s32.totalorder %s43, 0
      %p400 = por %p398, %p399
      %s402 = sadd.s32 %s401, 1
      %p405 = scmp.eq.s32.totalorder %s37, 1
      %p406 = scmp.ne.s32.totalorder %s401, %s403
      %p407 = scmp.eq.s32.totalorder %s37, 0
      %p408 = por %p406, %p407
      %p409 = scmp.ne.s32.totalorder %s401, %s403
      %p410 = scmp.eq.s32.totalorder %s42, 1
      %p411 = por %p409, %p410
      %p412 = scmp.ne.s32.totalorder %s403, %s404
      %p413 = scmp.eq.s32.totalorder %s42, 0
      %p414 = por %p412, %p413
      %p415 = scmp.ne.s32.totalorder %s403, %s404
      %p416 = scmp.eq.s32.totalorder %s43, 1
      %p417 = por %p415, %p416
      %p419 = scmp.ne.s32.totalorder %s404, %s418
      %p420 = scmp.eq.s32.totalorder %s43, 0
      %p421 = por %p419, %p420
      %s423 = sadd.s32 %s422, 1
      %p426 = scmp.eq.s32.totalorder %s37, 1
      %p427 = scmp.ne.s32.totalorder %s422, %s424
      %p428 = scmp.eq.s32.totalorder %s37, 0
      %p429 = por %p427, %p428
      %p430 = scmp.ne.s32.totalorder %s422, %s424
      %p431 = scmp.eq.s32.totalorder %s42, 1
      %p432 = por %p430, %p431
      %p433 = scmp.ne.s32.totalorder %s424, %s425
      %p434 = scmp.eq.s32.totalorder %s42, 0
      %p435 = por %p433, %p434
      %p436 = scmp.ne.s32.totalorder %s424, %s425
      %p437 = scmp.eq.s32.totalorder %s43, 1
      %p438 = por %p436, %p437
      %p440 = scmp.ne.s32.totalorder %s425, %s439
      %p441 = scmp.eq.s32.totalorder %s43, 0
      %p442 = por %p440, %p441
      %s444 = sadd.s32 %s443, 1
      %p447 = scmp.eq.s32.totalorder %s37, 1
      %p448 = scmp.ne.s32.totalorder %s443, %s445
      %p449 = scmp.eq.s32.totalorder %s37, 0
      %p450 = por %p448, %p449
      %p451 = scmp.ne.s32.totalorder %s443, %s445
      %p452 = scmp.eq.s32.totalorder %s42, 1
      %p453 = por %p451, %p452
      %p454 = scmp.ne.s32.totalorder %s445, %s446
      %p455 = scmp.eq.s32.totalorder %s42, 0
      %p456 = por %p454, %p455
      %p457 = scmp.ne.s32.totalorder %s445, %s446
      %p458 = scmp.eq.s32.totalorder %s43, 1
      %p459 = por %p457, %p458
      %p461 = scmp.ne.s32.totalorder %s446, %s460
      %p462 = scmp.eq.s32.totalorder %s43, 0
      %p463 = por %p461, %p462
      %s465 = sadd.s32 %s464, 1
      %p468 = scmp.eq.s32.totalorder %s37, 1
      %p469 = scmp.ne.s32.totalorder %s464, %s466
      %p470 = scmp.eq.s32.totalorder %s37, 0
      %p471 = por %p469, %p470
      %p472 = scmp.ne.s32.totalorder %s464, %s466
      %p473 = scmp.eq.s32.totalorder %s42, 1
      %p474 = por %p472, %p473
      %p475 = scmp.ne.s32.totalorder %s466, %s467
      %p476 = scmp.eq.s32.totalorder %s42, 0
      %p477 = por %p475, %p476
      %p478 = scmp.ne.s32.totalorder %s466, %s467
      %p479 = scmp.eq.s32.totalorder %s43, 1
      %p480 = por %p478, %p479
      %p482 = scmp.ne.s32.totalorder %s467, %s481
      %p483 = scmp.eq.s32.totalorder %s43, 0
      %p484 = por %p482, %p483
      %s486 = sadd.s32 %s485, 1
      %p489 = scmp.eq.s32.totalorder %s37, 1
      %p490 = scmp.ne.s32.totalorder %s485, %s487
      %p491 = scmp.eq.s32.totalorder %s37, 0
      %p492 = por %p490, %p491
      %p493 = scmp.ne.s32.totalorder %s485, %s487
      %p494 = scmp.eq.s32.totalorder %s42, 1
      %p495 = por %p493, %p494
      %p496 = scmp.ne.s32.totalorder %s487, %s488
      %p497 = scmp.eq.s32.totalorder %s42, 0
      %p498 = por %p496, %p497
      %p499 = scmp.ne.s32.totalorder %s487, %s488
      %p500 = scmp.eq.s32.totalorder %s43, 1
      %p501 = por %p499, %p500
      %p503 = scmp.ne.s32.totalorder %s488, %s502
      %p504 = scmp.eq.s32.totalorder %s43, 0
      %p505 = por %p503, %p504
      %s507 = sadd.s32 %s506, 1
      %p510 = scmp.eq.s32.totalorder %s37, 1
      %p511 = scmp.ne.s32.totalorder %s506, %s508
      %p512 = scmp.eq.s32.totalorder %s37, 0
      %p513 = por %p511, %p512
      %p514 = scmp.ne.s32.totalorder %s506, %s508
      %p515 = scmp.eq.s32.totalorder %s42, 1
      %p516 = por %p514, %p515
      %p517 = scmp.ne.s32.totalorder %s508, %s509
      %p518 = scmp.eq.s32.totalorder %s42, 0
      %p519 = por %p517, %p518
      %p520 = scmp.ne.s32.totalorder %s508, %s509
      %p521 = scmp.eq.s32.totalorder %s43, 1
      %p522 = por %p520, %p521
      %p524 = scmp.ne.s32.totalorder %s509, %s523
      %p525 = scmp.eq.s32.totalorder %s43, 0
      %p526 = por %p524, %p525
      %s527 = ssub.s32 %s37, %s44
      %p528 = scmp.eq.s32.totalorder %s527, 0
      %s530 = sadd.s32 %s529, 1
      %s531 = scalar_select %p528, %s529, %s530
      %p534 = pneg %p528
      %p535 = scmp.eq.s32.totalorder %s37, 1
      %p536 = por %p534, %p535
      %p537 = scmp.ne.s32.totalorder %s529, %s532
      %p538 = scmp.eq.s32.totalorder %s37, 0
      %p539 = por %p537, %p538
      %p540 = scmp.ne.s32.totalorder %s529, %s532
      %p541 = scmp.eq.s32.totalorder %s42, 1
      %p542 = por %p540, %p541
      %p543 = scmp.ne.s32.totalorder %s532, %s533
      %p544 = scmp.eq.s32.totalorder %s42, 0
      %p545 = por %p543, %p544
      %p546 = scmp.ne.s32.totalorder %s532, %s533
      %p547 = scmp.eq.s32.totalorder %s43, 1
      %p548 = por %p546, %p547
      %p550 = scmp.ne.s32.totalorder %s533, %s549
      %p551 = scmp.eq.s32.totalorder %s43, 0
      %p552 = por %p550, %p551
      %s553 = ssub.s32 %s37, %s44
      %p554 = scmp.eq.s32.totalorder %s553, 0
      %s556 = sadd.s32 %s555, 1
      %s557 = scalar_select %p554, %s555, %s556
      %p560 = pneg %p554
      %p561 = scmp.eq.s32.totalorder %s37, 1
      %p562 = por %p560, %p561
      %p563 = scmp.ne.s32.totalorder %s555, %s558
      %p564 = scmp.eq.s32.totalorder %s37, 0
      %p565 = por %p563, %p564
      %p566 = scmp.ne.s32.totalorder %s555, %s558
      %p567 = scmp.eq.s32.totalorder %s42, 1
      %p568 = por %p566, %p567
      %p569 = scmp.ne.s32.totalorder %s558, %s559
      %p570 = scmp.eq.s32.totalorder %s42, 0
      %p571 = por %p569, %p570
      %p572 = scmp.ne.s32.totalorder %s558, %s559
      %p573 = scmp.eq.s32.totalorder %s43, 1
      %p574 = por %p572, %p573
      %p576 = scmp.ne.s32.totalorder %s559, %s575
      %p577 = scmp.eq.s32.totalorder %s43, 0
      %p578 = por %p576, %p577
      %s579 = ssub.s32 %s37, %s44
      %p580 = scmp.eq.s32.totalorder %s579, 0
      %s582 = sadd.s32 %s581, 1
      %s583 = scalar_select %p580, %s581, %s582
      %p586 = pneg %p580
      %p587 = scmp.eq.s32.totalorder %s37, 1
      %p588 = por %p586, %p587
      %p589 = scmp.ne.s32.totalorder %s581, %s584
      %p590 = scmp.eq.s32.totalorder %s37, 0
      %p591 = por %p589, %p590
      %p592 = scmp.ne.s32.totalorder %s581, %s584
      %p593 = scmp.eq.s32.totalorder %s42, 1
      %p594 = por %p592, %p593
      %p595 = scmp.ne.s32.totalorder %s584, %s585
      %p596 = scmp.eq.s32.totalorder %s42, 0
      %p597 = por %p595, %p596
      %p598 = scmp.ne.s32.totalorder %s584, %s585
      %p599 = scmp.eq.s32.totalorder %s43, 1
      %p600 = por %p598, %p599
      %p602 = scmp.ne.s32.totalorder %s585, %s601
      %p603 = scmp.eq.s32.totalorder %s43, 0
      %p604 = por %p602, %p603
      %p605 = scmp.le.s32.totalorder 1, %s37
      %p606 = scmp.lt.s32.totalorder %s37, 3
      %p607 = pnand %p605, %p606
      %p608 = pneg %p607
      // Predicated region
      $region9: #{_lambda_.10} parent=5 // pred_check
        _
      $region10: #{_lambda_.10} parent=5 // pred_check_branch
        %610 = sbr.rel (%p607) target = $region12
      $region11: #{_lambda_.10} parent=5 // pred_region
        %s611 = ssub.s32 %s37, 1
        // Predicated region
        $region13: #{_lambda_.10} parent=11 // pred_check
          %p612 = pneg %p162
        $region14: #{_lambda_.10} parent=11 // pred_check_branch
          %614 = sbr.rel (%p612) target = $region16
        $region15: #{_lambda_.10} parent=11 // pred_region
          _
        $region16: #{_lambda_.10} parent=11 // pred_fallthru
          _
        // Predicated region
        $region17: #{_lambda_.10} parent=11 // pred_check
          %p615 = pneg %p183
        $region18: #{_lambda_.10} parent=11 // pred_check_branch
          %617 = sbr.rel (%p615) target = $region20
        $region19: #{_lambda_.10} parent=11 // pred_region
          _
        $region20: #{_lambda_.10} parent=11 // pred_fallthru
          _
        // Predicated region
        $region21: #{_lambda_.10} parent=11 // pred_check
          %p618 = pneg %p204
        $region22: #{_lambda_.10} parent=11 // pred_check_branch
          %620 = sbr.rel (%p618) target = $region24
        $region23: #{_lambda_.10} parent=11 // pred_region
          _
        $region24: #{_lambda_.10} parent=11 // pred_fallthru
          _
        // Predicated region
        $region25: #{_lambda_.10} parent=11 // pred_check
          %p621 = pneg %p225
        $region26: #{_lambda_.10} parent=11 // pred_check_branch
          %623 = sbr.rel (%p621) target = $region28
        $region27: #{_lambda_.10} parent=11 // pred_region
          _
        $region28: #{_lambda_.10} parent=11 // pred_fallthru
          _
        // Predicated region
        $region29: #{_lambda_.10} parent=11 // pred_check
          %p624 = pneg %p246
        $region30: #{_lambda_.10} parent=11 // pred_check_branch
          %626 = sbr.rel (%p624) target = $region32
        $region31: #{_lambda_.10} parent=11 // pred_region
          _
        $region32: #{_lambda_.10} parent=11 // pred_fallthru
          _
        // Predicated region
        $region33: #{_lambda_.10} parent=11 // pred_check
          %p627 = pneg %p267
        $region34: #{_lambda_.10} parent=11 // pred_check_branch
          %629 = sbr.rel (%p627) target = $region36
        $region35: #{_lambda_.10} parent=11 // pred_region
          _
        $region36: #{_lambda_.10} parent=11 // pred_fallthru
          _
        // Predicated region
        $region37: #{_lambda_.10} parent=11 // pred_check
          %p630 = pneg %p288
        $region38: #{_lambda_.10} parent=11 // pred_check_branch
          %632 = sbr.rel (%p630) target = $region40
        $region39: #{_lambda_.10} parent=11 // pred_region
          _
        $region40: #{_lambda_.10} parent=11 // pred_fallthru
          _
        // Predicated region
        $region41: #{_lambda_.10} parent=11 // pred_check
          %p633 = pneg %p309
        $region42: #{_lambda_.10} parent=11 // pred_check_branch
          %635 = sbr.rel (%p633) target = $region44
        $region43: #{_lambda_.10} parent=11 // pred_region
          _
        $region44: #{_lambda_.10} parent=11 // pred_fallthru
          _
        // Predicated region
        $region45: #{_lambda_.10} parent=11 // pred_check
          %p636 = pneg %p330
        $region46: #{_lambda_.10} parent=11 // pred_check_branch
          %638 = sbr.rel (%p636) target = $region48
        $region47: #{_lambda_.10} parent=11 // pred_region
          _
        $region48: #{_lambda_.10} parent=11 // pred_fallthru
          _
        // Predicated region
        $region49: #{_lambda_.10} parent=11 // pred_check
          %p639 = pneg %p351
        $region50: #{_lambda_.10} parent=11 // pred_check_branch
          %641 = sbr.rel (%p639) target = $region52
        $region51: #{_lambda_.10} parent=11 // pred_region
          _
        $region52: #{_lambda_.10} parent=11 // pred_fallthru
          _
        // Predicated region
        $region53: #{_lambda_.10} parent=11 // pred_check
          %p642 = pneg %p372
        $region54: #{_lambda_.10} parent=11 // pred_check_branch
          %644 = sbr.rel (%p642) target = $region56
        $region55: #{_lambda_.10} parent=11 // pred_region
          _
        $region56: #{_lambda_.10} parent=11 // pred_fallthru
          _
        // Predicated region
        $region57: #{_lambda_.10} parent=11 // pred_check
          %p645 = pneg %p393
        $region58: #{_lambda_.10} parent=11 // pred_check_branch
          %647 = sbr.rel (%p645) target = $region60
        $region59: #{_lambda_.10} parent=11 // pred_region
          _
        $region60: #{_lambda_.10} parent=11 // pred_fallthru
          _
        // Predicated region
        $region61: #{_lambda_.10} parent=11 // pred_check
          %p648 = pneg %p414
        $region62: #{_lambda_.10} parent=11 // pred_check_branch
          %650 = sbr.rel (%p648) target = $region64
        $region63: #{_lambda_.10} parent=11 // pred_region
          _
        $region64: #{_lambda_.10} parent=11 // pred_fallthru
          _
        // Predicated region
        $region65: #{_lambda_.10} parent=11 // pred_check
          %p651 = pneg %p435
        $region66: #{_lambda_.10} parent=11 // pred_check_branch
          %653 = sbr.rel (%p651) target = $region68
        $region67: #{_lambda_.10} parent=11 // pred_region
          _
        $region68: #{_lambda_.10} parent=11 // pred_fallthru
          _
        // Predicated region
        $region69: #{_lambda_.10} parent=11 // pred_check
          %p654 = pneg %p456
        $region70: #{_lambda_.10} parent=11 // pred_check_branch
          %656 = sbr.rel (%p654) target = $region72
        $region71: #{_lambda_.10} parent=11 // pred_region
          _
        $region72: #{_lambda_.10} parent=11 // pred_fallthru
          _
        // Predicated region
        $region73: #{_lambda_.10} parent=11 // pred_check
          %p657 = pneg %p477
        $region74: #{_lambda_.10} parent=11 // pred_check_branch
          %659 = sbr.rel (%p657) target = $region76
        $region75: #{_lambda_.10} parent=11 // pred_region
          _
        $region76: #{_lambda_.10} parent=11 // pred_fallthru
          _
        // Predicated region
        $region77: #{_lambda_.10} parent=11 // pred_check
          %p660 = pneg %p498
        $region78: #{_lambda_.10} parent=11 // pred_check_branch
          %662 = sbr.rel (%p660) target = $region80
        $region79: #{_lambda_.10} parent=11 // pred_region
          _
        $region80: #{_lambda_.10} parent=11 // pred_fallthru
          _
        // Predicated region
        $region81: #{_lambda_.10} parent=11 // pred_check
          %p663 = pneg %p519
        $region82: #{_lambda_.10} parent=11 // pred_check_branch
          %665 = sbr.rel (%p663) target = $region84
        $region83: #{_lambda_.10} parent=11 // pred_region
          _
        $region84: #{_lambda_.10} parent=11 // pred_fallthru
          _
      $region12: #{_lambda_.10} parent=5 // pred_fallthru
        _
      %p666 = scmp.lt.s32.totalorder %s37, 2
      // Predicated region
      $region85: #{_lambda_.10} parent=5 // pred_check
        %p667 = pneg %p666
      $region86: #{_lambda_.10} parent=5 // pred_check_branch
        %669 = sbr.rel (%p667) target = $region88
      $region87: #{_lambda_.10} parent=5 // pred_region
        // Predicated region
        $region89: #{_lambda_.10} parent=87 // pred_check
          %p670 = pneg %p57
        $region90: #{_lambda_.10} parent=87 // pred_check_branch
          %672 = sbr.rel (%p670) target = $region92
        $region91: #{_lambda_.10} parent=87 // pred_region
          %p673 = scmp.lt.s32.totalorder %s37, 1
          %s674 = scalar_select %p673, %s37, 1
          %s675 = smul.addr %s674, 8
          %s676 = scalar_lea.vmem %s0, %s675
        $region92: #{_lambda_.10} parent=87 // pred_fallthru
          _
        // Predicated region
        $region93: #{_lambda_.10} parent=87 // pred_check
          %p677 = pneg %p83
        $region94: #{_lambda_.10} parent=87 // pred_check_branch
          %679 = sbr.rel (%p677) target = $region96
        $region95: #{_lambda_.10} parent=87 // pred_region
          %p680 = scmp.lt.s32.totalorder %s37, 1
          %s681 = scalar_select %p680, %s37, 1
          %s682 = smul.addr %s681, 4
          %s683 = scalar_lea.vmem %s1, %s682
        $region96: #{_lambda_.10} parent=87 // pred_fallthru
          _
        // Predicated region
        $region97: #{_lambda_.10} parent=87 // pred_check
          %p684 = pneg %p109
        $region98: #{_lambda_.10} parent=87 // pred_check_branch
          %686 = sbr.rel (%p684) target = $region100
        $region99: #{_lambda_.10} parent=87 // pred_region
          %p687 = scmp.lt.s32.totalorder %s37, 1
          %s688 = scalar_select %p687, %s37, 1
          %s689 = scalar_lea.vmem %s2, %s688
        $region100: #{_lambda_.10} parent=87 // pred_fallthru
          _
        // Predicated region
        $region101: #{_lambda_.10} parent=87 // pred_check
          %p690 = pneg %p135
        $region102: #{_lambda_.10} parent=87 // pred_check_branch
          %692 = sbr.rel (%p690) target = $region104
        $region103: #{_lambda_.10} parent=87 // pred_region
          %p693 = scmp.lt.s32.totalorder %s37, 1
          %s694 = scalar_select %p693, %s37, 1
          %s695 = scalar_lea.vmem %s3, %s694
        $region104: #{_lambda_.10} parent=87 // pred_fallthru
          _
      $region88: #{_lambda_.10} parent=5 // pred_fallthru
        _
      %p696 = scmp.le.s32.totalorder 1, %s37
      %p697 = scmp.lt.s32.totalorder %s37, 3
      %p698 = pnand %p696, %p697
      %p699 = pneg %p698
      // Predicated region
      $region105: #{_lambda_.10} parent=5 // pred_check
        _
      $region106: #{_lambda_.10} parent=5 // pred_check_branch
        %701 = sbr.rel (%p698) target = $region108
      $region107: #{_lambda_.10} parent=5 // pred_region
        %s702 = ssub.s32 %s37, 1
        %p703 = scmp.lt.s32.totalorder %s42, 1
        %s704 = scalar_select %p703, %s42, 1
        %s705 = smul.addr %s704, 8
        %s706 = scalar_lea.vmem %s0, %s705
        %p707 = pneg %p63
        %p708 = pneg %p60
        %p709 = scmp.lt.s32.totalorder %s42, 1
        %s710 = scalar_select %p709, %s42, 1
        %s711 = smul.addr %s710, 4
        %s712 = scalar_lea.vmem %s1, %s711
        %p713 = pneg %p89
        %p714 = pneg %p86
        %p715 = scmp.lt.s32.totalorder %s42, 1
        %s716 = scalar_select %p715, %s42, 1
        %s717 = scalar_lea.vmem %s2, %s716
        %p718 = pneg %p115
        %p719 = pneg %p112
        %p720 = scmp.lt.s32.totalorder %s42, 1
        %s721 = scalar_select %p720, %s42, 1
        %s722 = scalar_lea.vmem %s3, %s721
        %p723 = pneg %p141
        %p724 = pneg %p138
        %p725 = pneg %p162
        %p726 = pneg %p159
        %p727 = pneg %p183
        %p728 = pneg %p180
        %p729 = pneg %p204
        %p730 = pneg %p201
        %p731 = pneg %p225
        %p732 = pneg %p222
        %p733 = pneg %p246
        %p734 = pneg %p243
        %p735 = pneg %p267
        %p736 = pneg %p264
        %p737 = pneg %p288
        %p738 = pneg %p285
        %p739 = pneg %p309
        %p740 = pneg %p306
        %p741 = pneg %p330
        %p742 = pneg %p327
        %p743 = pneg %p351
        %p744 = pneg %p348
        %p745 = pneg %p372
        %p746 = pneg %p369
        %p747 = pneg %p393
        %p748 = pneg %p390
        %p749 = pneg %p414
        %p750 = pneg %p411
        %p751 = pneg %p435
        %p752 = pneg %p432
        %p753 = pneg %p456
        %p754 = pneg %p453
        %p755 = pneg %p477
        %p756 = pneg %p474
        %p757 = pneg %p498
        %p758 = pneg %p495
        %p759 = pneg %p519
        %p760 = pneg %p516
        %p761 = pneg %p545
        %p762 = pneg %p542
        %p763 = scmp.lt.s32.totalorder %s42, 1
        %s764 = scalar_select %p763, %s42, 1
        %s765 = smul.addr %s764, 8
        %s766 = scalar_lea.vmem %s22, %s765
        %p767 = pneg %p571
        %p768 = pneg %p568
        %s769 = sand.u32 %s558, 1
        %s770 = scalar_lea.sflag [#allocation3], %s769
        %s771 = sand.u32 %s558, 1
        %s772 = smul.addr %s771, 32
        %s773 = scalar_lea.vmem [#allocation2], %s772
        %p774 = pneg %p597
        %p775 = pneg %p594
        %s776 = sand.u32 %s584, 1
        %s777 = scalar_lea.sflag [#allocation5], %s776
        %s778 = sand.u32 %s584, 1
        %s779 = smul.addr %s778, 32
        %s780 = scalar_lea.vmem [#allocation4], %s779
        %p781 = scmp.lt.s32.totalorder %s42, 1
        %s782 = scalar_select %p781, %s42, 1
        %s783 = smul.addr %s782, 8
        %s784 = scalar_lea.vmem %s0, %s783
        %p785 = scmp.lt.s32.totalorder %s42, 1
        %s786 = scalar_select %p785, %s42, 1
        %s787 = smul.addr %s786, 4
        %s788 = scalar_lea.vmem %s1, %s787
        %p789 = scmp.lt.s32.totalorder %s42, 1
        %s790 = scalar_select %p789, %s42, 1
        %s791 = scalar_lea.vmem %s2, %s790
        %p792 = scmp.lt.s32.totalorder %s42, 1
        %s793 = scalar_select %p792, %s42, 1
        %s794 = scalar_lea.vmem %s3, %s793
        %p795 = scmp.lt.s32.totalorder %s42, 1
        %s796 = scalar_select %p795, %s42, 1
        %s797 = smul.addr %s796, 8
        %s798 = scalar_lea.vmem %s22, %s797
        %v800 = vld [vmem:[%s784] sm:$0xff]
        %v801 = vld [vmem:[%s788] sm:$0xf]
        %v802 = vlaneseq
        %v803 = vshrl.u32 %v802, 7
        %v804 = vlaneseq
        %v805 = vand.u32 %v804, 127
        %v806 = vld [vmem:[%s791] sm:$0x1]
        %vm807 = vcmp.ne.s32.totalorder %v806, 0
        %vm808 = vcmp.gt.s32.totalorder %v805, %v803
        %v809 = vsel %vm807, 1, 0
        %v810 = vperm.slane %v809, 0
        %vm811 = vcmp.eq.s32.totalorder %v810, 1
        %vm812 = vmor %vm811, %vm808
        %v813 = vld [vmem:[%s794] sm:$0x1]
        %vm814 = vcmp.ne.s32.totalorder %v813, 0
        %v815 = vpack.c.bf16 %v800, %v800
        %v816 = vld [vmem:[%s4] sm:$0xf]
        %v817 = vld [vmem:[%s4 + $0x4] sm:$0xf]
        %v818 = vld [vmem:[%s4 + $0x8] sm:$0xf]
        %v819 = vld [vmem:[%s4 + $0xc] sm:$0xf]
        %v820 = vld [vmem:[%s4 + $0x10] sm:$0xf]
        %v821 = vld [vmem:[%s4 + $0x14] sm:$0xf]
        %v822 = vld [vmem:[%s4 + $0x18] sm:$0xf]
        %v823 = vld [vmem:[%s4 + $0x1c] sm:$0xf]
        %v824 = vld [vmem:[%s4 + $0x20] sm:$0xf]
        %v825 = vld [vmem:[%s4 + $0x24] sm:$0xf]
        %v826 = vld [vmem:[%s4 + $0x28] sm:$0xf]
        %v827 = vld [vmem:[%s4 + $0x2c] sm:$0xf]
        %v828 = vld [vmem:[%s4 + $0x30] sm:$0xf]
        %v829 = vld [vmem:[%s4 + $0x34] sm:$0xf]
        %v830 = vld [vmem:[%s4 + $0x38] sm:$0xf]
        %v831 = vld [vmem:[%s4 + $0x3c] sm:$0xf]
        %v832 = vld [vmem:[%s4 + $0x40] sm:$0xf]
        %v833 = vld [vmem:[%s4 + $0x44] sm:$0xf]
        %v834 = vld [vmem:[%s4 + $0x48] sm:$0xf]
        %v835 = vld [vmem:[%s4 + $0x4c] sm:$0xf]
        %v836 = vld [vmem:[%s4 + $0x50] sm:$0xf]
        %v837 = vld [vmem:[%s4 + $0x54] sm:$0xf]
        %v838 = vld [vmem:[%s4 + $0x58] sm:$0xf]
        %v839 = vld [vmem:[%s4 + $0x5c] sm:$0xf]
        %v840 = vld [vmem:[%s4 + $0x60] sm:$0xf]
        %v841 = vld [vmem:[%s4 + $0x64] sm:$0xf]
        %v842 = vld [vmem:[%s4 + $0x68] sm:$0xf]
        %v843 = vld [vmem:[%s4 + $0x6c] sm:$0xf]
        %v844 = vld [vmem:[%s4 + $0x70] sm:$0xf]
        %v845 = vld [vmem:[%s4 + $0x74] sm:$0xf]
        %v846 = vld [vmem:[%s4 + $0x78] sm:$0xf]
        %v847 = vld [vmem:[%s4 + $0x7c] sm:$0xf]
        %v848 = vld [vmem:[%s5] sm:$0xf]
        %v849 = vld [vmem:[%s5 + $0x4] sm:$0xf]
        %v850 = vld [vmem:[%s5 + $0x8] sm:$0xf]
        %v851 = vld [vmem:[%s5 + $0xc] sm:$0xf]
        %v852 = vld [vmem:[%s5 + $0x10] sm:$0xf]
        %v853 = vld [vmem:[%s5 + $0x14] sm:$0xf]
        %v854 = vld [vmem:[%s5 + $0x18] sm:$0xf]
        %v855 = vld [vmem:[%s5 + $0x1c] sm:$0xf]
        %v856 = vld [vmem:[%s5 + $0x20] sm:$0xf]
        %v857 = vld [vmem:[%s5 + $0x24] sm:$0xf]
        %v858 = vld [vmem:[%s5 + $0x28] sm:$0xf]
        %v859 = vld [vmem:[%s5 + $0x2c] sm:$0xf]
        %v860 = vld [vmem:[%s5 + $0x30] sm:$0xf]
        %v861 = vld [vmem:[%s5 + $0x34] sm:$0xf]
        %v862 = vld [vmem:[%s5 + $0x38] sm:$0xf]
        %v863 = vld [vmem:[%s5 + $0x3c] sm:$0xf]
        %v864 = vld [vmem:[%s5 + $0x40] sm:$0xf]
        %v865 = vld [vmem:[%s5 + $0x44] sm:$0xf]
        %v866 = vld [vmem:[%s5 + $0x48] sm:$0xf]
        %v867 = vld [vmem:[%s5 + $0x4c] sm:$0xf]
        %v868 = vld [vmem:[%s5 + $0x50] sm:$0xf]
        %v869 = vld [vmem:[%s5 + $0x54] sm:$0xf]
        %v870 = vld [vmem:[%s5 + $0x58] sm:$0xf]
        %v871 = vld [vmem:[%s5 + $0x5c] sm:$0xf]
        %v872 = vld [vmem:[%s5 + $0x60] sm:$0xf]
        %v873 = vld [vmem:[%s5 + $0x64] sm:$0xf]
        %v874 = vld [vmem:[%s5 + $0x68] sm:$0xf]
        %v875 = vld [vmem:[%s5 + $0x6c] sm:$0xf]
        %v876 = vld [vmem:[%s5 + $0x70] sm:$0xf]
        %v877 = vld [vmem:[%s5 + $0x74] sm:$0xf]
        %v878 = vld [vmem:[%s5 + $0x78] sm:$0xf]
        %v879 = vld [vmem:[%s5 + $0x7c] sm:$0xf]
        %v880 = vld [vmem:[%s6] sm:$0xf]
        %v881 = vld [vmem:[%s6 + $0x4] sm:$0xf]
        %v882 = vld [vmem:[%s6 + $0x8] sm:$0xf]
        %v883 = vld [vmem:[%s6 + $0xc] sm:$0xf]
        %v884 = vld [vmem:[%s6 + $0x10] sm:$0xf]
        %v885 = vld [vmem:[%s6 + $0x14] sm:$0xf]
        %v886 = vld [vmem:[%s6 + $0x18] sm:$0xf]
        %v887 = vld [vmem:[%s6 + $0x1c] sm:$0xf]
        %v888 = vld [vmem:[%s6 + $0x20] sm:$0xf]
        %v889 = vld [vmem:[%s6 + $0x24] sm:$0xf]
        %v890 = vld [vmem:[%s6 + $0x28] sm:$0xf]
        %v891 = vld [vmem:[%s6 + $0x2c] sm:$0xf]
        %v892 = vld [vmem:[%s6 + $0x30] sm:$0xf]
        %v893 = vld [vmem:[%s6 + $0x34] sm:$0xf]
        %v894 = vld [vmem:[%s6 + $0x38] sm:$0xf]
        %v895 = vld [vmem:[%s6 + $0x3c] sm:$0xf]
        %v896 = vld [vmem:[%s6 + $0x40] sm:$0xf]
        %v897 = vld [vmem:[%s6 + $0x44] sm:$0xf]
        %v898 = vld [vmem:[%s6 + $0x48] sm:$0xf]
        %v899 = vld [vmem:[%s6 + $0x4c] sm:$0xf]
        %v900 = vld [vmem:[%s6 + $0x50] sm:$0xf]
        %v901 = vld [vmem:[%s6 + $0x54] sm:$0xf]
        %v902 = vld [vmem:[%s6 + $0x58] sm:$0xf]
        %v903 = vld [vmem:[%s6 + $0x5c] sm:$0xf]
        %v904 = vld [vmem:[%s6 + $0x60] sm:$0xf]
        %v905 = vld [vmem:[%s6 + $0x64] sm:$0xf]
        %v906 = vld [vmem:[%s6 + $0x68] sm:$0xf]
        %v907 = vld [vmem:[%s6 + $0x6c] sm:$0xf]
        %v908 = vld [vmem:[%s6 + $0x70] sm:$0xf]
        %v909 = vld [vmem:[%s6 + $0x74] sm:$0xf]
        %v910 = vld [vmem:[%s6 + $0x78] sm:$0xf]
        %v911 = vld [vmem:[%s6 + $0x7c] sm:$0xf]
        %v912 = vld [vmem:[%s7] sm:$0xf]
        %v913 = vld [vmem:[%s7 + $0x4] sm:$0xf]
        %v914 = vld [vmem:[%s7 + $0x8] sm:$0xf]
        %v915 = vld [vmem:[%s7 + $0xc] sm:$0xf]
        %v916 = vld [vmem:[%s7 + $0x10] sm:$0xf]
        %v917 = vld [vmem:[%s7 + $0x14] sm:$0xf]
        %v918 = vld [vmem:[%s7 + $0x18] sm:$0xf]
        %v919 = vld [vmem:[%s7 + $0x1c] sm:$0xf]
        %v920 = vld [vmem:[%s8] sm:$0x1]
        %v921 = vld [vmem:[%s9] sm:$0x1]
        %v930 = vunpack.c.l.b16 %v816
        %v931 = vunpack.c.l.b16 %v817
        %v932 = vunpack.c.l.b16 %v818
        %v933 = vunpack.c.l.b16 %v819
        %v934 = vunpack.c.l.b16 %v820
        %v935 = vunpack.c.l.b16 %v821
        %v936 = vunpack.c.l.b16 %v822
        %v937 = vunpack.c.l.b16 %v823
        %v938 = vpack.c.b16 %v931, %v930
        %v939 = vpack.c.b16 %v933, %v932
        %v940 = vpack.c.b16 %v935, %v934
        %v941 = vpack.c.b16 %v937, %v936
        %vm946 = vcmask 523264
        %v948 = vsel %vm946, %v815, 0
        %950 = vmatpush.bf16.msra.mxu0 0
        %951 = vmatpush.bf16.msra.mxu0 0
        %952 = vmatpush.bf16.msra.mxu0 0
        %953 = vmatpush.bf16.msra.mxu0 0
        %954 = vmatpush.bf16.msra.mxu0 %v941
        %955 = vmatpush.bf16.msra.mxu0 %v940
        %956 = vmatpush.bf16.msra.mxu0 %v939
        %957 = vmatpush.bf16.msra.mxu0 %v938
        %958 = vmatmul.bf16.gmra.mxu0 %v948
        %v959 = vpop.f32.mrf.mxu0
        %v960 = vadd.f32 0.0, %v959
        %v961 = vpop.f32.mrf.mxu0
        %962 = vdwg.mxu0
        %v971 = vunpack.c.l.b16 %v824
        %v972 = vunpack.c.l.b16 %v825
        %v973 = vunpack.c.l.b16 %v826
        %v974 = vunpack.c.l.b16 %v827
        %v975 = vunpack.c.l.b16 %v828
        %v976 = vunpack.c.l.b16 %v829
        %v977 = vunpack.c.l.b16 %v830
        %v978 = vunpack.c.l.b16 %v831
        %v979 = vpack.c.b16 %v972, %v971
        %v980 = vpack.c.b16 %v974, %v973
        %v981 = vpack.c.b16 %v976, %v975
        %v982 = vpack.c.b16 %v978, %v977
        %987 = vmatpush.bf16.msra.mxu0 0
        %988 = vmatpush.bf16.msra.mxu0 0
        %989 = vmatpush.bf16.msra.mxu0 0
        %990 = vmatpush.bf16.msra.mxu0 0
        %991 = vmatpush.bf16.msra.mxu0 %v982
        %992 = vmatpush.bf16.msra.mxu0 %v981
        %993 = vmatpush.bf16.msra.mxu0 %v980
        %994 = vmatpush.bf16.msra.mxu0 %v979
        %995 = vmatmul.bf16.gmra.mxu0 %v948
        %v996 = vpop.f32.mrf.mxu0
        %v997 = vadd.f32 0.0, %v996
        %v998 = vpop.f32.mrf.mxu0
        %999 = vdwg.mxu0
        %v1008 = vunpack.c.l.b16 %v832
        %v1009 = vunpack.c.l.b16 %v833
        %v1010 = vunpack.c.l.b16 %v834
        %v1011 = vunpack.c.l.b16 %v835
        %v1012 = vunpack.c.l.b16 %v836
        %v1013 = vunpack.c.l.b16 %v837
        %v1014 = vunpack.c.l.b16 %v838
        %v1015 = vunpack.c.l.b16 %v839
        %v1016 = vpack.c.b16 %v1009, %v1008
        %v1017 = vpack.c.b16 %v1011, %v1010
        %v1018 = vpack.c.b16 %v1013, %v1012
        %v1019 = vpack.c.b16 %v1015, %v1014
        %1024 = vmatpush.bf16.msra.mxu0 0
        %1025 = vmatpush.bf16.msra.mxu0 0
        %1026 = vmatpush.bf16.msra.mxu0 0
        %1027 = vmatpush.bf16.msra.mxu0 0
        %1028 = vmatpush.bf16.msra.mxu0 %v1019
        %1029 = vmatpush.bf16.msra.mxu0 %v1018
        %1030 = vmatpush.bf16.msra.mxu0 %v1017
        %1031 = vmatpush.bf16.msra.mxu0 %v1016
        %1032 = vmatmul.bf16.gmra.mxu0 %v948
        %v1033 = vpop.f32.mrf.mxu0
        %v1034 = vadd.f32 0.0, %v1033
        %v1035 = vpop.f32.mrf.mxu0
        %1036 = vdwg.mxu0
        %v1045 = vunpack.c.l.b16 %v840
        %v1046 = vunpack.c.l.b16 %v841
        %v1047 = vunpack.c.l.b16 %v842
        %v1048 = vunpack.c.l.b16 %v843
        %v1049 = vunpack.c.l.b16 %v844
        %v1050 = vunpack.c.l.b16 %v845
        %v1051 = vunpack.c.l.b16 %v846
        %v1052 = vunpack.c.l.b16 %v847
        %v1053 = vpack.c.b16 %v1046, %v1045
        %v1054 = vpack.c.b16 %v1048, %v1047
        %v1055 = vpack.c.b16 %v1050, %v1049
        %v1056 = vpack.c.b16 %v1052, %v1051
        %1061 = vmatpush.bf16.msra.mxu0 0
        %1062 = vmatpush.bf16.msra.mxu0 0
        %1063 = vmatpush.bf16.msra.mxu0 0
        %1064 = vmatpush.bf16.msra.mxu0 0
        %1065 = vmatpush.bf16.msra.mxu0 %v1056
        %1066 = vmatpush.bf16.msra.mxu0 %v1055
        %1067 = vmatpush.bf16.msra.mxu0 %v1054
        %1068 = vmatpush.bf16.msra.mxu0 %v1053
        %1069 = vmatmul.bf16.gmra.mxu0 %v948
        %v1070 = vpop.f32.mrf.mxu0
        %v1071 = vadd.f32 0.0, %v1070
        %v1072 = vpop.f32.mrf.mxu0
        %1073 = vdwg.mxu0
        %v1074 = vpack.c.bf16 %v960, %v960
        %v1075 = vpack.c.bf16 %v997, %v997
        %v1076 = vpack.c.bf16 %v1034, %v1034
        %v1077 = vpack.c.bf16 %v1071, %v1071
        %v1086 = vunpack.c.l.b16 %v848
        %v1087 = vunpack.c.l.b16 %v849
        %v1088 = vunpack.c.l.b16 %v850
        %v1089 = vunpack.c.l.b16 %v851
        %v1090 = vunpack.c.l.b16 %v852
        %v1091 = vunpack.c.l.b16 %v853
        %v1092 = vunpack.c.l.b16 %v854
        %v1093 = vunpack.c.l.b16 %v855
        %v1094 = vpack.c.b16 %v1087, %v1086
        %v1095 = vpack.c.b16 %v1089, %v1088
        %v1096 = vpack.c.b16 %v1091, %v1090
        %v1097 = vpack.c.b16 %v1093, %v1092
        %1102 = vmatpush.bf16.msra.mxu0 0
        %1103 = vmatpush.bf16.msra.mxu0 0
        %1104 = vmatpush.bf16.msra.mxu0 0
        %1105 = vmatpush.bf16.msra.mxu0 0
        %1106 = vmatpush.bf16.msra.mxu0 %v1097
        %1107 = vmatpush.bf16.msra.mxu0 %v1096
        %1108 = vmatpush.bf16.msra.mxu0 %v1095
        %1109 = vmatpush.bf16.msra.mxu0 %v1094
        %1110 = vmatmul.bf16.gmra.mxu0 %v948
        %v1111 = vpop.f32.mrf.mxu0
        %v1112 = vadd.f32 0.0, %v1111
        %v1113 = vpop.f32.mrf.mxu0
        %1114 = vdwg.mxu0
        %v1123 = vunpack.c.l.b16 %v856
        %v1124 = vunpack.c.l.b16 %v857
        %v1125 = vunpack.c.l.b16 %v858
        %v1126 = vunpack.c.l.b16 %v859
        %v1127 = vunpack.c.l.b16 %v860
        %v1128 = vunpack.c.l.b16 %v861
        %v1129 = vunpack.c.l.b16 %v862
        %v1130 = vunpack.c.l.b16 %v863
        %v1131 = vpack.c.b16 %v1124, %v1123
        %v1132 = vpack.c.b16 %v1126, %v1125
        %v1133 = vpack.c.b16 %v1128, %v1127
        %v1134 = vpack.c.b16 %v1130, %v1129
        %1139 = vmatpush.bf16.msra.mxu0 0
        %1140 = vmatpush.bf16.msra.mxu0 0
        %1141 = vmatpush.bf16.msra.mxu0 0
        %1142 = vmatpush.bf16.msra.mxu0 0
        %1143 = vmatpush.bf16.msra.mxu0 %v1134
        %1144 = vmatpush.bf16.msra.mxu0 %v1133
        %1145 = vmatpush.bf16.msra.mxu0 %v1132
        %1146 = vmatpush.bf16.msra.mxu0 %v1131
        %1147 = vmatmul.bf16.gmra.mxu0 %v948
        %v1148 = vpop.f32.mrf.mxu0
        %v1149 = vadd.f32 0.0, %v1148
        %v1150 = vpop.f32.mrf.mxu0
        %1151 = vdwg.mxu0
        %v1160 = vunpack.c.l.b16 %v864
        %v1161 = vunpack.c.l.b16 %v865
        %v1162 = vunpack.c.l.b16 %v866
        %v1163 = vunpack.c.l.b16 %v867
        %v1164 = vunpack.c.l.b16 %v868
        %v1165 = vunpack.c.l.b16 %v869
        %v1166 = vunpack.c.l.b16 %v870
        %v1167 = vunpack.c.l.b16 %v871
        %v1168 = vpack.c.b16 %v1161, %v1160
        %v1169 = vpack.c.b16 %v1163, %v1162
        %v1170 = vpack.c.b16 %v1165, %v1164
        %v1171 = vpack.c.b16 %v1167, %v1166
        %1176 = vmatpush.bf16.msra.mxu0 0
        %1177 = vmatpush.bf16.msra.mxu0 0
        %1178 = vmatpush.bf16.msra.mxu0 0
        %1179 = vmatpush.bf16.msra.mxu0 0
        %1180 = vmatpush.bf16.msra.mxu0 %v1171
        %1181 = vmatpush.bf16.msra.mxu0 %v1170
        %1182 = vmatpush.bf16.msra.mxu0 %v1169
        %1183 = vmatpush.bf16.msra.mxu0 %v1168
        %1184 = vmatmul.bf16.gmra.mxu0 %v948
        %v1185 = vpop.f32.mrf.mxu0
        %v1186 = vadd.f32 0.0, %v1185
        %v1187 = vpop.f32.mrf.mxu0
        %1188 = vdwg.mxu0
        %v1197 = vunpack.c.l.b16 %v872
        %v1198 = vunpack.c.l.b16 %v873
        %v1199 = vunpack.c.l.b16 %v874
        %v1200 = vunpack.c.l.b16 %v875
        %v1201 = vunpack.c.l.b16 %v876
        %v1202 = vunpack.c.l.b16 %v877
        %v1203 = vunpack.c.l.b16 %v878
        %v1204 = vunpack.c.l.b16 %v879
        %v1205 = vpack.c.b16 %v1198, %v1197
        %v1206 = vpack.c.b16 %v1200, %v1199
        %v1207 = vpack.c.b16 %v1202, %v1201
        %v1208 = vpack.c.b16 %v1204, %v1203
        %1213 = vmatpush.bf16.msra.mxu0 0
        %1214 = vmatpush.bf16.msra.mxu0 0
        %1215 = vmatpush.bf16.msra.mxu0 0
        %1216 = vmatpush.bf16.msra.mxu0 0
        %1217 = vmatpush.bf16.msra.mxu0 %v1208
        %1218 = vmatpush.bf16.msra.mxu0 %v1207
        %1219 = vmatpush.bf16.msra.mxu0 %v1206
        %1220 = vmatpush.bf16.msra.mxu0 %v1205
        %1221 = vmatmul.bf16.gmra.mxu0 %v948
        %v1222 = vpop.f32.mrf.mxu0
        %v1223 = vadd.f32 0.0, %v1222
        %v1224 = vpop.f32.mrf.mxu0
        %1225 = vdwg.mxu0
        %v1226 = vpack.c.bf16 %v1112, %v1112
        %v1227 = vpack.c.bf16 %v1149, %v1149
        %v1228 = vpack.c.bf16 %v1186, %v1186
        %v1229 = vpack.c.bf16 %v1223, %v1223
        %v1238 = vunpack.c.l.b16 %v880
        %v1239 = vunpack.c.l.b16 %v881
        %v1240 = vunpack.c.l.b16 %v882
        %v1241 = vunpack.c.l.b16 %v883
        %v1242 = vunpack.c.l.b16 %v884
        %v1243 = vunpack.c.l.b16 %v885
        %v1244 = vunpack.c.l.b16 %v886
        %v1245 = vunpack.c.l.b16 %v887
        %v1246 = vpack.c.b16 %v1239, %v1238
        %v1247 = vpack.c.b16 %v1241, %v1240
        %v1248 = vpack.c.b16 %v1243, %v1242
        %v1249 = vpack.c.b16 %v1245, %v1244
        %1254 = vmatpush.bf16.msra.mxu0 0
        %1255 = vmatpush.bf16.msra.mxu0 0
        %1256 = vmatpush.bf16.msra.mxu0 0
        %1257 = vmatpush.bf16.msra.mxu0 0
        %1258 = vmatpush.bf16.msra.mxu0 %v1249
        %1259 = vmatpush.bf16.msra.mxu0 %v1248
        %1260 = vmatpush.bf16.msra.mxu0 %v1247
        %1261 = vmatpush.bf16.msra.mxu0 %v1246
        %1262 = vmatmul.bf16.gmra.mxu0 %v948
        %v1263 = vpop.f32.mrf.mxu0
        %v1264 = vadd.f32 0.0, %v1263
        %v1265 = vpop.f32.mrf.mxu0
        %1266 = vdwg.mxu0
        %v1275 = vunpack.c.l.b16 %v888
        %v1276 = vunpack.c.l.b16 %v889
        %v1277 = vunpack.c.l.b16 %v890
        %v1278 = vunpack.c.l.b16 %v891
        %v1279 = vunpack.c.l.b16 %v892
        %v1280 = vunpack.c.l.b16 %v893
        %v1281 = vunpack.c.l.b16 %v894
        %v1282 = vunpack.c.l.b16 %v895
        %v1283 = vpack.c.b16 %v1276, %v1275
        %v1284 = vpack.c.b16 %v1278, %v1277
        %v1285 = vpack.c.b16 %v1280, %v1279
        %v1286 = vpack.c.b16 %v1282, %v1281
        %1291 = vmatpush.bf16.msra.mxu0 0
        %1292 = vmatpush.bf16.msra.mxu0 0
        %1293 = vmatpush.bf16.msra.mxu0 0
        %1294 = vmatpush.bf16.msra.mxu0 0
        %1295 = vmatpush.bf16.msra.mxu0 %v1286
        %1296 = vmatpush.bf16.msra.mxu0 %v1285
        %1297 = vmatpush.bf16.msra.mxu0 %v1284
        %1298 = vmatpush.bf16.msra.mxu0 %v1283
        %1299 = vmatmul.bf16.gmra.mxu0 %v948
        %v1300 = vpop.f32.mrf.mxu0
        %v1301 = vadd.f32 0.0, %v1300
        %v1302 = vpop.f32.mrf.mxu0
        %1303 = vdwg.mxu0
        %v1312 = vunpack.c.l.b16 %v896
        %v1313 = vunpack.c.l.b16 %v897
        %v1314 = vunpack.c.l.b16 %v898
        %v1315 = vunpack.c.l.b16 %v899
        %v1316 = vunpack.c.l.b16 %v900
        %v1317 = vunpack.c.l.b16 %v901
        %v1318 = vunpack.c.l.b16 %v902
        %v1319 = vunpack.c.l.b16 %v903
        %v1320 = vpack.c.b16 %v1313, %v1312
        %v1321 = vpack.c.b16 %v1315, %v1314
        %v1322 = vpack.c.b16 %v1317, %v1316
        %v1323 = vpack.c.b16 %v1319, %v1318
        %1328 = vmatpush.bf16.msra.mxu0 0
        %1329 = vmatpush.bf16.msra.mxu0 0
        %1330 = vmatpush.bf16.msra.mxu0 0
        %1331 = vmatpush.bf16.msra.mxu0 0
        %1332 = vmatpush.bf16.msra.mxu0 %v1323
        %1333 = vmatpush.bf16.msra.mxu0 %v1322
        %1334 = vmatpush.bf16.msra.mxu0 %v1321
        %1335 = vmatpush.bf16.msra.mxu0 %v1320
        %1336 = vmatmul.bf16.gmra.mxu0 %v948
        %v1337 = vpop.f32.mrf.mxu0
        %v1338 = vadd.f32 0.0, %v1337
        %v1339 = vpop.f32.mrf.mxu0
        %1340 = vdwg.mxu0
        %v1349 = vunpack.c.l.b16 %v904
        %v1350 = vunpack.c.l.b16 %v905
        %v1351 = vunpack.c.l.b16 %v906
        %v1352 = vunpack.c.l.b16 %v907
        %v1353 = vunpack.c.l.b16 %v908
        %v1354 = vunpack.c.l.b16 %v909
        %v1355 = vunpack.c.l.b16 %v910
        %v1356 = vunpack.c.l.b16 %v911
        %v1357 = vpack.c.b16 %v1350, %v1349
        %v1358 = vpack.c.b16 %v1352, %v1351
        %v1359 = vpack.c.b16 %v1354, %v1353
        %v1360 = vpack.c.b16 %v1356, %v1355
        %1365 = vmatpush.bf16.msra.mxu0 0
        %1366 = vmatpush.bf16.msra.mxu0 0
        %1367 = vmatpush.bf16.msra.mxu0 0
        %1368 = vmatpush.bf16.msra.mxu0 0
        %1369 = vmatpush.bf16.msra.mxu0 %v1360
        %1370 = vmatpush.bf16.msra.mxu0 %v1359
        %1371 = vmatpush.bf16.msra.mxu0 %v1358
        %1372 = vmatpush.bf16.msra.mxu0 %v1357
        %1373 = vmatmul.bf16.gmra.mxu0 %v948
        %v1374 = vpop.f32.mrf.mxu0
        %v1375 = vadd.f32 0.0, %v1374
        %v1376 = vpop.f32.mrf.mxu0
        %1377 = vdwg.mxu0
        %v1378 = vpack.c.bf16 %v1264, %v1264
        %v1379 = vpack.c.bf16 %v1301, %v1301
        %v1380 = vpack.c.bf16 %v1338, %v1338
        %v1381 = vpack.c.bf16 %v1375, %v1375
        %vm1382 = vcmask 130048
        %v1384 = vsel %vm1382, %v1074, 0
        %v1387 = vsel %vm1382, %v1226, 0
        %1389 = vmatpush.bf16.xpose.msra.mxu0 0
        %1390 = vmatpush.bf16.xpose.msra.mxu0 0
        %1391 = vmatpush.bf16.xpose.msra.mxu0 0
        %1392 = vmatpush.bf16.xpose.msra.mxu0 0
        %1393 = vmatpush.bf16.xpose.msra.mxu0 0
        %1394 = vmatpush.bf16.xpose.msra.mxu0 0
        %1395 = vmatpush.bf16.xpose.msra.mxu0 0
        %1396 = vmatpush.bf16.xpose.msra.mxu0 %v1387
        %1397 = vmatmul.bf16.gmra.mxu0 %v1384
        %v1398 = vpop.f32.mrf.mxu0
        %v1399 = vadd.f32 0.0, %v1398
        %v1400 = vpop.f32.mrf.mxu0
        %1401 = vdwg.mxu0
        %v1403 = vsel %vm1382, %v1075, 0
        %v1406 = vsel %vm1382, %v1227, 0
        %1408 = vmatpush.bf16.xpose.msra.mxu0 0
        %1409 = vmatpush.bf16.xpose.msra.mxu0 0
        %1410 = vmatpush.bf16.xpose.msra.mxu0 0
        %1411 = vmatpush.bf16.xpose.msra.mxu0 0
        %1412 = vmatpush.bf16.xpose.msra.mxu0 0
        %1413 = vmatpush.bf16.xpose.msra.mxu0 0
        %1414 = vmatpush.bf16.xpose.msra.mxu0 0
        %1415 = vmatpush.bf16.xpose.msra.mxu0 %v1406
        %1416 = vmatmul.bf16.gmra.mxu0 %v1403
        %v1417 = vpop.f32.mrf.mxu0
        %v1418 = vadd.f32 0.0, %v1417
        %v1419 = vpop.f32.mrf.mxu0
        %1420 = vdwg.mxu0
        %v1422 = vsel %vm1382, %v1076, 0
        %v1425 = vsel %vm1382, %v1228, 0
        %1427 = vmatpush.bf16.xpose.msra.mxu0 0
        %1428 = vmatpush.bf16.xpose.msra.mxu0 0
        %1429 = vmatpush.bf16.xpose.msra.mxu0 0
        %1430 = vmatpush.bf16.xpose.msra.mxu0 0
        %1431 = vmatpush.bf16.xpose.msra.mxu0 0
        %1432 = vmatpush.bf16.xpose.msra.mxu0 0
        %1433 = vmatpush.bf16.xpose.msra.mxu0 0
        %1434 = vmatpush.bf16.xpose.msra.mxu0 %v1425
        %1435 = vmatmul.bf16.gmra.mxu0 %v1422
        %v1436 = vpop.f32.mrf.mxu0
        %v1437 = vadd.f32 0.0, %v1436
        %v1438 = vpop.f32.mrf.mxu0
        %1439 = vdwg.mxu0
        %v1441 = vsel %vm1382, %v1077, 0
        %v1444 = vsel %vm1382, %v1229, 0
        %1446 = vmatpush.bf16.xpose.msra.mxu0 0
        %1447 = vmatpush.bf16.xpose.msra.mxu0 0
        %1448 = vmatpush.bf16.xpose.msra.mxu0 0
        %1449 = vmatpush.bf16.xpose.msra.mxu0 0
        %1450 = vmatpush.bf16.xpose.msra.mxu0 0
        %1451 = vmatpush.bf16.xpose.msra.mxu0 0
        %1452 = vmatpush.bf16.xpose.msra.mxu0 0
        %1453 = vmatpush.bf16.xpose.msra.mxu0 %v1444
        %1454 = vmatmul.bf16.gmra.mxu0 %v1441
        %v1455 = vpop.f32.mrf.mxu0
        %v1456 = vadd.f32 0.0, %v1455
        %v1457 = vpop.f32.mrf.mxu0
        %1458 = vdwg.mxu0
        %v1459 = vsel %vm812, 1, 0
        %vm1460 = vcmp.eq.s32.totalorder %v1459, 1
        %v1461 = vsel %vm1460, -1e+09, %v1399
        %v1462 = vsel %vm1460, -1e+09, %v1418
        %v1463 = vsel %vm1460, -1e+09, %v1437
        %v1464 = vsel %vm1460, -1e+09, %v1456
        %vm1465 = vcmask 64512
        %v1466 = vsel %vm1465, %v1461, -inf
        %1467 = vmax.xlane.f32.xlu0 %v1466
        %v1468 = vpop.xlane.xlu0 %1467
        %v1469 = vsel %vm1465, %v1462, -inf
        %1470 = vmax.xlane.f32.xlu0 %v1469
        %v1471 = vpop.xlane.xlu0 %1470
        %v1472 = vsel %vm1465, %v1463, -inf
        %1473 = vmax.xlane.f32.xlu0 %v1472
        %v1474 = vpop.xlane.xlu0 %1473
        %v1475 = vsel %vm1465, %v1464, -inf
        %1476 = vmax.xlane.f32.xlu0 %v1475
        %v1477 = vpop.xlane.xlu0 %1476
        %v1478 = vsub.f32 %v1461, %v1468
        %v1479 = vsub.f32 %v1462, %v1471
        %v1480 = vsub.f32 %v1463, %v1474
        %v1481 = vsub.f32 %v1464, %v1477
        %v1482 = vmul.f32 %v1478, 1.442695
        %v1483 = vpow.pop %v1482
        %v1484 = vmul.f32 %v1479, 1.442695
        %v1485 = vpow.pop %v1484
        %v1486 = vmul.f32 %v1480, 1.442695
        %v1487 = vpow.pop %v1486
        %v1488 = vmul.f32 %v1481, 1.442695
        %v1489 = vpow.pop %v1488
        %v1490 = vsel %vm1465, %v1483, 0.0
        %1491 = vadd.xlane.f32.xlu0 %v1490
        %v1492 = vpop.xlane.xlu0 %1491
        %v1493 = vsel %vm1465, %v1485, 0.0
        %1494 = vadd.xlane.f32.xlu0 %v1493
        %v1495 = vpop.xlane.xlu0 %1494
        %v1496 = vsel %vm1465, %v1487, 0.0
        %1497 = vadd.xlane.f32.xlu0 %v1496
        %v1498 = vpop.xlane.xlu0 %1497
        %v1499 = vsel %vm1465, %v1489, 0.0
        %1500 = vadd.xlane.f32.xlu0 %v1499
        %v1501 = vpop.xlane.xlu0 %1500
        %v1502 = vrcp.pop %v1492
        %v1503 = vmul.f32 %v1492, %v1502
        %v1504 = vsub.f32 1.0, %v1503
        %v1505 = vmul.f32 %v1502, %v1504
        %v1506 = vadd.f32 %v1502, %v1505
        %vm1507 = vweird.f32 %v1492
        %vm1508 = vweird.f32 %v1502
        %vm1509 = vmor %vm1507, %vm1508
        %v1510 = vsel %vm1509, %v1502, %v1506
        %v1511 = vand.u32 2147483647, %v1492
        %vm1512 = vcmp.eq.f32.partialorder %v1511, 8.507059e+37
        %v1513 = vand.u32 %v1492, 2147483648
        %v1514 = vor.u32 1.1754944e-38, %v1513
        %v1515 = vsel %vm1512, %v1514, %v1510
        %v1516 = vmul.f32 %v1483, %v1515
        %v1517 = vrcp.pop %v1495
        %v1518 = vmul.f32 %v1495, %v1517
        %v1519 = vsub.f32 1.0, %v1518
        %v1520 = vmul.f32 %v1517, %v1519
        %v1521 = vadd.f32 %v1517, %v1520
        %vm1522 = vweird.f32 %v1495
        %vm1523 = vweird.f32 %v1517
        %vm1524 = vmor %vm1522, %vm1523
        %v1525 = vsel %vm1524, %v1517, %v1521
        %v1526 = vand.u32 2147483647, %v1495
        %vm1527 = vcmp.eq.f32.partialorder %v1526, 8.507059e+37
        %v1528 = vand.u32 %v1495, 2147483648
        %v1529 = vor.u32 1.1754944e-38, %v1528
        %v1530 = vsel %vm1527, %v1529, %v1525
        %v1531 = vmul.f32 %v1485, %v1530
        %v1532 = vrcp.pop %v1498
        %v1533 = vmul.f32 %v1498, %v1532
        %v1534 = vsub.f32 1.0, %v1533
        %v1535 = vmul.f32 %v1532, %v1534
        %v1536 = vadd.f32 %v1532, %v1535
        %vm1537 = vweird.f32 %v1498
        %vm1538 = vweird.f32 %v1532
        %vm1539 = vmor %vm1537, %vm1538
        %v1540 = vsel %vm1539, %v1532, %v1536
        %v1541 = vand.u32 2147483647, %v1498
        %vm1542 = vcmp.eq.f32.partialorder %v1541, 8.507059e+37
        %v1543 = vand.u32 %v1498, 2147483648
        %v1544 = vor.u32 1.1754944e-38, %v1543
        %v1545 = vsel %vm1542, %v1544, %v1540
        %v1546 = vmul.f32 %v1487, %v1545
        %v1547 = vrcp.pop %v1501
        %v1548 = vmul.f32 %v1501, %v1547
        %v1549 = vsub.f32 1.0, %v1548
        %v1550 = vmul.f32 %v1547, %v1549
        %v1551 = vadd.f32 %v1547, %v1550
        %vm1552 = vweird.f32 %v1501
        %vm1553 = vweird.f32 %v1547
        %vm1554 = vmor %vm1552, %vm1553
        %v1555 = vsel %vm1554, %v1547, %v1551
        %v1556 = vand.u32 2147483647, %v1501
        %vm1557 = vcmp.eq.f32.partialorder %v1556, 8.507059e+37
        %v1558 = vand.u32 %v1501, 2147483648
        %v1559 = vor.u32 1.1754944e-38, %v1558
        %v1560 = vsel %vm1557, %v1559, %v1555
        %v1561 = vmul.f32 %v1489, %v1560
        %v1562 = vpack.c.bf16 %v1516, %v1516
        %v1563 = vpack.c.bf16 %v1531, %v1531
        %v1564 = vpack.c.bf16 %v1546, %v1546
        %v1565 = vpack.c.bf16 %v1561, %v1561
        %v1567 = vsel %vm1465, %v1562, 0
        %vm1569 = vcmask 1043456
        %v1571 = vsel %vm1569, %v1378, 0
        %1573 = vmatpush.bf16.msra.mxu0 0
        %1574 = vmatpush.bf16.msra.mxu0 0
        %1575 = vmatpush.bf16.msra.mxu0 0
        %1576 = vmatpush.bf16.msra.mxu0 0
        %1577 = vmatpush.bf16.msra.mxu0 0
        %1578 = vmatpush.bf16.msra.mxu0 0
        %1579 = vmatpush.bf16.msra.mxu0 0
        %1580 = vmatpush.bf16.msra.mxu0 %v1571
        %1581 = vmatmul.bf16.gmra.mxu0 %v1567
        %v1582 = vpop.f32.mrf.mxu0
        %v1583 = vadd.f32 0.0, %v1582
        %v1584 = vpop.f32.mrf.mxu0
        %1585 = vdwg.mxu0
        %v1587 = vsel %vm1465, %v1563, 0
        %v1590 = vsel %vm1569, %v1379, 0
        %1592 = vmatpush.bf16.msra.mxu0 0
        %1593 = vmatpush.bf16.msra.mxu0 0
        %1594 = vmatpush.bf16.msra.mxu0 0
        %1595 = vmatpush.bf16.msra.mxu0 0
        %1596 = vmatpush.bf16.msra.mxu0 0
        %1597 = vmatpush.bf16.msra.mxu0 0
        %1598 = vmatpush.bf16.msra.mxu0 0
        %1599 = vmatpush.bf16.msra.mxu0 %v1590
        %1600 = vmatmul.bf16.gmra.mxu0 %v1587
        %v1601 = vpop.f32.mrf.mxu0
        %v1602 = vadd.f32 0.0, %v1601
        %v1603 = vpop.f32.mrf.mxu0
        %1604 = vdwg.mxu0
        %v1606 = vsel %vm1465, %v1564, 0
        %v1609 = vsel %vm1569, %v1380, 0
        %1611 = vmatpush.bf16.msra.mxu0 0
        %1612 = vmatpush.bf16.msra.mxu0 0
        %1613 = vmatpush.bf16.msra.mxu0 0
        %1614 = vmatpush.bf16.msra.mxu0 0
        %1615 = vmatpush.bf16.msra.mxu0 0
        %1616 = vmatpush.bf16.msra.mxu0 0
        %1617 = vmatpush.bf16.msra.mxu0 0
        %1618 = vmatpush.bf16.msra.mxu0 %v1609
        %1619 = vmatmul.bf16.gmra.mxu0 %v1606
        %v1620 = vpop.f32.mrf.mxu0
        %v1621 = vadd.f32 0.0, %v1620
        %v1622 = vpop.f32.mrf.mxu0
        %1623 = vdwg.mxu0
        %v1625 = vsel %vm1465, %v1565, 0
        %v1628 = vsel %vm1569, %v1381, 0
        %1630 = vmatpush.bf16.msra.mxu0 0
        %1631 = vmatpush.bf16.msra.mxu0 0
        %1632 = vmatpush.bf16.msra.mxu0 0
        %1633 = vmatpush.bf16.msra.mxu0 0
        %1634 = vmatpush.bf16.msra.mxu0 0
        %1635 = vmatpush.bf16.msra.mxu0 0
        %1636 = vmatpush.bf16.msra.mxu0 0
        %1637 = vmatpush.bf16.msra.mxu0 %v1628
        %1638 = vmatmul.bf16.gmra.mxu0 %v1625
        %v1639 = vpop.f32.mrf.mxu0
        %v1640 = vadd.f32 0.0, %v1639
        %v1641 = vpop.f32.mrf.mxu0
        %1642 = vdwg.mxu0
        %v1643 = vpack.c.bf16 %v1583, %v1583
        %v1644 = vpack.c.bf16 %v1602, %v1602
        %v1645 = vpack.c.bf16 %v1621, %v1621
        %v1646 = vpack.c.bf16 %v1640, %v1640
        %v1649 = vunpack.c.l.b16 %v912
        %v1650 = vunpack.c.l.b16 %v913
        %v1651 = vpack.c.b16 %v1650, %v1649
        %v1654 = vsel %vm1382, %v1643, 0
        %1656 = vmatpush.bf16.msra.mxu0 0
        %1657 = vmatpush.bf16.msra.mxu0 0
        %1658 = vmatpush.bf16.msra.mxu0 0
        %1659 = vmatpush.bf16.msra.mxu0 0
        %1660 = vmatpush.bf16.msra.mxu0 0
        %1661 = vmatpush.bf16.msra.mxu0 0
        %1662 = vmatpush.bf16.msra.mxu0 0
        %1663 = vmatpush.bf16.msra.mxu0 %v1651
        %1664 = vmatmul.bf16.gmra.mxu0 %v1654
        %v1665 = vpop.f32.mrf.mxu0
        %v1666 = vadd.f32 0.0, %v1665
        %v1667 = vpop.f32.mrf.mxu0
        %1668 = vdwg.mxu0
        %v1671 = vunpack.c.l.b16 %v914
        %v1672 = vunpack.c.l.b16 %v915
        %v1673 = vpack.c.b16 %v1672, %v1671
        %v1676 = vsel %vm1382, %v1644, 0
        %1678 = vmatpush.bf16.msra.mxu0 0
        %1679 = vmatpush.bf16.msra.mxu0 0
        %1680 = vmatpush.bf16.msra.mxu0 0
        %1681 = vmatpush.bf16.msra.mxu0 0
        %1682 = vmatpush.bf16.msra.mxu0 0
        %1683 = vmatpush.bf16.msra.mxu0 0
        %1684 = vmatpush.bf16.msra.mxu0 0
        %1685 = vmatpush.bf16.msra.mxu0 %v1673
        %1686 = vmatmul.bf16.gmra.mxu0 %v1676
        %v1687 = vpop.f32.mrf.mxu0
        %v1688 = vadd.f32 0.0, %v1687
        %v1689 = vpop.f32.mrf.mxu0
        %1690 = vdwg.mxu0
        %v1693 = vunpack.c.l.b16 %v916
        %v1694 = vunpack.c.l.b16 %v917
        %v1695 = vpack.c.b16 %v1694, %v1693
        %v1698 = vsel %vm1382, %v1645, 0
        %1700 = vmatpush.bf16.msra.mxu0 0
        %1701 = vmatpush.bf16.msra.mxu0 0
        %1702 = vmatpush.bf16.msra.mxu0 0
        %1703 = vmatpush.bf16.msra.mxu0 0
        %1704 = vmatpush.bf16.msra.mxu0 0
        %1705 = vmatpush.bf16.msra.mxu0 0
        %1706 = vmatpush.bf16.msra.mxu0 0
        %1707 = vmatpush.bf16.msra.mxu0 %v1695
        %1708 = vmatmul.bf16.gmra.mxu0 %v1698
        %v1709 = vpop.f32.mrf.mxu0
        %v1710 = vadd.f32 0.0, %v1709
        %v1711 = vpop.f32.mrf.mxu0
        %1712 = vdwg.mxu0
        %v1715 = vunpack.c.l.b16 %v918
        %v1716 = vunpack.c.l.b16 %v919
        %v1717 = vpack.c.b16 %v1716, %v1715
        %v1720 = vsel %vm1382, %v1646, 0
        %1722 = vmatpush.bf16.msra.mxu0 0
        %1723 = vmatpush.bf16.msra.mxu0 0
        %1724 = vmatpush.bf16.msra.mxu0 0
        %1725 = vmatpush.bf16.msra.mxu0 0
        %1726 = vmatpush.bf16.msra.mxu0 0
        %1727 = vmatpush.bf16.msra.mxu0 0
        %1728 = vmatpush.bf16.msra.mxu0 0
        %1729 = vmatpush.bf16.msra.mxu0 %v1717
        %1730 = vmatmul.bf16.gmra.mxu0 %v1720
        %v1731 = vpop.f32.mrf.mxu0
        %v1732 = vadd.f32 0.0, %v1731
        %v1733 = vpop.f32.mrf.mxu0
        %1734 = vdwg.mxu0
        %v1735 = vadd.f32 %v1666, %v1688
        %v1736 = vadd.f32 %v1735, %v1710
        %v1737 = vadd.f32 %v1736, %v1732
        %v1738 = vadd.f32 %v1737, %v800
        %v1739 = vsel %vm946, %v1738, 0.0
        %1740 = vadd.xlane.f32.xlu0 %v1739
        %v1741 = vpop.xlane.xlu0 %1740
        %v1742 = vrcp.pop 64.0
        %v1743 = vmul.f32 64.0, %v1742
        %v1744 = vsub.f32 1.0, %v1743
        %v1745 = vmul.f32 %v1742, %v1744
        %v1746 = vadd.f32 %v1742, %v1745
        %vm1747 = vweird.f32 %v1742
        %v1748 = vsel %vm1747, %v1742, %v1746
        %v1749 = vmul.f32 %v1741, %v1748
        %v1750 = vsub.f32 %v1738, %v1749
        %v1751 = vmul.f32 %v1750, %v1750
        %v1752 = vsel %vm946, %v1751, 0.0
        %1753 = vadd.xlane.f32.xlu0 %v1752
        %v1754 = vpop.xlane.xlu0 %1753
        %v1755 = vmul.f32 %v1754, %v1748
        %v1756 = vadd.f32 %v1755, 1e-06
        %v1757 = vrsqrt.pop %v1756
        %v1758 = vmul.f32 %v1757, %v1756
        %v1759 = vmul.f32 %v1758, %v1757
        %v1760 = vmul.f32 0.5, %v1759
        %v1761 = vsub.f32 1.5, %v1760
        %v1762 = vmul.f32 %v1757, %v1761
        %vm1763 = vweird.f32 %v1756
        %vm1764 = vweird.f32 %v1757
        %vm1765 = vmor %vm1763, %vm1764
        %v1766 = vsel %vm1765, %v1757, %v1762
        %v1767 = vmul.f32 %v1750, %v1766
        %v1769 = vperm.slane %v920, 0
        %v1771 = vmul.f32 %v1767, %v1769
        %v1773 = vperm.slane %v921, 0
        %v1775 = vadd.f32 %v1771, %v1773
        %v1776 = vld [vmem:[%s10] sm:$0xf]
        %v1777 = vld [vmem:[%s10 + $0x4] sm:$0xf]
        %v1778 = vld [vmem:[%s10 + $0x8] sm:$0xf]
        %v1779 = vld [vmem:[%s10 + $0xc] sm:$0xf]
        %v1780 = vld [vmem:[%s10 + $0x10] sm:$0xf]
        %v1781 = vld [vmem:[%s10 + $0x14] sm:$0xf]
        %v1782 = vld [vmem:[%s10 + $0x18] sm:$0xf]
        %v1783 = vld [vmem:[%s10 + $0x1c] sm:$0xf]
        %v1784 = vld [vmem:[%s10 + $0x20] sm:$0xf]
        %v1785 = vld [vmem:[%s10 + $0x24] sm:$0xf]
        %v1786 = vld [vmem:[%s10 + $0x28] sm:$0xf]
        %v1787 = vld [vmem:[%s10 + $0x2c] sm:$0xf]
        %v1788 = vld [vmem:[%s10 + $0x30] sm:$0xf]
        %v1789 = vld [vmem:[%s10 + $0x34] sm:$0xf]
        %v1790 = vld [vmem:[%s10 + $0x38] sm:$0xf]
        %v1791 = vld [vmem:[%s10 + $0x3c] sm:$0xf]
        %v1792 = vld [vmem:[%s10 + $0x40] sm:$0xf]
        %v1793 = vld [vmem:[%s10 + $0x44] sm:$0xf]
        %v1794 = vld [vmem:[%s10 + $0x48] sm:$0xf]
        %v1795 = vld [vmem:[%s10 + $0x4c] sm:$0xf]
        %v1796 = vld [vmem:[%s10 + $0x50] sm:$0xf]
        %v1797 = vld [vmem:[%s10 + $0x54] sm:$0xf]
        %v1798 = vld [vmem:[%s10 + $0x58] sm:$0xf]
        %v1799 = vld [vmem:[%s10 + $0x5c] sm:$0xf]
        %v1800 = vld [vmem:[%s10 + $0x60] sm:$0xf]
        %v1801 = vld [vmem:[%s10 + $0x64] sm:$0xf]
        %v1802 = vld [vmem:[%s10 + $0x68] sm:$0xf]
        %v1803 = vld [vmem:[%s10 + $0x6c] sm:$0xf]
        %v1804 = vld [vmem:[%s10 + $0x70] sm:$0xf]
        %v1805 = vld [vmem:[%s10 + $0x74] sm:$0xf]
        %v1806 = vld [vmem:[%s10 + $0x78] sm:$0xf]
        %v1807 = vld [vmem:[%s10 + $0x7c] sm:$0xf]
        %v1808 = vld [vmem:[%s11] sm:$0xf]
        %v1809 = vld [vmem:[%s11 + $0x4] sm:$0xf]
        %v1810 = vld [vmem:[%s11 + $0x8] sm:$0xf]
        %v1811 = vld [vmem:[%s11 + $0xc] sm:$0xf]
        %v1812 = vld [vmem:[%s11 + $0x10] sm:$0xf]
        %v1813 = vld [vmem:[%s11 + $0x14] sm:$0xf]
        %v1814 = vld [vmem:[%s11 + $0x18] sm:$0xf]
        %v1815 = vld [vmem:[%s11 + $0x1c] sm:$0xf]
        %v1816 = vld [vmem:[%s11 + $0x20] sm:$0xf]
        %v1817 = vld [vmem:[%s11 + $0x24] sm:$0xf]
        %v1818 = vld [vmem:[%s11 + $0x28] sm:$0xf]
        %v1819 = vld [vmem:[%s11 + $0x2c] sm:$0xf]
        %v1820 = vld [vmem:[%s11 + $0x30] sm:$0xf]
        %v1821 = vld [vmem:[%s11 + $0x34] sm:$0xf]
        %v1822 = vld [vmem:[%s11 + $0x38] sm:$0xf]
        %v1823 = vld [vmem:[%s11 + $0x3c] sm:$0xf]
        %v1824 = vld [vmem:[%s11 + $0x40] sm:$0xf]
        %v1825 = vld [vmem:[%s11 + $0x44] sm:$0xf]
        %v1826 = vld [vmem:[%s11 + $0x48] sm:$0xf]
        %v1827 = vld [vmem:[%s11 + $0x4c] sm:$0xf]
        %v1828 = vld [vmem:[%s11 + $0x50] sm:$0xf]
        %v1829 = vld [vmem:[%s11 + $0x54] sm:$0xf]
        %v1830 = vld [vmem:[%s11 + $0x58] sm:$0xf]
        %v1831 = vld [vmem:[%s11 + $0x5c] sm:$0xf]
        %v1832 = vld [vmem:[%s11 + $0x60] sm:$0xf]
        %v1833 = vld [vmem:[%s11 + $0x64] sm:$0xf]
        %v1834 = vld [vmem:[%s11 + $0x68] sm:$0xf]
        %v1835 = vld [vmem:[%s11 + $0x6c] sm:$0xf]
        %v1836 = vld [vmem:[%s11 + $0x70] sm:$0xf]
        %v1837 = vld [vmem:[%s11 + $0x74] sm:$0xf]
        %v1838 = vld [vmem:[%s11 + $0x78] sm:$0xf]
        %v1839 = vld [vmem:[%s11 + $0x7c] sm:$0xf]
        %v1840 = vld [vmem:[%s12] sm:$0xf]
        %v1841 = vld [vmem:[%s12 + $0x4] sm:$0xf]
        %v1842 = vld [vmem:[%s12 + $0x8] sm:$0xf]
        %v1843 = vld [vmem:[%s12 + $0xc] sm:$0xf]
        %v1844 = vld [vmem:[%s12 + $0x10] sm:$0xf]
        %v1845 = vld [vmem:[%s12 + $0x14] sm:$0xf]
        %v1846 = vld [vmem:[%s12 + $0x18] sm:$0xf]
        %v1847 = vld [vmem:[%s12 + $0x1c] sm:$0xf]
        %v1848 = vld [vmem:[%s12 + $0x20] sm:$0xf]
        %v1849 = vld [vmem:[%s12 + $0x24] sm:$0xf]
        %v1850 = vld [vmem:[%s12 + $0x28] sm:$0xf]
        %v1851 = vld [vmem:[%s12 + $0x2c] sm:$0xf]
        %v1852 = vld [vmem:[%s12 + $0x30] sm:$0xf]
        %v1853 = vld [vmem:[%s12 + $0x34] sm:$0xf]
        %v1854 = vld [vmem:[%s12 + $0x38] sm:$0xf]
        %v1855 = vld [vmem:[%s12 + $0x3c] sm:$0xf]
        %v1856 = vld [vmem:[%s12 + $0x40] sm:$0xf]
        %v1857 = vld [vmem:[%s12 + $0x44] sm:$0xf]
        %v1858 = vld [vmem:[%s12 + $0x48] sm:$0xf]
        %v1859 = vld [vmem:[%s12 + $0x4c] sm:$0xf]
        %v1860 = vld [vmem:[%s12 + $0x50] sm:$0xf]
        %v1861 = vld [vmem:[%s12 + $0x54] sm:$0xf]
        %v1862 = vld [vmem:[%s12 + $0x58] sm:$0xf]
        %v1863 = vld [vmem:[%s12 + $0x5c] sm:$0xf]
        %v1864 = vld [vmem:[%s12 + $0x60] sm:$0xf]
        %v1865 = vld [vmem:[%s12 + $0x64] sm:$0xf]
        %v1866 = vld [vmem:[%s12 + $0x68] sm:$0xf]
        %v1867 = vld [vmem:[%s12 + $0x6c] sm:$0xf]
        %v1868 = vld [vmem:[%s12 + $0x70] sm:$0xf]
        %v1869 = vld [vmem:[%s12 + $0x74] sm:$0xf]
        %v1870 = vld [vmem:[%s12 + $0x78] sm:$0xf]
        %v1871 = vld [vmem:[%s12 + $0x7c] sm:$0xf]
        %v1872 = vld [vmem:[%s13] sm:$0xf]
        %v1873 = vld [vmem:[%s13 + $0x4] sm:$0xf]
        %v1874 = vld [vmem:[%s13 + $0x8] sm:$0xf]
        %v1875 = vld [vmem:[%s13 + $0xc] sm:$0xf]
        %v1876 = vld [vmem:[%s13 + $0x10] sm:$0xf]
        %v1877 = vld [vmem:[%s13 + $0x14] sm:$0xf]
        %v1878 = vld [vmem:[%s13 + $0x18] sm:$0xf]
        %v1879 = vld [vmem:[%s13 + $0x1c] sm:$0xf]
        %v1880 = vld [vmem:[%s14] sm:$0x1]
        %v1881 = vld [vmem:[%s15] sm:$0x1]
        %v1882 = vpack.c.bf16 %v1775, %v1775
        %v1891 = vunpack.c.l.b16 %v1776
        %v1892 = vunpack.c.l.b16 %v1777
        %v1893 = vunpack.c.l.b16 %v1778
        %v1894 = vunpack.c.l.b16 %v1779
        %v1895 = vunpack.c.l.b16 %v1780
        %v1896 = vunpack.c.l.b16 %v1781
        %v1897 = vunpack.c.l.b16 %v1782
        %v1898 = vunpack.c.l.b16 %v1783
        %v1899 = vpack.c.b16 %v1892, %v1891
        %v1900 = vpack.c.b16 %v1894, %v1893
        %v1901 = vpack.c.b16 %v1896, %v1895
        %v1902 = vpack.c.b16 %v1898, %v1897
        %v1908 = vsel %vm946, %v1882, 0
        %1910 = vmatpush.bf16.msra.mxu0 0
        %1911 = vmatpush.bf16.msra.mxu0 0
        %1912 = vmatpush.bf16.msra.mxu0 0
        %1913 = vmatpush.bf16.msra.mxu0 0
        %1914 = vmatpush.bf16.msra.mxu0 %v1902
        %1915 = vmatpush.bf16.msra.mxu0 %v1901
        %1916 = vmatpush.bf16.msra.mxu0 %v1900
        %1917 = vmatpush.bf16.msra.mxu0 %v1899
        %1918 = vmatmul.bf16.gmra.mxu0 %v1908
        %v1919 = vpop.f32.mrf.mxu0
        %v1920 = vadd.f32 0.0, %v1919
        %v1921 = vpop.f32.mrf.mxu0
        %1922 = vdwg.mxu0
        %v1931 = vunpack.c.l.b16 %v1784
        %v1932 = vunpack.c.l.b16 %v1785
        %v1933 = vunpack.c.l.b16 %v1786
        %v1934 = vunpack.c.l.b16 %v1787
        %v1935 = vunpack.c.l.b16 %v1788
        %v1936 = vunpack.c.l.b16 %v1789
        %v1937 = vunpack.c.l.b16 %v1790
        %v1938 = vunpack.c.l.b16 %v1791
        %v1939 = vpack.c.b16 %v1932, %v1931
        %v1940 = vpack.c.b16 %v1934, %v1933
        %v1941 = vpack.c.b16 %v1936, %v1935
        %v1942 = vpack.c.b16 %v1938, %v1937
        %1947 = vmatpush.bf16.msra.mxu0 0
        %1948 = vmatpush.bf16.msra.mxu0 0
        %1949 = vmatpush.bf16.msra.mxu0 0
        %1950 = vmatpush.bf16.msra.mxu0 0
        %1951 = vmatpush.bf16.msra.mxu0 %v1942
        %1952 = vmatpush.bf16.msra.mxu0 %v1941
        %1953 = vmatpush.bf16.msra.mxu0 %v1940
        %1954 = vmatpush.bf16.msra.mxu0 %v1939
        %1955 = vmatmul.bf16.gmra.mxu0 %v1908
        %v1956 = vpop.f32.mrf.mxu0
        %v1957 = vadd.f32 0.0, %v1956
        %v1958 = vpop.f32.mrf.mxu0
        %1959 = vdwg.mxu0
        %v1968 = vunpack.c.l.b16 %v1792
        %v1969 = vunpack.c.l.b16 %v1793
        %v1970 = vunpack.c.l.b16 %v1794
        %v1971 = vunpack.c.l.b16 %v1795
        %v1972 = vunpack.c.l.b16 %v1796
        %v1973 = vunpack.c.l.b16 %v1797
        %v1974 = vunpack.c.l.b16 %v1798
        %v1975 = vunpack.c.l.b16 %v1799
        %v1976 = vpack.c.b16 %v1969, %v1968
        %v1977 = vpack.c.b16 %v1971, %v1970
        %v1978 = vpack.c.b16 %v1973, %v1972
        %v1979 = vpack.c.b16 %v1975, %v1974
        %1984 = vmatpush.bf16.msra.mxu0 0
        %1985 = vmatpush.bf16.msra.mxu0 0
        %1986 = vmatpush.bf16.msra.mxu0 0
        %1987 = vmatpush.bf16.msra.mxu0 0
        %1988 = vmatpush.bf16.msra.mxu0 %v1979
        %1989 = vmatpush.bf16.msra.mxu0 %v1978
        %1990 = vmatpush.bf16.msra.mxu0 %v1977
        %1991 = vmatpush.bf16.msra.mxu0 %v1976
        %1992 = vmatmul.bf16.gmra.mxu0 %v1908
        %v1993 = vpop.f32.mrf.mxu0
        %v1994 = vadd.f32 0.0, %v1993
        %v1995 = vpop.f32.mrf.mxu0
        %1996 = vdwg.mxu0
        %v2005 = vunpack.c.l.b16 %v1800
        %v2006 = vunpack.c.l.b16 %v1801
        %v2007 = vunpack.c.l.b16 %v1802
        %v2008 = vunpack.c.l.b16 %v1803
        %v2009 = vunpack.c.l.b16 %v1804
        %v2010 = vunpack.c.l.b16 %v1805
        %v2011 = vunpack.c.l.b16 %v1806
        %v2012 = vunpack.c.l.b16 %v1807
        %v2013 = vpack.c.b16 %v2006, %v2005
        %v2014 = vpack.c.b16 %v2008, %v2007
        %v2015 = vpack.c.b16 %v2010, %v2009
        %v2016 = vpack.c.b16 %v2012, %v2011
        %2021 = vmatpush.bf16.msra.mxu0 0
        %2022 = vmatpush.bf16.msra.mxu0 0
        %2023 = vmatpush.bf16.msra.mxu0 0
        %2024 = vmatpush.bf16.msra.mxu0 0
        %2025 = vmatpush.bf16.msra.mxu0 %v2016
        %2026 = vmatpush.bf16.msra.mxu0 %v2015
        %2027 = vmatpush.bf16.msra.mxu0 %v2014
        %2028 = vmatpush.bf16.msra.mxu0 %v2013
        %2029 = vmatmul.bf16.gmra.mxu0 %v1908
        %v2030 = vpop.f32.mrf.mxu0
        %v2031 = vadd.f32 0.0, %v2030
        %v2032 = vpop.f32.mrf.mxu0
        %2033 = vdwg.mxu0
        %v2034 = vpack.c.bf16 %v1920, %v1920
        %v2035 = vpack.c.bf16 %v1957, %v1957
        %v2036 = vpack.c.bf16 %v1994, %v1994
        %v2037 = vpack.c.bf16 %v2031, %v2031
        %v2046 = vunpack.c.l.b16 %v1808
        %v2047 = vunpack.c.l.b16 %v1809
        %v2048 = vunpack.c.l.b16 %v1810
        %v2049 = vunpack.c.l.b16 %v1811
        %v2050 = vunpack.c.l.b16 %v1812
        %v2051 = vunpack.c.l.b16 %v1813
        %v2052 = vunpack.c.l.b16 %v1814
        %v2053 = vunpack.c.l.b16 %v1815
        %v2054 = vpack.c.b16 %v2047, %v2046
        %v2055 = vpack.c.b16 %v2049, %v2048
        %v2056 = vpack.c.b16 %v2051, %v2050
        %v2057 = vpack.c.b16 %v2053, %v2052
        %v2063 = vsel %vm946, %v801, 0
        %2065 = vmatpush.bf16.msra.mxu0 0
        %2066 = vmatpush.bf16.msra.mxu0 0
        %2067 = vmatpush.bf16.msra.mxu0 0
        %2068 = vmatpush.bf16.msra.mxu0 0
        %2069 = vmatpush.bf16.msra.mxu0 %v2057
        %2070 = vmatpush.bf16.msra.mxu0 %v2056
        %2071 = vmatpush.bf16.msra.mxu0 %v2055
        %2072 = vmatpush.bf16.msra.mxu0 %v2054
        %2073 = vmatmul.bf16.gmra.mxu0 %v2063
        %v2074 = vpop.f32.mrf.mxu0
        %v2075 = vadd.f32 0.0, %v2074
        %v2076 = vpop.f32.mrf.mxu0
        %2077 = vdwg.mxu0
        %v2086 = vunpack.c.l.b16 %v1816
        %v2087 = vunpack.c.l.b16 %v1817
        %v2088 = vunpack.c.l.b16 %v1818
        %v2089 = vunpack.c.l.b16 %v1819
        %v2090 = vunpack.c.l.b16 %v1820
        %v2091 = vunpack.c.l.b16 %v1821
        %v2092 = vunpack.c.l.b16 %v1822
        %v2093 = vunpack.c.l.b16 %v1823
        %v2094 = vpack.c.b16 %v2087, %v2086
        %v2095 = vpack.c.b16 %v2089, %v2088
        %v2096 = vpack.c.b16 %v2091, %v2090
        %v2097 = vpack.c.b16 %v2093, %v2092
        %2102 = vmatpush.bf16.msra.mxu0 0
        %2103 = vmatpush.bf16.msra.mxu0 0
        %2104 = vmatpush.bf16.msra.mxu0 0
        %2105 = vmatpush.bf16.msra.mxu0 0
        %2106 = vmatpush.bf16.msra.mxu0 %v2097
        %2107 = vmatpush.bf16.msra.mxu0 %v2096
        %2108 = vmatpush.bf16.msra.mxu0 %v2095
        %2109 = vmatpush.bf16.msra.mxu0 %v2094
        %2110 = vmatmul.bf16.gmra.mxu0 %v2063
        %v2111 = vpop.f32.mrf.mxu0
        %v2112 = vadd.f32 0.0, %v2111
        %v2113 = vpop.f32.mrf.mxu0
        %2114 = vdwg.mxu0
        %v2123 = vunpack.c.l.b16 %v1824
        %v2124 = vunpack.c.l.b16 %v1825
        %v2125 = vunpack.c.l.b16 %v1826
        %v2126 = vunpack.c.l.b16 %v1827
        %v2127 = vunpack.c.l.b16 %v1828
        %v2128 = vunpack.c.l.b16 %v1829
        %v2129 = vunpack.c.l.b16 %v1830
        %v2130 = vunpack.c.l.b16 %v1831
        %v2131 = vpack.c.b16 %v2124, %v2123
        %v2132 = vpack.c.b16 %v2126, %v2125
        %v2133 = vpack.c.b16 %v2128, %v2127
        %v2134 = vpack.c.b16 %v2130, %v2129
        %2139 = vmatpush.bf16.msra.mxu0 0
        %2140 = vmatpush.bf16.msra.mxu0 0
        %2141 = vmatpush.bf16.msra.mxu0 0
        %2142 = vmatpush.bf16.msra.mxu0 0
        %2143 = vmatpush.bf16.msra.mxu0 %v2134
        %2144 = vmatpush.bf16.msra.mxu0 %v2133
        %2145 = vmatpush.bf16.msra.mxu0 %v2132
        %2146 = vmatpush.bf16.msra.mxu0 %v2131
        %2147 = vmatmul.bf16.gmra.mxu0 %v2063
        %v2148 = vpop.f32.mrf.mxu0
        %v2149 = vadd.f32 0.0, %v2148
        %v2150 = vpop.f32.mrf.mxu0
        %2151 = vdwg.mxu0
        %v2160 = vunpack.c.l.b16 %v1832
        %v2161 = vunpack.c.l.b16 %v1833
        %v2162 = vunpack.c.l.b16 %v1834
        %v2163 = vunpack.c.l.b16 %v1835
        %v2164 = vunpack.c.l.b16 %v1836
        %v2165 = vunpack.c.l.b16 %v1837
        %v2166 = vunpack.c.l.b16 %v1838
        %v2167 = vunpack.c.l.b16 %v1839
        %v2168 = vpack.c.b16 %v2161, %v2160
        %v2169 = vpack.c.b16 %v2163, %v2162
        %v2170 = vpack.c.b16 %v2165, %v2164
        %v2171 = vpack.c.b16 %v2167, %v2166
        %2176 = vmatpush.bf16.msra.mxu0 0
        %2177 = vmatpush.bf16.msra.mxu0 0
        %2178 = vmatpush.bf16.msra.mxu0 0
        %2179 = vmatpush.bf16.msra.mxu0 0
        %2180 = vmatpush.bf16.msra.mxu0 %v2171
        %2181 = vmatpush.bf16.msra.mxu0 %v2170
        %2182 = vmatpush.bf16.msra.mxu0 %v2169
        %2183 = vmatpush.bf16.msra.mxu0 %v2168
        %2184 = vmatmul.bf16.gmra.mxu0 %v2063
        %v2185 = vpop.f32.mrf.mxu0
        %v2186 = vadd.f32 0.0, %v2185
        %v2187 = vpop.f32.mrf.mxu0
        %2188 = vdwg.mxu0
        %v2189 = vpack.c.bf16 %v2075, %v2075
        %v2190 = vpack.c.bf16 %v2112, %v2112
        %v2191 = vpack.c.bf16 %v2149, %v2149
        %v2192 = vpack.c.bf16 %v2186, %v2186
        %v2201 = vunpack.c.l.b16 %v1840
        %v2202 = vunpack.c.l.b16 %v1841
        %v2203 = vunpack.c.l.b16 %v1842
        %v2204 = vunpack.c.l.b16 %v1843
        %v2205 = vunpack.c.l.b16 %v1844
        %v2206 = vunpack.c.l.b16 %v1845
        %v2207 = vunpack.c.l.b16 %v1846
        %v2208 = vunpack.c.l.b16 %v1847
        %v2209 = vpack.c.b16 %v2202, %v2201
        %v2210 = vpack.c.b16 %v2204, %v2203
        %v2211 = vpack.c.b16 %v2206, %v2205
        %v2212 = vpack.c.b16 %v2208, %v2207
        %2217 = vmatpush.bf16.msra.mxu0 0
        %2218 = vmatpush.bf16.msra.mxu0 0
        %2219 = vmatpush.bf16.msra.mxu0 0
        %2220 = vmatpush.bf16.msra.mxu0 0
        %2221 = vmatpush.bf16.msra.mxu0 %v2212
        %2222 = vmatpush.bf16.msra.mxu0 %v2211
        %2223 = vmatpush.bf16.msra.mxu0 %v2210
        %2224 = vmatpush.bf16.msra.mxu0 %v2209
        %2225 = vmatmul.bf16.gmra.mxu0 %v2063
        %v2226 = vpop.f32.mrf.mxu0
        %v2227 = vadd.f32 0.0, %v2226
        %v2228 = vpop.f32.mrf.mxu0
        %2229 = vdwg.mxu0
        %v2238 = vunpack.c.l.b16 %v1848
        %v2239 = vunpack.c.l.b16 %v1849
        %v2240 = vunpack.c.l.b16 %v1850
        %v2241 = vunpack.c.l.b16 %v1851
        %v2242 = vunpack.c.l.b16 %v1852
        %v2243 = vunpack.c.l.b16 %v1853
        %v2244 = vunpack.c.l.b16 %v1854
        %v2245 = vunpack.c.l.b16 %v1855
        %v2246 = vpack.c.b16 %v2239, %v2238
        %v2247 = vpack.c.b16 %v2241, %v2240
        %v2248 = vpack.c.b16 %v2243, %v2242
        %v2249 = vpack.c.b16 %v2245, %v2244
        %2254 = vmatpush.bf16.msra.mxu0 0
        %2255 = vmatpush.bf16.msra.mxu0 0
        %2256 = vmatpush.bf16.msra.mxu0 0
        %2257 = vmatpush.bf16.msra.mxu0 0
        %2258 = vmatpush.bf16.msra.mxu0 %v2249
        %2259 = vmatpush.bf16.msra.mxu0 %v2248
        %2260 = vmatpush.bf16.msra.mxu0 %v2247
        %2261 = vmatpush.bf16.msra.mxu0 %v2246
        %2262 = vmatmul.bf16.gmra.mxu0 %v2063
        %v2263 = vpop.f32.mrf.mxu0
        %v2264 = vadd.f32 0.0, %v2263
        %v2265 = vpop.f32.mrf.mxu0
        %2266 = vdwg.mxu0
        %v2275 = vunpack.c.l.b16 %v1856
        %v2276 = vunpack.c.l.b16 %v1857
        %v2277 = vunpack.c.l.b16 %v1858
        %v2278 = vunpack.c.l.b16 %v1859
        %v2279 = vunpack.c.l.b16 %v1860
        %v2280 = vunpack.c.l.b16 %v1861
        %v2281 = vunpack.c.l.b16 %v1862
        %v2282 = vunpack.c.l.b16 %v1863
        %v2283 = vpack.c.b16 %v2276, %v2275
        %v2284 = vpack.c.b16 %v2278, %v2277
        %v2285 = vpack.c.b16 %v2280, %v2279
        %v2286 = vpack.c.b16 %v2282, %v2281
        %2291 = vmatpush.bf16.msra.mxu0 0
        %2292 = vmatpush.bf16.msra.mxu0 0
        %2293 = vmatpush.bf16.msra.mxu0 0
        %2294 = vmatpush.bf16.msra.mxu0 0
        %2295 = vmatpush.bf16.msra.mxu0 %v2286
        %2296 = vmatpush.bf16.msra.mxu0 %v2285
        %2297 = vmatpush.bf16.msra.mxu0 %v2284
        %2298 = vmatpush.bf16.msra.mxu0 %v2283
        %2299 = vmatmul.bf16.gmra.mxu0 %v2063
        %v2300 = vpop.f32.mrf.mxu0
        %v2301 = vadd.f32 0.0, %v2300
        %v2302 = vpop.f32.mrf.mxu0
        %2303 = vdwg.mxu0
        %v2312 = vunpack.c.l.b16 %v1864
        %v2313 = vunpack.c.l.b16 %v1865
        %v2314 = vunpack.c.l.b16 %v1866
        %v2315 = vunpack.c.l.b16 %v1867
        %v2316 = vunpack.c.l.b16 %v1868
        %v2317 = vunpack.c.l.b16 %v1869
        %v2318 = vunpack.c.l.b16 %v1870
        %v2319 = vunpack.c.l.b16 %v1871
        %v2320 = vpack.c.b16 %v2313, %v2312
        %v2321 = vpack.c.b16 %v2315, %v2314
        %v2322 = vpack.c.b16 %v2317, %v2316
        %v2323 = vpack.c.b16 %v2319, %v2318
        %2328 = vmatpush.bf16.msra.mxu0 0
        %2329 = vmatpush.bf16.msra.mxu0 0
        %2330 = vmatpush.bf16.msra.mxu0 0
        %2331 = vmatpush.bf16.msra.mxu0 0
        %2332 = vmatpush.bf16.msra.mxu0 %v2323
        %2333 = vmatpush.bf16.msra.mxu0 %v2322
        %2334 = vmatpush.bf16.msra.mxu0 %v2321
        %2335 = vmatpush.bf16.msra.mxu0 %v2320
        %2336 = vmatmul.bf16.gmra.mxu0 %v2063
        %v2337 = vpop.f32.mrf.mxu0
        %v2338 = vadd.f32 0.0, %v2337
        %v2339 = vpop.f32.mrf.mxu0
        %2340 = vdwg.mxu0
        %v2341 = vpack.c.bf16 %v2227, %v2227
        %v2342 = vpack.c.bf16 %v2264, %v2264
        %v2343 = vpack.c.bf16 %v2301, %v2301
        %v2344 = vpack.c.bf16 %v2338, %v2338
        %v2346 = vsel %vm1382, %v2034, 0
        %v2349 = vsel %vm1382, %v2189, 0
        %2351 = vmatpush.bf16.xpose.msra.mxu0 0
        %2352 = vmatpush.bf16.xpose.msra.mxu0 0
        %2353 = vmatpush.bf16.xpose.msra.mxu0 0
        %2354 = vmatpush.bf16.xpose.msra.mxu0 0
        %2355 = vmatpush.bf16.xpose.msra.mxu0 0
        %2356 = vmatpush.bf16.xpose.msra.mxu0 0
        %2357 = vmatpush.bf16.xpose.msra.mxu0 0
        %2358 = vmatpush.bf16.xpose.msra.mxu0 %v2349
        %2359 = vmatmul.bf16.gmra.mxu0 %v2346
        %v2360 = vpop.f32.mrf.mxu0
        %v2361 = vadd.f32 0.0, %v2360
        %v2362 = vpop.f32.mrf.mxu0
        %2363 = vdwg.mxu0
        %v2365 = vsel %vm1382, %v2035, 0
        %v2368 = vsel %vm1382, %v2190, 0
        %2370 = vmatpush.bf16.xpose.msra.mxu0 0
        %2371 = vmatpush.bf16.xpose.msra.mxu0 0
        %2372 = vmatpush.bf16.xpose.msra.mxu0 0
        %2373 = vmatpush.bf16.xpose.msra.mxu0 0
        %2374 = vmatpush.bf16.xpose.msra.mxu0 0
        %2375 = vmatpush.bf16.xpose.msra.mxu0 0
        %2376 = vmatpush.bf16.xpose.msra.mxu0 0
        %2377 = vmatpush.bf16.xpose.msra.mxu0 %v2368
        %2378 = vmatmul.bf16.gmra.mxu0 %v2365
        %v2379 = vpop.f32.mrf.mxu0
        %v2380 = vadd.f32 0.0, %v2379
        %v2381 = vpop.f32.mrf.mxu0
        %2382 = vdwg.mxu0
        %v2384 = vsel %vm1382, %v2036, 0
        %v2387 = vsel %vm1382, %v2191, 0
        %2389 = vmatpush.bf16.xpose.msra.mxu0 0
        %2390 = vmatpush.bf16.xpose.msra.mxu0 0
        %2391 = vmatpush.bf16.xpose.msra.mxu0 0
        %2392 = vmatpush.bf16.xpose.msra.mxu0 0
        %2393 = vmatpush.bf16.xpose.msra.mxu0 0
        %2394 = vmatpush.bf16.xpose.msra.mxu0 0
        %2395 = vmatpush.bf16.xpose.msra.mxu0 0
        %2396 = vmatpush.bf16.xpose.msra.mxu0 %v2387
        %2397 = vmatmul.bf16.gmra.mxu0 %v2384
        %v2398 = vpop.f32.mrf.mxu0
        %v2399 = vadd.f32 0.0, %v2398
        %v2400 = vpop.f32.mrf.mxu0
        %2401 = vdwg.mxu0
        %v2403 = vsel %vm1382, %v2037, 0
        %v2406 = vsel %vm1382, %v2192, 0
        %2408 = vmatpush.bf16.xpose.msra.mxu0 0
        %2409 = vmatpush.bf16.xpose.msra.mxu0 0
        %2410 = vmatpush.bf16.xpose.msra.mxu0 0
        %2411 = vmatpush.bf16.xpose.msra.mxu0 0
        %2412 = vmatpush.bf16.xpose.msra.mxu0 0
        %2413 = vmatpush.bf16.xpose.msra.mxu0 0
        %2414 = vmatpush.bf16.xpose.msra.mxu0 0
        %2415 = vmatpush.bf16.xpose.msra.mxu0 %v2406
        %2416 = vmatmul.bf16.gmra.mxu0 %v2403
        %v2417 = vpop.f32.mrf.mxu0
        %v2418 = vadd.f32 0.0, %v2417
        %v2419 = vpop.f32.mrf.mxu0
        %2420 = vdwg.mxu0
        %v2421 = vsel %vm814, 1, 0
        %v2422 = vperm.slane %v2421, 0
        %vm2423 = vcmp.eq.s32.totalorder %v2422, 1
        %v2424 = vsel %vm2423, -1e+09, %v2361
        %v2425 = vsel %vm2423, -1e+09, %v2380
        %v2426 = vsel %vm2423, -1e+09, %v2399
        %v2427 = vsel %vm2423, -1e+09, %v2418
        %v2428 = vsel %vm1465, %v2424, -inf
        %2429 = vmax.xlane.f32.xlu0 %v2428
        %v2430 = vpop.xlane.xlu0 %2429
        %v2431 = vsel %vm1465, %v2425, -inf
        %2432 = vmax.xlane.f32.xlu0 %v2431
        %v2433 = vpop.xlane.xlu0 %2432
        %v2434 = vsel %vm1465, %v2426, -inf
        %2435 = vmax.xlane.f32.xlu0 %v2434
        %v2436 = vpop.xlane.xlu0 %2435
        %v2437 = vsel %vm1465, %v2427, -inf
        %2438 = vmax.xlane.f32.xlu0 %v2437
        %v2439 = vpop.xlane.xlu0 %2438
        %v2440 = vsub.f32 %v2424, %v2430
        %v2441 = vsub.f32 %v2425, %v2433
        %v2442 = vsub.f32 %v2426, %v2436
        %v2443 = vsub.f32 %v2427, %v2439
        %v2444 = vmul.f32 %v2440, 1.442695
        %v2445 = vpow.pop %v2444
        %v2446 = vmul.f32 %v2441, 1.442695
        %v2447 = vpow.pop %v2446
        %v2448 = vmul.f32 %v2442, 1.442695
        %v2449 = vpow.pop %v2448
        %v2450 = vmul.f32 %v2443, 1.442695
        %v2451 = vpow.pop %v2450
        %v2452 = vsel %vm1465, %v2445, 0.0
        %2453 = vadd.xlane.f32.xlu0 %v2452
        %v2454 = vpop.xlane.xlu0 %2453
        %v2455 = vsel %vm1465, %v2447, 0.0
        %2456 = vadd.xlane.f32.xlu0 %v2455
        %v2457 = vpop.xlane.xlu0 %2456
        %v2458 = vsel %vm1465, %v2449, 0.0
        %2459 = vadd.xlane.f32.xlu0 %v2458
        %v2460 = vpop.xlane.xlu0 %2459
        %v2461 = vsel %vm1465, %v2451, 0.0
        %2462 = vadd.xlane.f32.xlu0 %v2461
        %v2463 = vpop.xlane.xlu0 %2462
        %v2464 = vrcp.pop %v2454
        %v2465 = vmul.f32 %v2454, %v2464
        %v2466 = vsub.f32 1.0, %v2465
        %v2467 = vmul.f32 %v2464, %v2466
        %v2468 = vadd.f32 %v2464, %v2467
        %vm2469 = vweird.f32 %v2454
        %vm2470 = vweird.f32 %v2464
        %vm2471 = vmor %vm2469, %vm2470
        %v2472 = vsel %vm2471, %v2464, %v2468
        %v2473 = vand.u32 2147483647, %v2454
        %vm2474 = vcmp.eq.f32.partialorder %v2473, 8.507059e+37
        %v2475 = vand.u32 %v2454, 2147483648
        %v2476 = vor.u32 1.1754944e-38, %v2475
        %v2477 = vsel %vm2474, %v2476, %v2472
        %v2478 = vmul.f32 %v2445, %v2477
        %v2479 = vrcp.pop %v2457
        %v2480 = vmul.f32 %v2457, %v2479
        %v2481 = vsub.f32 1.0, %v2480
        %v2482 = vmul.f32 %v2479, %v2481
        %v2483 = vadd.f32 %v2479, %v2482
        %vm2484 = vweird.f32 %v2457
        %vm2485 = vweird.f32 %v2479
        %vm2486 = vmor %vm2484, %vm2485
        %v2487 = vsel %vm2486, %v2479, %v2483
        %v2488 = vand.u32 2147483647, %v2457
        %vm2489 = vcmp.eq.f32.partialorder %v2488, 8.507059e+37
        %v2490 = vand.u32 %v2457, 2147483648
        %v2491 = vor.u32 1.1754944e-38, %v2490
        %v2492 = vsel %vm2489, %v2491, %v2487
        %v2493 = vmul.f32 %v2447, %v2492
        %v2494 = vrcp.pop %v2460
        %v2495 = vmul.f32 %v2460, %v2494
        %v2496 = vsub.f32 1.0, %v2495
        %v2497 = vmul.f32 %v2494, %v2496
        %v2498 = vadd.f32 %v2494, %v2497
        %vm2499 = vweird.f32 %v2460
        %vm2500 = vweird.f32 %v2494
        %vm2501 = vmor %vm2499, %vm2500
        %v2502 = vsel %vm2501, %v2494, %v2498
        %v2503 = vand.u32 2147483647, %v2460
        %vm2504 = vcmp.eq.f32.partialorder %v2503, 8.507059e+37
        %v2505 = vand.u32 %v2460, 2147483648
        %v2506 = vor.u32 1.1754944e-38, %v2505
        %v2507 = vsel %vm2504, %v2506, %v2502
        %v2508 = vmul.f32 %v2449, %v2507
        %v2509 = vrcp.pop %v2463
        %v2510 = vmul.f32 %v2463, %v2509
        %v2511 = vsub.f32 1.0, %v2510
        %v2512 = vmul.f32 %v2509, %v2511
        %v2513 = vadd.f32 %v2509, %v2512
        %vm2514 = vweird.f32 %v2463
        %vm2515 = vweird.f32 %v2509
        %vm2516 = vmor %vm2514, %vm2515
        %v2517 = vsel %vm2516, %v2509, %v2513
        %v2518 = vand.u32 2147483647, %v2463
        %vm2519 = vcmp.eq.f32.partialorder %v2518, 8.507059e+37
        %v2520 = vand.u32 %v2463, 2147483648
        %v2521 = vor.u32 1.1754944e-38, %v2520
        %v2522 = vsel %vm2519, %v2521, %v2517
        %v2523 = vmul.f32 %v2451, %v2522
        %v2524 = vpack.c.bf16 %v2478, %v2478
        %v2525 = vpack.c.bf16 %v2493, %v2493
        %v2526 = vpack.c.bf16 %v2508, %v2508
        %v2527 = vpack.c.bf16 %v2523, %v2523
        %v2529 = vsel %vm1465, %v2524, 0
        %v2532 = vsel %vm1569, %v2341, 0
        %2534 = vmatpush.bf16.msra.mxu0 0
        %2535 = vmatpush.bf16.msra.mxu0 0
        %2536 = vmatpush.bf16.msra.mxu0 0
        %2537 = vmatpush.bf16.msra.mxu0 0
        %2538 = vmatpush.bf16.msra.mxu0 0
        %2539 = vmatpush.bf16.msra.mxu0 0
        %2540 = vmatpush.bf16.msra.mxu0 0
        %2541 = vmatpush.bf16.msra.mxu0 %v2532
        %2542 = vmatmul.bf16.gmra.mxu0 %v2529
        %v2543 = vpop.f32.mrf.mxu0
        %v2544 = vadd.f32 0.0, %v2543
        %v2545 = vpop.f32.mrf.mxu0
        %2546 = vdwg.mxu0
        %v2548 = vsel %vm1465, %v2525, 0
        %v2551 = vsel %vm1569, %v2342, 0
        %2553 = vmatpush.bf16.msra.mxu0 0
        %2554 = vmatpush.bf16.msra.mxu0 0
        %2555 = vmatpush.bf16.msra.mxu0 0
        %2556 = vmatpush.bf16.msra.mxu0 0
        %2557 = vmatpush.bf16.msra.mxu0 0
        %2558 = vmatpush.bf16.msra.mxu0 0
        %2559 = vmatpush.bf16.msra.mxu0 0
        %2560 = vmatpush.bf16.msra.mxu0 %v2551
        %2561 = vmatmul.bf16.gmra.mxu0 %v2548
        %v2562 = vpop.f32.mrf.mxu0
        %v2563 = vadd.f32 0.0, %v2562
        %v2564 = vpop.f32.mrf.mxu0
        %2565 = vdwg.mxu0
        %v2567 = vsel %vm1465, %v2526, 0
        %v2570 = vsel %vm1569, %v2343, 0
        %2572 = vmatpush.bf16.msra.mxu0 0
        %2573 = vmatpush.bf16.msra.mxu0 0
        %2574 = vmatpush.bf16.msra.mxu0 0
        %2575 = vmatpush.bf16.msra.mxu0 0
        %2576 = vmatpush.bf16.msra.mxu0 0
        %2577 = vmatpush.bf16.msra.mxu0 0
        %2578 = vmatpush.bf16.msra.mxu0 0
        %2579 = vmatpush.bf16.msra.mxu0 %v2570
        %2580 = vmatmul.bf16.gmra.mxu0 %v2567
        %v2581 = vpop.f32.mrf.mxu0
        %v2582 = vadd.f32 0.0, %v2581
        %v2583 = vpop.f32.mrf.mxu0
        %2584 = vdwg.mxu0
        %v2586 = vsel %vm1465, %v2527, 0
        %v2589 = vsel %vm1569, %v2344, 0
        %2591 = vmatpush.bf16.msra.mxu0 0
        %2592 = vmatpush.bf16.msra.mxu0 0
        %2593 = vmatpush.bf16.msra.mxu0 0
        %2594 = vmatpush.bf16.msra.mxu0 0
        %2595 = vmatpush.bf16.msra.mxu0 0
        %2596 = vmatpush.bf16.msra.mxu0 0
        %2597 = vmatpush.bf16.msra.mxu0 0
        %2598 = vmatpush.bf16.msra.mxu0 %v2589
        %2599 = vmatmul.bf16.gmra.mxu0 %v2586
        %v2600 = vpop.f32.mrf.mxu0
        %v2601 = vadd.f32 0.0, %v2600
        %v2602 = vpop.f32.mrf.mxu0
        %2603 = vdwg.mxu0
        %v2604 = vpack.c.bf16 %v2544, %v2544
        %v2605 = vpack.c.bf16 %v2563, %v2563
        %v2606 = vpack.c.bf16 %v2582, %v2582
        %v2607 = vpack.c.bf16 %v2601, %v2601
        %v2610 = vunpack.c.l.b16 %v1872
        %v2611 = vunpack.c.l.b16 %v1873
        %v2612 = vpack.c.b16 %v2611, %v2610
        %v2615 = vsel %vm1382, %v2604, 0
        %2617 = vmatpush.bf16.msra.mxu0 0
        %2618 = vmatpush.bf16.msra.mxu0 0
        %2619 = vmatpush.bf16.msra.mxu0 0
        %2620 = vmatpush.bf16.msra.mxu0 0
        %2621 = vmatpush.bf16.msra.mxu0 0
        %2622 = vmatpush.bf16.msra.mxu0 0
        %2623 = vmatpush.bf16.msra.mxu0 0
        %2624 = vmatpush.bf16.msra.mxu0 %v2612
        %2625 = vmatmul.bf16.gmra.mxu0 %v2615
        %v2626 = vpop.f32.mrf.mxu0
        %v2627 = vadd.f32 0.0, %v2626
        %v2628 = vpop.f32.mrf.mxu0
        %2629 = vdwg.mxu0
        %v2632 = vunpack.c.l.b16 %v1874
        %v2633 = vunpack.c.l.b16 %v1875
        %v2634 = vpack.c.b16 %v2633, %v2632
        %v2637 = vsel %vm1382, %v2605, 0
        %2639 = vmatpush.bf16.msra.mxu0 0
        %2640 = vmatpush.bf16.msra.mxu0 0
        %2641 = vmatpush.bf16.msra.mxu0 0
        %2642 = vmatpush.bf16.msra.mxu0 0
        %2643 = vmatpush.bf16.msra.mxu0 0
        %2644 = vmatpush.bf16.msra.mxu0 0
        %2645 = vmatpush.bf16.msra.mxu0 0
        %2646 = vmatpush.bf16.msra.mxu0 %v2634
        %2647 = vmatmul.bf16.gmra.mxu0 %v2637
        %v2648 = vpop.f32.mrf.mxu0
        %v2649 = vadd.f32 0.0, %v2648
        %v2650 = vpop.f32.mrf.mxu0
        %2651 = vdwg.mxu0
        %v2654 = vunpack.c.l.b16 %v1876
        %v2655 = vunpack.c.l.b16 %v1877
        %v2656 = vpack.c.b16 %v2655, %v2654
        %v2659 = vsel %vm1382, %v2606, 0
        %2661 = vmatpush.bf16.msra.mxu0 0
        %2662 = vmatpush.bf16.msra.mxu0 0
        %2663 = vmatpush.bf16.msra.mxu0 0
        %2664 = vmatpush.bf16.msra.mxu0 0
        %2665 = vmatpush.bf16.msra.mxu0 0
        %2666 = vmatpush.bf16.msra.mxu0 0
        %2667 = vmatpush.bf16.msra.mxu0 0
        %2668 = vmatpush.bf16.msra.mxu0 %v2656
        %2669 = vmatmul.bf16.gmra.mxu0 %v2659
        %v2670 = vpop.f32.mrf.mxu0
        %v2671 = vadd.f32 0.0, %v2670
        %v2672 = vpop.f32.mrf.mxu0
        %2673 = vdwg.mxu0
        %v2676 = vunpack.c.l.b16 %v1878
        %v2677 = vunpack.c.l.b16 %v1879
        %v2678 = vpack.c.b16 %v2677, %v2676
        %v2681 = vsel %vm1382, %v2607, 0
        %2683 = vmatpush.bf16.msra.mxu0 0
        %2684 = vmatpush.bf16.msra.mxu0 0
        %2685 = vmatpush.bf16.msra.mxu0 0
        %2686 = vmatpush.bf16.msra.mxu0 0
        %2687 = vmatpush.bf16.msra.mxu0 0
        %2688 = vmatpush.bf16.msra.mxu0 0
        %2689 = vmatpush.bf16.msra.mxu0 0
        %2690 = vmatpush.bf16.msra.mxu0 %v2678
        %2691 = vmatmul.bf16.gmra.mxu0 %v2681
        %v2692 = vpop.f32.mrf.mxu0
        %v2693 = vadd.f32 0.0, %v2692
        %v2694 = vpop.f32.mrf.mxu0
        %2695 = vdwg.mxu0
        %v2696 = vadd.f32 %v2627, %v2649
        %v2697 = vadd.f32 %v2696, %v2671
        %v2698 = vadd.f32 %v2697, %v2693
        %v2699 = vadd.f32 %v2698, %v1775
        %v2700 = vsel %vm946, %v2699, 0.0
        %2701 = vadd.xlane.f32.xlu0 %v2700
        %v2702 = vpop.xlane.xlu0 %2701
        %v2703 = vmul.f32 %v2702, %v1748
        %v2704 = vsub.f32 %v2699, %v2703
        %v2705 = vmul.f32 %v2704, %v2704
        %v2706 = vsel %vm946, %v2705, 0.0
        %2707 = vadd.xlane.f32.xlu0 %v2706
        %v2708 = vpop.xlane.xlu0 %2707
        %v2709 = vmul.f32 %v2708, %v1748
        %v2710 = vadd.f32 %v2709, 1e-06
        %v2711 = vrsqrt.pop %v2710
        %v2712 = vmul.f32 %v2711, %v2710
        %v2713 = vmul.f32 %v2712, %v2711
        %v2714 = vmul.f32 0.5, %v2713
        %v2715 = vsub.f32 1.5, %v2714
        %v2716 = vmul.f32 %v2711, %v2715
        %vm2717 = vweird.f32 %v2710
        %vm2718 = vweird.f32 %v2711
        %vm2719 = vmor %vm2717, %vm2718
        %v2720 = vsel %vm2719, %v2711, %v2716
        %v2721 = vmul.f32 %v2704, %v2720
        %v2723 = vperm.slane %v1880, 0
        %v2725 = vmul.f32 %v2721, %v2723
        %v2727 = vperm.slane %v1881, 0
        %v2729 = vadd.f32 %v2725, %v2727
        %v2730 = vld [vmem:[%s16] sm:$0xf]
        %v2731 = vld [vmem:[%s16 + $0x4] sm:$0xf]
        %v2732 = vld [vmem:[%s16 + $0x8] sm:$0xf]
        %v2733 = vld [vmem:[%s16 + $0xc] sm:$0xf]
        %v2734 = vld [vmem:[%s16 + $0x10] sm:$0xf]
        %v2735 = vld [vmem:[%s16 + $0x14] sm:$0xf]
        %v2736 = vld [vmem:[%s16 + $0x18] sm:$0xf]
        %v2737 = vld [vmem:[%s16 + $0x1c] sm:$0xf]
        %v2738 = vld [vmem:[%s17] sm:$0x1]
        %v2739 = vld [vmem:[%s18] sm:$0xf]
        %v2740 = vld [vmem:[%s18 + $0x4] sm:$0xf]
        %v2741 = vld [vmem:[%s18 + $0x8] sm:$0xf]
        %v2742 = vld [vmem:[%s18 + $0xc] sm:$0xf]
        %v2743 = vld [vmem:[%s18 + $0x10] sm:$0xf]
        %v2744 = vld [vmem:[%s18 + $0x14] sm:$0xf]
        %v2745 = vld [vmem:[%s18 + $0x18] sm:$0xf]
        %v2746 = vld [vmem:[%s18 + $0x1c] sm:$0xf]
        %v2747 = vld [vmem:[%s18 + $0x20] sm:$0xf]
        %v2748 = vld [vmem:[%s18 + $0x24] sm:$0xf]
        %v2749 = vld [vmem:[%s18 + $0x28] sm:$0xf]
        %v2750 = vld [vmem:[%s18 + $0x2c] sm:$0xf]
        %v2751 = vld [vmem:[%s18 + $0x30] sm:$0xf]
        %v2752 = vld [vmem:[%s18 + $0x34] sm:$0xf]
        %v2753 = vld [vmem:[%s18 + $0x38] sm:$0xf]
        %v2754 = vld [vmem:[%s18 + $0x3c] sm:$0xf]
        %v2755 = vld [vmem:[%s19] sm:$0x1]
        %v2756 = vld [vmem:[%s20] sm:$0x1]
        %v2757 = vld [vmem:[%s21] sm:$0x1]
        %v2758 = vpack.c.bf16 %v2729, %v2729
        %v2760 = vperm.slane %v2738, 0
        %v2770 = vunpack.c.l.b16 %v2730
        %v2771 = vunpack.c.l.b16 %v2731
        %v2772 = vunpack.c.l.b16 %v2732
        %v2773 = vunpack.c.l.b16 %v2733
        %v2774 = vunpack.c.l.b16 %v2734
        %v2775 = vunpack.c.l.b16 %v2735
        %v2776 = vunpack.c.l.b16 %v2736
        %v2777 = vunpack.c.l.b16 %v2737
        %v2778 = vpack.c.b16 %v2771, %v2770
        %v2779 = vpack.c.b16 %v2773, %v2772
        %v2780 = vpack.c.b16 %v2775, %v2774
        %v2781 = vpack.c.b16 %v2777, %v2776
        %v2787 = vsel %vm946, %v2758, 0
        %2789 = vmatpush.bf16.msra.mxu0 0
        %2790 = vmatpush.bf16.msra.mxu0 0
        %2791 = vmatpush.bf16.msra.mxu0 0
        %2792 = vmatpush.bf16.msra.mxu0 0
        %2793 = vmatpush.bf16.msra.mxu0 %v2781
        %2794 = vmatpush.bf16.msra.mxu0 %v2780
        %2795 = vmatpush.bf16.msra.mxu0 %v2779
        %2796 = vmatpush.bf16.msra.mxu0 %v2778
        %2797 = vmatmul.bf16.gmra.mxu0 %v2787
        %v2798 = vpop.f32.mrf.mxu0
        %v2799 = vadd.f32 %v2760, %v2798
        %v2800 = vpop.f32.mrf.mxu0
        %2801 = vdwg.mxu0
        %v2802 = vmax.f32 %v2799, 0.0
        %v2803 = vpack.c.bf16 %v2802, %v2802
        %v2805 = vperm.slane %v2755, 0
        %v2823 = vunpack.c.l.b16 %v2739
        %v2824 = vunpack.c.l.b16 %v2740
        %v2825 = vunpack.c.l.b16 %v2741
        %v2826 = vunpack.c.l.b16 %v2742
        %v2827 = vunpack.c.l.b16 %v2743
        %v2828 = vunpack.c.l.b16 %v2744
        %v2829 = vunpack.c.l.b16 %v2745
        %v2830 = vunpack.c.l.b16 %v2746
        %v2831 = vunpack.c.l.b16 %v2747
        %v2832 = vunpack.c.l.b16 %v2748
        %v2833 = vunpack.c.l.b16 %v2749
        %v2834 = vunpack.c.l.b16 %v2750
        %v2835 = vunpack.c.l.b16 %v2751
        %v2836 = vunpack.c.l.b16 %v2752
        %v2837 = vunpack.c.l.b16 %v2753
        %v2838 = vunpack.c.l.b16 %v2754
        %v2839 = vpack.c.b16 %v2824, %v2823
        %v2840 = vpack.c.b16 %v2826, %v2825
        %v2841 = vpack.c.b16 %v2828, %v2827
        %v2842 = vpack.c.b16 %v2830, %v2829
        %v2843 = vpack.c.b16 %v2832, %v2831
        %v2844 = vpack.c.b16 %v2834, %v2833
        %v2845 = vpack.c.b16 %v2836, %v2835
        %v2846 = vpack.c.b16 %v2838, %v2837
        %2855 = vmatpush.bf16.msra.mxu0 %v2846
        %2856 = vmatpush.bf16.msra.mxu0 %v2845
        %2857 = vmatpush.bf16.msra.mxu0 %v2844
        %2858 = vmatpush.bf16.msra.mxu0 %v2843
        %2859 = vmatpush.bf16.msra.mxu0 %v2842
        %2860 = vmatpush.bf16.msra.mxu0 %v2841
        %2861 = vmatpush.bf16.msra.mxu0 %v2840
        %2862 = vmatpush.bf16.msra.mxu0 %v2839
        %2863 = vmatmul.bf16.gmra.mxu0 %v2803
        %v2864 = vpop.f32.mrf.mxu0
        %v2865 = vadd.f32 %v2805, %v2864
        %v2866 = vpop.f32.mrf.mxu0
        %2867 = vdwg.mxu0
        %v2868 = vadd.f32 %v2865, %v2729
        %v2869 = vsel %vm946, %v2868, 0.0
        %2870 = vadd.xlane.f32.xlu0 %v2869
        %v2871 = vpop.xlane.xlu0 %2870
        %v2872 = vmul.f32 %v2871, %v1748
        %v2873 = vsub.f32 %v2868, %v2872
        %v2874 = vmul.f32 %v2873, %v2873
        %v2875 = vsel %vm946, %v2874, 0.0
        %2876 = vadd.xlane.f32.xlu0 %v2875
        %v2877 = vpop.xlane.xlu0 %2876
        %v2878 = vmul.f32 %v2877, %v1748
        %v2879 = vadd.f32 %v2878, 1e-06
        %v2880 = vrsqrt.pop %v2879
        %v2881 = vmul.f32 %v2880, %v2879
        %v2882 = vmul.f32 %v2881, %v2880
        %v2883 = vmul.f32 0.5, %v2882
        %v2884 = vsub.f32 1.5, %v2883
        %v2885 = vmul.f32 %v2880, %v2884
        %vm2886 = vweird.f32 %v2879
        %vm2887 = vweird.f32 %v2880
        %vm2888 = vmor %vm2886, %vm2887
        %v2889 = vsel %vm2888, %v2880, %v2885
        %v2890 = vmul.f32 %v2873, %v2889
        %v2892 = vperm.slane %v2756, 0
        %v2894 = vmul.f32 %v2890, %v2892
        %v2896 = vperm.slane %v2757, 0
        %v2898 = vadd.f32 %v2894, %v2896
        %2899 = vst.msk [vmem:[%s798] sm:$0xff] %vm946, %v2898
        %2900 = vst.msk [vmem:[%s773] sm:$0xff] %vm1465, %v1516
        %2901 = vst.msk [vmem:[%s773 + $0x8] sm:$0xff] %vm1465, %v1531
        %2902 = vst.msk [vmem:[%s773 + $0x10] sm:$0xff] %vm1465, %v1546
        %2903 = vst.msk [vmem:[%s773 + $0x18] sm:$0xff] %vm1465, %v1561
        %2904 = vst.msk [vmem:[%s780] sm:$0xff] %vm1465, %v2478
        %2905 = vst.msk [vmem:[%s780 + $0x8] sm:$0xff] %vm1465, %v2493
        %2906 = vst.msk [vmem:[%s780 + $0x10] sm:$0xff] %vm1465, %v2508
        %2907 = vst.msk [vmem:[%s780 + $0x18] sm:$0xff] %vm1465, %v2523
        %p2908 = scmp.lt.s32.totalorder %s42, 1
        %s2909 = scalar_select %p2908, %s42, 1
        %s2910 = smul.addr %s2909, 8
        %s2911 = scalar_lea.vmem %s22, %s2910
        %s2912 = sand.u32 %s558, 1
        %s2913 = scalar_lea.sflag [#allocation3], %s2912
        %s2914 = sand.u32 %s558, 1
        %s2915 = smul.addr %s2914, 32
        %s2916 = scalar_lea.vmem [#allocation2], %s2915
        %s2917 = sand.u32 %s584, 1
        %s2918 = scalar_lea.sflag [#allocation5], %s2917
        %s2919 = sand.u32 %s584, 1
        %s2920 = smul.addr %s2919, 32
        %s2921 = scalar_lea.vmem [#allocation4], %s2920
        // Predicated region
        $region109: #{_lambda_.10} parent=107 // pred_check
          %p2922 = pneg %p542
        $region110: #{_lambda_.10} parent=107 // pred_check_branch
          %2924 = sbr.rel (%p2922) target = $region112
        $region111: #{_lambda_.10} parent=107 // pred_region
          _
        $region112: #{_lambda_.10} parent=107 // pred_fallthru
          _
        // Predicated region
        $region113: #{_lambda_.10} parent=107 // pred_check
          %p2925 = pneg %p568
        $region114: #{_lambda_.10} parent=107 // pred_check_branch
          %2927 = sbr.rel (%p2925) target = $region116
        $region115: #{_lambda_.10} parent=107 // pred_region
          %2929 = vsyncadd %s2913, 0
          %s2930 = smul.addr %s42, 4
          %s2931 = smul.addr %s2930, 8
          %s2932 = scalar_lea.hbm %s23, %s2931
          %s2933 = sshll.u32 %s2916, 4
          %s2934 = int_to_ptr.vmem [resolvable:$true] %s2933
          %s2935 = sshll.u32 %s2932, 4
          %s2936 = int_to_ptr.hbm [resolvable:$true] %s2935
          %2941 = dma.vmem_to_hbm [thread:$0]  %s2934, 512, %s2936, %s2913, 128, 128, 8
        $region116: #{_lambda_.10} parent=107 // pred_fallthru
          _
        // Predicated region
        $region117: #{_lambda_.10} parent=107 // pred_check
          %p2942 = pneg %p594
        $region118: #{_lambda_.10} parent=107 // pred_check_branch
          %2944 = sbr.rel (%p2942) target = $region120
        $region119: #{_lambda_.10} parent=107 // pred_region
          %2946 = vsyncadd %s2918, 0
          %s2947 = smul.addr %s42, 4
          %s2948 = smul.addr %s2947, 8
          %s2949 = scalar_lea.hbm %s24, %s2948
          %s2950 = sshll.u32 %s2921, 4
          %s2951 = int_to_ptr.vmem [resolvable:$true] %s2950
          %s2952 = sshll.u32 %s2949, 4
          %s2953 = int_to_ptr.hbm [resolvable:$true] %s2952
          %2958 = dma.vmem_to_hbm [thread:$0]  %s2951, 512, %s2953, %s2918, 128, 128, 8
        $region120: #{_lambda_.10} parent=107 // pred_fallthru
          _
      $region108: #{_lambda_.10} parent=5 // pred_fallthru
        _
      %p2959 = scmp.le.s32.totalorder 2, %s37
      // Predicated region
      $region121: #{_lambda_.10} parent=5 // pred_check
        %p2960 = pneg %p2959
      $region122: #{_lambda_.10} parent=5 // pred_check_branch
        %2962 = sbr.rel (%p2960) target = $region124
      $region123: #{_lambda_.10} parent=5 // pred_region
        %s2963 = ssub.s32 %s37, 2
        // Predicated region
        $region125: #{_lambda_.10} parent=123 // pred_check
          %p2964 = pneg %p548
        $region126: #{_lambda_.10} parent=123 // pred_check_branch
          %2966 = sbr.rel (%p2964) target = $region128
        $region127: #{_lambda_.10} parent=123 // pred_region
          %p2967 = scmp.lt.s32.totalorder %s43, 1
          %s2968 = scalar_select %p2967, %s43, 1
          %s2969 = smul.addr %s2968, 8
          %s2970 = scalar_lea.vmem %s22, %s2969
        $region128: #{_lambda_.10} parent=123 // pred_fallthru
          _
        // Predicated region
        $region129: #{_lambda_.10} parent=123 // pred_check
          %p2971 = pneg %p574
        $region130: #{_lambda_.10} parent=123 // pred_check_branch
          %2973 = sbr.rel (%p2971) target = $region132
        $region131: #{_lambda_.10} parent=123 // pred_region
          %s2974 = sand.u32 %s559, 1
          %s2975 = scalar_lea.sflag [#allocation3], %s2974
          %s2976 = sand.u32 %s559, 1
          %s2977 = smul.addr %s2976, 32
          %s2978 = scalar_lea.vmem [#allocation2], %s2977
          %2980 = dma.done %s2975, 512
        $region132: #{_lambda_.10} parent=123 // pred_fallthru
          _
        // Predicated region
        $region133: #{_lambda_.10} parent=123 // pred_check
          %p2981 = pneg %p600
        $region134: #{_lambda_.10} parent=123 // pred_check_branch
          %2983 = sbr.rel (%p2981) target = $region136
        $region135: #{_lambda_.10} parent=123 // pred_region
          %s2984 = sand.u32 %s585, 1
          %s2985 = scalar_lea.sflag [#allocation5], %s2984
          %s2986 = sand.u32 %s585, 1
          %s2987 = smul.addr %s2986, 32
          %s2988 = scalar_lea.vmem [#allocation4], %s2987
          %2990 = dma.done %s2985, 512
        $region136: #{_lambda_.10} parent=123 // pred_fallthru
          _
      $region124: #{_lambda_.10} parent=5 // pred_fallthru
        _
    $region6: #{_lambda_.10} parent=1 // loop_footer
      %s41 = sadd.s32 1, %s37
    $region7: #{_lambda_.10} parent=1 // loop_footer_branch
      %36 = sbr.rel target = $region3
    $region8: #{_lambda_.10} parent=1 // loop_exit
      _
    %2991 = vsyncpa [#allocation3], 1
    %s2992 = scalar_lea.sflag [#allocation3], 1
    %2993 = vsyncpa %s2992, 1
    %2994 = vsyncpa [#allocation5], 1
    %s2995 = scalar_lea.sflag [#allocation5], 1
    %2996 = vsyncpa %s2995, 1

// kernel: _lambda_.9
$region0: #{_lambda_.9}
  #allocation0 [shape = 'u32[]', space=smem, size = 0x4, offset = 0x4, fixed_abs, tag = 'smem constant byte address 0x4 - core index']
  #allocation1 [shape = 'u32[72,128]{1,0:T(1,128)}', space=vmem, size = 0x9000, scoped, tag = 'internal scratch']
  %s0 = inlined_call_operand.vmem [shape: f32[2,8,64], index: 0, kind: input, shape index: {}]
  %s1 = inlined_call_operand.vmem [shape: bf16[2,8,64], index: 1, kind: input, shape index: {}]
  %s2 = inlined_call_operand.vmem [shape: s32[2,1,8], index: 2, kind: input, shape index: {}]
  %s3 = inlined_call_operand.vmem [shape: s32[2,1,8], index: 3, kind: input, shape index: {}]
  %s4 = inlined_call_operand.vmem [shape: bf16[4,64,16], index: 4, kind: input, shape index: {}]
  %s5 = inlined_call_operand.vmem [shape: bf16[4,64,16], index: 5, kind: input, shape index: {}]
  %s6 = inlined_call_operand.vmem [shape: bf16[4,64,16], index: 6, kind: input, shape index: {}]
  %s7 = inlined_call_operand.vmem [shape: bf16[4,16,64], index: 7, kind: input, shape index: {}]
  %s8 = inlined_call_operand.vmem [shape: f32[1,64], index: 8, kind: input, shape index: {}]
  %s9 = inlined_call_operand.vmem [shape: f32[1,64], index: 9, kind: input, shape index: {}]
  %s10 = inlined_call_operand.vmem [shape: bf16[4,64,16], index: 10, kind: input, shape index: {}]
  %s11 = inlined_call_operand.vmem [shape: bf16[4,64,16], index: 11, kind: input, shape index: {}]
  %s12 = inlined_call_operand.vmem [shape: bf16[4,64,16], index: 12, kind: input, shape index: {}]
  %s13 = inlined_call_operand.vmem [shape: bf16[4,16,64], index: 13, kind: input, shape index: {}]
  %s14 = inlined_call_operand.vmem [shape: f32[1,64], index: 14, kind: input, shape index: {}]
  %s15 = inlined_call_operand.vmem [shape: f32[1,64], index: 15, kind: input, shape index: {}]
  %s16 = inlined_call_operand.vmem [shape: bf16[64,128], index: 16, kind: input, shape index: {}]
  %s17 = inlined_call_operand.vmem [shape: f32[1,128], index: 17, kind: input, shape index: {}]
  %s18 = inlined_call_operand.vmem [shape: bf16[128,64], index: 18, kind: input, shape index: {}]
  %s19 = inlined_call_operand.vmem [shape: f32[1,64], index: 19, kind: input, shape index: {}]
  %s20 = inlined_call_operand.vmem [shape: f32[1,64], index: 20, kind: input, shape index: {}]
  %s21 = inlined_call_operand.vmem [shape: f32[1,64], index: 21, kind: input, shape index: {}]
  %s22 = inlined_call_operand.hbm [shape: f32[2,8,64], index: 22, kind: output, shape index: {0}]
  %s23 = inlined_call_operand.hbm [shape: f32[2,4,8,8], index: 23, kind: output, shape index: {1}]
  %s24 = inlined_call_operand.hbm [shape: f32[2,4,8,8], index: 24, kind: output, shape index: {2}]
  %25 = xla_tuple %s22, %s23, %s24
  %s26 = sld [smem:[#allocation0]]
  $region137: #{_lambda_.9} parent=0
    _
  %s28 = ssub.s32 1, %s26
  %s29 = scalar_select 0, %s28, %s26
  $region1: #{_lambda_.9} parent=0
    #allocation2 [shape = 'u8[8192]{0}', space=vmem, size = 0x2000, scoped, tag = 'output window, operand 0']
    #allocation3 [shape = 's32[2]{0}', space=sflag, size = 0x8, scoped, tag = 'scoped memory for _lambda_.9']
    #allocation4 [shape = 'u8[32768]{0}', space=vmem, size = 0x8000, scoped, tag = 'output window, operand 1']
    #allocation5 [shape = 's32[2]{0}', space=sflag, size = 0x8, scoped, tag = 'scoped memory for _lambda_.9']
    #allocation6 [shape = 'u8[32768]{0}', space=vmem, size = 0x8000, scoped, tag = 'output window, operand 2']
    %30 = vsyncpa [#allocation3], 0
    %s31 = scalar_lea.sflag [#allocation3], 1
    %32 = vsyncpa %s31, 0
    %33 = vsyncpa [#allocation5], 0
    %s34 = scalar_lea.sflag [#allocation5], 1
    %35 = vsyncpa %s34, 0
    loop: start=0, step=1, limit=4
    $region2: #{_lambda_.9} parent=1 // loop_pre_header
      _
    $region3: #{_lambda_.9} parent=1 // loop_header
      %s37 = sphi 0, %s41
      %p38 = scmp.ge.s32.totalorder %s37, 4
      %s47 = sphi 0, %s49
      %s50 = sphi 0, %s47
      %s51 = sphi 0, %s50
      %s67 = sphi 0, %s51
      %s73 = sphi 0, %s75
      %s76 = sphi 0, %s73
      %s77 = sphi 0, %s76
      %s93 = sphi 0, %s77
      %s99 = sphi 0, %s101
      %s102 = sphi 0, %s99
      %s103 = sphi 0, %s102
      %s119 = sphi 0, %s103
      %s125 = sphi 0, %s127
      %s128 = sphi 0, %s125
      %s129 = sphi 0, %s128
      %s145 = sphi 0, %s129
      %s149 = sphi 0, %s149
      %s151 = sphi 0, %s149
      %s152 = sphi 0, %s151
      %s166 = sphi 0, %s152
      %s170 = sphi 0, %s170
      %s172 = sphi 0, %s170
      %s173 = sphi 0, %s172
      %s187 = sphi 0, %s173
      %s191 = sphi 0, %s191
      %s193 = sphi 0, %s191
      %s194 = sphi 0, %s193
      %s208 = sphi 0, %s194
      %s212 = sphi 0, %s212
      %s214 = sphi 0, %s212
      %s215 = sphi 0, %s214
      %s229 = sphi 0, %s215
      %s233 = sphi 0, %s233
      %s235 = sphi 0, %s233
      %s236 = sphi 0, %s235
      %s250 = sphi 0, %s236
      %s254 = sphi 0, %s254
      %s256 = sphi 0, %s254
      %s257 = sphi 0, %s256
      %s271 = sphi 0, %s257
      %s275 = sphi 0, %s275
      %s277 = sphi 0, %s275
      %s278 = sphi 0, %s277
      %s292 = sphi 0, %s278
      %s296 = sphi 0, %s296
      %s298 = sphi 0, %s296
      %s299 = sphi 0, %s298
      %s313 = sphi 0, %s299
      %s317 = sphi 0, %s317
      %s319 = sphi 0, %s317
      %s320 = sphi 0, %s319
      %s334 = sphi 0, %s320
      %s338 = sphi 0, %s338
      %s340 = sphi 0, %s338
      %s341 = sphi 0, %s340
      %s355 = sphi 0, %s341
      %s359 = sphi 0, %s359
      %s361 = sphi 0, %s359
      %s362 = sphi 0, %s361
      %s376 = sphi 0, %s362
      %s380 = sphi 0, %s380
      %s382 = sphi 0, %s380
      %s383 = sphi 0, %s382
      %s397 = sphi 0, %s383
      %s401 = sphi 0, %s401
      %s403 = sphi 0, %s401
      %s404 = sphi 0, %s403
      %s418 = sphi 0, %s404
      %s422 = sphi 0, %s422
      %s424 = sphi 0, %s422
      %s425 = sphi 0, %s424
      %s439 = sphi 0, %s425
      %s443 = sphi 0, %s443
      %s445 = sphi 0, %s443
      %s446 = sphi 0, %s445
      %s460 = sphi 0, %s446
      %s464 = sphi 0, %s464
      %s466 = sphi 0, %s464
      %s467 = sphi 0, %s466
      %s481 = sphi 0, %s467
      %s485 = sphi 0, %s485
      %s487 = sphi 0, %s485
      %s488 = sphi 0, %s487
      %s502 = sphi 0, %s488
      %s506 = sphi 0, %s506
      %s508 = sphi 0, %s506
      %s509 = sphi 0, %s508
      %s523 = sphi 0, %s509
      %s529 = sphi 0, %s531
      %s532 = sphi 0, %s529
      %s533 = sphi 0, %s532
      %s549 = sphi 0, %s533
      %s555 = sphi 0, %s557
      %s558 = sphi 0, %s555
      %s559 = sphi 0, %s558
      %s575 = sphi 0, %s559
      %s581 = sphi 0, %s583
      %s584 = sphi 0, %s581
      %s585 = sphi 0, %s584
      %s601 = sphi 0, %s585
    $region4: #{_lambda_.9} parent=1 // loop_header_branch
      %40 = sbr.rel (%p38) target = $region8
    $region5: #{_lambda_.9} parent=1 // loop_body
      %s42 = ssub.s32 %s37, 1
      %s43 = ssub.s32 %s37, 2
      %s44 = sadd.s32 %s37, 1
      %s45 = ssub.s32 %s37, %s44
      %p46 = scmp.eq.s32.totalorder %s45, 0
      %s48 = sadd.s32 %s47, 1
      %s49 = scalar_select %p46, %s47, %s48
      %p52 = pneg %p46
      %p53 = scmp.eq.s32.totalorder %s37, 1
      %p54 = por %p52, %p53
      %p55 = scmp.ne.s32.totalorder %s47, %s50
      %p56 = scmp.eq.s32.totalorder %s37, 0
      %p57 = por %p55, %p56
      %p58 = scmp.ne.s32.totalorder %s47, %s50
      %p59 = scmp.eq.s32.totalorder %s42, 1
      %p60 = por %p58, %p59
      %p61 = scmp.ne.s32.totalorder %s50, %s51
      %p62 = scmp.eq.s32.totalorder %s42, 0
      %p63 = por %p61, %p62
      %p64 = scmp.ne.s32.totalorder %s50, %s51
      %p65 = scmp.eq.s32.totalorder %s43, 1
      %p66 = por %p64, %p65
      %p68 = scmp.ne.s32.totalorder %s51, %s67
      %p69 = scmp.eq.s32.totalorder %s43, 0
      %p70 = por %p68, %p69
      %s71 = ssub.s32 %s37, %s44
      %p72 = scmp.eq.s32.totalorder %s71, 0
      %s74 = sadd.s32 %s73, 1
      %s75 = scalar_select %p72, %s73, %s74
      %p78 = pneg %p72
      %p79 = scmp.eq.s32.totalorder %s37, 1
      %p80 = por %p78, %p79
      %p81 = scmp.ne.s32.totalorder %s73, %s76
      %p82 = scmp.eq.s32.totalorder %s37, 0
      %p83 = por %p81, %p82
      %p84 = scmp.ne.s32.totalorder %s73, %s76
      %p85 = scmp.eq.s32.totalorder %s42, 1
      %p86 = por %p84, %p85
      %p87 = scmp.ne.s32.totalorder %s76, %s77
      %p88 = scmp.eq.s32.totalorder %s42, 0
      %p89 = por %p87, %p88
      %p90 = scmp.ne.s32.totalorder %s76, %s77
      %p91 = scmp.eq.s32.totalorder %s43, 1
      %p92 = por %p90, %p91
      %p94 = scmp.ne.s32.totalorder %s77, %s93
      %p95 = scmp.eq.s32.totalorder %s43, 0
      %p96 = por %p94, %p95
      %s97 = ssub.s32 %s37, %s44
      %p98 = scmp.eq.s32.totalorder %s97, 0
      %s100 = sadd.s32 %s99, 1
      %s101 = scalar_select %p98, %s99, %s100
      %p104 = pneg %p98
      %p105 = scmp.eq.s32.totalorder %s37, 1
      %p106 = por %p104, %p105
      %p107 = scmp.ne.s32.totalorder %s99, %s102
      %p108 = scmp.eq.s32.totalorder %s37, 0
      %p109 = por %p107, %p108
      %p110 = scmp.ne.s32.totalorder %s99, %s102
      %p111 = scmp.eq.s32.totalorder %s42, 1
      %p112 = por %p110, %p111
      %p113 = scmp.ne.s32.totalorder %s102, %s103
      %p114 = scmp.eq.s32.totalorder %s42, 0
      %p115 = por %p113, %p114
      %p116 = scmp.ne.s32.totalorder %s102, %s103
      %p117 = scmp.eq.s32.totalorder %s43, 1
      %p118 = por %p116, %p117
      %p120 = scmp.ne.s32.totalorder %s103, %s119
      %p121 = scmp.eq.s32.totalorder %s43, 0
      %p122 = por %p120, %p121
      %s123 = ssub.s32 %s37, %s44
      %p124 = scmp.eq.s32.totalorder %s123, 0
      %s126 = sadd.s32 %s125, 1
      %s127 = scalar_select %p124, %s125, %s126
      %p130 = pneg %p124
      %p131 = scmp.eq.s32.totalorder %s37, 1
      %p132 = por %p130, %p131
      %p133 = scmp.ne.s32.totalorder %s125, %s128
      %p134 = scmp.eq.s32.totalorder %s37, 0
      %p135 = por %p133, %p134
      %p136 = scmp.ne.s32.totalorder %s125, %s128
      %p137 = scmp.eq.s32.totalorder %s42, 1
      %p138 = por %p136, %p137
      %p139 = scmp.ne.s32.totalorder %s128, %s129
      %p140 = scmp.eq.s32.totalorder %s42, 0
      %p141 = por %p139, %p140
      %p142 = scmp.ne.s32.totalorder %s128, %s129
      %p143 = scmp.eq.s32.totalorder %s43, 1
      %p144 = por %p142, %p143
      %p146 = scmp.ne.s32.totalorder %s129, %s145
      %p147 = scmp.eq.s32.totalorder %s43, 0
      %p148 = por %p146, %p147
      %s150 = sadd.s32 %s149, 1
      %p153 = scmp.eq.s32.totalorder %s37, 1
      %p154 = scmp.ne.s32.totalorder %s149, %s151
      %p155 = scmp.eq.s32.totalorder %s37, 0
      %p156 = por %p154, %p155
      %p157 = scmp.ne.s32.totalorder %s149, %s151
      %p158 = scmp.eq.s32.totalorder %s42, 1
      %p159 = por %p157, %p158
      %p160 = scmp.ne.s32.totalorder %s151, %s152
      %p161 = scmp.eq.s32.totalorder %s42, 0
      %p162 = por %p160, %p161
      %p163 = scmp.ne.s32.totalorder %s151, %s152
      %p164 = scmp.eq.s32.totalorder %s43, 1
      %p165 = por %p163, %p164
      %p167 = scmp.ne.s32.totalorder %s152, %s166
      %p168 = scmp.eq.s32.totalorder %s43, 0
      %p169 = por %p167, %p168
      %s171 = sadd.s32 %s170, 1
      %p174 = scmp.eq.s32.totalorder %s37, 1
      %p175 = scmp.ne.s32.totalorder %s170, %s172
      %p176 = scmp.eq.s32.totalorder %s37, 0
      %p177 = por %p175, %p176
      %p178 = scmp.ne.s32.totalorder %s170, %s172
      %p179 = scmp.eq.s32.totalorder %s42, 1
      %p180 = por %p178, %p179
      %p181 = scmp.ne.s32.totalorder %s172, %s173
      %p182 = scmp.eq.s32.totalorder %s42, 0
      %p183 = por %p181, %p182
      %p184 = scmp.ne.s32.totalorder %s172, %s173
      %p185 = scmp.eq.s32.totalorder %s43, 1
      %p186 = por %p184, %p185
      %p188 = scmp.ne.s32.totalorder %s173, %s187
      %p189 = scmp.eq.s32.totalorder %s43, 0
      %p190 = por %p188, %p189
      %s192 = sadd.s32 %s191, 1
      %p195 = scmp.eq.s32.totalorder %s37, 1
      %p196 = scmp.ne.s32.totalorder %s191, %s193
      %p197 = scmp.eq.s32.totalorder %s37, 0
      %p198 = por %p196, %p197
      %p199 = scmp.ne.s32.totalorder %s191, %s193
      %p200 = scmp.eq.s32.totalorder %s42, 1
      %p201 = por %p199, %p200
      %p202 = scmp.ne.s32.totalorder %s193, %s194
      %p203 = scmp.eq.s32.totalorder %s42, 0
      %p204 = por %p202, %p203
      %p205 = scmp.ne.s32.totalorder %s193, %s194
      %p206 = scmp.eq.s32.totalorder %s43, 1
      %p207 = por %p205, %p206
      %p209 = scmp.ne.s32.totalorder %s194, %s208
      %p210 = scmp.eq.s32.totalorder %s43, 0
      %p211 = por %p209, %p210
      %s213 = sadd.s32 %s212, 1
      %p216 = scmp.eq.s32.totalorder %s37, 1
      %p217 = scmp.ne.s32.totalorder %s212, %s214
      %p218 = scmp.eq.s32.totalorder %s37, 0
      %p219 = por %p217, %p218
      %p220 = scmp.ne.s32.totalorder %s212, %s214
      %p221 = scmp.eq.s32.totalorder %s42, 1
      %p222 = por %p220, %p221
      %p223 = scmp.ne.s32.totalorder %s214, %s215
      %p224 = scmp.eq.s32.totalorder %s42, 0
      %p225 = por %p223, %p224
      %p226 = scmp.ne.s32.totalorder %s214, %s215
      %p227 = scmp.eq.s32.totalorder %s43, 1
      %p228 = por %p226, %p227
      %p230 = scmp.ne.s32.totalorder %s215, %s229
      %p231 = scmp.eq.s32.totalorder %s43, 0
      %p232 = por %p230, %p231
      %s234 = sadd.s32 %s233, 1
      %p237 = scmp.eq.s32.totalorder %s37, 1
      %p238 = scmp.ne.s32.totalorder %s233, %s235
      %p239 = scmp.eq.s32.totalorder %s37, 0
      %p240 = por %p238, %p239
      %p241 = scmp.ne.s32.totalorder %s233, %s235
      %p242 = scmp.eq.s32.totalorder %s42, 1
      %p243 = por %p241, %p242
      %p244 = scmp.ne.s32.totalorder %s235, %s236
      %p245 = scmp.eq.s32.totalorder %s42, 0
      %p246 = por %p244, %p245
      %p247 = scmp.ne.s32.totalorder %s235, %s236
      %p248 = scmp.eq.s32.totalorder %s43, 1
      %p249 = por %p247, %p248
      %p251 = scmp.ne.s32.totalorder %s236, %s250
      %p252 = scmp.eq.s32.totalorder %s43, 0
      %p253 = por %p251, %p252
      %s255 = sadd.s32 %s254, 1
      %p258 = scmp.eq.s32.totalorder %s37, 1
      %p259 = scmp.ne.s32.totalorder %s254, %s256
      %p260 = scmp.eq.s32.totalorder %s37, 0
      %p261 = por %p259, %p260
      %p262 = scmp.ne.s32.totalorder %s254, %s256
      %p263 = scmp.eq.s32.totalorder %s42, 1
      %p264 = por %p262, %p263
      %p265 = scmp.ne.s32.totalorder %s256, %s257
      %p266 = scmp.eq.s32.totalorder %s42, 0
      %p267 = por %p265, %p266
      %p268 = scmp.ne.s32.totalorder %s256, %s257
      %p269 = scmp.eq.s32.totalorder %s43, 1
      %p270 = por %p268, %p269
      %p272 = scmp.ne.s32.totalorder %s257, %s271
      %p273 = scmp.eq.s32.totalorder %s43, 0
      %p274 = por %p272, %p273
      %s276 = sadd.s32 %s275, 1
      %p279 = scmp.eq.s32.totalorder %s37, 1
      %p280 = scmp.ne.s32.totalorder %s275, %s277
      %p281 = scmp.eq.s32.totalorder %s37, 0
      %p282 = por %p280, %p281
      %p283 = scmp.ne.s32.totalorder %s275, %s277
      %p284 = scmp.eq.s32.totalorder %s42, 1
      %p285 = por %p283, %p284
      %p286 = scmp.ne.s32.totalorder %s277, %s278
      %p287 = scmp.eq.s32.totalorder %s42, 0
      %p288 = por %p286, %p287
      %p289 = scmp.ne.s32.totalorder %s277, %s278
      %p290 = scmp.eq.s32.totalorder %s43, 1
      %p291 = por %p289, %p290
      %p293 = scmp.ne.s32.totalorder %s278, %s292
      %p294 = scmp.eq.s32.totalorder %s43, 0
      %p295 = por %p293, %p294
      %s297 = sadd.s32 %s296, 1
      %p300 = scmp.eq.s32.totalorder %s37, 1
      %p301 = scmp.ne.s32.totalorder %s296, %s298
      %p302 = scmp.eq.s32.totalorder %s37, 0
      %p303 = por %p301, %p302
      %p304 = scmp.ne.s32.totalorder %s296, %s298
      %p305 = scmp.eq.s32.totalorder %s42, 1
      %p306 = por %p304, %p305
      %p307 = scmp.ne.s32.totalorder %s298, %s299
      %p308 = scmp.eq.s32.totalorder %s42, 0
      %p309 = por %p307, %p308
      %p310 = scmp.ne.s32.totalorder %s298, %s299
      %p311 = scmp.eq.s32.totalorder %s43, 1
      %p312 = por %p310, %p311
      %p314 = scmp.ne.s32.totalorder %s299, %s313
      %p315 = scmp.eq.s32.totalorder %s43, 0
      %p316 = por %p314, %p315
      %s318 = sadd.s32 %s317, 1
      %p321 = scmp.eq.s32.totalorder %s37, 1
      %p322 = scmp.ne.s32.totalorder %s317, %s319
      %p323 = scmp.eq.s32.totalorder %s37, 0
      %p324 = por %p322, %p323
      %p325 = scmp.ne.s32.totalorder %s317, %s319
      %p326 = scmp.eq.s32.totalorder %s42, 1
      %p327 = por %p325, %p326
      %p328 = scmp.ne.s32.totalorder %s319, %s320
      %p329 = scmp.eq.s32.totalorder %s42, 0
      %p330 = por %p328, %p329
      %p331 = scmp.ne.s32.totalorder %s319, %s320
      %p332 = scmp.eq.s32.totalorder %s43, 1
      %p333 = por %p331, %p332
      %p335 = scmp.ne.s32.totalorder %s320, %s334
      %p336 = scmp.eq.s32.totalorder %s43, 0
      %p337 = por %p335, %p336
      %s339 = sadd.s32 %s338, 1
      %p342 = scmp.eq.s32.totalorder %s37, 1
      %p343 = scmp.ne.s32.totalorder %s338, %s340
      %p344 = scmp.eq.s32.totalorder %s37, 0
      %p345 = por %p343, %p344
      %p346 = scmp.ne.s32.totalorder %s338, %s340
      %p347 = scmp.eq.s32.totalorder %s42, 1
      %p348 = por %p346, %p347
      %p349 = scmp.ne.s32.totalorder %s340, %s341
      %p350 = scmp.eq.s32.totalorder %s42, 0
      %p351 = por %p349, %p350
      %p352 = scmp.ne.s32.totalorder %s340, %s341
      %p353 = scmp.eq.s32.totalorder %s43, 1
      %p354 = por %p352, %p353
      %p356 = scmp.ne.s32.totalorder %s341, %s355
      %p357 = scmp.eq.s32.totalorder %s43, 0
      %p358 = por %p356, %p357
      %s360 = sadd.s32 %s359, 1
      %p363 = scmp.eq.s32.totalorder %s37, 1
      %p364 = scmp.ne.s32.totalorder %s359, %s361
      %p365 = scmp.eq.s32.totalorder %s37, 0
      %p366 = por %p364, %p365
      %p367 = scmp.ne.s32.totalorder %s359, %s361
      %p368 = scmp.eq.s32.totalorder %s42, 1
      %p369 = por %p367, %p368
      %p370 = scmp.ne.s32.totalorder %s361, %s362
      %p371 = scmp.eq.s32.totalorder %s42, 0
      %p372 = por %p370, %p371
      %p373 = scmp.ne.s32.totalorder %s361, %s362
      %p374 = scmp.eq.s32.totalorder %s43, 1
      %p375 = por %p373, %p374
      %p377 = scmp.ne.s32.totalorder %s362, %s376
      %p378 = scmp.eq.s32.totalorder %s43, 0
      %p379 = por %p377, %p378
      %s381 = sadd.s32 %s380, 1
      %p384 = scmp.eq.s32.totalorder %s37, 1
      %p385 = scmp.ne.s32.totalorder %s380, %s382
      %p386 = scmp.eq.s32.totalorder %s37, 0
      %p387 = por %p385, %p386
      %p388 = scmp.ne.s32.totalorder %s380, %s382
      %p389 = scmp.eq.s32.totalorder %s42, 1
      %p390 = por %p388, %p389
      %p391 = scmp.ne.s32.totalorder %s382, %s383
      %p392 = scmp.eq.s32.totalorder %s42, 0
      %p393 = por %p391, %p392
      %p394 = scmp.ne.s32.totalorder %s382, %s383
      %p395 = scmp.eq.s32.totalorder %s43, 1
      %p396 = por %p394, %p395
      %p398 = scmp.ne.s32.totalorder %s383, %s397
      %p399 = scmp.eq.s32.totalorder %s43, 0
      %p400 = por %p398, %p399
      %s402 = sadd.s32 %s401, 1
      %p405 = scmp.eq.s32.totalorder %s37, 1
      %p406 = scmp.ne.s32.totalorder %s401, %s403
      %p407 = scmp.eq.s32.totalorder %s37, 0
      %p408 = por %p406, %p407
      %p409 = scmp.ne.s32.totalorder %s401, %s403
      %p410 = scmp.eq.s32.totalorder %s42, 1
      %p411 = por %p409, %p410
      %p412 = scmp.ne.s32.totalorder %s403, %s404
      %p413 = scmp.eq.s32.totalorder %s42, 0
      %p414 = por %p412, %p413
      %p415 = scmp.ne.s32.totalorder %s403, %s404
      %p416 = scmp.eq.s32.totalorder %s43, 1
      %p417 = por %p415, %p416
      %p419 = scmp.ne.s32.totalorder %s404, %s418
      %p420 = scmp.eq.s32.totalorder %s43, 0
      %p421 = por %p419, %p420
      %s423 = sadd.s32 %s422, 1
      %p426 = scmp.eq.s32.totalorder %s37, 1
      %p427 = scmp.ne.s32.totalorder %s422, %s424
      %p428 = scmp.eq.s32.totalorder %s37, 0
      %p429 = por %p427, %p428
      %p430 = scmp.ne.s32.totalorder %s422, %s424
      %p431 = scmp.eq.s32.totalorder %s42, 1
      %p432 = por %p430, %p431
      %p433 = scmp.ne.s32.totalorder %s424, %s425
      %p434 = scmp.eq.s32.totalorder %s42, 0
      %p435 = por %p433, %p434
      %p436 = scmp.ne.s32.totalorder %s424, %s425
      %p437 = scmp.eq.s32.totalorder %s43, 1
      %p438 = por %p436, %p437
      %p440 = scmp.ne.s32.totalorder %s425, %s439
      %p441 = scmp.eq.s32.totalorder %s43, 0
      %p442 = por %p440, %p441
      %s444 = sadd.s32 %s443, 1
      %p447 = scmp.eq.s32.totalorder %s37, 1
      %p448 = scmp.ne.s32.totalorder %s443, %s445
      %p449 = scmp.eq.s32.totalorder %s37, 0
      %p450 = por %p448, %p449
      %p451 = scmp.ne.s32.totalorder %s443, %s445
      %p452 = scmp.eq.s32.totalorder %s42, 1
      %p453 = por %p451, %p452
      %p454 = scmp.ne.s32.totalorder %s445, %s446
      %p455 = scmp.eq.s32.totalorder %s42, 0
      %p456 = por %p454, %p455
      %p457 = scmp.ne.s32.totalorder %s445, %s446
      %p458 = scmp.eq.s32.totalorder %s43, 1
      %p459 = por %p457, %p458
      %p461 = scmp.ne.s32.totalorder %s446, %s460
      %p462 = scmp.eq.s32.totalorder %s43, 0
      %p463 = por %p461, %p462
      %s465 = sadd.s32 %s464, 1
      %p468 = scmp.eq.s32.totalorder %s37, 1
      %p469 = scmp.ne.s32.totalorder %s464, %s466
      %p470 = scmp.eq.s32.totalorder %s37, 0
      %p471 = por %p469, %p470
      %p472 = scmp.ne.s32.totalorder %s464, %s466
      %p473 = scmp.eq.s32.totalorder %s42, 1
      %p474 = por %p472, %p473
      %p475 = scmp.ne.s32.totalorder %s466, %s467
      %p476 = scmp.eq.s32.totalorder %s42, 0
      %p477 = por %p475, %p476
      %p478 = scmp.ne.s32.totalorder %s466, %s467
      %p479 = scmp.eq.s32.totalorder %s43, 1
      %p480 = por %p478, %p479
      %p482 = scmp.ne.s32.totalorder %s467, %s481
      %p483 = scmp.eq.s32.totalorder %s43, 0
      %p484 = por %p482, %p483
      %s486 = sadd.s32 %s485, 1
      %p489 = scmp.eq.s32.totalorder %s37, 1
      %p490 = scmp.ne.s32.totalorder %s485, %s487
      %p491 = scmp.eq.s32.totalorder %s37, 0
      %p492 = por %p490, %p491
      %p493 = scmp.ne.s32.totalorder %s485, %s487
      %p494 = scmp.eq.s32.totalorder %s42, 1
      %p495 = por %p493, %p494
      %p496 = scmp.ne.s32.totalorder %s487, %s488
      %p497 = scmp.eq.s32.totalorder %s42, 0
      %p498 = por %p496, %p497
      %p499 = scmp.ne.s32.totalorder %s487, %s488
      %p500 = scmp.eq.s32.totalorder %s43, 1
      %p501 = por %p499, %p500
      %p503 = scmp.ne.s32.totalorder %s488, %s502
      %p504 = scmp.eq.s32.totalorder %s43, 0
      %p505 = por %p503, %p504
      %s507 = sadd.s32 %s506, 1
      %p510 = scmp.eq.s32.totalorder %s37, 1
      %p511 = scmp.ne.s32.totalorder %s506, %s508
      %p512 = scmp.eq.s32.totalorder %s37, 0
      %p513 = por %p511, %p512
      %p514 = scmp.ne.s32.totalorder %s506, %s508
      %p515 = scmp.eq.s32.totalorder %s42, 1
      %p516 = por %p514, %p515
      %p517 = scmp.ne.s32.totalorder %s508, %s509
      %p518 = scmp.eq.s32.totalorder %s42, 0
      %p519 = por %p517, %p518
      %p520 = scmp.ne.s32.totalorder %s508, %s509
      %p521 = scmp.eq.s32.totalorder %s43, 1
      %p522 = por %p520, %p521
      %p524 = scmp.ne.s32.totalorder %s509, %s523
      %p525 = scmp.eq.s32.totalorder %s43, 0
      %p526 = por %p524, %p525
      %s527 = ssub.s32 %s37, %s44
      %p528 = scmp.eq.s32.totalorder %s527, 0
      %s530 = sadd.s32 %s529, 1
      %s531 = scalar_select %p528, %s529, %s530
      %p534 = pneg %p528
      %p535 = scmp.eq.s32.totalorder %s37, 1
      %p536 = por %p534, %p535
      %p537 = scmp.ne.s32.totalorder %s529, %s532
      %p538 = scmp.eq.s32.totalorder %s37, 0
      %p539 = por %p537, %p538
      %p540 = scmp.ne.s32.totalorder %s529, %s532
      %p541 = scmp.eq.s32.totalorder %s42, 1
      %p542 = por %p540, %p541
      %p543 = scmp.ne.s32.totalorder %s532, %s533
      %p544 = scmp.eq.s32.totalorder %s42, 0
      %p545 = por %p543, %p544
      %p546 = scmp.ne.s32.totalorder %s532, %s533
      %p547 = scmp.eq.s32.totalorder %s43, 1
      %p548 = por %p546, %p547
      %p550 = scmp.ne.s32.totalorder %s533, %s549
      %p551 = scmp.eq.s32.totalorder %s43, 0
      %p552 = por %p550, %p551
      %s553 = ssub.s32 %s37, %s44
      %p554 = scmp.eq.s32.totalorder %s553, 0
      %s556 = sadd.s32 %s555, 1
      %s557 = scalar_select %p554, %s555, %s556
      %p560 = pneg %p554
      %p561 = scmp.eq.s32.totalorder %s37, 1
      %p562 = por %p560, %p561
      %p563 = scmp.ne.s32.totalorder %s555, %s558
      %p564 = scmp.eq.s32.totalorder %s37, 0
      %p565 = por %p563, %p564
      %p566 = scmp.ne.s32.totalorder %s555, %s558
      %p567 = scmp.eq.s32.totalorder %s42, 1
      %p568 = por %p566, %p567
      %p569 = scmp.ne.s32.totalorder %s558, %s559
      %p570 = scmp.eq.s32.totalorder %s42, 0
      %p571 = por %p569, %p570
      %p572 = scmp.ne.s32.totalorder %s558, %s559
      %p573 = scmp.eq.s32.totalorder %s43, 1
      %p574 = por %p572, %p573
      %p576 = scmp.ne.s32.totalorder %s559, %s575
      %p577 = scmp.eq.s32.totalorder %s43, 0
      %p578 = por %p576, %p577
      %s579 = ssub.s32 %s37, %s44
      %p580 = scmp.eq.s32.totalorder %s579, 0
      %s582 = sadd.s32 %s581, 1
      %s583 = scalar_select %p580, %s581, %s582
      %p586 = pneg %p580
      %p587 = scmp.eq.s32.totalorder %s37, 1
      %p588 = por %p586, %p587
      %p589 = scmp.ne.s32.totalorder %s581, %s584
      %p590 = scmp.eq.s32.totalorder %s37, 0
      %p591 = por %p589, %p590
      %p592 = scmp.ne.s32.totalorder %s581, %s584
      %p593 = scmp.eq.s32.totalorder %s42, 1
      %p594 = por %p592, %p593
      %p595 = scmp.ne.s32.totalorder %s584, %s585
      %p596 = scmp.eq.s32.totalorder %s42, 0
      %p597 = por %p595, %p596
      %p598 = scmp.ne.s32.totalorder %s584, %s585
      %p599 = scmp.eq.s32.totalorder %s43, 1
      %p600 = por %p598, %p599
      %p602 = scmp.ne.s32.totalorder %s585, %s601
      %p603 = scmp.eq.s32.totalorder %s43, 0
      %p604 = por %p602, %p603
      %p605 = scmp.le.s32.totalorder 1, %s37
      %p606 = scmp.lt.s32.totalorder %s37, 3
      %p607 = pnand %p605, %p606
      %p608 = pneg %p607
      // Predicated region
      $region9: #{_lambda_.9} parent=5 // pred_check
        _
      $region10: #{_lambda_.9} parent=5 // pred_check_branch
        %610 = sbr.rel (%p607) target = $region12
      $region11: #{_lambda_.9} parent=5 // pred_region
        %s611 = ssub.s32 %s37, 1
        // Predicated region
        $region13: #{_lambda_.9} parent=11 // pred_check
          %p612 = pneg %p162
        $region14: #{_lambda_.9} parent=11 // pred_check_branch
          %614 = sbr.rel (%p612) target = $region16
        $region15: #{_lambda_.9} parent=11 // pred_region
          _
        $region16: #{_lambda_.9} parent=11 // pred_fallthru
          _
        // Predicated region
        $region17: #{_lambda_.9} parent=11 // pred_check
          %p615 = pneg %p183
        $region18: #{_lambda_.9} parent=11 // pred_check_branch
          %617 = sbr.rel (%p615) target = $region20
        $region19: #{_lambda_.9} parent=11 // pred_region
          _
        $region20: #{_lambda_.9} parent=11 // pred_fallthru
          _
        // Predicated region
        $region21: #{_lambda_.9} parent=11 // pred_check
          %p618 = pneg %p204
        $region22: #{_lambda_.9} parent=11 // pred_check_branch
          %620 = sbr.rel (%p618) target = $region24
        $region23: #{_lambda_.9} parent=11 // pred_region
          _
        $region24: #{_lambda_.9} parent=11 // pred_fallthru
          _
        // Predicated region
        $region25: #{_lambda_.9} parent=11 // pred_check
          %p621 = pneg %p225
        $region26: #{_lambda_.9} parent=11 // pred_check_branch
          %623 = sbr.rel (%p621) target = $region28
        $region27: #{_lambda_.9} parent=11 // pred_region
          _
        $region28: #{_lambda_.9} parent=11 // pred_fallthru
          _
        // Predicated region
        $region29: #{_lambda_.9} parent=11 // pred_check
          %p624 = pneg %p246
        $region30: #{_lambda_.9} parent=11 // pred_check_branch
          %626 = sbr.rel (%p624) target = $region32
        $region31: #{_lambda_.9} parent=11 // pred_region
          _
        $region32: #{_lambda_.9} parent=11 // pred_fallthru
          _
        // Predicated region
        $region33: #{_lambda_.9} parent=11 // pred_check
          %p627 = pneg %p267
        $region34: #{_lambda_.9} parent=11 // pred_check_branch
          %629 = sbr.rel (%p627) target = $region36
        $region35: #{_lambda_.9} parent=11 // pred_region
          _
        $region36: #{_lambda_.9} parent=11 // pred_fallthru
          _
        // Predicated region
        $region37: #{_lambda_.9} parent=11 // pred_check
          %p630 = pneg %p288
        $region38: #{_lambda_.9} parent=11 // pred_check_branch
          %632 = sbr.rel (%p630) target = $region40
        $region39: #{_lambda_.9} parent=11 // pred_region
          _
        $region40: #{_lambda_.9} parent=11 // pred_fallthru
          _
        // Predicated region
        $region41: #{_lambda_.9} parent=11 // pred_check
          %p633 = pneg %p309
        $region42: #{_lambda_.9} parent=11 // pred_check_branch
          %635 = sbr.rel (%p633) target = $region44
        $region43: #{_lambda_.9} parent=11 // pred_region
          _
        $region44: #{_lambda_.9} parent=11 // pred_fallthru
          _
        // Predicated region
        $region45: #{_lambda_.9} parent=11 // pred_check
          %p636 = pneg %p330
        $region46: #{_lambda_.9} parent=11 // pred_check_branch
          %638 = sbr.rel (%p636) target = $region48
        $region47: #{_lambda_.9} parent=11 // pred_region
          _
        $region48: #{_lambda_.9} parent=11 // pred_fallthru
          _
        // Predicated region
        $region49: #{_lambda_.9} parent=11 // pred_check
          %p639 = pneg %p351
        $region50: #{_lambda_.9} parent=11 // pred_check_branch
          %641 = sbr.rel (%p639) target = $region52
        $region51: #{_lambda_.9} parent=11 // pred_region
          _
        $region52: #{_lambda_.9} parent=11 // pred_fallthru
          _
        // Predicated region
        $region53: #{_lambda_.9} parent=11 // pred_check
          %p642 = pneg %p372
        $region54: #{_lambda_.9} parent=11 // pred_check_branch
          %644 = sbr.rel (%p642) target = $region56
        $region55: #{_lambda_.9} parent=11 // pred_region
          _
        $region56: #{_lambda_.9} parent=11 // pred_fallthru
          _
        // Predicated region
        $region57: #{_lambda_.9} parent=11 // pred_check
          %p645 = pneg %p393
        $region58: #{_lambda_.9} parent=11 // pred_check_branch
          %647 = sbr.rel (%p645) target = $region60
        $region59: #{_lambda_.9} parent=11 // pred_region
          _
        $region60: #{_lambda_.9} parent=11 // pred_fallthru
          _
        // Predicated region
        $region61: #{_lambda_.9} parent=11 // pred_check
          %p648 = pneg %p414
        $region62: #{_lambda_.9} parent=11 // pred_check_branch
          %650 = sbr.rel (%p648) target = $region64
        $region63: #{_lambda_.9} parent=11 // pred_region
          _
        $region64: #{_lambda_.9} parent=11 // pred_fallthru
          _
        // Predicated region
        $region65: #{_lambda_.9} parent=11 // pred_check
          %p651 = pneg %p435
        $region66: #{_lambda_.9} parent=11 // pred_check_branch
          %653 = sbr.rel (%p651) target = $region68
        $region67: #{_lambda_.9} parent=11 // pred_region
          _
        $region68: #{_lambda_.9} parent=11 // pred_fallthru
          _
        // Predicated region
        $region69: #{_lambda_.9} parent=11 // pred_check
          %p654 = pneg %p456
        $region70: #{_lambda_.9} parent=11 // pred_check_branch
          %656 = sbr.rel (%p654) target = $region72
        $region71: #{_lambda_.9} parent=11 // pred_region
          _
        $region72: #{_lambda_.9} parent=11 // pred_fallthru
          _
        // Predicated region
        $region73: #{_lambda_.9} parent=11 // pred_check
          %p657 = pneg %p477
        $region74: #{_lambda_.9} parent=11 // pred_check_branch
          %659 = sbr.rel (%p657) target = $region76
        $region75: #{_lambda_.9} parent=11 // pred_region
          _
        $region76: #{_lambda_.9} parent=11 // pred_fallthru
          _
        // Predicated region
        $region77: #{_lambda_.9} parent=11 // pred_check
          %p660 = pneg %p498
        $region78: #{_lambda_.9} parent=11 // pred_check_branch
          %662 = sbr.rel (%p660) target = $region80
        $region79: #{_lambda_.9} parent=11 // pred_region
          _
        $region80: #{_lambda_.9} parent=11 // pred_fallthru
          _
        // Predicated region
        $region81: #{_lambda_.9} parent=11 // pred_check
          %p663 = pneg %p519
        $region82: #{_lambda_.9} parent=11 // pred_check_branch
          %665 = sbr.rel (%p663) target = $region84
        $region83: #{_lambda_.9} parent=11 // pred_region
          _
        $region84: #{_lambda_.9} parent=11 // pred_fallthru
          _
      $region12: #{_lambda_.9} parent=5 // pred_fallthru
        _
      %p666 = scmp.lt.s32.totalorder %s37, 2
      // Predicated region
      $region85: #{_lambda_.9} parent=5 // pred_check
        %p667 = pneg %p666
      $region86: #{_lambda_.9} parent=5 // pred_check_branch
        %669 = sbr.rel (%p667) target = $region88
      $region87: #{_lambda_.9} parent=5 // pred_region
        // Predicated region
        $region89: #{_lambda_.9} parent=87 // pred_check
          %p670 = pneg %p57
        $region90: #{_lambda_.9} parent=87 // pred_check_branch
          %672 = sbr.rel (%p670) target = $region92
        $region91: #{_lambda_.9} parent=87 // pred_region
          %p673 = scmp.lt.s32.totalorder %s37, 1
          %s674 = scalar_select %p673, %s37, 1
          %s675 = smul.addr %s674, 8
          %s676 = scalar_lea.vmem %s0, %s675
        $region92: #{_lambda_.9} parent=87 // pred_fallthru
          _
        // Predicated region
        $region93: #{_lambda_.9} parent=87 // pred_check
          %p677 = pneg %p83
        $region94: #{_lambda_.9} parent=87 // pred_check_branch
          %679 = sbr.rel (%p677) target = $region96
        $region95: #{_lambda_.9} parent=87 // pred_region
          %p680 = scmp.lt.s32.totalorder %s37, 1
          %s681 = scalar_select %p680, %s37, 1
          %s682 = smul.addr %s681, 4
          %s683 = scalar_lea.vmem %s1, %s682
        $region96: #{_lambda_.9} parent=87 // pred_fallthru
          _
        // Predicated region
        $region97: #{_lambda_.9} parent=87 // pred_check
          %p684 = pneg %p109
        $region98: #{_lambda_.9} parent=87 // pred_check_branch
          %686 = sbr.rel (%p684) target = $region100
        $region99: #{_lambda_.9} parent=87 // pred_region
          %p687 = scmp.lt.s32.totalorder %s37, 1
          %s688 = scalar_select %p687, %s37, 1
          %s689 = scalar_lea.vmem %s2, %s688
        $region100: #{_lambda_.9} parent=87 // pred_fallthru
          _
        // Predicated region
        $region101: #{_lambda_.9} parent=87 // pred_check
          %p690 = pneg %p135
        $region102: #{_lambda_.9} parent=87 // pred_check_branch
          %692 = sbr.rel (%p690) target = $region104
        $region103: #{_lambda_.9} parent=87 // pred_region
          %p693 = scmp.lt.s32.totalorder %s37, 1
          %s694 = scalar_select %p693, %s37, 1
          %s695 = scalar_lea.vmem %s3, %s694
        $region104: #{_lambda_.9} parent=87 // pred_fallthru
          _
      $region88: #{_lambda_.9} parent=5 // pred_fallthru
        _
      %p696 = scmp.le.s32.totalorder 1, %s37
      %p697 = scmp.lt.s32.totalorder %s37, 3
      %p698 = pnand %p696, %p697
      %p699 = pneg %p698
      // Predicated region
      $region105: #{_lambda_.9} parent=5 // pred_check
        _
      $region106: #{_lambda_.9} parent=5 // pred_check_branch
        %701 = sbr.rel (%p698) target = $region108
      $region107: #{_lambda_.9} parent=5 // pred_region
        %s702 = ssub.s32 %s37, 1
        %p703 = scmp.lt.s32.totalorder %s42, 1
        %s704 = scalar_select %p703, %s42, 1
        %s705 = smul.addr %s704, 8
        %s706 = scalar_lea.vmem %s0, %s705
        %p707 = pneg %p63
        %p708 = pneg %p60
        %p709 = scmp.lt.s32.totalorder %s42, 1
        %s710 = scalar_select %p709, %s42, 1
        %s711 = smul.addr %s710, 4
        %s712 = scalar_lea.vmem %s1, %s711
        %p713 = pneg %p89
        %p714 = pneg %p86
        %p715 = scmp.lt.s32.totalorder %s42, 1
        %s716 = scalar_select %p715, %s42, 1
        %s717 = scalar_lea.vmem %s2, %s716
        %p718 = pneg %p115
        %p719 = pneg %p112
        %p720 = scmp.lt.s32.totalorder %s42, 1
        %s721 = scalar_select %p720, %s42, 1
        %s722 = scalar_lea.vmem %s3, %s721
        %p723 = pneg %p141
        %p724 = pneg %p138
        %p725 = pneg %p162
        %p726 = pneg %p159
        %p727 = pneg %p183
        %p728 = pneg %p180
        %p729 = pneg %p204
        %p730 = pneg %p201
        %p731 = pneg %p225
        %p732 = pneg %p222
        %p733 = pneg %p246
        %p734 = pneg %p243
        %p735 = pneg %p267
        %p736 = pneg %p264
        %p737 = pneg %p288
        %p738 = pneg %p285
        %p739 = pneg %p309
        %p740 = pneg %p306
        %p741 = pneg %p330
        %p742 = pneg %p327
        %p743 = pneg %p351
        %p744 = pneg %p348
        %p745 = pneg %p372
        %p746 = pneg %p369
        %p747 = pneg %p393
        %p748 = pneg %p390
        %p749 = pneg %p414
        %p750 = pneg %p411
        %p751 = pneg %p435
        %p752 = pneg %p432
        %p753 = pneg %p456
        %p754 = pneg %p453
        %p755 = pneg %p477
        %p756 = pneg %p474
        %p757 = pneg %p498
        %p758 = pneg %p495
        %p759 = pneg %p519
        %p760 = pneg %p516
        %p761 = pneg %p545
        %p762 = pneg %p542
        %s763 = sand.u32 %s532, 1
        %s764 = scalar_lea.sflag [#allocation3], %s763
        %s765 = sand.u32 %s532, 1
        %s766 = smul.addr %s765, 8
        %s767 = scalar_lea.vmem [#allocation2], %s766
        %p768 = pneg %p571
        %p769 = pneg %p568
        %s770 = sand.u32 %s42, 1
        %s771 = scalar_lea.sflag [#allocation5], %s770
        %s772 = sand.u32 %s558, 1
        %s773 = smul.addr %s772, 32
        %s774 = scalar_lea.vmem [#allocation4], %s773
        %p775 = pneg %p597
        %p776 = pneg %p594
        %s777 = sand.u32 %s42, 1
        %s778 = scalar_lea.sflag [#allocation5], %s777
        %s779 = sand.u32 %s584, 1
        %s780 = smul.addr %s779, 32
        %s781 = scalar_lea.vmem [#allocation6], %s780
        %p782 = scmp.lt.s32.totalorder %s42, 1
        %s783 = scalar_select %p782, %s42, 1
        %s784 = smul.addr %s783, 8
        %s785 = scalar_lea.vmem %s0, %s784
        %p786 = scmp.lt.s32.totalorder %s42, 1
        %s787 = scalar_select %p786, %s42, 1
        %s788 = smul.addr %s787, 4
        %s789 = scalar_lea.vmem %s1, %s788
        %p790 = scmp.lt.s32.totalorder %s42, 1
        %s791 = scalar_select %p790, %s42, 1
        %s792 = scalar_lea.vmem %s2, %s791
        %p793 = scmp.lt.s32.totalorder %s42, 1
        %s794 = scalar_select %p793, %s42, 1
        %s795 = scalar_lea.vmem %s3, %s794
        %v797 = vld [vmem:[%s785] sm:$0xff]
        %v798 = vld [vmem:[%s789] sm:$0xf]
        %v799 = vlaneseq
        %v800 = vshrl.u32 %v799, 7
        %v801 = vlaneseq
        %v802 = vand.u32 %v801, 127
        %v803 = vld [vmem:[%s792] sm:$0x1]
        %vm804 = vcmp.ne.s32.totalorder %v803, 0
        %vm805 = vcmp.gt.s32.totalorder %v802, %v800
        %v806 = vsel %vm804, 1, 0
        %v807 = vperm.slane %v806, 0
        %vm808 = vcmp.eq.s32.totalorder %v807, 1
        %vm809 = vmor %vm808, %vm805
        %v810 = vld [vmem:[%s795] sm:$0x1]
        %vm811 = vcmp.ne.s32.totalorder %v810, 0
        %v812 = vpack.c.bf16 %v797, %v797
        %v813 = vld [vmem:[%s4] sm:$0xf]
        %v814 = vld [vmem:[%s4 + $0x4] sm:$0xf]
        %v815 = vld [vmem:[%s4 + $0x8] sm:$0xf]
        %v816 = vld [vmem:[%s4 + $0xc] sm:$0xf]
        %v817 = vld [vmem:[%s4 + $0x10] sm:$0xf]
        %v818 = vld [vmem:[%s4 + $0x14] sm:$0xf]
        %v819 = vld [vmem:[%s4 + $0x18] sm:$0xf]
        %v820 = vld [vmem:[%s4 + $0x1c] sm:$0xf]
        %v821 = vld [vmem:[%s4 + $0x20] sm:$0xf]
        %v822 = vld [vmem:[%s4 + $0x24] sm:$0xf]
        %v823 = vld [vmem:[%s4 + $0x28] sm:$0xf]
        %v824 = vld [vmem:[%s4 + $0x2c] sm:$0xf]
        %v825 = vld [vmem:[%s4 + $0x30] sm:$0xf]
        %v826 = vld [vmem:[%s4 + $0x34] sm:$0xf]
        %v827 = vld [vmem:[%s4 + $0x38] sm:$0xf]
        %v828 = vld [vmem:[%s4 + $0x3c] sm:$0xf]
        %v829 = vld [vmem:[%s4 + $0x40] sm:$0xf]
        %v830 = vld [vmem:[%s4 + $0x44] sm:$0xf]
        %v831 = vld [vmem:[%s4 + $0x48] sm:$0xf]
        %v832 = vld [vmem:[%s4 + $0x4c] sm:$0xf]
        %v833 = vld [vmem:[%s4 + $0x50] sm:$0xf]
        %v834 = vld [vmem:[%s4 + $0x54] sm:$0xf]
        %v835 = vld [vmem:[%s4 + $0x58] sm:$0xf]
        %v836 = vld [vmem:[%s4 + $0x5c] sm:$0xf]
        %v837 = vld [vmem:[%s4 + $0x60] sm:$0xf]
        %v838 = vld [vmem:[%s4 + $0x64] sm:$0xf]
        %v839 = vld [vmem:[%s4 + $0x68] sm:$0xf]
        %v840 = vld [vmem:[%s4 + $0x6c] sm:$0xf]
        %v841 = vld [vmem:[%s4 + $0x70] sm:$0xf]
        %v842 = vld [vmem:[%s4 + $0x74] sm:$0xf]
        %v843 = vld [vmem:[%s4 + $0x78] sm:$0xf]
        %v844 = vld [vmem:[%s4 + $0x7c] sm:$0xf]
        %v845 = vld [vmem:[%s5] sm:$0xf]
        %v846 = vld [vmem:[%s5 + $0x4] sm:$0xf]
        %v847 = vld [vmem:[%s5 + $0x8] sm:$0xf]
        %v848 = vld [vmem:[%s5 + $0xc] sm:$0xf]
        %v849 = vld [vmem:[%s5 + $0x10] sm:$0xf]
        %v850 = vld [vmem:[%s5 + $0x14] sm:$0xf]
        %v851 = vld [vmem:[%s5 + $0x18] sm:$0xf]
        %v852 = vld [vmem:[%s5 + $0x1c] sm:$0xf]
        %v853 = vld [vmem:[%s5 + $0x20] sm:$0xf]
        %v854 = vld [vmem:[%s5 + $0x24] sm:$0xf]
        %v855 = vld [vmem:[%s5 + $0x28] sm:$0xf]
        %v856 = vld [vmem:[%s5 + $0x2c] sm:$0xf]
        %v857 = vld [vmem:[%s5 + $0x30] sm:$0xf]
        %v858 = vld [vmem:[%s5 + $0x34] sm:$0xf]
        %v859 = vld [vmem:[%s5 + $0x38] sm:$0xf]
        %v860 = vld [vmem:[%s5 + $0x3c] sm:$0xf]
        %v861 = vld [vmem:[%s5 + $0x40] sm:$0xf]
        %v862 = vld [vmem:[%s5 + $0x44] sm:$0xf]
        %v863 = vld [vmem:[%s5 + $0x48] sm:$0xf]
        %v864 = vld [vmem:[%s5 + $0x4c] sm:$0xf]
        %v865 = vld [vmem:[%s5 + $0x50] sm:$0xf]
        %v866 = vld [vmem:[%s5 + $0x54] sm:$0xf]
        %v867 = vld [vmem:[%s5 + $0x58] sm:$0xf]
        %v868 = vld [vmem:[%s5 + $0x5c] sm:$0xf]
        %v869 = vld [vmem:[%s5 + $0x60] sm:$0xf]
        %v870 = vld [vmem:[%s5 + $0x64] sm:$0xf]
        %v871 = vld [vmem:[%s5 + $0x68] sm:$0xf]
        %v872 = vld [vmem:[%s5 + $0x6c] sm:$0xf]
        %v873 = vld [vmem:[%s5 + $0x70] sm:$0xf]
        %v874 = vld [vmem:[%s5 + $0x74] sm:$0xf]
        %v875 = vld [vmem:[%s5 + $0x78] sm:$0xf]
        %v876 = vld [vmem:[%s5 + $0x7c] sm:$0xf]
        %v877 = vld [vmem:[%s6] sm:$0xf]
        %v878 = vld [vmem:[%s6 + $0x4] sm:$0xf]
        %v879 = vld [vmem:[%s6 + $0x8] sm:$0xf]
        %v880 = vld [vmem:[%s6 + $0xc] sm:$0xf]
        %v881 = vld [vmem:[%s6 + $0x10] sm:$0xf]
        %v882 = vld [vmem:[%s6 + $0x14] sm:$0xf]
        %v883 = vld [vmem:[%s6 + $0x18] sm:$0xf]
        %v884 = vld [vmem:[%s6 + $0x1c] sm:$0xf]
        %v885 = vld [vmem:[%s6 + $0x20] sm:$0xf]
        %v886 = vld [vmem:[%s6 + $0x24] sm:$0xf]
        %v887 = vld [vmem:[%s6 + $0x28] sm:$0xf]
        %v888 = vld [vmem:[%s6 + $0x2c] sm:$0xf]
        %v889 = vld [vmem:[%s6 + $0x30] sm:$0xf]
        %v890 = vld [vmem:[%s6 + $0x34] sm:$0xf]
        %v891 = vld [vmem:[%s6 + $0x38] sm:$0xf]
        %v892 = vld [vmem:[%s6 + $0x3c] sm:$0xf]
        %v893 = vld [vmem:[%s6 + $0x40] sm:$0xf]
        %v894 = vld [vmem:[%s6 + $0x44] sm:$0xf]
        %v895 = vld [vmem:[%s6 + $0x48] sm:$0xf]
        %v896 = vld [vmem:[%s6 + $0x4c] sm:$0xf]
        %v897 = vld [vmem:[%s6 + $0x50] sm:$0xf]
        %v898 = vld [vmem:[%s6 + $0x54] sm:$0xf]
        %v899 = vld [vmem:[%s6 + $0x58] sm:$0xf]
        %v900 = vld [vmem:[%s6 + $0x5c] sm:$0xf]
        %v901 = vld [vmem:[%s6 + $0x60] sm:$0xf]
        %v902 = vld [vmem:[%s6 + $0x64] sm:$0xf]
        %v903 = vld [vmem:[%s6 + $0x68] sm:$0xf]
        %v904 = vld [vmem:[%s6 + $0x6c] sm:$0xf]
        %v905 = vld [vmem:[%s6 + $0x70] sm:$0xf]
        %v906 = vld [vmem:[%s6 + $0x74] sm:$0xf]
        %v907 = vld [vmem:[%s6 + $0x78] sm:$0xf]
        %v908 = vld [vmem:[%s6 + $0x7c] sm:$0xf]
        %v909 = vld [vmem:[%s7] sm:$0xf]
        %v910 = vld [vmem:[%s7 + $0x4] sm:$0xf]
        %v911 = vld [vmem:[%s7 + $0x8] sm:$0xf]
        %v912 = vld [vmem:[%s7 + $0xc] sm:$0xf]
        %v913 = vld [vmem:[%s7 + $0x10] sm:$0xf]
        %v914 = vld [vmem:[%s7 + $0x14] sm:$0xf]
        %v915 = vld [vmem:[%s7 + $0x18] sm:$0xf]
        %v916 = vld [vmem:[%s7 + $0x1c] sm:$0xf]
        %v917 = vld [vmem:[%s8] sm:$0x1]
        %v918 = vld [vmem:[%s9] sm:$0x1]
        %v927 = vunpack.c.l.b16 %v813
        %v928 = vunpack.c.l.b16 %v814
        %v929 = vunpack.c.l.b16 %v815
        %v930 = vunpack.c.l.b16 %v816
        %v931 = vunpack.c.l.b16 %v817
        %v932 = vunpack.c.l.b16 %v818
        %v933 = vunpack.c.l.b16 %v819
        %v934 = vunpack.c.l.b16 %v820
        %v935 = vpack.c.b16 %v928, %v927
        %v936 = vpack.c.b16 %v930, %v929
        %v937 = vpack.c.b16 %v932, %v931
        %v938 = vpack.c.b16 %v934, %v933
        %vm943 = vcmask 523264
        %v945 = vsel %vm943, %v812, 0
        %947 = vmatpush.bf16.msra.mxu0 0
        %948 = vmatpush.bf16.msra.mxu0 0
        %949 = vmatpush.bf16.msra.mxu0 0
        %950 = vmatpush.bf16.msra.mxu0 0
        %951 = vmatpush.bf16.msra.mxu0 %v938
        %952 = vmatpush.bf16.msra.mxu0 %v937
        %953 = vmatpush.bf16.msra.mxu0 %v936
        %954 = vmatpush.bf16.msra.mxu0 %v935
        %955 = vmatmul.bf16.gmra.mxu0 %v945
        %v956 = vpop.f32.mrf.mxu0
        %v957 = vadd.f32 0.0, %v956
        %v958 = vpop.f32.mrf.mxu0
        %959 = vdwg.mxu0
        %v968 = vunpack.c.l.b16 %v821
        %v969 = vunpack.c.l.b16 %v822
        %v970 = vunpack.c.l.b16 %v823
        %v971 = vunpack.c.l.b16 %v824
        %v972 = vunpack.c.l.b16 %v825
        %v973 = vunpack.c.l.b16 %v826
        %v974 = vunpack.c.l.b16 %v827
        %v975 = vunpack.c.l.b16 %v828
        %v976 = vpack.c.b16 %v969, %v968
        %v977 = vpack.c.b16 %v971, %v970
        %v978 = vpack.c.b16 %v973, %v972
        %v979 = vpack.c.b16 %v975, %v974
        %984 = vmatpush.bf16.msra.mxu0 0
        %985 = vmatpush.bf16.msra.mxu0 0
        %986 = vmatpush.bf16.msra.mxu0 0
        %987 = vmatpush.bf16.msra.mxu0 0
        %988 = vmatpush.bf16.msra.mxu0 %v979
        %989 = vmatpush.bf16.msra.mxu0 %v978
        %990 = vmatpush.bf16.msra.mxu0 %v977
        %991 = vmatpush.bf16.msra.mxu0 %v976
        %992 = vmatmul.bf16.gmra.mxu0 %v945
        %v993 = vpop.f32.mrf.mxu0
        %v994 = vadd.f32 0.0, %v993
        %v995 = vpop.f32.mrf.mxu0
        %996 = vdwg.mxu0
        %v1005 = vunpack.c.l.b16 %v829
        %v1006 = vunpack.c.l.b16 %v830
        %v1007 = vunpack.c.l.b16 %v831
        %v1008 = vunpack.c.l.b16 %v832
        %v1009 = vunpack.c.l.b16 %v833
        %v1010 = vunpack.c.l.b16 %v834
        %v1011 = vunpack.c.l.b16 %v835
        %v1012 = vunpack.c.l.b16 %v836
        %v1013 = vpack.c.b16 %v1006, %v1005
        %v1014 = vpack.c.b16 %v1008, %v1007
        %v1015 = vpack.c.b16 %v1010, %v1009
        %v1016 = vpack.c.b16 %v1012, %v1011
        %1021 = vmatpush.bf16.msra.mxu0 0
        %1022 = vmatpush.bf16.msra.mxu0 0
        %1023 = vmatpush.bf16.msra.mxu0 0
        %1024 = vmatpush.bf16.msra.mxu0 0
        %1025 = vmatpush.bf16.msra.mxu0 %v1016
        %1026 = vmatpush.bf16.msra.mxu0 %v1015
        %1027 = vmatpush.bf16.msra.mxu0 %v1014
        %1028 = vmatpush.bf16.msra.mxu0 %v1013
        %1029 = vmatmul.bf16.gmra.mxu0 %v945
        %v1030 = vpop.f32.mrf.mxu0
        %v1031 = vadd.f32 0.0, %v1030
        %v1032 = vpop.f32.mrf.mxu0
        %1033 = vdwg.mxu0
        %v1042 = vunpack.c.l.b16 %v837
        %v1043 = vunpack.c.l.b16 %v838
        %v1044 = vunpack.c.l.b16 %v839
        %v1045 = vunpack.c.l.b16 %v840
        %v1046 = vunpack.c.l.b16 %v841
        %v1047 = vunpack.c.l.b16 %v842
        %v1048 = vunpack.c.l.b16 %v843
        %v1049 = vunpack.c.l.b16 %v844
        %v1050 = vpack.c.b16 %v1043, %v1042
        %v1051 = vpack.c.b16 %v1045, %v1044
        %v1052 = vpack.c.b16 %v1047, %v1046
        %v1053 = vpack.c.b16 %v1049, %v1048
        %1058 = vmatpush.bf16.msra.mxu0 0
        %1059 = vmatpush.bf16.msra.mxu0 0
        %1060 = vmatpush.bf16.msra.mxu0 0
        %1061 = vmatpush.bf16.msra.mxu0 0
        %1062 = vmatpush.bf16.msra.mxu0 %v1053
        %1063 = vmatpush.bf16.msra.mxu0 %v1052
        %1064 = vmatpush.bf16.msra.mxu0 %v1051
        %1065 = vmatpush.bf16.msra.mxu0 %v1050
        %1066 = vmatmul.bf16.gmra.mxu0 %v945
        %v1067 = vpop.f32.mrf.mxu0
        %v1068 = vadd.f32 0.0, %v1067
        %v1069 = vpop.f32.mrf.mxu0
        %1070 = vdwg.mxu0
        %v1071 = vpack.c.bf16 %v957, %v957
        %v1072 = vpack.c.bf16 %v994, %v994
        %v1073 = vpack.c.bf16 %v1031, %v1031
        %v1074 = vpack.c.bf16 %v1068, %v1068
        %v1083 = vunpack.c.l.b16 %v845
        %v1084 = vunpack.c.l.b16 %v846
        %v1085 = vunpack.c.l.b16 %v847
        %v1086 = vunpack.c.l.b16 %v848
        %v1087 = vunpack.c.l.b16 %v849
        %v1088 = vunpack.c.l.b16 %v850
        %v1089 = vunpack.c.l.b16 %v851
        %v1090 = vunpack.c.l.b16 %v852
        %v1091 = vpack.c.b16 %v1084, %v1083
        %v1092 = vpack.c.b16 %v1086, %v1085
        %v1093 = vpack.c.b16 %v1088, %v1087
        %v1094 = vpack.c.b16 %v1090, %v1089
        %1099 = vmatpush.bf16.msra.mxu0 0
        %1100 = vmatpush.bf16.msra.mxu0 0
        %1101 = vmatpush.bf16.msra.mxu0 0
        %1102 = vmatpush.bf16.msra.mxu0 0
        %1103 = vmatpush.bf16.msra.mxu0 %v1094
        %1104 = vmatpush.bf16.msra.mxu0 %v1093
        %1105 = vmatpush.bf16.msra.mxu0 %v1092
        %1106 = vmatpush.bf16.msra.mxu0 %v1091
        %1107 = vmatmul.bf16.gmra.mxu0 %v945
        %v1108 = vpop.f32.mrf.mxu0
        %v1109 = vadd.f32 0.0, %v1108
        %v1110 = vpop.f32.mrf.mxu0
        %1111 = vdwg.mxu0
        %v1120 = vunpack.c.l.b16 %v853
        %v1121 = vunpack.c.l.b16 %v854
        %v1122 = vunpack.c.l.b16 %v855
        %v1123 = vunpack.c.l.b16 %v856
        %v1124 = vunpack.c.l.b16 %v857
        %v1125 = vunpack.c.l.b16 %v858
        %v1126 = vunpack.c.l.b16 %v859
        %v1127 = vunpack.c.l.b16 %v860
        %v1128 = vpack.c.b16 %v1121, %v1120
        %v1129 = vpack.c.b16 %v1123, %v1122
        %v1130 = vpack.c.b16 %v1125, %v1124
        %v1131 = vpack.c.b16 %v1127, %v1126
        %1136 = vmatpush.bf16.msra.mxu0 0
        %1137 = vmatpush.bf16.msra.mxu0 0
        %1138 = vmatpush.bf16.msra.mxu0 0
        %1139 = vmatpush.bf16.msra.mxu0 0
        %1140 = vmatpush.bf16.msra.mxu0 %v1131
        %1141 = vmatpush.bf16.msra.mxu0 %v1130
        %1142 = vmatpush.bf16.msra.mxu0 %v1129
        %1143 = vmatpush.bf16.msra.mxu0 %v1128
        %1144 = vmatmul.bf16.gmra.mxu0 %v945
        %v1145 = vpop.f32.mrf.mxu0
        %v1146 = vadd.f32 0.0, %v1145
        %v1147 = vpop.f32.mrf.mxu0
        %1148 = vdwg.mxu0
        %v1157 = vunpack.c.l.b16 %v861
        %v1158 = vunpack.c.l.b16 %v862
        %v1159 = vunpack.c.l.b16 %v863
        %v1160 = vunpack.c.l.b16 %v864
        %v1161 = vunpack.c.l.b16 %v865
        %v1162 = vunpack.c.l.b16 %v866
        %v1163 = vunpack.c.l.b16 %v867
        %v1164 = vunpack.c.l.b16 %v868
        %v1165 = vpack.c.b16 %v1158, %v1157
        %v1166 = vpack.c.b16 %v1160, %v1159
        %v1167 = vpack.c.b16 %v1162, %v1161
        %v1168 = vpack.c.b16 %v1164, %v1163
        %1173 = vmatpush.bf16.msra.mxu0 0
        %1174 = vmatpush.bf16.msra.mxu0 0
        %1175 = vmatpush.bf16.msra.mxu0 0
        %1176 = vmatpush.bf16.msra.mxu0 0
        %1177 = vmatpush.bf16.msra.mxu0 %v1168
        %1178 = vmatpush.bf16.msra.mxu0 %v1167
        %1179 = vmatpush.bf16.msra.mxu0 %v1166
        %1180 = vmatpush.bf16.msra.mxu0 %v1165
        %1181 = vmatmul.bf16.gmra.mxu0 %v945
        %v1182 = vpop.f32.mrf.mxu0
        %v1183 = vadd.f32 0.0, %v1182
        %v1184 = vpop.f32.mrf.mxu0
        %1185 = vdwg.mxu0
        %v1194 = vunpack.c.l.b16 %v869
        %v1195 = vunpack.c.l.b16 %v870
        %v1196 = vunpack.c.l.b16 %v871
        %v1197 = vunpack.c.l.b16 %v872
        %v1198 = vunpack.c.l.b16 %v873
        %v1199 = vunpack.c.l.b16 %v874
        %v1200 = vunpack.c.l.b16 %v875
        %v1201 = vunpack.c.l.b16 %v876
        %v1202 = vpack.c.b16 %v1195, %v1194
        %v1203 = vpack.c.b16 %v1197, %v1196
        %v1204 = vpack.c.b16 %v1199, %v1198
        %v1205 = vpack.c.b16 %v1201, %v1200
        %1210 = vmatpush.bf16.msra.mxu0 0
        %1211 = vmatpush.bf16.msra.mxu0 0
        %1212 = vmatpush.bf16.msra.mxu0 0
        %1213 = vmatpush.bf16.msra.mxu0 0
        %1214 = vmatpush.bf16.msra.mxu0 %v1205
        %1215 = vmatpush.bf16.msra.mxu0 %v1204
        %1216 = vmatpush.bf16.msra.mxu0 %v1203
        %1217 = vmatpush.bf16.msra.mxu0 %v1202
        %1218 = vmatmul.bf16.gmra.mxu0 %v945
        %v1219 = vpop.f32.mrf.mxu0
        %v1220 = vadd.f32 0.0, %v1219
        %v1221 = vpop.f32.mrf.mxu0
        %1222 = vdwg.mxu0
        %v1223 = vpack.c.bf16 %v1109, %v1109
        %v1224 = vpack.c.bf16 %v1146, %v1146
        %v1225 = vpack.c.bf16 %v1183, %v1183
        %v1226 = vpack.c.bf16 %v1220, %v1220
        %v1235 = vunpack.c.l.b16 %v877
        %v1236 = vunpack.c.l.b16 %v878
        %v1237 = vunpack.c.l.b16 %v879
        %v1238 = vunpack.c.l.b16 %v880
        %v1239 = vunpack.c.l.b16 %v881
        %v1240 = vunpack.c.l.b16 %v882
        %v1241 = vunpack.c.l.b16 %v883
        %v1242 = vunpack.c.l.b16 %v884
        %v1243 = vpack.c.b16 %v1236, %v1235
        %v1244 = vpack.c.b16 %v1238, %v1237
        %v1245 = vpack.c.b16 %v1240, %v1239
        %v1246 = vpack.c.b16 %v1242, %v1241
        %1251 = vmatpush.bf16.msra.mxu0 0
        %1252 = vmatpush.bf16.msra.mxu0 0
        %1253 = vmatpush.bf16.msra.mxu0 0
        %1254 = vmatpush.bf16.msra.mxu0 0
        %1255 = vmatpush.bf16.msra.mxu0 %v1246
        %1256 = vmatpush.bf16.msra.mxu0 %v1245
        %1257 = vmatpush.bf16.msra.mxu0 %v1244
        %1258 = vmatpush.bf16.msra.mxu0 %v1243
        %1259 = vmatmul.bf16.gmra.mxu0 %v945
        %v1260 = vpop.f32.mrf.mxu0
        %v1261 = vadd.f32 0.0, %v1260
        %v1262 = vpop.f32.mrf.mxu0
        %1263 = vdwg.mxu0
        %v1272 = vunpack.c.l.b16 %v885
        %v1273 = vunpack.c.l.b16 %v886
        %v1274 = vunpack.c.l.b16 %v887
        %v1275 = vunpack.c.l.b16 %v888
        %v1276 = vunpack.c.l.b16 %v889
        %v1277 = vunpack.c.l.b16 %v890
        %v1278 = vunpack.c.l.b16 %v891
        %v1279 = vunpack.c.l.b16 %v892
        %v1280 = vpack.c.b16 %v1273, %v1272
        %v1281 = vpack.c.b16 %v1275, %v1274
        %v1282 = vpack.c.b16 %v1277, %v1276
        %v1283 = vpack.c.b16 %v1279, %v1278
        %1288 = vmatpush.bf16.msra.mxu0 0
        %1289 = vmatpush.bf16.msra.mxu0 0
        %1290 = vmatpush.bf16.msra.mxu0 0
        %1291 = vmatpush.bf16.msra.mxu0 0
        %1292 = vmatpush.bf16.msra.mxu0 %v1283
        %1293 = vmatpush.bf16.msra.mxu0 %v1282
        %1294 = vmatpush.bf16.msra.mxu0 %v1281
        %1295 = vmatpush.bf16.msra.mxu0 %v1280
        %1296 = vmatmul.bf16.gmra.mxu0 %v945
        %v1297 = vpop.f32.mrf.mxu0
        %v1298 = vadd.f32 0.0, %v1297
        %v1299 = vpop.f32.mrf.mxu0
        %1300 = vdwg.mxu0
        %v1309 = vunpack.c.l.b16 %v893
        %v1310 = vunpack.c.l.b16 %v894
        %v1311 = vunpack.c.l.b16 %v895
        %v1312 = vunpack.c.l.b16 %v896
        %v1313 = vunpack.c.l.b16 %v897
        %v1314 = vunpack.c.l.b16 %v898
        %v1315 = vunpack.c.l.b16 %v899
        %v1316 = vunpack.c.l.b16 %v900
        %v1317 = vpack.c.b16 %v1310, %v1309
        %v1318 = vpack.c.b16 %v1312, %v1311
        %v1319 = vpack.c.b16 %v1314, %v1313
        %v1320 = vpack.c.b16 %v1316, %v1315
        %1325 = vmatpush.bf16.msra.mxu0 0
        %1326 = vmatpush.bf16.msra.mxu0 0
        %1327 = vmatpush.bf16.msra.mxu0 0
        %1328 = vmatpush.bf16.msra.mxu0 0
        %1329 = vmatpush.bf16.msra.mxu0 %v1320
        %1330 = vmatpush.bf16.msra.mxu0 %v1319
        %1331 = vmatpush.bf16.msra.mxu0 %v1318
        %1332 = vmatpush.bf16.msra.mxu0 %v1317
        %1333 = vmatmul.bf16.gmra.mxu0 %v945
        %v1334 = vpop.f32.mrf.mxu0
        %v1335 = vadd.f32 0.0, %v1334
        %v1336 = vpop.f32.mrf.mxu0
        %1337 = vdwg.mxu0
        %v1346 = vunpack.c.l.b16 %v901
        %v1347 = vunpack.c.l.b16 %v902
        %v1348 = vunpack.c.l.b16 %v903
        %v1349 = vunpack.c.l.b16 %v904
        %v1350 = vunpack.c.l.b16 %v905
        %v1351 = vunpack.c.l.b16 %v906
        %v1352 = vunpack.c.l.b16 %v907
        %v1353 = vunpack.c.l.b16 %v908
        %v1354 = vpack.c.b16 %v1347, %v1346
        %v1355 = vpack.c.b16 %v1349, %v1348
        %v1356 = vpack.c.b16 %v1351, %v1350
        %v1357 = vpack.c.b16 %v1353, %v1352
        %1362 = vmatpush.bf16.msra.mxu0 0
        %1363 = vmatpush.bf16.msra.mxu0 0
        %1364 = vmatpush.bf16.msra.mxu0 0
        %1365 = vmatpush.bf16.msra.mxu0 0
        %1366 = vmatpush.bf16.msra.mxu0 %v1357
        %1367 = vmatpush.bf16.msra.mxu0 %v1356
        %1368 = vmatpush.bf16.msra.mxu0 %v1355
        %1369 = vmatpush.bf16.msra.mxu0 %v1354
        %1370 = vmatmul.bf16.gmra.mxu0 %v945
        %v1371 = vpop.f32.mrf.mxu0
        %v1372 = vadd.f32 0.0, %v1371
        %v1373 = vpop.f32.mrf.mxu0
        %1374 = vdwg.mxu0
        %v1375 = vpack.c.bf16 %v1261, %v1261
        %v1376 = vpack.c.bf16 %v1298, %v1298
        %v1377 = vpack.c.bf16 %v1335, %v1335
        %v1378 = vpack.c.bf16 %v1372, %v1372
        %vm1379 = vcmask 130048
        %v1381 = vsel %vm1379, %v1071, 0
        %v1384 = vsel %vm1379, %v1223, 0
        %1386 = vmatpush.bf16.xpose.msra.mxu0 0
        %1387 = vmatpush.bf16.xpose.msra.mxu0 0
        %1388 = vmatpush.bf16.xpose.msra.mxu0 0
        %1389 = vmatpush.bf16.xpose.msra.mxu0 0
        %1390 = vmatpush.bf16.xpose.msra.mxu0 0
        %1391 = vmatpush.bf16.xpose.msra.mxu0 0
        %1392 = vmatpush.bf16.xpose.msra.mxu0 0
        %1393 = vmatpush.bf16.xpose.msra.mxu0 %v1384
        %1394 = vmatmul.bf16.gmra.mxu0 %v1381
        %v1395 = vpop.f32.mrf.mxu0
        %v1396 = vadd.f32 0.0, %v1395
        %v1397 = vpop.f32.mrf.mxu0
        %1398 = vdwg.mxu0
        %v1400 = vsel %vm1379, %v1072, 0
        %v1403 = vsel %vm1379, %v1224, 0
        %1405 = vmatpush.bf16.xpose.msra.mxu0 0
        %1406 = vmatpush.bf16.xpose.msra.mxu0 0
        %1407 = vmatpush.bf16.xpose.msra.mxu0 0
        %1408 = vmatpush.bf16.xpose.msra.mxu0 0
        %1409 = vmatpush.bf16.xpose.msra.mxu0 0
        %1410 = vmatpush.bf16.xpose.msra.mxu0 0
        %1411 = vmatpush.bf16.xpose.msra.mxu0 0
        %1412 = vmatpush.bf16.xpose.msra.mxu0 %v1403
        %1413 = vmatmul.bf16.gmra.mxu0 %v1400
        %v1414 = vpop.f32.mrf.mxu0
        %v1415 = vadd.f32 0.0, %v1414
        %v1416 = vpop.f32.mrf.mxu0
        %1417 = vdwg.mxu0
        %v1419 = vsel %vm1379, %v1073, 0
        %v1422 = vsel %vm1379, %v1225, 0
        %1424 = vmatpush.bf16.xpose.msra.mxu0 0
        %1425 = vmatpush.bf16.xpose.msra.mxu0 0
        %1426 = vmatpush.bf16.xpose.msra.mxu0 0
        %1427 = vmatpush.bf16.xpose.msra.mxu0 0
        %1428 = vmatpush.bf16.xpose.msra.mxu0 0
        %1429 = vmatpush.bf16.xpose.msra.mxu0 0
        %1430 = vmatpush.bf16.xpose.msra.mxu0 0
        %1431 = vmatpush.bf16.xpose.msra.mxu0 %v1422
        %1432 = vmatmul.bf16.gmra.mxu0 %v1419
        %v1433 = vpop.f32.mrf.mxu0
        %v1434 = vadd.f32 0.0, %v1433
        %v1435 = vpop.f32.mrf.mxu0
        %1436 = vdwg.mxu0
        %v1438 = vsel %vm1379, %v1074, 0
        %v1441 = vsel %vm1379, %v1226, 0
        %1443 = vmatpush.bf16.xpose.msra.mxu0 0
        %1444 = vmatpush.bf16.xpose.msra.mxu0 0
        %1445 = vmatpush.bf16.xpose.msra.mxu0 0
        %1446 = vmatpush.bf16.xpose.msra.mxu0 0
        %1447 = vmatpush.bf16.xpose.msra.mxu0 0
        %1448 = vmatpush.bf16.xpose.msra.mxu0 0
        %1449 = vmatpush.bf16.xpose.msra.mxu0 0
        %1450 = vmatpush.bf16.xpose.msra.mxu0 %v1441
        %1451 = vmatmul.bf16.gmra.mxu0 %v1438
        %v1452 = vpop.f32.mrf.mxu0
        %v1453 = vadd.f32 0.0, %v1452
        %v1454 = vpop.f32.mrf.mxu0
        %1455 = vdwg.mxu0
        %v1456 = vsel %vm809, 1, 0
        %vm1457 = vcmp.eq.s32.totalorder %v1456, 1
        %v1458 = vsel %vm1457, -1e+09, %v1396
        %v1459 = vsel %vm1457, -1e+09, %v1415
        %v1460 = vsel %vm1457, -1e+09, %v1434
        %v1461 = vsel %vm1457, -1e+09, %v1453
        %vm1462 = vcmask 64512
        %v1463 = vsel %vm1462, %v1458, -inf
        %1464 = vmax.xlane.f32.xlu0 %v1463
        %v1465 = vpop.xlane.xlu0 %1464
        %v1466 = vsel %vm1462, %v1459, -inf
        %1467 = vmax.xlane.f32.xlu0 %v1466
        %v1468 = vpop.xlane.xlu0 %1467
        %v1469 = vsel %vm1462, %v1460, -inf
        %1470 = vmax.xlane.f32.xlu0 %v1469
        %v1471 = vpop.xlane.xlu0 %1470
        %v1472 = vsel %vm1462, %v1461, -inf
        %1473 = vmax.xlane.f32.xlu0 %v1472
        %v1474 = vpop.xlane.xlu0 %1473
        %v1475 = vsub.f32 %v1458, %v1465
        %v1476 = vsub.f32 %v1459, %v1468
        %v1477 = vsub.f32 %v1460, %v1471
        %v1478 = vsub.f32 %v1461, %v1474
        %v1479 = vmul.f32 %v1475, 1.442695
        %v1480 = vpow.pop %v1479
        %v1481 = vmul.f32 %v1476, 1.442695
        %v1482 = vpow.pop %v1481
        %v1483 = vmul.f32 %v1477, 1.442695
        %v1484 = vpow.pop %v1483
        %v1485 = vmul.f32 %v1478, 1.442695
        %v1486 = vpow.pop %v1485
        %v1487 = vsel %vm1462, %v1480, 0.0
        %1488 = vadd.xlane.f32.xlu0 %v1487
        %v1489 = vpop.xlane.xlu0 %1488
        %v1490 = vsel %vm1462, %v1482, 0.0
        %1491 = vadd.xlane.f32.xlu0 %v1490
        %v1492 = vpop.xlane.xlu0 %1491
        %v1493 = vsel %vm1462, %v1484, 0.0
        %1494 = vadd.xlane.f32.xlu0 %v1493
        %v1495 = vpop.xlane.xlu0 %1494
        %v1496 = vsel %vm1462, %v1486, 0.0
        %1497 = vadd.xlane.f32.xlu0 %v1496
        %v1498 = vpop.xlane.xlu0 %1497
        %v1499 = vrcp.pop %v1489
        %v1500 = vmul.f32 %v1489, %v1499
        %v1501 = vsub.f32 1.0, %v1500
        %v1502 = vmul.f32 %v1499, %v1501
        %v1503 = vadd.f32 %v1499, %v1502
        %vm1504 = vweird.f32 %v1489
        %vm1505 = vweird.f32 %v1499
        %vm1506 = vmor %vm1504, %vm1505
        %v1507 = vsel %vm1506, %v1499, %v1503
        %v1508 = vand.u32 2147483647, %v1489
        %vm1509 = vcmp.eq.f32.partialorder %v1508, 8.507059e+37
        %v1510 = vand.u32 %v1489, 2147483648
        %v1511 = vor.u32 1.1754944e-38, %v1510
        %v1512 = vsel %vm1509, %v1511, %v1507
        %v1513 = vmul.f32 %v1480, %v1512
        %v1514 = vrcp.pop %v1492
        %v1515 = vmul.f32 %v1492, %v1514
        %v1516 = vsub.f32 1.0, %v1515
        %v1517 = vmul.f32 %v1514, %v1516
        %v1518 = vadd.f32 %v1514, %v1517
        %vm1519 = vweird.f32 %v1492
        %vm1520 = vweird.f32 %v1514
        %vm1521 = vmor %vm1519, %vm1520
        %v1522 = vsel %vm1521, %v1514, %v1518
        %v1523 = vand.u32 2147483647, %v1492
        %vm1524 = vcmp.eq.f32.partialorder %v1523, 8.507059e+37
        %v1525 = vand.u32 %v1492, 2147483648
        %v1526 = vor.u32 1.1754944e-38, %v1525
        %v1527 = vsel %vm1524, %v1526, %v1522
        %v1528 = vmul.f32 %v1482, %v1527
        %v1529 = vrcp.pop %v1495
        %v1530 = vmul.f32 %v1495, %v1529
        %v1531 = vsub.f32 1.0, %v1530
        %v1532 = vmul.f32 %v1529, %v1531
        %v1533 = vadd.f32 %v1529, %v1532
        %vm1534 = vweird.f32 %v1495
        %vm1535 = vweird.f32 %v1529
        %vm1536 = vmor %vm1534, %vm1535
        %v1537 = vsel %vm1536, %v1529, %v1533
        %v1538 = vand.u32 2147483647, %v1495
        %vm1539 = vcmp.eq.f32.partialorder %v1538, 8.507059e+37
        %v1540 = vand.u32 %v1495, 2147483648
        %v1541 = vor.u32 1.1754944e-38, %v1540
        %v1542 = vsel %vm1539, %v1541, %v1537
        %v1543 = vmul.f32 %v1484, %v1542
        %v1544 = vrcp.pop %v1498
        %v1545 = vmul.f32 %v1498, %v1544
        %v1546 = vsub.f32 1.0, %v1545
        %v1547 = vmul.f32 %v1544, %v1546
        %v1548 = vadd.f32 %v1544, %v1547
        %vm1549 = vweird.f32 %v1498
        %vm1550 = vweird.f32 %v1544
        %vm1551 = vmor %vm1549, %vm1550
        %v1552 = vsel %vm1551, %v1544, %v1548
        %v1553 = vand.u32 2147483647, %v1498
        %vm1554 = vcmp.eq.f32.partialorder %v1553, 8.507059e+37
        %v1555 = vand.u32 %v1498, 2147483648
        %v1556 = vor.u32 1.1754944e-38, %v1555
        %v1557 = vsel %vm1554, %v1556, %v1552
        %v1558 = vmul.f32 %v1486, %v1557
        %v1559 = vpack.c.bf16 %v1513, %v1513
        %v1560 = vpack.c.bf16 %v1528, %v1528
        %v1561 = vpack.c.bf16 %v1543, %v1543
        %v1562 = vpack.c.bf16 %v1558, %v1558
        %v1564 = vsel %vm1462, %v1559, 0
        %vm1566 = vcmask 1043456
        %v1568 = vsel %vm1566, %v1375, 0
        %1570 = vmatpush.bf16.msra.mxu0 0
        %1571 = vmatpush.bf16.msra.mxu0 0
        %1572 = vmatpush.bf16.msra.mxu0 0
        %1573 = vmatpush.bf16.msra.mxu0 0
        %1574 = vmatpush.bf16.msra.mxu0 0
        %1575 = vmatpush.bf16.msra.mxu0 0
        %1576 = vmatpush.bf16.msra.mxu0 0
        %1577 = vmatpush.bf16.msra.mxu0 %v1568
        %1578 = vmatmul.bf16.gmra.mxu0 %v1564
        %v1579 = vpop.f32.mrf.mxu0
        %v1580 = vadd.f32 0.0, %v1579
        %v1581 = vpop.f32.mrf.mxu0
        %1582 = vdwg.mxu0
        %v1584 = vsel %vm1462, %v1560, 0
        %v1587 = vsel %vm1566, %v1376, 0
        %1589 = vmatpush.bf16.msra.mxu0 0
        %1590 = vmatpush.bf16.msra.mxu0 0
        %1591 = vmatpush.bf16.msra.mxu0 0
        %1592 = vmatpush.bf16.msra.mxu0 0
        %1593 = vmatpush.bf16.msra.mxu0 0
        %1594 = vmatpush.bf16.msra.mxu0 0
        %1595 = vmatpush.bf16.msra.mxu0 0
        %1596 = vmatpush.bf16.msra.mxu0 %v1587
        %1597 = vmatmul.bf16.gmra.mxu0 %v1584
        %v1598 = vpop.f32.mrf.mxu0
        %v1599 = vadd.f32 0.0, %v1598
        %v1600 = vpop.f32.mrf.mxu0
        %1601 = vdwg.mxu0
        %v1603 = vsel %vm1462, %v1561, 0
        %v1606 = vsel %vm1566, %v1377, 0
        %1608 = vmatpush.bf16.msra.mxu0 0
        %1609 = vmatpush.bf16.msra.mxu0 0
        %1610 = vmatpush.bf16.msra.mxu0 0
        %1611 = vmatpush.bf16.msra.mxu0 0
        %1612 = vmatpush.bf16.msra.mxu0 0
        %1613 = vmatpush.bf16.msra.mxu0 0
        %1614 = vmatpush.bf16.msra.mxu0 0
        %1615 = vmatpush.bf16.msra.mxu0 %v1606
        %1616 = vmatmul.bf16.gmra.mxu0 %v1603
        %v1617 = vpop.f32.mrf.mxu0
        %v1618 = vadd.f32 0.0, %v1617
        %v1619 = vpop.f32.mrf.mxu0
        %1620 = vdwg.mxu0
        %v1622 = vsel %vm1462, %v1562, 0
        %v1625 = vsel %vm1566, %v1378, 0
        %1627 = vmatpush.bf16.msra.mxu0 0
        %1628 = vmatpush.bf16.msra.mxu0 0
        %1629 = vmatpush.bf16.msra.mxu0 0
        %1630 = vmatpush.bf16.msra.mxu0 0
        %1631 = vmatpush.bf16.msra.mxu0 0
        %1632 = vmatpush.bf16.msra.mxu0 0
        %1633 = vmatpush.bf16.msra.mxu0 0
        %1634 = vmatpush.bf16.msra.mxu0 %v1625
        %1635 = vmatmul.bf16.gmra.mxu0 %v1622
        %v1636 = vpop.f32.mrf.mxu0
        %v1637 = vadd.f32 0.0, %v1636
        %v1638 = vpop.f32.mrf.mxu0
        %1639 = vdwg.mxu0
        %v1640 = vpack.c.bf16 %v1580, %v1580
        %v1641 = vpack.c.bf16 %v1599, %v1599
        %v1642 = vpack.c.bf16 %v1618, %v1618
        %v1643 = vpack.c.bf16 %v1637, %v1637
        %v1646 = vunpack.c.l.b16 %v909
        %v1647 = vunpack.c.l.b16 %v910
        %v1648 = vpack.c.b16 %v1647, %v1646
        %v1651 = vsel %vm1379, %v1640, 0
        %1653 = vmatpush.bf16.msra.mxu0 0
        %1654 = vmatpush.bf16.msra.mxu0 0
        %1655 = vmatpush.bf16.msra.mxu0 0
        %1656 = vmatpush.bf16.msra.mxu0 0
        %1657 = vmatpush.bf16.msra.mxu0 0
        %1658 = vmatpush.bf16.msra.mxu0 0
        %1659 = vmatpush.bf16.msra.mxu0 0
        %1660 = vmatpush.bf16.msra.mxu0 %v1648
        %1661 = vmatmul.bf16.gmra.mxu0 %v1651
        %v1662 = vpop.f32.mrf.mxu0
        %v1663 = vadd.f32 0.0, %v1662
        %v1664 = vpop.f32.mrf.mxu0
        %1665 = vdwg.mxu0
        %v1668 = vunpack.c.l.b16 %v911
        %v1669 = vunpack.c.l.b16 %v912
        %v1670 = vpack.c.b16 %v1669, %v1668
        %v1673 = vsel %vm1379, %v1641, 0
        %1675 = vmatpush.bf16.msra.mxu0 0
        %1676 = vmatpush.bf16.msra.mxu0 0
        %1677 = vmatpush.bf16.msra.mxu0 0
        %1678 = vmatpush.bf16.msra.mxu0 0
        %1679 = vmatpush.bf16.msra.mxu0 0
        %1680 = vmatpush.bf16.msra.mxu0 0
        %1681 = vmatpush.bf16.msra.mxu0 0
        %1682 = vmatpush.bf16.msra.mxu0 %v1670
        %1683 = vmatmul.bf16.gmra.mxu0 %v1673
        %v1684 = vpop.f32.mrf.mxu0
        %v1685 = vadd.f32 0.0, %v1684
        %v1686 = vpop.f32.mrf.mxu0
        %1687 = vdwg.mxu0
        %v1690 = vunpack.c.l.b16 %v913
        %v1691 = vunpack.c.l.b16 %v914
        %v1692 = vpack.c.b16 %v1691, %v1690
        %v1695 = vsel %vm1379, %v1642, 0
        %1697 = vmatpush.bf16.msra.mxu0 0
        %1698 = vmatpush.bf16.msra.mxu0 0
        %1699 = vmatpush.bf16.msra.mxu0 0
        %1700 = vmatpush.bf16.msra.mxu0 0
        %1701 = vmatpush.bf16.msra.mxu0 0
        %1702 = vmatpush.bf16.msra.mxu0 0
        %1703 = vmatpush.bf16.msra.mxu0 0
        %1704 = vmatpush.bf16.msra.mxu0 %v1692
        %1705 = vmatmul.bf16.gmra.mxu0 %v1695
        %v1706 = vpop.f32.mrf.mxu0
        %v1707 = vadd.f32 0.0, %v1706
        %v1708 = vpop.f32.mrf.mxu0
        %1709 = vdwg.mxu0
        %v1712 = vunpack.c.l.b16 %v915
        %v1713 = vunpack.c.l.b16 %v916
        %v1714 = vpack.c.b16 %v1713, %v1712
        %v1717 = vsel %vm1379, %v1643, 0
        %1719 = vmatpush.bf16.msra.mxu0 0
        %1720 = vmatpush.bf16.msra.mxu0 0
        %1721 = vmatpush.bf16.msra.mxu0 0
        %1722 = vmatpush.bf16.msra.mxu0 0
        %1723 = vmatpush.bf16.msra.mxu0 0
        %1724 = vmatpush.bf16.msra.mxu0 0
        %1725 = vmatpush.bf16.msra.mxu0 0
        %1726 = vmatpush.bf16.msra.mxu0 %v1714
        %1727 = vmatmul.bf16.gmra.mxu0 %v1717
        %v1728 = vpop.f32.mrf.mxu0
        %v1729 = vadd.f32 0.0, %v1728
        %v1730 = vpop.f32.mrf.mxu0
        %1731 = vdwg.mxu0
        %v1732 = vadd.f32 %v1663, %v1685
        %v1733 = vadd.f32 %v1732, %v1707
        %v1734 = vadd.f32 %v1733, %v1729
        %v1735 = vadd.f32 %v1734, %v797
        %v1736 = vsel %vm943, %v1735, 0.0
        %1737 = vadd.xlane.f32.xlu0 %v1736
        %v1738 = vpop.xlane.xlu0 %1737
        %v1739 = vrcp.pop 64.0
        %v1740 = vmul.f32 64.0, %v1739
        %v1741 = vsub.f32 1.0, %v1740
        %v1742 = vmul.f32 %v1739, %v1741
        %v1743 = vadd.f32 %v1739, %v1742
        %vm1744 = vweird.f32 %v1739
        %v1745 = vsel %vm1744, %v1739, %v1743
        %v1746 = vmul.f32 %v1738, %v1745
        %v1747 = vsub.f32 %v1735, %v1746
        %v1748 = vmul.f32 %v1747, %v1747
        %v1749 = vsel %vm943, %v1748, 0.0
        %1750 = vadd.xlane.f32.xlu0 %v1749
        %v1751 = vpop.xlane.xlu0 %1750
        %v1752 = vmul.f32 %v1751, %v1745
        %v1753 = vadd.f32 %v1752, 1e-06
        %v1754 = vrsqrt.pop %v1753
        %v1755 = vmul.f32 %v1754, %v1753
        %v1756 = vmul.f32 %v1755, %v1754
        %v1757 = vmul.f32 0.5, %v1756
        %v1758 = vsub.f32 1.5, %v1757
        %v1759 = vmul.f32 %v1754, %v1758
        %vm1760 = vweird.f32 %v1753
        %vm1761 = vweird.f32 %v1754
        %vm1762 = vmor %vm1760, %vm1761
        %v1763 = vsel %vm1762, %v1754, %v1759
        %v1764 = vmul.f32 %v1747, %v1763
        %v1766 = vperm.slane %v917, 0
        %v1768 = vmul.f32 %v1764, %v1766
        %v1770 = vperm.slane %v918, 0
        %v1772 = vadd.f32 %v1768, %v1770
        %v1773 = vld [vmem:[%s10] sm:$0xf]
        %v1774 = vld [vmem:[%s10 + $0x4] sm:$0xf]
        %v1775 = vld [vmem:[%s10 + $0x8] sm:$0xf]
        %v1776 = vld [vmem:[%s10 + $0xc] sm:$0xf]
        %v1777 = vld [vmem:[%s10 + $0x10] sm:$0xf]
        %v1778 = vld [vmem:[%s10 + $0x14] sm:$0xf]
        %v1779 = vld [vmem:[%s10 + $0x18] sm:$0xf]
        %v1780 = vld [vmem:[%s10 + $0x1c] sm:$0xf]
        %v1781 = vld [vmem:[%s10 + $0x20] sm:$0xf]
        %v1782 = vld [vmem:[%s10 + $0x24] sm:$0xf]
        %v1783 = vld [vmem:[%s10 + $0x28] sm:$0xf]
        %v1784 = vld [vmem:[%s10 + $0x2c] sm:$0xf]
        %v1785 = vld [vmem:[%s10 + $0x30] sm:$0xf]
        %v1786 = vld [vmem:[%s10 + $0x34] sm:$0xf]
        %v1787 = vld [vmem:[%s10 + $0x38] sm:$0xf]
        %v1788 = vld [vmem:[%s10 + $0x3c] sm:$0xf]
        %v1789 = vld [vmem:[%s10 + $0x40] sm:$0xf]
        %v1790 = vld [vmem:[%s10 + $0x44] sm:$0xf]
        %v1791 = vld [vmem:[%s10 + $0x48] sm:$0xf]
        %v1792 = vld [vmem:[%s10 + $0x4c] sm:$0xf]
        %v1793 = vld [vmem:[%s10 + $0x50] sm:$0xf]
        %v1794 = vld [vmem:[%s10 + $0x54] sm:$0xf]
        %v1795 = vld [vmem:[%s10 + $0x58] sm:$0xf]
        %v1796 = vld [vmem:[%s10 + $0x5c] sm:$0xf]
        %v1797 = vld [vmem:[%s10 + $0x60] sm:$0xf]
        %v1798 = vld [vmem:[%s10 + $0x64] sm:$0xf]
        %v1799 = vld [vmem:[%s10 + $0x68] sm:$0xf]
        %v1800 = vld [vmem:[%s10 + $0x6c] sm:$0xf]
        %v1801 = vld [vmem:[%s10 + $0x70] sm:$0xf]
        %v1802 = vld [vmem:[%s10 + $0x74] sm:$0xf]
        %v1803 = vld [vmem:[%s10 + $0x78] sm:$0xf]
        %v1804 = vld [vmem:[%s10 + $0x7c] sm:$0xf]
        %v1805 = vld [vmem:[%s11] sm:$0xf]
        %v1806 = vld [vmem:[%s11 + $0x4] sm:$0xf]
        %v1807 = vld [vmem:[%s11 + $0x8] sm:$0xf]
        %v1808 = vld [vmem:[%s11 + $0xc] sm:$0xf]
        %v1809 = vld [vmem:[%s11 + $0x10] sm:$0xf]
        %v1810 = vld [vmem:[%s11 + $0x14] sm:$0xf]
        %v1811 = vld [vmem:[%s11 + $0x18] sm:$0xf]
        %v1812 = vld [vmem:[%s11 + $0x1c] sm:$0xf]
        %v1813 = vld [vmem:[%s11 + $0x20] sm:$0xf]
        %v1814 = vld [vmem:[%s11 + $0x24] sm:$0xf]
        %v1815 = vld [vmem:[%s11 + $0x28] sm:$0xf]
        %v1816 = vld [vmem:[%s11 + $0x2c] sm:$0xf]
        %v1817 = vld [vmem:[%s11 + $0x30] sm:$0xf]
        %v1818 = vld [vmem:[%s11 + $0x34] sm:$0xf]
        %v1819 = vld [vmem:[%s11 + $0x38] sm:$0xf]
        %v1820 = vld [vmem:[%s11 + $0x3c] sm:$0xf]
        %v1821 = vld [vmem:[%s11 + $0x40] sm:$0xf]
        %v1822 = vld [vmem:[%s11 + $0x44] sm:$0xf]
        %v1823 = vld [vmem:[%s11 + $0x48] sm:$0xf]
        %v1824 = vld [vmem:[%s11 + $0x4c] sm:$0xf]
        %v1825 = vld [vmem:[%s11 + $0x50] sm:$0xf]
        %v1826 = vld [vmem:[%s11 + $0x54] sm:$0xf]
        %v1827 = vld [vmem:[%s11 + $0x58] sm:$0xf]
        %v1828 = vld [vmem:[%s11 + $0x5c] sm:$0xf]
        %v1829 = vld [vmem:[%s11 + $0x60] sm:$0xf]
        %v1830 = vld [vmem:[%s11 + $0x64] sm:$0xf]
        %v1831 = vld [vmem:[%s11 + $0x68] sm:$0xf]
        %v1832 = vld [vmem:[%s11 + $0x6c] sm:$0xf]
        %v1833 = vld [vmem:[%s11 + $0x70] sm:$0xf]
        %v1834 = vld [vmem:[%s11 + $0x74] sm:$0xf]
        %v1835 = vld [vmem:[%s11 + $0x78] sm:$0xf]
        %v1836 = vld [vmem:[%s11 + $0x7c] sm:$0xf]
        %v1837 = vld [vmem:[%s12] sm:$0xf]
        %v1838 = vld [vmem:[%s12 + $0x4] sm:$0xf]
        %v1839 = vld [vmem:[%s12 + $0x8] sm:$0xf]
        %v1840 = vld [vmem:[%s12 + $0xc] sm:$0xf]
        %v1841 = vld [vmem:[%s12 + $0x10] sm:$0xf]
        %v1842 = vld [vmem:[%s12 + $0x14] sm:$0xf]
        %v1843 = vld [vmem:[%s12 + $0x18] sm:$0xf]
        %v1844 = vld [vmem:[%s12 + $0x1c] sm:$0xf]
        %v1845 = vld [vmem:[%s12 + $0x20] sm:$0xf]
        %v1846 = vld [vmem:[%s12 + $0x24] sm:$0xf]
        %v1847 = vld [vmem:[%s12 + $0x28] sm:$0xf]
        %v1848 = vld [vmem:[%s12 + $0x2c] sm:$0xf]
        %v1849 = vld [vmem:[%s12 + $0x30] sm:$0xf]
        %v1850 = vld [vmem:[%s12 + $0x34] sm:$0xf]
        %v1851 = vld [vmem:[%s12 + $0x38] sm:$0xf]
        %v1852 = vld [vmem:[%s12 + $0x3c] sm:$0xf]
        %v1853 = vld [vmem:[%s12 + $0x40] sm:$0xf]
        %v1854 = vld [vmem:[%s12 + $0x44] sm:$0xf]
        %v1855 = vld [vmem:[%s12 + $0x48] sm:$0xf]
        %v1856 = vld [vmem:[%s12 + $0x4c] sm:$0xf]
        %v1857 = vld [vmem:[%s12 + $0x50] sm:$0xf]
        %v1858 = vld [vmem:[%s12 + $0x54] sm:$0xf]
        %v1859 = vld [vmem:[%s12 + $0x58] sm:$0xf]
        %v1860 = vld [vmem:[%s12 + $0x5c] sm:$0xf]
        %v1861 = vld [vmem:[%s12 + $0x60] sm:$0xf]
        %v1862 = vld [vmem:[%s12 + $0x64] sm:$0xf]
        %v1863 = vld [vmem:[%s12 + $0x68] sm:$0xf]
        %v1864 = vld [vmem:[%s12 + $0x6c] sm:$0xf]
        %v1865 = vld [vmem:[%s12 + $0x70] sm:$0xf]
        %v1866 = vld [vmem:[%s12 + $0x74] sm:$0xf]
        %v1867 = vld [vmem:[%s12 + $0x78] sm:$0xf]
        %v1868 = vld [vmem:[%s12 + $0x7c] sm:$0xf]
        %v1869 = vld [vmem:[%s13] sm:$0xf]
        %v1870 = vld [vmem:[%s13 + $0x4] sm:$0xf]
        %v1871 = vld [vmem:[%s13 + $0x8] sm:$0xf]
        %v1872 = vld [vmem:[%s13 + $0xc] sm:$0xf]
        %v1873 = vld [vmem:[%s13 + $0x10] sm:$0xf]
        %v1874 = vld [vmem:[%s13 + $0x14] sm:$0xf]
        %v1875 = vld [vmem:[%s13 + $0x18] sm:$0xf]
        %v1876 = vld [vmem:[%s13 + $0x1c] sm:$0xf]
        %v1877 = vld [vmem:[%s14] sm:$0x1]
        %v1878 = vld [vmem:[%s15] sm:$0x1]
        %v1879 = vpack.c.bf16 %v1772, %v1772
        %v1888 = vunpack.c.l.b16 %v1773
        %v1889 = vunpack.c.l.b16 %v1774
        %v1890 = vunpack.c.l.b16 %v1775
        %v1891 = vunpack.c.l.b16 %v1776
        %v1892 = vunpack.c.l.b16 %v1777
        %v1893 = vunpack.c.l.b16 %v1778
        %v1894 = vunpack.c.l.b16 %v1779
        %v1895 = vunpack.c.l.b16 %v1780
        %v1896 = vpack.c.b16 %v1889, %v1888
        %v1897 = vpack.c.b16 %v1891, %v1890
        %v1898 = vpack.c.b16 %v1893, %v1892
        %v1899 = vpack.c.b16 %v1895, %v1894
        %v1905 = vsel %vm943, %v1879, 0
        %1907 = vmatpush.bf16.msra.mxu0 0
        %1908 = vmatpush.bf16.msra.mxu0 0
        %1909 = vmatpush.bf16.msra.mxu0 0
        %1910 = vmatpush.bf16.msra.mxu0 0
        %1911 = vmatpush.bf16.msra.mxu0 %v1899
        %1912 = vmatpush.bf16.msra.mxu0 %v1898
        %1913 = vmatpush.bf16.msra.mxu0 %v1897
        %1914 = vmatpush.bf16.msra.mxu0 %v1896
        %1915 = vmatmul.bf16.gmra.mxu0 %v1905
        %v1916 = vpop.f32.mrf.mxu0
        %v1917 = vadd.f32 0.0, %v1916
        %v1918 = vpop.f32.mrf.mxu0
        %1919 = vdwg.mxu0
        %v1928 = vunpack.c.l.b16 %v1781
        %v1929 = vunpack.c.l.b16 %v1782
        %v1930 = vunpack.c.l.b16 %v1783
        %v1931 = vunpack.c.l.b16 %v1784
        %v1932 = vunpack.c.l.b16 %v1785
        %v1933 = vunpack.c.l.b16 %v1786
        %v1934 = vunpack.c.l.b16 %v1787
        %v1935 = vunpack.c.l.b16 %v1788
        %v1936 = vpack.c.b16 %v1929, %v1928
        %v1937 = vpack.c.b16 %v1931, %v1930
        %v1938 = vpack.c.b16 %v1933, %v1932
        %v1939 = vpack.c.b16 %v1935, %v1934
        %1944 = vmatpush.bf16.msra.mxu0 0
        %1945 = vmatpush.bf16.msra.mxu0 0
        %1946 = vmatpush.bf16.msra.mxu0 0
        %1947 = vmatpush.bf16.msra.mxu0 0
        %1948 = vmatpush.bf16.msra.mxu0 %v1939
        %1949 = vmatpush.bf16.msra.mxu0 %v1938
        %1950 = vmatpush.bf16.msra.mxu0 %v1937
        %1951 = vmatpush.bf16.msra.mxu0 %v1936
        %1952 = vmatmul.bf16.gmra.mxu0 %v1905
        %v1953 = vpop.f32.mrf.mxu0
        %v1954 = vadd.f32 0.0, %v1953
        %v1955 = vpop.f32.mrf.mxu0
        %1956 = vdwg.mxu0
        %v1965 = vunpack.c.l.b16 %v1789
        %v1966 = vunpack.c.l.b16 %v1790
        %v1967 = vunpack.c.l.b16 %v1791
        %v1968 = vunpack.c.l.b16 %v1792
        %v1969 = vunpack.c.l.b16 %v1793
        %v1970 = vunpack.c.l.b16 %v1794
        %v1971 = vunpack.c.l.b16 %v1795
        %v1972 = vunpack.c.l.b16 %v1796
        %v1973 = vpack.c.b16 %v1966, %v1965
        %v1974 = vpack.c.b16 %v1968, %v1967
        %v1975 = vpack.c.b16 %v1970, %v1969
        %v1976 = vpack.c.b16 %v1972, %v1971
        %1981 = vmatpush.bf16.msra.mxu0 0
        %1982 = vmatpush.bf16.msra.mxu0 0
        %1983 = vmatpush.bf16.msra.mxu0 0
        %1984 = vmatpush.bf16.msra.mxu0 0
        %1985 = vmatpush.bf16.msra.mxu0 %v1976
        %1986 = vmatpush.bf16.msra.mxu0 %v1975
        %1987 = vmatpush.bf16.msra.mxu0 %v1974
        %1988 = vmatpush.bf16.msra.mxu0 %v1973
        %1989 = vmatmul.bf16.gmra.mxu0 %v1905
        %v1990 = vpop.f32.mrf.mxu0
        %v1991 = vadd.f32 0.0, %v1990
        %v1992 = vpop.f32.mrf.mxu0
        %1993 = vdwg.mxu0
        %v2002 = vunpack.c.l.b16 %v1797
        %v2003 = vunpack.c.l.b16 %v1798
        %v2004 = vunpack.c.l.b16 %v1799
        %v2005 = vunpack.c.l.b16 %v1800
        %v2006 = vunpack.c.l.b16 %v1801
        %v2007 = vunpack.c.l.b16 %v1802
        %v2008 = vunpack.c.l.b16 %v1803
        %v2009 = vunpack.c.l.b16 %v1804
        %v2010 = vpack.c.b16 %v2003, %v2002
        %v2011 = vpack.c.b16 %v2005, %v2004
        %v2012 = vpack.c.b16 %v2007, %v2006
        %v2013 = vpack.c.b16 %v2009, %v2008
        %2018 = vmatpush.bf16.msra.mxu0 0
        %2019 = vmatpush.bf16.msra.mxu0 0
        %2020 = vmatpush.bf16.msra.mxu0 0
        %2021 = vmatpush.bf16.msra.mxu0 0
        %2022 = vmatpush.bf16.msra.mxu0 %v2013
        %2023 = vmatpush.bf16.msra.mxu0 %v2012
        %2024 = vmatpush.bf16.msra.mxu0 %v2011
        %2025 = vmatpush.bf16.msra.mxu0 %v2010
        %2026 = vmatmul.bf16.gmra.mxu0 %v1905
        %v2027 = vpop.f32.mrf.mxu0
        %v2028 = vadd.f32 0.0, %v2027
        %v2029 = vpop.f32.mrf.mxu0
        %2030 = vdwg.mxu0
        %v2031 = vpack.c.bf16 %v1917, %v1917
        %v2032 = vpack.c.bf16 %v1954, %v1954
        %v2033 = vpack.c.bf16 %v1991, %v1991
        %v2034 = vpack.c.bf16 %v2028, %v2028
        %v2043 = vunpack.c.l.b16 %v1805
        %v2044 = vunpack.c.l.b16 %v1806
        %v2045 = vunpack.c.l.b16 %v1807
        %v2046 = vunpack.c.l.b16 %v1808
        %v2047 = vunpack.c.l.b16 %v1809
        %v2048 = vunpack.c.l.b16 %v1810
        %v2049 = vunpack.c.l.b16 %v1811
        %v2050 = vunpack.c.l.b16 %v1812
        %v2051 = vpack.c.b16 %v2044, %v2043
        %v2052 = vpack.c.b16 %v2046, %v2045
        %v2053 = vpack.c.b16 %v2048, %v2047
        %v2054 = vpack.c.b16 %v2050, %v2049
        %v2060 = vsel %vm943, %v798, 0
        %2062 = vmatpush.bf16.msra.mxu0 0
        %2063 = vmatpush.bf16.msra.mxu0 0
        %2064 = vmatpush.bf16.msra.mxu0 0
        %2065 = vmatpush.bf16.msra.mxu0 0
        %2066 = vmatpush.bf16.msra.mxu0 %v2054
        %2067 = vmatpush.bf16.msra.mxu0 %v2053
        %2068 = vmatpush.bf16.msra.mxu0 %v2052
        %2069 = vmatpush.bf16.msra.mxu0 %v2051
        %2070 = vmatmul.bf16.gmra.mxu0 %v2060
        %v2071 = vpop.f32.mrf.mxu0
        %v2072 = vadd.f32 0.0, %v2071
        %v2073 = vpop.f32.mrf.mxu0
        %2074 = vdwg.mxu0
        %v2083 = vunpack.c.l.b16 %v1813
        %v2084 = vunpack.c.l.b16 %v1814
        %v2085 = vunpack.c.l.b16 %v1815
        %v2086 = vunpack.c.l.b16 %v1816
        %v2087 = vunpack.c.l.b16 %v1817
        %v2088 = vunpack.c.l.b16 %v1818
        %v2089 = vunpack.c.l.b16 %v1819
        %v2090 = vunpack.c.l.b16 %v1820
        %v2091 = vpack.c.b16 %v2084, %v2083
        %v2092 = vpack.c.b16 %v2086, %v2085
        %v2093 = vpack.c.b16 %v2088, %v2087
        %v2094 = vpack.c.b16 %v2090, %v2089
        %2099 = vmatpush.bf16.msra.mxu0 0
        %2100 = vmatpush.bf16.msra.mxu0 0
        %2101 = vmatpush.bf16.msra.mxu0 0
        %2102 = vmatpush.bf16.msra.mxu0 0
        %2103 = vmatpush.bf16.msra.mxu0 %v2094
        %2104 = vmatpush.bf16.msra.mxu0 %v2093
        %2105 = vmatpush.bf16.msra.mxu0 %v2092
        %2106 = vmatpush.bf16.msra.mxu0 %v2091
        %2107 = vmatmul.bf16.gmra.mxu0 %v2060
        %v2108 = vpop.f32.mrf.mxu0
        %v2109 = vadd.f32 0.0, %v2108
        %v2110 = vpop.f32.mrf.mxu0
        %2111 = vdwg.mxu0
        %v2120 = vunpack.c.l.b16 %v1821
        %v2121 = vunpack.c.l.b16 %v1822
        %v2122 = vunpack.c.l.b16 %v1823
        %v2123 = vunpack.c.l.b16 %v1824
        %v2124 = vunpack.c.l.b16 %v1825
        %v2125 = vunpack.c.l.b16 %v1826
        %v2126 = vunpack.c.l.b16 %v1827
        %v2127 = vunpack.c.l.b16 %v1828
        %v2128 = vpack.c.b16 %v2121, %v2120
        %v2129 = vpack.c.b16 %v2123, %v2122
        %v2130 = vpack.c.b16 %v2125, %v2124
        %v2131 = vpack.c.b16 %v2127, %v2126
        %2136 = vmatpush.bf16.msra.mxu0 0
        %2137 = vmatpush.bf16.msra.mxu0 0
        %2138 = vmatpush.bf16.msra.mxu0 0
        %2139 = vmatpush.bf16.msra.mxu0 0
        %2140 = vmatpush.bf16.msra.mxu0 %v2131
        %2141 = vmatpush.bf16.msra.mxu0 %v2130
        %2142 = vmatpush.bf16.msra.mxu0 %v2129
        %2143 = vmatpush.bf16.msra.mxu0 %v2128
        %2144 = vmatmul.bf16.gmra.mxu0 %v2060
        %v2145 = vpop.f32.mrf.mxu0
        %v2146 = vadd.f32 0.0, %v2145
        %v2147 = vpop.f32.mrf.mxu0
        %2148 = vdwg.mxu0
        %v2157 = vunpack.c.l.b16 %v1829
        %v2158 = vunpack.c.l.b16 %v1830
        %v2159 = vunpack.c.l.b16 %v1831
        %v2160 = vunpack.c.l.b16 %v1832
        %v2161 = vunpack.c.l.b16 %v1833
        %v2162 = vunpack.c.l.b16 %v1834
        %v2163 = vunpack.c.l.b16 %v1835
        %v2164 = vunpack.c.l.b16 %v1836
        %v2165 = vpack.c.b16 %v2158, %v2157
        %v2166 = vpack.c.b16 %v2160, %v2159
        %v2167 = vpack.c.b16 %v2162, %v2161
        %v2168 = vpack.c.b16 %v2164, %v2163
        %2173 = vmatpush.bf16.msra.mxu0 0
        %2174 = vmatpush.bf16.msra.mxu0 0
        %2175 = vmatpush.bf16.msra.mxu0 0
        %2176 = vmatpush.bf16.msra.mxu0 0
        %2177 = vmatpush.bf16.msra.mxu0 %v2168
        %2178 = vmatpush.bf16.msra.mxu0 %v2167
        %2179 = vmatpush.bf16.msra.mxu0 %v2166
        %2180 = vmatpush.bf16.msra.mxu0 %v2165
        %2181 = vmatmul.bf16.gmra.mxu0 %v2060
        %v2182 = vpop.f32.mrf.mxu0
        %v2183 = vadd.f32 0.0, %v2182
        %v2184 = vpop.f32.mrf.mxu0
        %2185 = vdwg.mxu0
        %v2186 = vpack.c.bf16 %v2072, %v2072
        %v2187 = vpack.c.bf16 %v2109, %v2109
        %v2188 = vpack.c.bf16 %v2146, %v2146
        %v2189 = vpack.c.bf16 %v2183, %v2183
        %v2198 = vunpack.c.l.b16 %v1837
        %v2199 = vunpack.c.l.b16 %v1838
        %v2200 = vunpack.c.l.b16 %v1839
        %v2201 = vunpack.c.l.b16 %v1840
        %v2202 = vunpack.c.l.b16 %v1841
        %v2203 = vunpack.c.l.b16 %v1842
        %v2204 = vunpack.c.l.b16 %v1843
        %v2205 = vunpack.c.l.b16 %v1844
        %v2206 = vpack.c.b16 %v2199, %v2198
        %v2207 = vpack.c.b16 %v2201, %v2200
        %v2208 = vpack.c.b16 %v2203, %v2202
        %v2209 = vpack.c.b16 %v2205, %v2204
        %2214 = vmatpush.bf16.msra.mxu0 0
        %2215 = vmatpush.bf16.msra.mxu0 0
        %2216 = vmatpush.bf16.msra.mxu0 0
        %2217 = vmatpush.bf16.msra.mxu0 0
        %2218 = vmatpush.bf16.msra.mxu0 %v2209
        %2219 = vmatpush.bf16.msra.mxu0 %v2208
        %2220 = vmatpush.bf16.msra.mxu0 %v2207
        %2221 = vmatpush.bf16.msra.mxu0 %v2206
        %2222 = vmatmul.bf16.gmra.mxu0 %v2060
        %v2223 = vpop.f32.mrf.mxu0
        %v2224 = vadd.f32 0.0, %v2223
        %v2225 = vpop.f32.mrf.mxu0
        %2226 = vdwg.mxu0
        %v2235 = vunpack.c.l.b16 %v1845
        %v2236 = vunpack.c.l.b16 %v1846
        %v2237 = vunpack.c.l.b16 %v1847
        %v2238 = vunpack.c.l.b16 %v1848
        %v2239 = vunpack.c.l.b16 %v1849
        %v2240 = vunpack.c.l.b16 %v1850
        %v2241 = vunpack.c.l.b16 %v1851
        %v2242 = vunpack.c.l.b16 %v1852
        %v2243 = vpack.c.b16 %v2236, %v2235
        %v2244 = vpack.c.b16 %v2238, %v2237
        %v2245 = vpack.c.b16 %v2240, %v2239
        %v2246 = vpack.c.b16 %v2242, %v2241
        %2251 = vmatpush.bf16.msra.mxu0 0
        %2252 = vmatpush.bf16.msra.mxu0 0
        %2253 = vmatpush.bf16.msra.mxu0 0
        %2254 = vmatpush.bf16.msra.mxu0 0
        %2255 = vmatpush.bf16.msra.mxu0 %v2246
        %2256 = vmatpush.bf16.msra.mxu0 %v2245
        %2257 = vmatpush.bf16.msra.mxu0 %v2244
        %2258 = vmatpush.bf16.msra.mxu0 %v2243
        %2259 = vmatmul.bf16.gmra.mxu0 %v2060
        %v2260 = vpop.f32.mrf.mxu0
        %v2261 = vadd.f32 0.0, %v2260
        %v2262 = vpop.f32.mrf.mxu0
        %2263 = vdwg.mxu0
        %v2272 = vunpack.c.l.b16 %v1853
        %v2273 = vunpack.c.l.b16 %v1854
        %v2274 = vunpack.c.l.b16 %v1855
        %v2275 = vunpack.c.l.b16 %v1856
        %v2276 = vunpack.c.l.b16 %v1857
        %v2277 = vunpack.c.l.b16 %v1858
        %v2278 = vunpack.c.l.b16 %v1859
        %v2279 = vunpack.c.l.b16 %v1860
        %v2280 = vpack.c.b16 %v2273, %v2272
        %v2281 = vpack.c.b16 %v2275, %v2274
        %v2282 = vpack.c.b16 %v2277, %v2276
        %v2283 = vpack.c.b16 %v2279, %v2278
        %2288 = vmatpush.bf16.msra.mxu0 0
        %2289 = vmatpush.bf16.msra.mxu0 0
        %2290 = vmatpush.bf16.msra.mxu0 0
        %2291 = vmatpush.bf16.msra.mxu0 0
        %2292 = vmatpush.bf16.msra.mxu0 %v2283
        %2293 = vmatpush.bf16.msra.mxu0 %v2282
        %2294 = vmatpush.bf16.msra.mxu0 %v2281
        %2295 = vmatpush.bf16.msra.mxu0 %v2280
        %2296 = vmatmul.bf16.gmra.mxu0 %v2060
        %v2297 = vpop.f32.mrf.mxu0
        %v2298 = vadd.f32 0.0, %v2297
        %v2299 = vpop.f32.mrf.mxu0
        %2300 = vdwg.mxu0
        %v2309 = vunpack.c.l.b16 %v1861
        %v2310 = vunpack.c.l.b16 %v1862
        %v2311 = vunpack.c.l.b16 %v1863
        %v2312 = vunpack.c.l.b16 %v1864
        %v2313 = vunpack.c.l.b16 %v1865
        %v2314 = vunpack.c.l.b16 %v1866
        %v2315 = vunpack.c.l.b16 %v1867
        %v2316 = vunpack.c.l.b16 %v1868
        %v2317 = vpack.c.b16 %v2310, %v2309
        %v2318 = vpack.c.b16 %v2312, %v2311
        %v2319 = vpack.c.b16 %v2314, %v2313
        %v2320 = vpack.c.b16 %v2316, %v2315
        %2325 = vmatpush.bf16.msra.mxu0 0
        %2326 = vmatpush.bf16.msra.mxu0 0
        %2327 = vmatpush.bf16.msra.mxu0 0
        %2328 = vmatpush.bf16.msra.mxu0 0
        %2329 = vmatpush.bf16.msra.mxu0 %v2320
        %2330 = vmatpush.bf16.msra.mxu0 %v2319
        %2331 = vmatpush.bf16.msra.mxu0 %v2318
        %2332 = vmatpush.bf16.msra.mxu0 %v2317
        %2333 = vmatmul.bf16.gmra.mxu0 %v2060
        %v2334 = vpop.f32.mrf.mxu0
        %v2335 = vadd.f32 0.0, %v2334
        %v2336 = vpop.f32.mrf.mxu0
        %2337 = vdwg.mxu0
        %v2338 = vpack.c.bf16 %v2224, %v2224
        %v2339 = vpack.c.bf16 %v2261, %v2261
        %v2340 = vpack.c.bf16 %v2298, %v2298
        %v2341 = vpack.c.bf16 %v2335, %v2335
        %v2343 = vsel %vm1379, %v2031, 0
        %v2346 = vsel %vm1379, %v2186, 0
        %2348 = vmatpush.bf16.xpose.msra.mxu0 0
        %2349 = vmatpush.bf16.xpose.msra.mxu0 0
        %2350 = vmatpush.bf16.xpose.msra.mxu0 0
        %2351 = vmatpush.bf16.xpose.msra.mxu0 0
        %2352 = vmatpush.bf16.xpose.msra.mxu0 0
        %2353 = vmatpush.bf16.xpose.msra.mxu0 0
        %2354 = vmatpush.bf16.xpose.msra.mxu0 0
        %2355 = vmatpush.bf16.xpose.msra.mxu0 %v2346
        %2356 = vmatmul.bf16.gmra.mxu0 %v2343
        %v2357 = vpop.f32.mrf.mxu0
        %v2358 = vadd.f32 0.0, %v2357
        %v2359 = vpop.f32.mrf.mxu0
        %2360 = vdwg.mxu0
        %v2362 = vsel %vm1379, %v2032, 0
        %v2365 = vsel %vm1379, %v2187, 0
        %2367 = vmatpush.bf16.xpose.msra.mxu0 0
        %2368 = vmatpush.bf16.xpose.msra.mxu0 0
        %2369 = vmatpush.bf16.xpose.msra.mxu0 0
        %2370 = vmatpush.bf16.xpose.msra.mxu0 0
        %2371 = vmatpush.bf16.xpose.msra.mxu0 0
        %2372 = vmatpush.bf16.xpose.msra.mxu0 0
        %2373 = vmatpush.bf16.xpose.msra.mxu0 0
        %2374 = vmatpush.bf16.xpose.msra.mxu0 %v2365
        %2375 = vmatmul.bf16.gmra.mxu0 %v2362
        %v2376 = vpop.f32.mrf.mxu0
        %v2377 = vadd.f32 0.0, %v2376
        %v2378 = vpop.f32.mrf.mxu0
        %2379 = vdwg.mxu0
        %v2381 = vsel %vm1379, %v2033, 0
        %v2384 = vsel %vm1379, %v2188, 0
        %2386 = vmatpush.bf16.xpose.msra.mxu0 0
        %2387 = vmatpush.bf16.xpose.msra.mxu0 0
        %2388 = vmatpush.bf16.xpose.msra.mxu0 0
        %2389 = vmatpush.bf16.xpose.msra.mxu0 0
        %2390 = vmatpush.bf16.xpose.msra.mxu0 0
        %2391 = vmatpush.bf16.xpose.msra.mxu0 0
        %2392 = vmatpush.bf16.xpose.msra.mxu0 0
        %2393 = vmatpush.bf16.xpose.msra.mxu0 %v2384
        %2394 = vmatmul.bf16.gmra.mxu0 %v2381
        %v2395 = vpop.f32.mrf.mxu0
        %v2396 = vadd.f32 0.0, %v2395
        %v2397 = vpop.f32.mrf.mxu0
        %2398 = vdwg.mxu0
        %v2400 = vsel %vm1379, %v2034, 0
        %v2403 = vsel %vm1379, %v2189, 0
        %2405 = vmatpush.bf16.xpose.msra.mxu0 0
        %2406 = vmatpush.bf16.xpose.msra.mxu0 0
        %2407 = vmatpush.bf16.xpose.msra.mxu0 0
        %2408 = vmatpush.bf16.xpose.msra.mxu0 0
        %2409 = vmatpush.bf16.xpose.msra.mxu0 0
        %2410 = vmatpush.bf16.xpose.msra.mxu0 0
        %2411 = vmatpush.bf16.xpose.msra.mxu0 0
        %2412 = vmatpush.bf16.xpose.msra.mxu0 %v2403
        %2413 = vmatmul.bf16.gmra.mxu0 %v2400
        %v2414 = vpop.f32.mrf.mxu0
        %v2415 = vadd.f32 0.0, %v2414
        %v2416 = vpop.f32.mrf.mxu0
        %2417 = vdwg.mxu0
        %v2418 = vsel %vm811, 1, 0
        %v2419 = vperm.slane %v2418, 0
        %vm2420 = vcmp.eq.s32.totalorder %v2419, 1
        %v2421 = vsel %vm2420, -1e+09, %v2358
        %v2422 = vsel %vm2420, -1e+09, %v2377
        %v2423 = vsel %vm2420, -1e+09, %v2396
        %v2424 = vsel %vm2420, -1e+09, %v2415
        %v2425 = vsel %vm1462, %v2421, -inf
        %2426 = vmax.xlane.f32.xlu0 %v2425
        %v2427 = vpop.xlane.xlu0 %2426
        %v2428 = vsel %vm1462, %v2422, -inf
        %2429 = vmax.xlane.f32.xlu0 %v2428
        %v2430 = vpop.xlane.xlu0 %2429
        %v2431 = vsel %vm1462, %v2423, -inf
        %2432 = vmax.xlane.f32.xlu0 %v2431
        %v2433 = vpop.xlane.xlu0 %2432
        %v2434 = vsel %vm1462, %v2424, -inf
        %2435 = vmax.xlane.f32.xlu0 %v2434
        %v2436 = vpop.xlane.xlu0 %2435
        %v2437 = vsub.f32 %v2421, %v2427
        %v2438 = vsub.f32 %v2422, %v2430
        %v2439 = vsub.f32 %v2423, %v2433
        %v2440 = vsub.f32 %v2424, %v2436
        %v2441 = vmul.f32 %v2437, 1.442695
        %v2442 = vpow.pop %v2441
        %v2443 = vmul.f32 %v2438, 1.442695
        %v2444 = vpow.pop %v2443
        %v2445 = vmul.f32 %v2439, 1.442695
        %v2446 = vpow.pop %v2445
        %v2447 = vmul.f32 %v2440, 1.442695
        %v2448 = vpow.pop %v2447
        %v2449 = vsel %vm1462, %v2442, 0.0
        %2450 = vadd.xlane.f32.xlu0 %v2449
        %v2451 = vpop.xlane.xlu0 %2450
        %v2452 = vsel %vm1462, %v2444, 0.0
        %2453 = vadd.xlane.f32.xlu0 %v2452
        %v2454 = vpop.xlane.xlu0 %2453
        %v2455 = vsel %vm1462, %v2446, 0.0
        %2456 = vadd.xlane.f32.xlu0 %v2455
        %v2457 = vpop.xlane.xlu0 %2456
        %v2458 = vsel %vm1462, %v2448, 0.0
        %2459 = vadd.xlane.f32.xlu0 %v2458
        %v2460 = vpop.xlane.xlu0 %2459
        %v2461 = vrcp.pop %v2451
        %v2462 = vmul.f32 %v2451, %v2461
        %v2463 = vsub.f32 1.0, %v2462
        %v2464 = vmul.f32 %v2461, %v2463
        %v2465 = vadd.f32 %v2461, %v2464
        %vm2466 = vweird.f32 %v2451
        %vm2467 = vweird.f32 %v2461
        %vm2468 = vmor %vm2466, %vm2467
        %v2469 = vsel %vm2468, %v2461, %v2465
        %v2470 = vand.u32 2147483647, %v2451
        %vm2471 = vcmp.eq.f32.partialorder %v2470, 8.507059e+37
        %v2472 = vand.u32 %v2451, 2147483648
        %v2473 = vor.u32 1.1754944e-38, %v2472
        %v2474 = vsel %vm2471, %v2473, %v2469
        %v2475 = vmul.f32 %v2442, %v2474
        %v2476 = vrcp.pop %v2454
        %v2477 = vmul.f32 %v2454, %v2476
        %v2478 = vsub.f32 1.0, %v2477
        %v2479 = vmul.f32 %v2476, %v2478
        %v2480 = vadd.f32 %v2476, %v2479
        %vm2481 = vweird.f32 %v2454
        %vm2482 = vweird.f32 %v2476
        %vm2483 = vmor %vm2481, %vm2482
        %v2484 = vsel %vm2483, %v2476, %v2480
        %v2485 = vand.u32 2147483647, %v2454
        %vm2486 = vcmp.eq.f32.partialorder %v2485, 8.507059e+37
        %v2487 = vand.u32 %v2454, 2147483648
        %v2488 = vor.u32 1.1754944e-38, %v2487
        %v2489 = vsel %vm2486, %v2488, %v2484
        %v2490 = vmul.f32 %v2444, %v2489
        %v2491 = vrcp.pop %v2457
        %v2492 = vmul.f32 %v2457, %v2491
        %v2493 = vsub.f32 1.0, %v2492
        %v2494 = vmul.f32 %v2491, %v2493
        %v2495 = vadd.f32 %v2491, %v2494
        %vm2496 = vweird.f32 %v2457
        %vm2497 = vweird.f32 %v2491
        %vm2498 = vmor %vm2496, %vm2497
        %v2499 = vsel %vm2498, %v2491, %v2495
        %v2500 = vand.u32 2147483647, %v2457
        %vm2501 = vcmp.eq.f32.partialorder %v2500, 8.507059e+37
        %v2502 = vand.u32 %v2457, 2147483648
        %v2503 = vor.u32 1.1754944e-38, %v2502
        %v2504 = vsel %vm2501, %v2503, %v2499
        %v2505 = vmul.f32 %v2446, %v2504
        %v2506 = vrcp.pop %v2460
        %v2507 = vmul.f32 %v2460, %v2506
        %v2508 = vsub.f32 1.0, %v2507
        %v2509 = vmul.f32 %v2506, %v2508
        %v2510 = vadd.f32 %v2506, %v2509
        %vm2511 = vweird.f32 %v2460
        %vm2512 = vweird.f32 %v2506
        %vm2513 = vmor %vm2511, %vm2512
        %v2514 = vsel %vm2513, %v2506, %v2510
        %v2515 = vand.u32 2147483647, %v2460
        %vm2516 = vcmp.eq.f32.partialorder %v2515, 8.507059e+37
        %v2517 = vand.u32 %v2460, 2147483648
        %v2518 = vor.u32 1.1754944e-38, %v2517
        %v2519 = vsel %vm2516, %v2518, %v2514
        %v2520 = vmul.f32 %v2448, %v2519
        %v2521 = vpack.c.bf16 %v2475, %v2475
        %v2522 = vpack.c.bf16 %v2490, %v2490
        %v2523 = vpack.c.bf16 %v2505, %v2505
        %v2524 = vpack.c.bf16 %v2520, %v2520
        %v2526 = vsel %vm1462, %v2521, 0
        %v2529 = vsel %vm1566, %v2338, 0
        %2531 = vmatpush.bf16.msra.mxu0 0
        %2532 = vmatpush.bf16.msra.mxu0 0
        %2533 = vmatpush.bf16.msra.mxu0 0
        %2534 = vmatpush.bf16.msra.mxu0 0
        %2535 = vmatpush.bf16.msra.mxu0 0
        %2536 = vmatpush.bf16.msra.mxu0 0
        %2537 = vmatpush.bf16.msra.mxu0 0
        %2538 = vmatpush.bf16.msra.mxu0 %v2529
        %2539 = vmatmul.bf16.gmra.mxu0 %v2526
        %v2540 = vpop.f32.mrf.mxu0
        %v2541 = vadd.f32 0.0, %v2540
        %v2542 = vpop.f32.mrf.mxu0
        %2543 = vdwg.mxu0
        %v2545 = vsel %vm1462, %v2522, 0
        %v2548 = vsel %vm1566, %v2339, 0
        %2550 = vmatpush.bf16.msra.mxu0 0
        %2551 = vmatpush.bf16.msra.mxu0 0
        %2552 = vmatpush.bf16.msra.mxu0 0
        %2553 = vmatpush.bf16.msra.mxu0 0
        %2554 = vmatpush.bf16.msra.mxu0 0
        %2555 = vmatpush.bf16.msra.mxu0 0
        %2556 = vmatpush.bf16.msra.mxu0 0
        %2557 = vmatpush.bf16.msra.mxu0 %v2548
        %2558 = vmatmul.bf16.gmra.mxu0 %v2545
        %v2559 = vpop.f32.mrf.mxu0
        %v2560 = vadd.f32 0.0, %v2559
        %v2561 = vpop.f32.mrf.mxu0
        %2562 = vdwg.mxu0
        %v2564 = vsel %vm1462, %v2523, 0
        %v2567 = vsel %vm1566, %v2340, 0
        %2569 = vmatpush.bf16.msra.mxu0 0
        %2570 = vmatpush.bf16.msra.mxu0 0
        %2571 = vmatpush.bf16.msra.mxu0 0
        %2572 = vmatpush.bf16.msra.mxu0 0
        %2573 = vmatpush.bf16.msra.mxu0 0
        %2574 = vmatpush.bf16.msra.mxu0 0
        %2575 = vmatpush.bf16.msra.mxu0 0
        %2576 = vmatpush.bf16.msra.mxu0 %v2567
        %2577 = vmatmul.bf16.gmra.mxu0 %v2564
        %v2578 = vpop.f32.mrf.mxu0
        %v2579 = vadd.f32 0.0, %v2578
        %v2580 = vpop.f32.mrf.mxu0
        %2581 = vdwg.mxu0
        %v2583 = vsel %vm1462, %v2524, 0
        %v2586 = vsel %vm1566, %v2341, 0
        %2588 = vmatpush.bf16.msra.mxu0 0
        %2589 = vmatpush.bf16.msra.mxu0 0
        %2590 = vmatpush.bf16.msra.mxu0 0
        %2591 = vmatpush.bf16.msra.mxu0 0
        %2592 = vmatpush.bf16.msra.mxu0 0
        %2593 = vmatpush.bf16.msra.mxu0 0
        %2594 = vmatpush.bf16.msra.mxu0 0
        %2595 = vmatpush.bf16.msra.mxu0 %v2586
        %2596 = vmatmul.bf16.gmra.mxu0 %v2583
        %v2597 = vpop.f32.mrf.mxu0
        %v2598 = vadd.f32 0.0, %v2597
        %v2599 = vpop.f32.mrf.mxu0
        %2600 = vdwg.mxu0
        %v2601 = vpack.c.bf16 %v2541, %v2541
        %v2602 = vpack.c.bf16 %v2560, %v2560
        %v2603 = vpack.c.bf16 %v2579, %v2579
        %v2604 = vpack.c.bf16 %v2598, %v2598
        %v2607 = vunpack.c.l.b16 %v1869
        %v2608 = vunpack.c.l.b16 %v1870
        %v2609 = vpack.c.b16 %v2608, %v2607
        %v2612 = vsel %vm1379, %v2601, 0
        %2614 = vmatpush.bf16.msra.mxu0 0
        %2615 = vmatpush.bf16.msra.mxu0 0
        %2616 = vmatpush.bf16.msra.mxu0 0
        %2617 = vmatpush.bf16.msra.mxu0 0
        %2618 = vmatpush.bf16.msra.mxu0 0
        %2619 = vmatpush.bf16.msra.mxu0 0
        %2620 = vmatpush.bf16.msra.mxu0 0
        %2621 = vmatpush.bf16.msra.mxu0 %v2609
        %2622 = vmatmul.bf16.gmra.mxu0 %v2612
        %v2623 = vpop.f32.mrf.mxu0
        %v2624 = vadd.f32 0.0, %v2623
        %v2625 = vpop.f32.mrf.mxu0
        %2626 = vdwg.mxu0
        %v2629 = vunpack.c.l.b16 %v1871
        %v2630 = vunpack.c.l.b16 %v1872
        %v2631 = vpack.c.b16 %v2630, %v2629
        %v2634 = vsel %vm1379, %v2602, 0
        %2636 = vmatpush.bf16.msra.mxu0 0
        %2637 = vmatpush.bf16.msra.mxu0 0
        %2638 = vmatpush.bf16.msra.mxu0 0
        %2639 = vmatpush.bf16.msra.mxu0 0
        %2640 = vmatpush.bf16.msra.mxu0 0
        %2641 = vmatpush.bf16.msra.mxu0 0
        %2642 = vmatpush.bf16.msra.mxu0 0
        %2643 = vmatpush.bf16.msra.mxu0 %v2631
        %2644 = vmatmul.bf16.gmra.mxu0 %v2634
        %v2645 = vpop.f32.mrf.mxu0
        %v2646 = vadd.f32 0.0, %v2645
        %v2647 = vpop.f32.mrf.mxu0
        %2648 = vdwg.mxu0
        %v2651 = vunpack.c.l.b16 %v1873
        %v2652 = vunpack.c.l.b16 %v1874
        %v2653 = vpack.c.b16 %v2652, %v2651
        %v2656 = vsel %vm1379, %v2603, 0
        %2658 = vmatpush.bf16.msra.mxu0 0
        %2659 = vmatpush.bf16.msra.mxu0 0
        %2660 = vmatpush.bf16.msra.mxu0 0
        %2661 = vmatpush.bf16.msra.mxu0 0
        %2662 = vmatpush.bf16.msra.mxu0 0
        %2663 = vmatpush.bf16.msra.mxu0 0
        %2664 = vmatpush.bf16.msra.mxu0 0
        %2665 = vmatpush.bf16.msra.mxu0 %v2653
        %2666 = vmatmul.bf16.gmra.mxu0 %v2656
        %v2667 = vpop.f32.mrf.mxu0
        %v2668 = vadd.f32 0.0, %v2667
        %v2669 = vpop.f32.mrf.mxu0
        %2670 = vdwg.mxu0
        %v2673 = vunpack.c.l.b16 %v1875
        %v2674 = vunpack.c.l.b16 %v1876
        %v2675 = vpack.c.b16 %v2674, %v2673
        %v2678 = vsel %vm1379, %v2604, 0
        %2680 = vmatpush.bf16.msra.mxu0 0
        %2681 = vmatpush.bf16.msra.mxu0 0
        %2682 = vmatpush.bf16.msra.mxu0 0
        %2683 = vmatpush.bf16.msra.mxu0 0
        %2684 = vmatpush.bf16.msra.mxu0 0
        %2685 = vmatpush.bf16.msra.mxu0 0
        %2686 = vmatpush.bf16.msra.mxu0 0
        %2687 = vmatpush.bf16.msra.mxu0 %v2675
        %2688 = vmatmul.bf16.gmra.mxu0 %v2678
        %v2689 = vpop.f32.mrf.mxu0
        %v2690 = vadd.f32 0.0, %v2689
        %v2691 = vpop.f32.mrf.mxu0
        %2692 = vdwg.mxu0
        %v2693 = vadd.f32 %v2624, %v2646
        %v2694 = vadd.f32 %v2693, %v2668
        %v2695 = vadd.f32 %v2694, %v2690
        %v2696 = vadd.f32 %v2695, %v1772
        %v2697 = vsel %vm943, %v2696, 0.0
        %2698 = vadd.xlane.f32.xlu0 %v2697
        %v2699 = vpop.xlane.xlu0 %2698
        %v2700 = vmul.f32 %v2699, %v1745
        %v2701 = vsub.f32 %v2696, %v2700
        %v2702 = vmul.f32 %v2701, %v2701
        %v2703 = vsel %vm943, %v2702, 0.0
        %2704 = vadd.xlane.f32.xlu0 %v2703
        %v2705 = vpop.xlane.xlu0 %2704
        %v2706 = vmul.f32 %v2705, %v1745
        %v2707 = vadd.f32 %v2706, 1e-06
        %v2708 = vrsqrt.pop %v2707
        %v2709 = vmul.f32 %v2708, %v2707
        %v2710 = vmul.f32 %v2709, %v2708
        %v2711 = vmul.f32 0.5, %v2710
        %v2712 = vsub.f32 1.5, %v2711
        %v2713 = vmul.f32 %v2708, %v2712
        %vm2714 = vweird.f32 %v2707
        %vm2715 = vweird.f32 %v2708
        %vm2716 = vmor %vm2714, %vm2715
        %v2717 = vsel %vm2716, %v2708, %v2713
        %v2718 = vmul.f32 %v2701, %v2717
        %v2720 = vperm.slane %v1877, 0
        %v2722 = vmul.f32 %v2718, %v2720
        %v2724 = vperm.slane %v1878, 0
        %v2726 = vadd.f32 %v2722, %v2724
        %v2727 = vld [vmem:[%s16] sm:$0xf]
        %v2728 = vld [vmem:[%s16 + $0x4] sm:$0xf]
        %v2729 = vld [vmem:[%s16 + $0x8] sm:$0xf]
        %v2730 = vld [vmem:[%s16 + $0xc] sm:$0xf]
        %v2731 = vld [vmem:[%s16 + $0x10] sm:$0xf]
        %v2732 = vld [vmem:[%s16 + $0x14] sm:$0xf]
        %v2733 = vld [vmem:[%s16 + $0x18] sm:$0xf]
        %v2734 = vld [vmem:[%s16 + $0x1c] sm:$0xf]
        %v2735 = vld [vmem:[%s17] sm:$0x1]
        %v2736 = vld [vmem:[%s18] sm:$0xf]
        %v2737 = vld [vmem:[%s18 + $0x4] sm:$0xf]
        %v2738 = vld [vmem:[%s18 + $0x8] sm:$0xf]
        %v2739 = vld [vmem:[%s18 + $0xc] sm:$0xf]
        %v2740 = vld [vmem:[%s18 + $0x10] sm:$0xf]
        %v2741 = vld [vmem:[%s18 + $0x14] sm:$0xf]
        %v2742 = vld [vmem:[%s18 + $0x18] sm:$0xf]
        %v2743 = vld [vmem:[%s18 + $0x1c] sm:$0xf]
        %v2744 = vld [vmem:[%s18 + $0x20] sm:$0xf]
        %v2745 = vld [vmem:[%s18 + $0x24] sm:$0xf]
        %v2746 = vld [vmem:[%s18 + $0x28] sm:$0xf]
        %v2747 = vld [vmem:[%s18 + $0x2c] sm:$0xf]
        %v2748 = vld [vmem:[%s18 + $0x30] sm:$0xf]
        %v2749 = vld [vmem:[%s18 + $0x34] sm:$0xf]
        %v2750 = vld [vmem:[%s18 + $0x38] sm:$0xf]
        %v2751 = vld [vmem:[%s18 + $0x3c] sm:$0xf]
        %v2752 = vld [vmem:[%s19] sm:$0x1]
        %v2753 = vld [vmem:[%s20] sm:$0x1]
        %v2754 = vld [vmem:[%s21] sm:$0x1]
        %v2755 = vpack.c.bf16 %v2726, %v2726
        %v2757 = vperm.slane %v2735, 0
        %v2767 = vunpack.c.l.b16 %v2727
        %v2768 = vunpack.c.l.b16 %v2728
        %v2769 = vunpack.c.l.b16 %v2729
        %v2770 = vunpack.c.l.b16 %v2730
        %v2771 = vunpack.c.l.b16 %v2731
        %v2772 = vunpack.c.l.b16 %v2732
        %v2773 = vunpack.c.l.b16 %v2733
        %v2774 = vunpack.c.l.b16 %v2734
        %v2775 = vpack.c.b16 %v2768, %v2767
        %v2776 = vpack.c.b16 %v2770, %v2769
        %v2777 = vpack.c.b16 %v2772, %v2771
        %v2778 = vpack.c.b16 %v2774, %v2773
        %v2784 = vsel %vm943, %v2755, 0
        %2786 = vmatpush.bf16.msra.mxu0 0
        %2787 = vmatpush.bf16.msra.mxu0 0
        %2788 = vmatpush.bf16.msra.mxu0 0
        %2789 = vmatpush.bf16.msra.mxu0 0
        %2790 = vmatpush.bf16.msra.mxu0 %v2778
        %2791 = vmatpush.bf16.msra.mxu0 %v2777
        %2792 = vmatpush.bf16.msra.mxu0 %v2776
        %2793 = vmatpush.bf16.msra.mxu0 %v2775
        %2794 = vmatmul.bf16.gmra.mxu0 %v2784
        %v2795 = vpop.f32.mrf.mxu0
        %v2796 = vadd.f32 %v2757, %v2795
        %v2797 = vpop.f32.mrf.mxu0
        %2798 = vdwg.mxu0
        %v2799 = vmax.f32 %v2796, 0.0
        %v2800 = vpack.c.bf16 %v2799, %v2799
        %v2802 = vperm.slane %v2752, 0
        %v2820 = vunpack.c.l.b16 %v2736
        %v2821 = vunpack.c.l.b16 %v2737
        %v2822 = vunpack.c.l.b16 %v2738
        %v2823 = vunpack.c.l.b16 %v2739
        %v2824 = vunpack.c.l.b16 %v2740
        %v2825 = vunpack.c.l.b16 %v2741
        %v2826 = vunpack.c.l.b16 %v2742
        %v2827 = vunpack.c.l.b16 %v2743
        %v2828 = vunpack.c.l.b16 %v2744
        %v2829 = vunpack.c.l.b16 %v2745
        %v2830 = vunpack.c.l.b16 %v2746
        %v2831 = vunpack.c.l.b16 %v2747
        %v2832 = vunpack.c.l.b16 %v2748
        %v2833 = vunpack.c.l.b16 %v2749
        %v2834 = vunpack.c.l.b16 %v2750
        %v2835 = vunpack.c.l.b16 %v2751
        %v2836 = vpack.c.b16 %v2821, %v2820
        %v2837 = vpack.c.b16 %v2823, %v2822
        %v2838 = vpack.c.b16 %v2825, %v2824
        %v2839 = vpack.c.b16 %v2827, %v2826
        %v2840 = vpack.c.b16 %v2829, %v2828
        %v2841 = vpack.c.b16 %v2831, %v2830
        %v2842 = vpack.c.b16 %v2833, %v2832
        %v2843 = vpack.c.b16 %v2835, %v2834
        %2852 = vmatpush.bf16.msra.mxu0 %v2843
        %2853 = vmatpush.bf16.msra.mxu0 %v2842
        %2854 = vmatpush.bf16.msra.mxu0 %v2841
        %2855 = vmatpush.bf16.msra.mxu0 %v2840
        %2856 = vmatpush.bf16.msra.mxu0 %v2839
        %2857 = vmatpush.bf16.msra.mxu0 %v2838
        %2858 = vmatpush.bf16.msra.mxu0 %v2837
        %2859 = vmatpush.bf16.msra.mxu0 %v2836
        %2860 = vmatmul.bf16.gmra.mxu0 %v2800
        %v2861 = vpop.f32.mrf.mxu0
        %v2862 = vadd.f32 %v2802, %v2861
        %v2863 = vpop.f32.mrf.mxu0
        %2864 = vdwg.mxu0
        %v2865 = vadd.f32 %v2862, %v2726
        %v2866 = vsel %vm943, %v2865, 0.0
        %2867 = vadd.xlane.f32.xlu0 %v2866
        %v2868 = vpop.xlane.xlu0 %2867
        %v2869 = vmul.f32 %v2868, %v1745
        %v2870 = vsub.f32 %v2865, %v2869
        %v2871 = vmul.f32 %v2870, %v2870
        %v2872 = vsel %vm943, %v2871, 0.0
        %2873 = vadd.xlane.f32.xlu0 %v2872
        %v2874 = vpop.xlane.xlu0 %2873
        %v2875 = vmul.f32 %v2874, %v1745
        %v2876 = vadd.f32 %v2875, 1e-06
        %v2877 = vrsqrt.pop %v2876
        %v2878 = vmul.f32 %v2877, %v2876
        %v2879 = vmul.f32 %v2878, %v2877
        %v2880 = vmul.f32 0.5, %v2879
        %v2881 = vsub.f32 1.5, %v2880
        %v2882 = vmul.f32 %v2877, %v2881
        %vm2883 = vweird.f32 %v2876
        %vm2884 = vweird.f32 %v2877
        %vm2885 = vmor %vm2883, %vm2884
        %v2886 = vsel %vm2885, %v2877, %v2882
        %v2887 = vmul.f32 %v2870, %v2886
        %v2889 = vperm.slane %v2753, 0
        %v2891 = vmul.f32 %v2887, %v2889
        %v2893 = vperm.slane %v2754, 0
        %v2895 = vadd.f32 %v2891, %v2893
        %2896 = vst.msk [vmem:[%s767] sm:$0xff] %vm943, %v2895
        %2897 = vst.msk [vmem:[%s774] sm:$0xff] %vm1462, %v1513
        %2898 = vst.msk [vmem:[%s774 + $0x8] sm:$0xff] %vm1462, %v1528
        %2899 = vst.msk [vmem:[%s774 + $0x10] sm:$0xff] %vm1462, %v1543
        %2900 = vst.msk [vmem:[%s774 + $0x18] sm:$0xff] %vm1462, %v1558
        %2901 = vst.msk [vmem:[%s781] sm:$0xff] %vm1462, %v2475
        %2902 = vst.msk [vmem:[%s781 + $0x8] sm:$0xff] %vm1462, %v2490
        %2903 = vst.msk [vmem:[%s781 + $0x10] sm:$0xff] %vm1462, %v2505
        %2904 = vst.msk [vmem:[%s781 + $0x18] sm:$0xff] %vm1462, %v2520
        %s2905 = sand.u32 %s532, 1
        %s2906 = scalar_lea.sflag [#allocation3], %s2905
        %s2907 = sand.u32 %s532, 1
        %s2908 = smul.addr %s2907, 8
        %s2909 = scalar_lea.vmem [#allocation2], %s2908
        %s2910 = sand.u32 %s42, 1
        %s2911 = scalar_lea.sflag [#allocation5], %s2910
        %s2912 = sand.u32 %s558, 1
        %s2913 = smul.addr %s2912, 32
        %s2914 = scalar_lea.vmem [#allocation4], %s2913
        %s2915 = sand.u32 %s42, 1
        %s2916 = scalar_lea.sflag [#allocation5], %s2915
        %s2917 = sand.u32 %s584, 1
        %s2918 = smul.addr %s2917, 32
        %s2919 = scalar_lea.vmem [#allocation6], %s2918
        // Predicated region
        $region109: #{_lambda_.9} parent=107 // pred_check
          %p2920 = pneg %p542
        $region110: #{_lambda_.9} parent=107 // pred_check_branch
          %2922 = sbr.rel (%p2920) target = $region112
        $region111: #{_lambda_.9} parent=107 // pred_region
          %2924 = vsyncadd %s2906, 0
          %s2925 = smul.addr %s42, 8
          %s2926 = scalar_lea.hbm %s22, %s2925
          %s2928 = sshll.u32 %s2909, 4
          %s2929 = int_to_ptr.vmem [resolvable:$true] %s2928
          %s2930 = sshll.u32 %s2926, 4
          %s2931 = int_to_ptr.hbm [resolvable:$true] %s2930
          %2933 = dma.vmem_to_hbm [thread:$0]  %s2929, 128, %s2931, %s2906
        $region112: #{_lambda_.9} parent=107 // pred_fallthru
          _
        // Predicated region
        $region113: #{_lambda_.9} parent=107 // pred_check
          %p2934 = pneg %p568
        $region114: #{_lambda_.9} parent=107 // pred_check_branch
          %2936 = sbr.rel (%p2934) target = $region116
        $region115: #{_lambda_.9} parent=107 // pred_region
          %2938 = vsyncadd %s2911, 0
          %s2939 = smul.addr %s42, 4
          %s2940 = smul.addr %s2939, 8
          %s2941 = scalar_lea.hbm %s23, %s2940
          %s2942 = sshll.u32 %s2914, 4
          %s2943 = int_to_ptr.vmem [resolvable:$true] %s2942
          %s2944 = sshll.u32 %s2941, 4
          %s2945 = int_to_ptr.hbm [resolvable:$true] %s2944
          %2950 = dma.vmem_to_hbm [thread:$0]  %s2943, 512, %s2945, %s2911, 128, 128, 8
        $region116: #{_lambda_.9} parent=107 // pred_fallthru
          _
        // Predicated region
        $region117: #{_lambda_.9} parent=107 // pred_check
          %p2951 = pneg %p594
        $region118: #{_lambda_.9} parent=107 // pred_check_branch
          %2953 = sbr.rel (%p2951) target = $region120
        $region119: #{_lambda_.9} parent=107 // pred_region
          %2955 = vsyncadd %s2916, 0
          %s2956 = smul.addr %s42, 4
          %s2957 = smul.addr %s2956, 8
          %s2958 = scalar_lea.hbm %s24, %s2957
          %s2959 = sshll.u32 %s2919, 4
          %s2960 = int_to_ptr.vmem [resolvable:$true] %s2959
          %s2961 = sshll.u32 %s2958, 4
          %s2962 = int_to_ptr.hbm [resolvable:$true] %s2961
          %2967 = dma.vmem_to_hbm [thread:$0]  %s2960, 512, %s2962, %s2916, 128, 128, 8
        $region120: #{_lambda_.9} parent=107 // pred_fallthru
          _
      $region108: #{_lambda_.9} parent=5 // pred_fallthru
        _
      %p2968 = scmp.le.s32.totalorder 2, %s37
      // Predicated region
      $region121: #{_lambda_.9} parent=5 // pred_check
        %p2969 = pneg %p2968
      $region122: #{_lambda_.9} parent=5 // pred_check_branch
        %2971 = sbr.rel (%p2969) target = $region124
      $region123: #{_lambda_.9} parent=5 // pred_region
        %s2972 = ssub.s32 %s37, 2
        // Predicated region
        $region125: #{_lambda_.9} parent=123 // pred_check
          %p2973 = pneg %p548
        $region126: #{_lambda_.9} parent=123 // pred_check_branch
          %2975 = sbr.rel (%p2973) target = $region128
        $region127: #{_lambda_.9} parent=123 // pred_region
          %s2976 = sand.u32 %s533, 1
          %s2977 = scalar_lea.sflag [#allocation3], %s2976
          %s2978 = sand.u32 %s533, 1
          %s2979 = smul.addr %s2978, 8
          %s2980 = scalar_lea.vmem [#allocation2], %s2979
          %2982 = dma.done %s2977, 128
        $region128: #{_lambda_.9} parent=123 // pred_fallthru
          _
        // Predicated region
        $region129: #{_lambda_.9} parent=123 // pred_check
          %p2983 = pneg %p574
        $region130: #{_lambda_.9} parent=123 // pred_check_branch
          %2985 = sbr.rel (%p2983) target = $region132
        $region131: #{_lambda_.9} parent=123 // pred_region
          %s2986 = sand.u32 %s43, 1
          %s2987 = scalar_lea.sflag [#allocation5], %s2986
          %s2988 = sand.u32 %s559, 1
          %s2989 = smul.addr %s2988, 32
          %s2990 = scalar_lea.vmem [#allocation4], %s2989
          %2992 = dma.done %s2987, 512
        $region132: #{_lambda_.9} parent=123 // pred_fallthru
          _
        // Predicated region
        $region133: #{_lambda_.9} parent=123 // pred_check
          %p2993 = pneg %p600
        $region134: #{_lambda_.9} parent=123 // pred_check_branch
          %2995 = sbr.rel (%p2993) target = $region136
        $region135: #{_lambda_.9} parent=123 // pred_region
          %s2996 = sand.u32 %s43, 1
          %s2997 = scalar_lea.sflag [#allocation5], %s2996
          %s2998 = sand.u32 %s585, 1
          %s2999 = smul.addr %s2998, 32
          %s3000 = scalar_lea.vmem [#allocation6], %s2999
          %3002 = dma.done %s2997, 512
        $region136: #{_lambda_.9} parent=123 // pred_fallthru
          _
      $region124: #{_lambda_.9} parent=5 // pred_fallthru
        _
    $region6: #{_lambda_.9} parent=1 // loop_footer
      %s41 = sadd.s32 1, %s37
    $region7: #{_lambda_.9} parent=1 // loop_footer_branch
      %36 = sbr.rel target = $region3
    $region8: #{_lambda_.9} parent=1 // loop_exit
      _
    %3003 = vsyncpa [#allocation3], 1
    %s3004 = scalar_lea.sflag [#allocation3], 1
    %3005 = vsyncpa %s3004, 1
    %3006 = vsyncpa [#allocation5], 1
    %s3007 = scalar_lea.sflag [#allocation5], 1
    %3008 = vsyncpa %s3007, 1

</llo_original>
